<compile_context>
chip_gen: v7x
topology: tpu7x:2x2x1
jax: 0.10.0
libtpu: 0.0.40
codegen_flags: <defaults>
</compile_context>

<pallas_src>
import math
import functools

import jax
import jax.numpy as jnp
from jax.experimental import pallas as pl
from jax.experimental.pallas import tpu as pltpu


LANE = 128  # TPU lane width
P_HI = jax.lax.Precision.HIGHEST


# ----------------------------------------------------------------------------
# helpers (plain Python / JAX glue)
# ----------------------------------------------------------------------------
def best_patch_split(H, W, num_patches):
    best_pair = None
    best_ratio_diff = float("inf")
    for h in range(1, num_patches + 1):
        if num_patches % h != 0:
            continue
        w = num_patches // h
        if H % h != 0 or W % w != 0:
            continue
        patch_H = H // h
        patch_W = W // w
        ratio = patch_W / patch_H
        ratio_diff = abs(ratio - 1)
        if ratio_diff < best_ratio_diff:
            best_ratio_diff = ratio_diff
            best_pair = (h, w)
    assert best_pair is not None, "image cant be chunked into given number of patches"
    return best_pair


def patchify(x, hstep, wstep):
    """(B, C, H, W) -> (B, numChunks, C*pH*pW)."""
    B, C, H, W = x.shape
    pH, pW = H // hstep, W // wstep
    x = x.reshape(B, C, hstep, pH, wstep, pW)
    x = x.transpose(0, 2, 4, 1, 3, 5)          # (B, hstep, wstep, C, pH, pW)
    return x.reshape(B, hstep * wstep, C * pH * pW)


def prepare_params(raw, d_model, numheads):
    """Lane-dense padded params (Dp = next multiple of 128) with fused projections.

    Real features live in lanes [0, d_model); pad lanes are zero everywhere, so
    residuals / matmuls keep them zero and LayerNorm stats can mask them out.
    Layouts:
      wqkv : (Dp, 3*d_model)  columns [Q | K | V], head-major inside each block,
             with 1/sqrt(dk) folded into the Q columns.
      wo   : (d_model, Dp)    ctx (row-major heads) -> padded model dim.
      wf   : (Dp, Dp)
    """
    dk = d_model // numheads
    d_pad = ((d_model + LANE - 1) // LANE) * LANE
    f32 = jnp.float32
    scale = 1.0 / math.sqrt(dk)   # attention scale folded into the Q projection

    def pad_in_rows(w, s=1.0):
        # torch (out, in) -> (d_pad, out): transpose, scale, zero-pad input rows.
        wt = (w.T * s).astype(f32)                               # (in, out)
        return jnp.pad(wt, ((0, d_pad - d_model), (0, 0)))

    def pad_vec(v):
        return jnp.zeros((1, d_pad), f32).at[0, :d_model].set(v)

    wqkv = jnp.concatenate([pad_in_rows(raw["wq"], scale),
                            pad_in_rows(raw["wk"]),
                            pad_in_rows(raw["wv"])], axis=1)      # (d_pad, 3*d_model)
    bqkv = jnp.concatenate([raw["bq"] * scale, raw["bk"], raw["bv"]])[None, :]

    wo = jnp.pad(raw["wo"].T.astype(f32), ((0, 0), (0, d_pad - d_model)))   # (d_model, d_pad)
    wf = jnp.pad(raw["wf"].T.astype(f32),
                 ((0, d_pad - d_model), (0, d_pad - d_model)))              # (d_pad, d_pad)

    params = dict(
        wqkv=wqkv, bqkv=bqkv, wo=wo, bo=pad_vec(raw["bo"]),
        wf=wf, bf=pad_vec(raw["bf"]),
        gamma=pad_vec(raw["gamma"]), beta=pad_vec(raw["beta"]),
    )
    return params, d_pad


# ----------------------------------------------------------------------------
# Pallas kernel: whole batch folded into the row axis, lane-dense Dp
# ----------------------------------------------------------------------------
def tiny_vit_kernel(x_ref, wqkv_ref, bqkv_ref, wo_ref, bo_ref, wf_ref, bf_ref,
                    gamma_ref, beta_ref, o_ref, *, batch, seq, numheads, d_real,
                    matmul_dtype):
    rows, dp = x_ref.shape                     # (batch*seq, Dp)
    dk = d_real // numheads
    hd = numheads * dk                         # == d_real
    mm = matmul_dtype
    prec = P_HI if jnp.dtype(mm) == jnp.dtype(jnp.float32) else jax.lax.Precision.DEFAULT

    # Weights are resident in VMEM (constant index_maps); load once per grid step.
    wqkv = wqkv_ref[...].astype(mm)            # (Dp, 3*H*dk)
    bqkv = bqkv_ref[...]                       # (1, 3*H*dk)
    wo = wo_ref[...].astype(mm)                # (H*dk, Dp)
    bo = bo_ref[...]                           # (1, Dp)
    wf = wf_ref[...].astype(mm)                # (Dp, Dp)
    bf = bf_ref[...]                           # (1, Dp)
    gamma = gamma_ref[...]                     # (1, Dp)
    beta = beta_ref[...]                       # (1, Dp)

    # LayerNorm over the d_real true features only (pad lanes are zero by construction).
    real = jax.lax.broadcasted_iota(jnp.int32, (1, dp), 1) < d_real
    inv_d = 1.0 / d_real

    def layer_norm(y):
        mu = jnp.sum(y, axis=-1, keepdims=True) * inv_d          # pads contribute 0
        diff = jnp.where(real, y - mu, 0.0)
        var = jnp.sum(diff * diff, axis=-1, keepdims=True) * inv_d
        return diff * jax.lax.rsqrt(var + 1e-5) * gamma + beta   # pad lanes stay 0

    x = x_ref[...]                             # (rows, Dp), f32, whole batch as rows

    # --- fused QKV projection: ONE (rows, Dp) x (Dp, 3*H*dk) matmul -----------------
    qkv = jnp.dot(x.astype(mm), wqkv, preferred_element_type=jnp.float32,
                  precision=prec) + bqkv       # (rows, 3*H*dk), f32

    # --- attention: per-(batch, head) tiny 2D contractions on static lane slices ----
    ctx_rows = []
    for b in range(batch):
        r0, r1 = b * seq, (b + 1) * seq
        heads = []
        for h in range(numheads):
            c = h * dk
            q = qkv[r0:r1, c:c + dk].astype(mm)                       # (seq, dk)
            k = qkv[r0:r1, hd + c:hd + c + dk].astype(mm)             # (seq, dk)
            v = qkv[r0:r1, 2 * hd + c:2 * hd + c + dk].astype(mm)     # (seq, dk)
            s = jnp.einsum("qd,kd->qk", q, k,
                           preferred_element_type=jnp.float32, precision=prec)
            m = jnp.max(s, axis=-1, keepdims=True)
            e = jnp.exp(s - m)
            p = e / jnp.sum(e, axis=-1, keepdims=True)   # exact divide (review item)
            heads.append(jnp.dot(p.astype(mm), v,
                                 preferred_element_type=jnp.float32,
                                 precision=prec))                     # (seq, dk)
        ctx_rows.append(jnp.concatenate(heads, axis=1))               # (seq, H*dk)
    ctx = jnp.concatenate(ctx_rows, axis=0) if batch > 1 else ctx_rows[0]  # (rows, H*dk)

    # --- fused output projection: single (rows, H*dk) x (H*dk, Dp) matmul -----------
    attn = jnp.dot(ctx.astype(mm), wo, preferred_element_type=jnp.float32,
                   precision=prec) + bo        # (rows, Dp)

    # --- post-norm residual blocks (dropout == identity, eval mode) ------------------
    y = x + layer_norm(attn)
    ff = jnp.dot(y.astype(mm), wf, preferred_element_type=jnp.float32,
                 precision=prec) + bf
    o_ref[...] = y + layer_norm(ff)            # lane-dense (rows, Dp) store


@functools.partial(jax.jit, static_argnames=("numheads", "d_real", "matmul_dtype"))
def tiny_vit_forward(tokens_p, params, *, numheads, d_real,
                     matmul_dtype=jnp.bfloat16):
    """tokens_p: (B, N, Dp) lane-dense padded tokens.  Returns (B, N, d_real)."""
    B, N, Dp = tokens_p.shape
    R = B * N
    x2 = tokens_p.reshape(R, Dp)               # batch folded into rows (review item)

    kernel = functools.partial(tiny_vit_kernel, batch=B, seq=N, numheads=numheads,
                               d_real=d_real, matmul_dtype=matmul_dtype)

    def full_spec(shape):                      # resident weights, constant index map
        return pl.BlockSpec(shape, lambda i, _r=len(shape): (0,) * _r)

    row_spec = pl.BlockSpec((R, Dp), lambda i: (i, 0))

    # Single grid step: the whole (tiny) problem fits trivially in VMEM (~0.2 MiB of
    # weights + 9 KiB of tokens), and the kernel is latency-bound, so one step beats
    # splitting.  On v7x one could A/B a batch-split "parallel" grid across the 2 TCs.
    out = pl.pallas_call(
        kernel,
        out_shape=jax.ShapeDtypeStruct((R, Dp), jnp.float32),
        grid=(1,),
        in_specs=[row_spec,
                  full_spec(params["wqkv"].shape), full_spec(params["bqkv"].shape),
                  full_spec(params["wo"].shape), full_spec(params["bo"].shape),
                  full_spec(params["wf"].shape), full_spec(params["bf"].shape),
                  full_spec(params["gamma"].shape), full_spec(params["beta"].shape)],
        out_specs=row_spec,
        compiler_params=pltpu.CompilerParams(dimension_semantics=("arbitrary",)),
    )(x2, params["wqkv"], params["bqkv"], params["wo"], params["bo"],
      params["wf"], params["bf"], params["gamma"], params["beta"])

    return out.reshape(B, N, Dp)[..., :d_real]   # drop lane padding outside the kernel


# ----------------------------------------------------------------------------
# pure-JAX reference (mirrors the PyTorch forward, eval mode, HIGHEST precision)
# ----------------------------------------------------------------------------
def reference_forward(tokens, raw, numheads):
    B, N, D = tokens.shape
    dk = D // numheads

    def lin(t, w, b):                      # PyTorch Linear: x @ W.T + b
        return jnp.einsum("bnd,od->bno", t, w, precision=P_HI) + b

    q = lin(tokens, raw["wq"], raw["bq"]).reshape(B, N, numheads, dk).transpose(0, 2, 1, 3)
    k = lin(tokens, raw["wk"], raw["bk"]).reshape(B, N, numheads, dk).transpose(0, 2, 1, 3)
    v = lin(tokens, raw["wv"], raw["bv"]).reshape(B, N, numheads, dk).transpose(0, 2, 1, 3)
    scores = jnp.einsum("bhqd,bhkd->bhqk", q, k, precision=P_HI) / math.sqrt(dk)
    attn = jax.nn.softmax(scores, axis=-1)
    ctx = jnp.einsum("bhqk,bhkd->bhqd", attn, v,
                     precision=P_HI).transpose(0, 2, 1, 3).reshape(B, N, D)
    x1 = lin(ctx, raw["wo"], raw["bo"])

    def ln(y):
        mu = y.mean(-1, keepdims=True)
        var = ((y - mu) ** 2).mean(-1, keepdims=True)
        return (y - mu) / jnp.sqrt(var + 1e-5) * raw["gamma"] + raw["beta"]

    x = tokens + ln(x1)
    x1 = lin(x, raw["wf"], raw["bf"])
    return x + ln(x1)


# ----------------------------------------------------------------------------
# main
# ----------------------------------------------------------------------------
if __name__ == "__main__":
    B, C, H_img, W_img = 2, 4, 12, 12
    numChunks = 9
    numheads = 4

    hstep, wstep = best_patch_split(H_img, W_img, numChunks)
    pH, pW = H_img // hstep, W_img // wstep
    dModel = C * pH * pW                   # 64
    assert dModel % numheads == 0

    key = jax.random.PRNGKey(0)
    keys = jax.random.split(key, 11)
    x_img = jax.random.normal(keys[0], (B, C, H_img, W_img), jnp.float32)

    def lin_init(kw, kb, fan_in, fan_out):  # PyTorch-style uniform init
        bound = 1.0 / math.sqrt(fan_in)
        w = jax.random.uniform(kw, (fan_out, fan_in), jnp.float32, -bound, bound)
        b = jax.random.uniform(kb, (fan_out,), jnp.float32, -bound, bound)
        return w, b

    wq, bq = lin_init(keys[1], keys[2], dModel, dModel)
    wk, bk = lin_init(keys[3], keys[4], dModel, dModel)
    wv, bv = lin_init(keys[5], keys[6], dModel, dModel)
    wo, bo = lin_init(keys[7], keys[8], dModel, dModel)
    wf, bf = lin_init(keys[9], keys[10], dModel, dModel)
    gamma = jnp.ones((dModel,), jnp.float32)
    beta = jnp.zeros((dModel,), jnp.float32)

    raw = dict(wq=wq, bq=bq, wk=wk, bk=bk, wv=wv, bv=bv,
               wo=wo, bo=bo, wf=wf, bf=bf, gamma=gamma, beta=beta)

    params, d_pad = prepare_params(raw, dModel, numheads)

    tokens = patchify(x_img, hstep, wstep)                               # (2, 9, 64)
    tokens_p = jnp.pad(tokens, ((0, 0), (0, 0), (0, d_pad - dModel)))    # (2, 9, 128)

    # Strict numeric gate: f32 MXU operands, explicit HIGHEST precision on both sides,
    # exact softmax divide -> agreement at ~1e-4 level (5e-3 tolerance leaves margin
    # for hardware rsqrt in the in-kernel LayerNorm).
    out = tiny_vit_forward(tokens_p, params, numheads=numheads, d_real=dModel,
                           matmul_dtype=jnp.float32)
    out = jax.block_until_ready(out)

    ref = reference_forward(tokens, raw, numheads)
    assert out.shape == (B, numChunks, dModel)
    assert jnp.allclose(out, ref, atol=5e-3, rtol=5e-3), "mismatch vs. reference"

    # Perf path (review item): bf16 MXU operands with f32 accumulation.  Verified to
    # compile/run; the strict numeric gate stays on the f32 path above because bf16
    # operand error after two LayerNorms would require a much looser, less meaningful
    # tolerance.
    out_bf16 = tiny_vit_forward(tokens_p, params, numheads=numheads, d_real=dModel,
                                matmul_dtype=jnp.bfloat16)
    out_bf16 = jax.block_until_ready(out_bf16)
    assert out_bf16.shape == (B, numChunks, dModel)
    assert bool(jnp.isfinite(out_bf16).all())

    print("KERNEL_OK")
</pallas_src>

<mosaic_0001>
module attributes {stable_mosaic.version = 11 : i64} {
  func.func @tiny_vit_kernel(%arg0: i32, %arg1: memref<18x128xf32, #tpu.memory_space<vmem>>, %arg2: memref<128x192xf32, #tpu.memory_space<vmem>>, %arg3: memref<1x192xf32, #tpu.memory_space<vmem>>, %arg4: memref<64x128xf32, #tpu.memory_space<vmem>>, %arg5: memref<1x128xf32, #tpu.memory_space<vmem>>, %arg6: memref<128x128xf32, #tpu.memory_space<vmem>>, %arg7: memref<1x128xf32, #tpu.memory_space<vmem>>, %arg8: memref<1x128xf32, #tpu.memory_space<vmem>>, %arg9: memref<1x128xf32, #tpu.memory_space<vmem>>, %arg10: memref<18x128xf32, #tpu.memory_space<vmem>>) attributes {dimension_semantics = [#tpu.dimension_semantics<arbitrary>], iteration_bounds = array<i64: 1>, scalar_prefetch = 0 : i64, scratch_operands = 0 : i64, tpu.core_type = #tpu.core_type<tc>, window_params = [{transform_indices = @transform_0, window_bounds = array<i64: 18, 128>}, {pipeline_mode = #tpu.pipeline_mode<synchronous>, transform_indices = @transform_1, window_bounds = array<i64: 128, 192>}, {pipeline_mode = #tpu.pipeline_mode<synchronous>, transform_indices = @transform_2, window_bounds = array<i64: 1, 192>}, {pipeline_mode = #tpu.pipeline_mode<synchronous>, transform_indices = @transform_3, window_bounds = array<i64: 64, 128>}, {pipeline_mode = #tpu.pipeline_mode<synchronous>, transform_indices = @transform_4, window_bounds = array<i64: 1, 128>}, {pipeline_mode = #tpu.pipeline_mode<synchronous>, transform_indices = @transform_5, window_bounds = array<i64: 128, 128>}, {pipeline_mode = #tpu.pipeline_mode<synchronous>, transform_indices = @transform_6, window_bounds = array<i64: 1, 128>}, {pipeline_mode = #tpu.pipeline_mode<synchronous>, transform_indices = @transform_7, window_bounds = array<i64: 1, 128>}, {pipeline_mode = #tpu.pipeline_mode<synchronous>, transform_indices = @transform_8, window_bounds = array<i64: 1, 128>}, {transform_indices = @transform_9, window_bounds = array<i64: 18, 128>}]} {
    %c0 = arith.constant 0 : index
    %c0_0 = arith.constant 0 : index
    %0 = vector.load %arg2[%c0, %c0_0] : memref<128x192xf32, #tpu.memory_space<vmem>>, vector<128x192xf32>
    %c0_1 = arith.constant 0 : index
    %c0_2 = arith.constant 0 : index
    %1 = vector.load %arg3[%c0_1, %c0_2] : memref<1x192xf32, #tpu.memory_space<vmem>>, vector<1x192xf32>
    %c0_3 = arith.constant 0 : index
    %c0_4 = arith.constant 0 : index
    %2 = vector.load %arg4[%c0_3, %c0_4] : memref<64x128xf32, #tpu.memory_space<vmem>>, vector<64x128xf32>
    %c0_5 = arith.constant 0 : index
    %c0_6 = arith.constant 0 : index
    %3 = vector.load %arg5[%c0_5, %c0_6] : memref<1x128xf32, #tpu.memory_space<vmem>>, vector<1x128xf32>
    %c0_7 = arith.constant 0 : index
    %c0_8 = arith.constant 0 : index
    %4 = vector.load %arg6[%c0_7, %c0_8] : memref<128x128xf32, #tpu.memory_space<vmem>>, vector<128x128xf32>
    %c0_9 = arith.constant 0 : index
    %c0_10 = arith.constant 0 : index
    %5 = vector.load %arg7[%c0_9, %c0_10] : memref<1x128xf32, #tpu.memory_space<vmem>>, vector<1x128xf32>
    %c0_11 = arith.constant 0 : index
    %c0_12 = arith.constant 0 : index
    %6 = vector.load %arg8[%c0_11, %c0_12] : memref<1x128xf32, #tpu.memory_space<vmem>>, vector<1x128xf32>
    %c0_13 = arith.constant 0 : index
    %c0_14 = arith.constant 0 : index
    %7 = vector.load %arg9[%c0_13, %c0_14] : memref<1x128xf32, #tpu.memory_space<vmem>>, vector<1x128xf32>
    %8 = tpu.iota {dimensions = array<i32: 1>} : vector<1x128xi32>
    %c64_i32 = arith.constant 64 : i32
    %9 = vector.broadcast %c64_i32 : i32 to vector<1x128xi32>
    %10 = arith.cmpi slt, %8, %9 : vector<1x128xi32>
    %c0_15 = arith.constant 0 : index
    %c0_16 = arith.constant 0 : index
    %11 = vector.load %arg1[%c0_15, %c0_16] : memref<18x128xf32, #tpu.memory_space<vmem>>, vector<18x128xf32>
    %cst = arith.constant dense<0.000000e+00> : vector<18x192xf32>
    %12 = tpu.matmul %11, %0, %cst {dimension_numbers = #tpu.dot_dimension_numbers<[1], [0], [0], [1], [0, 0, 1, 1], [], []>, precision = #tpu.contract_precision<fp32>} : vector<18x128xf32>, vector<128x192xf32>, vector<18x192xf32> -> vector<18x192xf32>
    %13 = vector.broadcast %1 : vector<1x192xf32> to vector<18x192xf32>
    %14 = arith.addf %12, %13 : vector<18x192xf32>
    %15 = vector.extract_strided_slice %14 {offsets = [0, 0], sizes = [9, 16], strides = [1, 1]} : vector<18x192xf32> to vector<9x16xf32>
    %16 = vector.extract_strided_slice %14 {offsets = [0, 64], sizes = [9, 16], strides = [1, 1]} : vector<18x192xf32> to vector<9x16xf32>
    %17 = vector.extract_strided_slice %14 {offsets = [0, 128], sizes = [9, 16], strides = [1, 1]} : vector<18x192xf32> to vector<9x16xf32>
    "tpu.trace_start"() <{level = 10 : i32, message = "qd,kd->qk"}> : () -> ()
    %cst_17 = arith.constant dense<0.000000e+00> : vector<9x9xf32>
    %18 = tpu.matmul %15, %16, %cst_17 {dimension_numbers = #tpu.dot_dimension_numbers<[1], [1], [0], [0], [0, 0, 1, 0], [], []>, precision = #tpu.contract_precision<fp32>} : vector<9x16xf32>, vector<9x16xf32>, vector<9x9xf32> -> vector<9x9xf32>
    "tpu.trace_stop"() : () -> ()
    %cst_18 = arith.constant dense<0xFF800000> : vector<9xf32>
    %19 = vector.multi_reduction <maximumf>, %18, %cst_18 [1] : vector<9x9xf32> to vector<9xf32>
    %20 = vector.shape_cast %19 : vector<9xf32> to vector<9x1xf32>
    %21 = vector.broadcast %20 : vector<9x1xf32> to vector<9x9xf32>
    %22 = arith.subf %18, %21 : vector<9x9xf32>
    %23 = math.exp %22 : vector<9x9xf32>
    %cst_19 = arith.constant dense<0.000000e+00> : vector<9xf32>
    %24 = vector.multi_reduction <add>, %23, %cst_19 [1] : vector<9x9xf32> to vector<9xf32>
    %25 = vector.shape_cast %24 : vector<9xf32> to vector<9x1xf32>
    %26 = vector.broadcast %25 : vector<9x1xf32> to vector<9x9xf32>
    %27 = arith.divf %23, %26 : vector<9x9xf32>
    %cst_20 = arith.constant dense<0.000000e+00> : vector<9x16xf32>
    %28 = tpu.matmul %27, %17, %cst_20 {dimension_numbers = #tpu.dot_dimension_numbers<[1], [0], [0], [1], [0, 0, 1, 1], [], []>, precision = #tpu.contract_precision<fp32>} : vector<9x9xf32>, vector<9x16xf32>, vector<9x16xf32> -> vector<9x16xf32>
    %29 = vector.extract_strided_slice %14 {offsets = [0, 16], sizes = [9, 16], strides = [1, 1]} : vector<18x192xf32> to vector<9x16xf32>
    %30 = vector.extract_strided_slice %14 {offsets = [0, 80], sizes = [9, 16], strides = [1, 1]} : vector<18x192xf32> to vector<9x16xf32>
    %31 = vector.extract_strided_slice %14 {offsets = [0, 144], sizes = [9, 16], strides = [1, 1]} : vector<18x192xf32> to vector<9x16xf32>
    "tpu.trace_start"() <{level = 10 : i32, message = "qd,kd->qk"}> : () -> ()
    %cst_21 = arith.constant dense<0.000000e+00> : vector<9x9xf32>
    %32 = tpu.matmul %29, %30, %cst_21 {dimension_numbers = #tpu.dot_dimension_numbers<[1], [1], [0], [0], [0, 0, 1, 0], [], []>, precision = #tpu.contract_precision<fp32>} : vector<9x16xf32>, vector<9x16xf32>, vector<9x9xf32> -> vector<9x9xf32>
    "tpu.trace_stop"() : () -> ()
    %cst_22 = arith.constant dense<0xFF800000> : vector<9xf32>
    %33 = vector.multi_reduction <maximumf>, %32, %cst_22 [1] : vector<9x9xf32> to vector<9xf32>
    %34 = vector.shape_cast %33 : vector<9xf32> to vector<9x1xf32>
    %35 = vector.broadcast %34 : vector<9x1xf32> to vector<9x9xf32>
    %36 = arith.subf %32, %35 : vector<9x9xf32>
    %37 = math.exp %36 : vector<9x9xf32>
    %cst_23 = arith.constant dense<0.000000e+00> : vector<9xf32>
    %38 = vector.multi_reduction <add>, %37, %cst_23 [1] : vector<9x9xf32> to vector<9xf32>
    %39 = vector.shape_cast %38 : vector<9xf32> to vector<9x1xf32>
    %40 = vector.broadcast %39 : vector<9x1xf32> to vector<9x9xf32>
    %41 = arith.divf %37, %40 : vector<9x9xf32>
    %cst_24 = arith.constant dense<0.000000e+00> : vector<9x16xf32>
    %42 = tpu.matmul %41, %31, %cst_24 {dimension_numbers = #tpu.dot_dimension_numbers<[1], [0], [0], [1], [0, 0, 1, 1], [], []>, precision = #tpu.contract_precision<fp32>} : vector<9x9xf32>, vector<9x16xf32>, vector<9x16xf32> -> vector<9x16xf32>
    %43 = vector.extract_strided_slice %14 {offsets = [0, 32], sizes = [9, 16], strides = [1, 1]} : vector<18x192xf32> to vector<9x16xf32>
    %44 = vector.extract_strided_slice %14 {offsets = [0, 96], sizes = [9, 16], strides = [1, 1]} : vector<18x192xf32> to vector<9x16xf32>
    %45 = vector.extract_strided_slice %14 {offsets = [0, 160], sizes = [9, 16], strides = [1, 1]} : vector<18x192xf32> to vector<9x16xf32>
    "tpu.trace_start"() <{level = 10 : i32, message = "qd,kd->qk"}> : () -> ()
    %cst_25 = arith.constant dense<0.000000e+00> : vector<9x9xf32>
    %46 = tpu.matmul %43, %44, %cst_25 {dimension_numbers = #tpu.dot_dimension_numbers<[1], [1], [0], [0], [0, 0, 1, 0], [], []>, precision = #tpu.contract_precision<fp32>} : vector<9x16xf32>, vector<9x16xf32>, vector<9x9xf32> -> vector<9x9xf32>
    "tpu.trace_stop"() : () -> ()
    %cst_26 = arith.constant dense<0xFF800000> : vector<9xf32>
    %47 = vector.multi_reduction <maximumf>, %46, %cst_26 [1] : vector<9x9xf32> to vector<9xf32>
    %48 = vector.shape_cast %47 : vector<9xf32> to vector<9x1xf32>
    %49 = vector.broadcast %48 : vector<9x1xf32> to vector<9x9xf32>
    %50 = arith.subf %46, %49 : vector<9x9xf32>
    %51 = math.exp %50 : vector<9x9xf32>
    %cst_27 = arith.constant dense<0.000000e+00> : vector<9xf32>
    %52 = vector.multi_reduction <add>, %51, %cst_27 [1] : vector<9x9xf32> to vector<9xf32>
    %53 = vector.shape_cast %52 : vector<9xf32> to vector<9x1xf32>
    %54 = vector.broadcast %53 : vector<9x1xf32> to vector<9x9xf32>
    %55 = arith.divf %51, %54 : vector<9x9xf32>
    %cst_28 = arith.constant dense<0.000000e+00> : vector<9x16xf32>
    %56 = tpu.matmul %55, %45, %cst_28 {dimension_numbers = #tpu.dot_dimension_numbers<[1], [0], [0], [1], [0, 0, 1, 1], [], []>, precision = #tpu.contract_precision<fp32>} : vector<9x9xf32>, vector<9x16xf32>, vector<9x16xf32> -> vector<9x16xf32>
    %57 = vector.extract_strided_slice %14 {offsets = [0, 48], sizes = [9, 16], strides = [1, 1]} : vector<18x192xf32> to vector<9x16xf32>
    %58 = vector.extract_strided_slice %14 {offsets = [0, 112], sizes = [9, 16], strides = [1, 1]} : vector<18x192xf32> to vector<9x16xf32>
    %59 = vector.extract_strided_slice %14 {offsets = [0, 176], sizes = [9, 16], strides = [1, 1]} : vector<18x192xf32> to vector<9x16xf32>
    "tpu.trace_start"() <{level = 10 : i32, message = "qd,kd->qk"}> : () -> ()
    %cst_29 = arith.constant dense<0.000000e+00> : vector<9x9xf32>
    %60 = tpu.matmul %57, %58, %cst_29 {dimension_numbers = #tpu.dot_dimension_numbers<[1], [1], [0], [0], [0, 0, 1, 0], [], []>, precision = #tpu.contract_precision<fp32>} : vector<9x16xf32>, vector<9x16xf32>, vector<9x9xf32> -> vector<9x9xf32>
    "tpu.trace_stop"() : () -> ()
    %cst_30 = arith.constant dense<0xFF800000> : vector<9xf32>
    %61 = vector.multi_reduction <maximumf>, %60, %cst_30 [1] : vector<9x9xf32> to vector<9xf32>
    %62 = vector.shape_cast %61 : vector<9xf32> to vector<9x1xf32>
    %63 = vector.broadcast %62 : vector<9x1xf32> to vector<9x9xf32>
    %64 = arith.subf %60, %63 : vector<9x9xf32>
    %65 = math.exp %64 : vector<9x9xf32>
    %cst_31 = arith.constant dense<0.000000e+00> : vector<9xf32>
    %66 = vector.multi_reduction <add>, %65, %cst_31 [1] : vector<9x9xf32> to vector<9xf32>
    %67 = vector.shape_cast %66 : vector<9xf32> to vector<9x1xf32>
    %68 = vector.broadcast %67 : vector<9x1xf32> to vector<9x9xf32>
    %69 = arith.divf %65, %68 : vector<9x9xf32>
    %cst_32 = arith.constant dense<0.000000e+00> : vector<9x16xf32>
    %70 = tpu.matmul %69, %59, %cst_32 {dimension_numbers = #tpu.dot_dimension_numbers<[1], [0], [0], [1], [0, 0, 1, 1], [], []>, precision = #tpu.contract_precision<fp32>} : vector<9x9xf32>, vector<9x16xf32>, vector<9x16xf32> -> vector<9x16xf32>
    %71 = tpu.concatenate %28, %42, %56, %70 in 1 : vector<9x16xf32>, vector<9x16xf32>, vector<9x16xf32>, vector<9x16xf32> -> vector<9x64xf32>
    %72 = vector.extract_strided_slice %14 {offsets = [9, 0], sizes = [9, 16], strides = [1, 1]} : vector<18x192xf32> to vector<9x16xf32>
    %73 = vector.extract_strided_slice %14 {offsets = [9, 64], sizes = [9, 16], strides = [1, 1]} : vector<18x192xf32> to vector<9x16xf32>
    %74 = vector.extract_strided_slice %14 {offsets = [9, 128], sizes = [9, 16], strides = [1, 1]} : vector<18x192xf32> to vector<9x16xf32>
    "tpu.trace_start"() <{level = 10 : i32, message = "qd,kd->qk"}> : () -> ()
    %cst_33 = arith.constant dense<0.000000e+00> : vector<9x9xf32>
    %75 = tpu.matmul %72, %73, %cst_33 {dimension_numbers = #tpu.dot_dimension_numbers<[1], [1], [0], [0], [0, 0, 1, 0], [], []>, precision = #tpu.contract_precision<fp32>} : vector<9x16xf32>, vector<9x16xf32>, vector<9x9xf32> -> vector<9x9xf32>
    "tpu.trace_stop"() : () -> ()
    %cst_34 = arith.constant dense<0xFF800000> : vector<9xf32>
    %76 = vector.multi_reduction <maximumf>, %75, %cst_34 [1] : vector<9x9xf32> to vector<9xf32>
    %77 = vector.shape_cast %76 : vector<9xf32> to vector<9x1xf32>
    %78 = vector.broadcast %77 : vector<9x1xf32> to vector<9x9xf32>
    %79 = arith.subf %75, %78 : vector<9x9xf32>
    %80 = math.exp %79 : vector<9x9xf32>
    %cst_35 = arith.constant dense<0.000000e+00> : vector<9xf32>
    %81 = vector.multi_reduction <add>, %80, %cst_35 [1] : vector<9x9xf32> to vector<9xf32>
    %82 = vector.shape_cast %81 : vector<9xf32> to vector<9x1xf32>
    %83 = vector.broadcast %82 : vector<9x1xf32> to vector<9x9xf32>
    %84 = arith.divf %80, %83 : vector<9x9xf32>
    %cst_36 = arith.constant dense<0.000000e+00> : vector<9x16xf32>
    %85 = tpu.matmul %84, %74, %cst_36 {dimension_numbers = #tpu.dot_dimension_numbers<[1], [0], [0], [1], [0, 0, 1, 1], [], []>, precision = #tpu.contract_precision<fp32>} : vector<9x9xf32>, vector<9x16xf32>, vector<9x16xf32> -> vector<9x16xf32>
    %86 = vector.extract_strided_slice %14 {offsets = [9, 16], sizes = [9, 16], strides = [1, 1]} : vector<18x192xf32> to vector<9x16xf32>
    %87 = vector.extract_strided_slice %14 {offsets = [9, 80], sizes = [9, 16], strides = [1, 1]} : vector<18x192xf32> to vector<9x16xf32>
    %88 = vector.extract_strided_slice %14 {offsets = [9, 144], sizes = [9, 16], strides = [1, 1]} : vector<18x192xf32> to vector<9x16xf32>
    "tpu.trace_start"() <{level = 10 : i32, message = "qd,kd->qk"}> : () -> ()
    %cst_37 = arith.constant dense<0.000000e+00> : vector<9x9xf32>
    %89 = tpu.matmul %86, %87, %cst_37 {dimension_numbers = #tpu.dot_dimension_numbers<[1], [1], [0], [0], [0, 0, 1, 0], [], []>, precision = #tpu.contract_precision<fp32>} : vector<9x16xf32>, vector<9x16xf32>, vector<9x9xf32> -> vector<9x9xf32>
    "tpu.trace_stop"() : () -> ()
    %cst_38 = arith.constant dense<0xFF800000> : vector<9xf32>
    %90 = vector.multi_reduction <maximumf>, %89, %cst_38 [1] : vector<9x9xf32> to vector<9xf32>
    %91 = vector.shape_cast %90 : vector<9xf32> to vector<9x1xf32>
    %92 = vector.broadcast %91 : vector<9x1xf32> to vector<9x9xf32>
    %93 = arith.subf %89, %92 : vector<9x9xf32>
    %94 = math.exp %93 : vector<9x9xf32>
    %cst_39 = arith.constant dense<0.000000e+00> : vector<9xf32>
    %95 = vector.multi_reduction <add>, %94, %cst_39 [1] : vector<9x9xf32> to vector<9xf32>
    %96 = vector.shape_cast %95 : vector<9xf32> to vector<9x1xf32>
    %97 = vector.broadcast %96 : vector<9x1xf32> to vector<9x9xf32>
    %98 = arith.divf %94, %97 : vector<9x9xf32>
    %cst_40 = arith.constant dense<0.000000e+00> : vector<9x16xf32>
    %99 = tpu.matmul %98, %88, %cst_40 {dimension_numbers = #tpu.dot_dimension_numbers<[1], [0], [0], [1], [0, 0, 1, 1], [], []>, precision = #tpu.contract_precision<fp32>} : vector<9x9xf32>, vector<9x16xf32>, vector<9x16xf32> -> vector<9x16xf32>
    %100 = vector.extract_strided_slice %14 {offsets = [9, 32], sizes = [9, 16], strides = [1, 1]} : vector<18x192xf32> to vector<9x16xf32>
    %101 = vector.extract_strided_slice %14 {offsets = [9, 96], sizes = [9, 16], strides = [1, 1]} : vector<18x192xf32> to vector<9x16xf32>
    %102 = vector.extract_strided_slice %14 {offsets = [9, 160], sizes = [9, 16], strides = [1, 1]} : vector<18x192xf32> to vector<9x16xf32>
    "tpu.trace_start"() <{level = 10 : i32, message = "qd,kd->qk"}> : () -> ()
    %cst_41 = arith.constant dense<0.000000e+00> : vector<9x9xf32>
    %103 = tpu.matmul %100, %101, %cst_41 {dimension_numbers = #tpu.dot_dimension_numbers<[1], [1], [0], [0], [0, 0, 1, 0], [], []>, precision = #tpu.contract_precision<fp32>} : vector<9x16xf32>, vector<9x16xf32>, vector<9x9xf32> -> vector<9x9xf32>
    "tpu.trace_stop"() : () -> ()
    %cst_42 = arith.constant dense<0xFF800000> : vector<9xf32>
    %104 = vector.multi_reduction <maximumf>, %103, %cst_42 [1] : vector<9x9xf32> to vector<9xf32>
    %105 = vector.shape_cast %104 : vector<9xf32> to vector<9x1xf32>
    %106 = vector.broadcast %105 : vector<9x1xf32> to vector<9x9xf32>
    %107 = arith.subf %103, %106 : vector<9x9xf32>
    %108 = math.exp %107 : vector<9x9xf32>
    %cst_43 = arith.constant dense<0.000000e+00> : vector<9xf32>
    %109 = vector.multi_reduction <add>, %108, %cst_43 [1] : vector<9x9xf32> to vector<9xf32>
    %110 = vector.shape_cast %109 : vector<9xf32> to vector<9x1xf32>
    %111 = vector.broadcast %110 : vector<9x1xf32> to vector<9x9xf32>
    %112 = arith.divf %108, %111 : vector<9x9xf32>
    %cst_44 = arith.constant dense<0.000000e+00> : vector<9x16xf32>
    %113 = tpu.matmul %112, %102, %cst_44 {dimension_numbers = #tpu.dot_dimension_numbers<[1], [0], [0], [1], [0, 0, 1, 1], [], []>, precision = #tpu.contract_precision<fp32>} : vector<9x9xf32>, vector<9x16xf32>, vector<9x16xf32> -> vector<9x16xf32>
    %114 = vector.extract_strided_slice %14 {offsets = [9, 48], sizes = [9, 16], strides = [1, 1]} : vector<18x192xf32> to vector<9x16xf32>
    %115 = vector.extract_strided_slice %14 {offsets = [9, 112], sizes = [9, 16], strides = [1, 1]} : vector<18x192xf32> to vector<9x16xf32>
    %116 = vector.extract_strided_slice %14 {offsets = [9, 176], sizes = [9, 16], strides = [1, 1]} : vector<18x192xf32> to vector<9x16xf32>
    "tpu.trace_start"() <{level = 10 : i32, message = "qd,kd->qk"}> : () -> ()
    %cst_45 = arith.constant dense<0.000000e+00> : vector<9x9xf32>
    %117 = tpu.matmul %114, %115, %cst_45 {dimension_numbers = #tpu.dot_dimension_numbers<[1], [1], [0], [0], [0, 0, 1, 0], [], []>, precision = #tpu.contract_precision<fp32>} : vector<9x16xf32>, vector<9x16xf32>, vector<9x9xf32> -> vector<9x9xf32>
    "tpu.trace_stop"() : () -> ()
    %cst_46 = arith.constant dense<0xFF800000> : vector<9xf32>
    %118 = vector.multi_reduction <maximumf>, %117, %cst_46 [1] : vector<9x9xf32> to vector<9xf32>
    %119 = vector.shape_cast %118 : vector<9xf32> to vector<9x1xf32>
    %120 = vector.broadcast %119 : vector<9x1xf32> to vector<9x9xf32>
    %121 = arith.subf %117, %120 : vector<9x9xf32>
    %122 = math.exp %121 : vector<9x9xf32>
    %cst_47 = arith.constant dense<0.000000e+00> : vector<9xf32>
    %123 = vector.multi_reduction <add>, %122, %cst_47 [1] : vector<9x9xf32> to vector<9xf32>
    %124 = vector.shape_cast %123 : vector<9xf32> to vector<9x1xf32>
    %125 = vector.broadcast %124 : vector<9x1xf32> to vector<9x9xf32>
    %126 = arith.divf %122, %125 : vector<9x9xf32>
    %cst_48 = arith.constant dense<0.000000e+00> : vector<9x16xf32>
    %127 = tpu.matmul %126, %116, %cst_48 {dimension_numbers = #tpu.dot_dimension_numbers<[1], [0], [0], [1], [0, 0, 1, 1], [], []>, precision = #tpu.contract_precision<fp32>} : vector<9x9xf32>, vector<9x16xf32>, vector<9x16xf32> -> vector<9x16xf32>
    %128 = tpu.concatenate %85, %99, %113, %127 in 1 : vector<9x16xf32>, vector<9x16xf32>, vector<9x16xf32>, vector<9x16xf32> -> vector<9x64xf32>
    %129 = tpu.concatenate %71, %128 in 0 : vector<9x64xf32>, vector<9x64xf32> -> vector<18x64xf32>
    %cst_49 = arith.constant dense<0.000000e+00> : vector<18x128xf32>
    %130 = tpu.matmul %129, %2, %cst_49 {dimension_numbers = #tpu.dot_dimension_numbers<[1], [0], [0], [1], [0, 0, 1, 1], [], []>, precision = #tpu.contract_precision<fp32>} : vector<18x64xf32>, vector<64x128xf32>, vector<18x128xf32> -> vector<18x128xf32>
    %131 = vector.broadcast %3 : vector<1x128xf32> to vector<18x128xf32>
    %132 = arith.addf %130, %131 : vector<18x128xf32>
    %cst_50 = arith.constant dense<0.000000e+00> : vector<18xf32>
    %133 = vector.multi_reduction <add>, %132, %cst_50 [1] : vector<18x128xf32> to vector<18xf32>
    %134 = vector.shape_cast %133 : vector<18xf32> to vector<18x1xf32>
    %cst_51 = arith.constant 1.562500e-02 : f32
    %135 = vector.broadcast %cst_51 : f32 to vector<18x1xf32>
    %136 = arith.mulf %134, %135 : vector<18x1xf32>
    %137 = vector.broadcast %136 : vector<18x1xf32> to vector<18x128xf32>
    %138 = arith.subf %132, %137 : vector<18x128xf32>
    %cst_52 = arith.constant 0.000000e+00 : f32
    %139 = vector.shape_cast %10 : vector<1x128xi1> to vector<1x128xi1>
    %140 = vector.broadcast %139 : vector<1x128xi1> to vector<18x128xi1>
    %141 = vector.broadcast %cst_52 : f32 to vector<18x128xf32>
    %142 = arith.select %140, %138, %141 : vector<18x128xi1>, vector<18x128xf32>
    %143 = arith.mulf %142, %142 : vector<18x128xf32>
    %cst_53 = arith.constant dense<0.000000e+00> : vector<18xf32>
    %144 = vector.multi_reduction <add>, %143, %cst_53 [1] : vector<18x128xf32> to vector<18xf32>
    %145 = vector.shape_cast %144 : vector<18xf32> to vector<18x1xf32>
    %cst_54 = arith.constant 1.562500e-02 : f32
    %146 = vector.broadcast %cst_54 : f32 to vector<18x1xf32>
    %147 = arith.mulf %145, %146 : vector<18x1xf32>
    %cst_55 = arith.constant 9.99999974E-6 : f32
    %148 = vector.broadcast %cst_55 : f32 to vector<18x1xf32>
    %149 = arith.addf %147, %148 : vector<18x1xf32>
    %150 = math.rsqrt %149 : vector<18x1xf32>
    %151 = vector.broadcast %150 : vector<18x1xf32> to vector<18x128xf32>
    %152 = arith.mulf %142, %151 : vector<18x128xf32>
    %153 = vector.broadcast %6 : vector<1x128xf32> to vector<18x128xf32>
    %154 = arith.mulf %152, %153 : vector<18x128xf32>
    %155 = vector.broadcast %7 : vector<1x128xf32> to vector<18x128xf32>
    %156 = arith.addf %154, %155 : vector<18x128xf32>
    %157 = arith.addf %11, %156 : vector<18x128xf32>
    %cst_56 = arith.constant dense<0.000000e+00> : vector<18x128xf32>
    %158 = tpu.matmul %157, %4, %cst_56 {dimension_numbers = #tpu.dot_dimension_numbers<[1], [0], [0], [1], [0, 0, 1, 1], [], []>, precision = #tpu.contract_precision<fp32>} : vector<18x128xf32>, vector<128x128xf32>, vector<18x128xf32> -> vector<18x128xf32>
    %159 = vector.broadcast %5 : vector<1x128xf32> to vector<18x128xf32>
    %160 = arith.addf %158, %159 : vector<18x128xf32>
    %cst_57 = arith.constant dense<0.000000e+00> : vector<18xf32>
    %161 = vector.multi_reduction <add>, %160, %cst_57 [1] : vector<18x128xf32> to vector<18xf32>
    %162 = vector.shape_cast %161 : vector<18xf32> to vector<18x1xf32>
    %cst_58 = arith.constant 1.562500e-02 : f32
    %163 = vector.broadcast %cst_58 : f32 to vector<18x1xf32>
    %164 = arith.mulf %162, %163 : vector<18x1xf32>
    %165 = vector.broadcast %164 : vector<18x1xf32> to vector<18x128xf32>
    %166 = arith.subf %160, %165 : vector<18x128xf32>
    %cst_59 = arith.constant 0.000000e+00 : f32
    %167 = vector.shape_cast %10 : vector<1x128xi1> to vector<1x128xi1>
    %168 = vector.broadcast %167 : vector<1x128xi1> to vector<18x128xi1>
    %169 = vector.broadcast %cst_59 : f32 to vector<18x128xf32>
    %170 = arith.select %168, %166, %169 : vector<18x128xi1>, vector<18x128xf32>
    %171 = arith.mulf %170, %170 : vector<18x128xf32>
    %cst_60 = arith.constant dense<0.000000e+00> : vector<18xf32>
    %172 = vector.multi_reduction <add>, %171, %cst_60 [1] : vector<18x128xf32> to vector<18xf32>
    %173 = vector.shape_cast %172 : vector<18xf32> to vector<18x1xf32>
    %cst_61 = arith.constant 1.562500e-02 : f32
    %174 = vector.broadcast %cst_61 : f32 to vector<18x1xf32>
    %175 = arith.mulf %173, %174 : vector<18x1xf32>
    %cst_62 = arith.constant 9.99999974E-6 : f32
    %176 = vector.broadcast %cst_62 : f32 to vector<18x1xf32>
    %177 = arith.addf %175, %176 : vector<18x1xf32>
    %178 = math.rsqrt %177 : vector<18x1xf32>
    %179 = vector.broadcast %178 : vector<18x1xf32> to vector<18x128xf32>
    %180 = arith.mulf %170, %179 : vector<18x128xf32>
    %181 = vector.broadcast %6 : vector<1x128xf32> to vector<18x128xf32>
    %182 = arith.mulf %180, %181 : vector<18x128xf32>
    %183 = vector.broadcast %7 : vector<1x128xf32> to vector<18x128xf32>
    %184 = arith.addf %182, %183 : vector<18x128xf32>
    %185 = arith.addf %157, %184 : vector<18x128xf32>
    %c0_63 = arith.constant 0 : index
    %c0_64 = arith.constant 0 : index
    %186 = vector.load %arg10[%c0_63, %c0_64] : memref<18x128xf32, #tpu.memory_space<vmem>>, vector<18x128xf32>
    tpu.vector_store %arg10[%c0_63, %c0_64], %185 {strides = array<i32>} : memref<18x128xf32, #tpu.memory_space<vmem>>, vector<18x128xf32>,
    return
  }
  func.func @transform_0(%arg0: i32) -> (i32, i32) {
    %c0_i32 = arith.constant 0 : i32
    %c0_i32_0 = arith.constant 0 : i32
    return %arg0, %c0_i32 : i32, i32
  }
  func.func @transform_1(%arg0: i32) -> (i32, i32) {
    %c0_i32 = arith.constant 0 : i32
    %c0_i32_0 = arith.constant 0 : i32
    %c0_i32_1 = arith.constant 0 : i32
    return %c0_i32, %c0_i32_0 : i32, i32
  }
  func.func @transform_2(%arg0: i32) -> (i32, i32) {
    %c0_i32 = arith.constant 0 : i32
    %c0_i32_0 = arith.constant 0 : i32
    %c0_i32_1 = arith.constant 0 : i32
    return %c0_i32, %c0_i32_0 : i32, i32
  }
  func.func @transform_3(%arg0: i32) -> (i32, i32) {
    %c0_i32 = arith.constant 0 : i32
    %c0_i32_0 = arith.constant 0 : i32
    %c0_i32_1 = arith.constant 0 : i32
    return %c0_i32, %c0_i32_0 : i32, i32
  }
  func.func @transform_4(%arg0: i32) -> (i32, i32) {
    %c0_i32 = arith.constant 0 : i32
    %c0_i32_0 = arith.constant 0 : i32
    %c0_i32_1 = arith.constant 0 : i32
    return %c0_i32, %c0_i32_0 : i32, i32
  }
  func.func @transform_5(%arg0: i32) -> (i32, i32) {
    %c0_i32 = arith.constant 0 : i32
    %c0_i32_0 = arith.constant 0 : i32
    %c0_i32_1 = arith.constant 0 : i32
    return %c0_i32, %c0_i32_0 : i32, i32
  }
  func.func @transform_6(%arg0: i32) -> (i32, i32) {
    %c0_i32 = arith.constant 0 : i32
    %c0_i32_0 = arith.constant 0 : i32
    %c0_i32_1 = arith.constant 0 : i32
    return %c0_i32, %c0_i32_0 : i32, i32
  }
  func.func @transform_7(%arg0: i32) -> (i32, i32) {
    %c0_i32 = arith.constant 0 : i32
    %c0_i32_0 = arith.constant 0 : i32
    %c0_i32_1 = arith.constant 0 : i32
    return %c0_i32, %c0_i32_0 : i32, i32
  }
  func.func @transform_8(%arg0: i32) -> (i32, i32) {
    %c0_i32 = arith.constant 0 : i32
    %c0_i32_0 = arith.constant 0 : i32
    %c0_i32_1 = arith.constant 0 : i32
    return %c0_i32, %c0_i32_0 : i32, i32
  }
  func.func @transform_9(%arg0: i32) -> (i32, i32) {
    %c0_i32 = arith.constant 0 : i32
    %c0_i32_0 = arith.constant 0 : i32
    return %arg0, %c0_i32 : i32, i32
  }
}

</mosaic_0001>

<llo_original>
// kernel: tiny_vit_forward.1
$region0: #{tiny_vit_forward.1}
  #allocation0 [shape = 'u32[]', space=smem, size = 0x4, offset = 0x4, fixed_abs, tag = 'smem constant byte address 0x4 - core index']
  #allocation1 [shape = 'u32[144,128]{1,0:T(1,128)}', space=vmem, size = 0x12000, scoped, tag = 'internal scratch']
  %s0 = inlined_call_operand.vmem [shape: f32[18,128], index: 0, kind: input, shape index: {}]
  %s1 = inlined_call_operand.vmem [shape: f32[128,192], index: 1, kind: input, shape index: {}]
  %s2 = inlined_call_operand.vmem [shape: f32[1,192], index: 2, kind: input, shape index: {}]
  %s3 = inlined_call_operand.vmem [shape: f32[64,128], index: 3, kind: input, shape index: {}]
  %s4 = inlined_call_operand.vmem [shape: f32[1,128], index: 4, kind: input, shape index: {}]
  %s5 = inlined_call_operand.vmem [shape: f32[128,128], index: 5, kind: input, shape index: {}]
  %s6 = inlined_call_operand.vmem [shape: f32[1,128], index: 6, kind: input, shape index: {}]
  %s7 = inlined_call_operand.vmem [shape: f32[1,128], index: 7, kind: input, shape index: {}]
  %s8 = inlined_call_operand.vmem [shape: f32[1,128], index: 8, kind: input, shape index: {}]
  %s9 = inlined_call_operand.vmem [shape: f32[18,128], index: 9, kind: output, shape index: {}]
  %s10 = sld [smem:[#allocation0]]
  $region46: #{tiny_vit_forward.1} parent=0
    _
  %s12 = ssub.s32 1, %s10
  %s13 = scalar_select 0, %s12, %s10
  // Predicated region
  $region2: #{tiny_vit_forward.1} parent=0 // pred_check
    _
  $region3: #{tiny_vit_forward.1} parent=0 // pred_check_branch
    %15 = sbr.rel (0) target = $region5
  $region4: #{tiny_vit_forward.1} parent=0 // pred_region
    _
  $region5: #{tiny_vit_forward.1} parent=0 // pred_fallthru
    _
  // Predicated region
  $region6: #{tiny_vit_forward.1} parent=0 // pred_check
    _
  $region7: #{tiny_vit_forward.1} parent=0 // pred_check_branch
    %17 = sbr.rel (0) target = $region9
  $region8: #{tiny_vit_forward.1} parent=0 // pred_region
    _
  $region9: #{tiny_vit_forward.1} parent=0 // pred_fallthru
    _
  // Predicated region
  $region10: #{tiny_vit_forward.1} parent=0 // pred_check
    _
  $region11: #{tiny_vit_forward.1} parent=0 // pred_check_branch
    %19 = sbr.rel (0) target = $region13
  $region12: #{tiny_vit_forward.1} parent=0 // pred_region
    _
  $region13: #{tiny_vit_forward.1} parent=0 // pred_fallthru
    _
  // Predicated region
  $region14: #{tiny_vit_forward.1} parent=0 // pred_check
    _
  $region15: #{tiny_vit_forward.1} parent=0 // pred_check_branch
    %21 = sbr.rel (0) target = $region17
  $region16: #{tiny_vit_forward.1} parent=0 // pred_region
    _
  $region17: #{tiny_vit_forward.1} parent=0 // pred_fallthru
    _
  // Predicated region
  $region18: #{tiny_vit_forward.1} parent=0 // pred_check
    _
  $region19: #{tiny_vit_forward.1} parent=0 // pred_check_branch
    %23 = sbr.rel (0) target = $region21
  $region20: #{tiny_vit_forward.1} parent=0 // pred_region
    _
  $region21: #{tiny_vit_forward.1} parent=0 // pred_fallthru
    _
  // Predicated region
  $region22: #{tiny_vit_forward.1} parent=0 // pred_check
    _
  $region23: #{tiny_vit_forward.1} parent=0 // pred_check_branch
    %25 = sbr.rel (0) target = $region25
  $region24: #{tiny_vit_forward.1} parent=0 // pred_region
    _
  $region25: #{tiny_vit_forward.1} parent=0 // pred_fallthru
    _
  // Predicated region
  $region26: #{tiny_vit_forward.1} parent=0 // pred_check
    _
  $region27: #{tiny_vit_forward.1} parent=0 // pred_check_branch
    %27 = sbr.rel (0) target = $region29
  $region28: #{tiny_vit_forward.1} parent=0 // pred_region
    _
  $region29: #{tiny_vit_forward.1} parent=0 // pred_fallthru
    _
  // Predicated region
  $region30: #{tiny_vit_forward.1} parent=0 // pred_check
    _
  $region31: #{tiny_vit_forward.1} parent=0 // pred_check_branch
    %29 = sbr.rel (0) target = $region33
  $region32: #{tiny_vit_forward.1} parent=0 // pred_region
    _
  $region33: #{tiny_vit_forward.1} parent=0 // pred_fallthru
    _
  // Predicated region
  $region34: #{tiny_vit_forward.1} parent=0 // pred_check
    _
  $region35: #{tiny_vit_forward.1} parent=0 // pred_check_branch
    %31 = sbr.rel (0) target = $region37
  $region36: #{tiny_vit_forward.1} parent=0 // pred_region
    _
  $region37: #{tiny_vit_forward.1} parent=0 // pred_fallthru
    _
  %v32 = vld [vmem:[%s1] sm:$0xff]
  %v33 = vld [vmem:[%s1 + $0x8] sm:$0xff]
  %v34 = vld [vmem:[%s1 + $0x10] sm:$0xff]
  %v35 = vld [vmem:[%s1 + $0x18] sm:$0xff]
  %v36 = vld [vmem:[%s1 + $0x20] sm:$0xff]
  %v37 = vld [vmem:[%s1 + $0x28] sm:$0xff]
  %v38 = vld [vmem:[%s1 + $0x30] sm:$0xff]
  %v39 = vld [vmem:[%s1 + $0x38] sm:$0xff]
  %v40 = vld [vmem:[%s1 + $0x40] sm:$0xff]
  %v41 = vld [vmem:[%s1 + $0x48] sm:$0xff]
  %v42 = vld [vmem:[%s1 + $0x50] sm:$0xff]
  %v43 = vld [vmem:[%s1 + $0x58] sm:$0xff]
  %v44 = vld [vmem:[%s1 + $0x60] sm:$0xff]
  %v45 = vld [vmem:[%s1 + $0x68] sm:$0xff]
  %v46 = vld [vmem:[%s1 + $0x70] sm:$0xff]
  %v47 = vld [vmem:[%s1 + $0x78] sm:$0xff]
  %v48 = vld [vmem:[%s1 + $0x80] sm:$0xff]
  %v49 = vld [vmem:[%s1 + $0x88] sm:$0xff]
  %v50 = vld [vmem:[%s1 + $0x90] sm:$0xff]
  %v51 = vld [vmem:[%s1 + $0x98] sm:$0xff]
  %v52 = vld [vmem:[%s1 + $0xa0] sm:$0xff]
  %v53 = vld [vmem:[%s1 + $0xa8] sm:$0xff]
  %v54 = vld [vmem:[%s1 + $0xb0] sm:$0xff]
  %v55 = vld [vmem:[%s1 + $0xb8] sm:$0xff]
  %v56 = vld [vmem:[%s1 + $0xc0] sm:$0xff]
  %v57 = vld [vmem:[%s1 + $0xc8] sm:$0xff]
  %v58 = vld [vmem:[%s1 + $0xd0] sm:$0xff]
  %v59 = vld [vmem:[%s1 + $0xd8] sm:$0xff]
  %v60 = vld [vmem:[%s1 + $0xe0] sm:$0xff]
  %v61 = vld [vmem:[%s1 + $0xe8] sm:$0xff]
  %v62 = vld [vmem:[%s1 + $0xf0] sm:$0xff]
  %v63 = vld [vmem:[%s1 + $0xf8] sm:$0xff]
  %v64 = vld [vmem:[%s2] sm:$0x3]
  %v65 = vld [vmem:[%s3] sm:$0xff]
  %v66 = vld [vmem:[%s3 + $0x8] sm:$0xff]
  %v67 = vld [vmem:[%s3 + $0x10] sm:$0xff]
  %v68 = vld [vmem:[%s3 + $0x18] sm:$0xff]
  %v69 = vld [vmem:[%s3 + $0x20] sm:$0xff]
  %v70 = vld [vmem:[%s3 + $0x28] sm:$0xff]
  %v71 = vld [vmem:[%s3 + $0x30] sm:$0xff]
  %v72 = vld [vmem:[%s3 + $0x38] sm:$0xff]
  %v73 = vld [vmem:[%s4] sm:$0x1]
  %v74 = vld [vmem:[%s5] sm:$0xff]
  %v75 = vld [vmem:[%s5 + $0x8] sm:$0xff]
  %v76 = vld [vmem:[%s5 + $0x10] sm:$0xff]
  %v77 = vld [vmem:[%s5 + $0x18] sm:$0xff]
  %v78 = vld [vmem:[%s5 + $0x20] sm:$0xff]
  %v79 = vld [vmem:[%s5 + $0x28] sm:$0xff]
  %v80 = vld [vmem:[%s5 + $0x30] sm:$0xff]
  %v81 = vld [vmem:[%s5 + $0x38] sm:$0xff]
  %v82 = vld [vmem:[%s5 + $0x40] sm:$0xff]
  %v83 = vld [vmem:[%s5 + $0x48] sm:$0xff]
  %v84 = vld [vmem:[%s5 + $0x50] sm:$0xff]
  %v85 = vld [vmem:[%s5 + $0x58] sm:$0xff]
  %v86 = vld [vmem:[%s5 + $0x60] sm:$0xff]
  %v87 = vld [vmem:[%s5 + $0x68] sm:$0xff]
  %v88 = vld [vmem:[%s5 + $0x70] sm:$0xff]
  %v89 = vld [vmem:[%s5 + $0x78] sm:$0xff]
  %v90 = vld [vmem:[%s6] sm:$0x1]
  %v91 = vld [vmem:[%s7] sm:$0x1]
  %v92 = vld [vmem:[%s8] sm:$0x1]
  %v93 = vlaneseq
  %v94 = vand.u32 %v93, 127
  %vm95 = vcmp.lt.s32.totalorder %v94, 64
  %v96 = vld [vmem:[%s0] sm:$0xff]
  %v97 = vld [vmem:[%s0 + $0x8] sm:$0xff]
  %v98 = vld [vmem:[%s0 + $0x10] sm:$0x3]
  %v100 = vlaneseq
  %v101 = vshrl.u32 %v100, 7
  %v102 = vsub.s32 0, %v101
  %v103 = vrot.slane %v64, %v102
  %v104 = vlaneseq
  %v105 = vshrl.u32 %v104, 7
  %v106 = vsub.s32 1, %v105
  %v107 = vrot.slane %v64, %v106
  %v110 = vand.u32 %v33, 4294901760
  %111 = vmatprep.subr.mxu0 %v110
  %v112 = vand.u32 %v32, 4294901760
  %113 = vmatpush1.msra.mxu0 %v112
  %v114 = vand.u32 %v35, 4294901760
  %115 = vmatprep.subr.mxu0 %v114
  %v116 = vand.u32 %v34, 4294901760
  %117 = vmatpush1.msra.mxu0 %v116
  %v118 = vand.u32 %v37, 4294901760
  %119 = vmatprep.subr.mxu0 %v118
  %v120 = vand.u32 %v36, 4294901760
  %121 = vmatpush1.msra.mxu0 %v120
  %v122 = vand.u32 %v39, 4294901760
  %123 = vmatprep.subr.mxu0 %v122
  %v124 = vand.u32 %v38, 4294901760
  %125 = vmatpush1.msra.mxu0 %v124
  %v126 = vand.u32 %v41, 4294901760
  %127 = vmatprep.subr.mxu0 %v126
  %v128 = vand.u32 %v40, 4294901760
  %129 = vmatpush1.msra.mxu0 %v128
  %v130 = vand.u32 %v43, 4294901760
  %131 = vmatprep.subr.mxu0 %v130
  %v132 = vand.u32 %v42, 4294901760
  %133 = vmatpush1.msra.mxu0 %v132
  %v134 = vand.u32 %v45, 4294901760
  %135 = vmatprep.subr.mxu0 %v134
  %v136 = vand.u32 %v44, 4294901760
  %137 = vmatpush1.msra.mxu0 %v136
  %v138 = vand.u32 %v47, 4294901760
  %139 = vmatprep.subr.mxu0 %v138
  %v140 = vand.u32 %v46, 4294901760
  %141 = vmatpush1.msra.mxu0 %v140
  %v142 = vand.u32 %v49, 4294901760
  %143 = vmatprep.subr.mxu0 %v142
  %v144 = vand.u32 %v48, 4294901760
  %145 = vmatpush1.msra.mxu0 %v144
  %v146 = vand.u32 %v51, 4294901760
  %147 = vmatprep.subr.mxu0 %v146
  %v148 = vand.u32 %v50, 4294901760
  %149 = vmatpush1.msra.mxu0 %v148
  %v150 = vand.u32 %v53, 4294901760
  %151 = vmatprep.subr.mxu0 %v150
  %v152 = vand.u32 %v52, 4294901760
  %153 = vmatpush1.msra.mxu0 %v152
  %v154 = vand.u32 %v55, 4294901760
  %155 = vmatprep.subr.mxu0 %v154
  %v156 = vand.u32 %v54, 4294901760
  %157 = vmatpush1.msra.mxu0 %v156
  %v158 = vand.u32 %v57, 4294901760
  %159 = vmatprep.subr.mxu0 %v158
  %v160 = vand.u32 %v56, 4294901760
  %161 = vmatpush1.msra.mxu0 %v160
  %v162 = vand.u32 %v59, 4294901760
  %163 = vmatprep.subr.mxu0 %v162
  %v164 = vand.u32 %v58, 4294901760
  %165 = vmatpush1.msra.mxu0 %v164
  %v166 = vand.u32 %v61, 4294901760
  %167 = vmatprep.subr.mxu0 %v166
  %v168 = vand.u32 %v60, 4294901760
  %169 = vmatpush1.msra.mxu0 %v168
  %v170 = vand.u32 %v63, 4294901760
  %171 = vmatprep.subr.mxu0 %v170
  %v172 = vand.u32 %v62, 4294901760
  %173 = vmatpush1.msra.mxu0 %v172
  %174 = vmatprep.subr.mxu0 0.0
  %175 = vmatpush1.msra.mxu0 0.0
  %176 = vmatprep.subr.mxu0 0.0
  %177 = vmatpush1.msra.mxu0 0.0
  %178 = vmatprep.subr.mxu0 0.0
  %179 = vmatpush1.msra.mxu0 0.0
  %180 = vmatprep.subr.mxu0 0.0
  %181 = vmatpush1.msra.mxu0 0.0
  %182 = vmatprep.subr.mxu0 0.0
  %183 = vmatpush1.msra.mxu0 0.0
  %184 = vmatprep.subr.mxu0 0.0
  %185 = vmatpush1.msra.mxu0 0.0
  %186 = vmatprep.subr.mxu0 0.0
  %187 = vmatpush1.msra.mxu0 0.0
  %188 = vmatprep.subr.mxu0 0.0
  %189 = vmatpush1.msra.mxu0 0.0
  %190 = vmatprep.subr.mxu0 0.0
  %191 = vmatpush1.msra.mxu0 0.0
  %192 = vmatprep.subr.mxu0 0.0
  %193 = vmatpush1.msra.mxu0 0.0
  %194 = vmatprep.subr.mxu0 0.0
  %195 = vmatpush1.msra.mxu0 0.0
  %196 = vmatprep.subr.mxu0 0.0
  %197 = vmatpush1.msra.mxu0 0.0
  %198 = vmatprep.subr.mxu0 0.0
  %199 = vmatpush1.msra.mxu0 0.0
  %200 = vmatprep.subr.mxu0 0.0
  %201 = vmatpush1.msra.mxu0 0.0
  %202 = vmatprep.subr.mxu0 0.0
  %203 = vmatpush1.msra.mxu0 0.0
  %204 = vmatprep.subr.mxu0 0.0
  %205 = vmatpush1.msra.mxu0 0.0
  %206 = vmatprep.mubr.f32.mxu0 0.0
  %v207 = vand.u32 %v96, 4294901760
  %v208 = vsub.f32 %v96, %v207
  %v209 = vand.u32 %v208, 4294901760
  %v210 = vsub.f32 %v208, %v209
  %v211 = vand.u32 %v210, 4294901760
  %212 = vmatmul.mubr.f32.gmra.mrb[0].mxu0 %v211
  %v213 = vpop.f32.mrb[0].mxu0
  %v214 = vadd.f32 %v103, %v213
  %v215 = vpop.f32.mrb[0].mxu0
  %v216 = vadd.f32 %v107, %v215
  %217 = vmatprep.mubr.f32.mxu0 0.0
  %v218 = vand.u32 %v97, 4294901760
  %v219 = vsub.f32 %v97, %v218
  %v220 = vand.u32 %v219, 4294901760
  %v221 = vsub.f32 %v219, %v220
  %v222 = vand.u32 %v221, 4294901760
  %223 = vmatmul.mubr.f32.gmra.mrb[0].mxu0 %v222
  %v224 = vpop.f32.mrb[0].mxu0
  %v225 = vadd.f32 %v103, %v224
  %v226 = vpop.f32.mrb[0].mxu0
  %v227 = vadd.f32 %v107, %v226
  %228 = vmatprep.mubr.f32.mxu0 0.0
  %v229 = vand.u32 %v98, 4294901760
  %v230 = vsub.f32 %v98, %v229
  %v231 = vand.u32 %v230, 4294901760
  %v232 = vsub.f32 %v230, %v231
  %v233 = vand.u32 %v232, 4294901760
  %234 = vmatmul.mubr.f32.gmra.mrb[0].mxu0 %v233
  %v235 = vpop.f32.mrb[0].mxu0
  %v236 = vadd.f32 %v103, %v235
  %v237 = vpop.f32.mrb[0].mxu0
  %v238 = vadd.f32 %v107, %v237
  %239 = vdwg.mxu0
  %v240 = vand.u32 %v33, 4294901760
  %v241 = vsub.f32 %v33, %v240
  %v242 = vand.u32 %v241, 4294901760
  %v243 = vsub.f32 %v241, %v242
  %v244 = vand.u32 %v243, 4294901760
  %245 = vmatprep.subr.mxu0 %v244
  %v246 = vand.u32 %v32, 4294901760
  %v247 = vsub.f32 %v32, %v246
  %v248 = vand.u32 %v247, 4294901760
  %v249 = vsub.f32 %v247, %v248
  %v250 = vand.u32 %v249, 4294901760
  %251 = vmatpush1.msra.mxu0 %v250
  %v252 = vand.u32 %v35, 4294901760
  %v253 = vsub.f32 %v35, %v252
  %v254 = vand.u32 %v253, 4294901760
  %v255 = vsub.f32 %v253, %v254
  %v256 = vand.u32 %v255, 4294901760
  %257 = vmatprep.subr.mxu0 %v256
  %v258 = vand.u32 %v34, 4294901760
  %v259 = vsub.f32 %v34, %v258
  %v260 = vand.u32 %v259, 4294901760
  %v261 = vsub.f32 %v259, %v260
  %v262 = vand.u32 %v261, 4294901760
  %263 = vmatpush1.msra.mxu0 %v262
  %v264 = vand.u32 %v37, 4294901760
  %v265 = vsub.f32 %v37, %v264
  %v266 = vand.u32 %v265, 4294901760
  %v267 = vsub.f32 %v265, %v266
  %v268 = vand.u32 %v267, 4294901760
  %269 = vmatprep.subr.mxu0 %v268
  %v270 = vand.u32 %v36, 4294901760
  %v271 = vsub.f32 %v36, %v270
  %v272 = vand.u32 %v271, 4294901760
  %v273 = vsub.f32 %v271, %v272
  %v274 = vand.u32 %v273, 4294901760
  %275 = vmatpush1.msra.mxu0 %v274
  %v276 = vand.u32 %v39, 4294901760
  %v277 = vsub.f32 %v39, %v276
  %v278 = vand.u32 %v277, 4294901760
  %v279 = vsub.f32 %v277, %v278
  %v280 = vand.u32 %v279, 4294901760
  %281 = vmatprep.subr.mxu0 %v280
  %v282 = vand.u32 %v38, 4294901760
  %v283 = vsub.f32 %v38, %v282
  %v284 = vand.u32 %v283, 4294901760
  %v285 = vsub.f32 %v283, %v284
  %v286 = vand.u32 %v285, 4294901760
  %287 = vmatpush1.msra.mxu0 %v286
  %v288 = vand.u32 %v41, 4294901760
  %v289 = vsub.f32 %v41, %v288
  %v290 = vand.u32 %v289, 4294901760
  %v291 = vsub.f32 %v289, %v290
  %v292 = vand.u32 %v291, 4294901760
  %293 = vmatprep.subr.mxu0 %v292
  %v294 = vand.u32 %v40, 4294901760
  %v295 = vsub.f32 %v40, %v294
  %v296 = vand.u32 %v295, 4294901760
  %v297 = vsub.f32 %v295, %v296
  %v298 = vand.u32 %v297, 4294901760
  %299 = vmatpush1.msra.mxu0 %v298
  %v300 = vand.u32 %v43, 4294901760
  %v301 = vsub.f32 %v43, %v300
  %v302 = vand.u32 %v301, 4294901760
  %v303 = vsub.f32 %v301, %v302
  %v304 = vand.u32 %v303, 4294901760
  %305 = vmatprep.subr.mxu0 %v304
  %v306 = vand.u32 %v42, 4294901760
  %v307 = vsub.f32 %v42, %v306
  %v308 = vand.u32 %v307, 4294901760
  %v309 = vsub.f32 %v307, %v308
  %v310 = vand.u32 %v309, 4294901760
  %311 = vmatpush1.msra.mxu0 %v310
  %v312 = vand.u32 %v45, 4294901760
  %v313 = vsub.f32 %v45, %v312
  %v314 = vand.u32 %v313, 4294901760
  %v315 = vsub.f32 %v313, %v314
  %v316 = vand.u32 %v315, 4294901760
  %317 = vmatprep.subr.mxu0 %v316
  %v318 = vand.u32 %v44, 4294901760
  %v319 = vsub.f32 %v44, %v318
  %v320 = vand.u32 %v319, 4294901760
  %v321 = vsub.f32 %v319, %v320
  %v322 = vand.u32 %v321, 4294901760
  %323 = vmatpush1.msra.mxu0 %v322
  %v324 = vand.u32 %v47, 4294901760
  %v325 = vsub.f32 %v47, %v324
  %v326 = vand.u32 %v325, 4294901760
  %v327 = vsub.f32 %v325, %v326
  %v328 = vand.u32 %v327, 4294901760
  %329 = vmatprep.subr.mxu0 %v328
  %v330 = vand.u32 %v46, 4294901760
  %v331 = vsub.f32 %v46, %v330
  %v332 = vand.u32 %v331, 4294901760
  %v333 = vsub.f32 %v331, %v332
  %v334 = vand.u32 %v333, 4294901760
  %335 = vmatpush1.msra.mxu0 %v334
  %v336 = vand.u32 %v49, 4294901760
  %v337 = vsub.f32 %v49, %v336
  %v338 = vand.u32 %v337, 4294901760
  %v339 = vsub.f32 %v337, %v338
  %v340 = vand.u32 %v339, 4294901760
  %341 = vmatprep.subr.mxu0 %v340
  %v342 = vand.u32 %v48, 4294901760
  %v343 = vsub.f32 %v48, %v342
  %v344 = vand.u32 %v343, 4294901760
  %v345 = vsub.f32 %v343, %v344
  %v346 = vand.u32 %v345, 4294901760
  %347 = vmatpush1.msra.mxu0 %v346
  %v348 = vand.u32 %v51, 4294901760
  %v349 = vsub.f32 %v51, %v348
  %v350 = vand.u32 %v349, 4294901760
  %v351 = vsub.f32 %v349, %v350
  %v352 = vand.u32 %v351, 4294901760
  %353 = vmatprep.subr.mxu0 %v352
  %v354 = vand.u32 %v50, 4294901760
  %v355 = vsub.f32 %v50, %v354
  %v356 = vand.u32 %v355, 4294901760
  %v357 = vsub.f32 %v355, %v356
  %v358 = vand.u32 %v357, 4294901760
  %359 = vmatpush1.msra.mxu0 %v358
  %v360 = vand.u32 %v53, 4294901760
  %v361 = vsub.f32 %v53, %v360
  %v362 = vand.u32 %v361, 4294901760
  %v363 = vsub.f32 %v361, %v362
  %v364 = vand.u32 %v363, 4294901760
  %365 = vmatprep.subr.mxu0 %v364
  %v366 = vand.u32 %v52, 4294901760
  %v367 = vsub.f32 %v52, %v366
  %v368 = vand.u32 %v367, 4294901760
  %v369 = vsub.f32 %v367, %v368
  %v370 = vand.u32 %v369, 4294901760
  %371 = vmatpush1.msra.mxu0 %v370
  %v372 = vand.u32 %v55, 4294901760
  %v373 = vsub.f32 %v55, %v372
  %v374 = vand.u32 %v373, 4294901760
  %v375 = vsub.f32 %v373, %v374
  %v376 = vand.u32 %v375, 4294901760
  %377 = vmatprep.subr.mxu0 %v376
  %v378 = vand.u32 %v54, 4294901760
  %v379 = vsub.f32 %v54, %v378
  %v380 = vand.u32 %v379, 4294901760
  %v381 = vsub.f32 %v379, %v380
  %v382 = vand.u32 %v381, 4294901760
  %383 = vmatpush1.msra.mxu0 %v382
  %v384 = vand.u32 %v57, 4294901760
  %v385 = vsub.f32 %v57, %v384
  %v386 = vand.u32 %v385, 4294901760
  %v387 = vsub.f32 %v385, %v386
  %v388 = vand.u32 %v387, 4294901760
  %389 = vmatprep.subr.mxu0 %v388
  %v390 = vand.u32 %v56, 4294901760
  %v391 = vsub.f32 %v56, %v390
  %v392 = vand.u32 %v391, 4294901760
  %v393 = vsub.f32 %v391, %v392
  %v394 = vand.u32 %v393, 4294901760
  %395 = vmatpush1.msra.mxu0 %v394
  %v396 = vand.u32 %v59, 4294901760
  %v397 = vsub.f32 %v59, %v396
  %v398 = vand.u32 %v397, 4294901760
  %v399 = vsub.f32 %v397, %v398
  %v400 = vand.u32 %v399, 4294901760
  %401 = vmatprep.subr.mxu0 %v400
  %v402 = vand.u32 %v58, 4294901760
  %v403 = vsub.f32 %v58, %v402
  %v404 = vand.u32 %v403, 4294901760
  %v405 = vsub.f32 %v403, %v404
  %v406 = vand.u32 %v405, 4294901760
  %407 = vmatpush1.msra.mxu0 %v406
  %v408 = vand.u32 %v61, 4294901760
  %v409 = vsub.f32 %v61, %v408
  %v410 = vand.u32 %v409, 4294901760
  %v411 = vsub.f32 %v409, %v410
  %v412 = vand.u32 %v411, 4294901760
  %413 = vmatprep.subr.mxu0 %v412
  %v414 = vand.u32 %v60, 4294901760
  %v415 = vsub.f32 %v60, %v414
  %v416 = vand.u32 %v415, 4294901760
  %v417 = vsub.f32 %v415, %v416
  %v418 = vand.u32 %v417, 4294901760
  %419 = vmatpush1.msra.mxu0 %v418
  %v420 = vand.u32 %v63, 4294901760
  %v421 = vsub.f32 %v63, %v420
  %v422 = vand.u32 %v421, 4294901760
  %v423 = vsub.f32 %v421, %v422
  %v424 = vand.u32 %v423, 4294901760
  %425 = vmatprep.subr.mxu0 %v424
  %v426 = vand.u32 %v62, 4294901760
  %v427 = vsub.f32 %v62, %v426
  %v428 = vand.u32 %v427, 4294901760
  %v429 = vsub.f32 %v427, %v428
  %v430 = vand.u32 %v429, 4294901760
  %431 = vmatpush1.msra.mxu0 %v430
  %432 = vmatprep.subr.mxu0 0.0
  %433 = vmatpush1.msra.mxu0 0.0
  %434 = vmatprep.subr.mxu0 0.0
  %435 = vmatpush1.msra.mxu0 0.0
  %436 = vmatprep.subr.mxu0 0.0
  %437 = vmatpush1.msra.mxu0 0.0
  %438 = vmatprep.subr.mxu0 0.0
  %439 = vmatpush1.msra.mxu0 0.0
  %440 = vmatprep.subr.mxu0 0.0
  %441 = vmatpush1.msra.mxu0 0.0
  %442 = vmatprep.subr.mxu0 0.0
  %443 = vmatpush1.msra.mxu0 0.0
  %444 = vmatprep.subr.mxu0 0.0
  %445 = vmatpush1.msra.mxu0 0.0
  %446 = vmatprep.subr.mxu0 0.0
  %447 = vmatpush1.msra.mxu0 0.0
  %448 = vmatprep.subr.mxu0 0.0
  %449 = vmatpush1.msra.mxu0 0.0
  %450 = vmatprep.subr.mxu0 0.0
  %451 = vmatpush1.msra.mxu0 0.0
  %452 = vmatprep.subr.mxu0 0.0
  %453 = vmatpush1.msra.mxu0 0.0
  %454 = vmatprep.subr.mxu0 0.0
  %455 = vmatpush1.msra.mxu0 0.0
  %456 = vmatprep.subr.mxu0 0.0
  %457 = vmatpush1.msra.mxu0 0.0
  %458 = vmatprep.subr.mxu0 0.0
  %459 = vmatpush1.msra.mxu0 0.0
  %460 = vmatprep.subr.mxu0 0.0
  %461 = vmatpush1.msra.mxu0 0.0
  %462 = vmatprep.subr.mxu0 0.0
  %463 = vmatpush1.msra.mxu0 0.0
  %464 = vmatprep.mubr.f32.mxu0 0.0
  %v465 = vand.u32 %v96, 4294901760
  %466 = vmatmul.mubr.f32.gmra.mrb[0].mxu0 %v465
  %v467 = vpop.f32.mrb[0].mxu0
  %v468 = vadd.f32 %v214, %v467
  %v469 = vpop.f32.mrb[0].mxu0
  %v470 = vadd.f32 %v216, %v469
  %471 = vmatprep.mubr.f32.mxu0 0.0
  %v472 = vand.u32 %v97, 4294901760
  %473 = vmatmul.mubr.f32.gmra.mrb[0].mxu0 %v472
  %v474 = vpop.f32.mrb[0].mxu0
  %v475 = vadd.f32 %v225, %v474
  %v476 = vpop.f32.mrb[0].mxu0
  %v477 = vadd.f32 %v227, %v476
  %478 = vmatprep.mubr.f32.mxu0 0.0
  %v479 = vand.u32 %v98, 4294901760
  %480 = vmatmul.mubr.f32.gmra.mrb[0].mxu0 %v479
  %v481 = vpop.f32.mrb[0].mxu0
  %v482 = vadd.f32 %v236, %v481
  %v483 = vpop.f32.mrb[0].mxu0
  %v484 = vadd.f32 %v238, %v483
  %485 = vdwg.mxu0
  %v486 = vand.u32 %v33, 4294901760
  %v487 = vsub.f32 %v33, %v486
  %488 = vmatprep.subr.mxu0 %v487
  %v489 = vand.u32 %v32, 4294901760
  %v490 = vsub.f32 %v32, %v489
  %491 = vmatpush1.msra.mxu0 %v490
  %v492 = vand.u32 %v35, 4294901760
  %v493 = vsub.f32 %v35, %v492
  %494 = vmatprep.subr.mxu0 %v493
  %v495 = vand.u32 %v34, 4294901760
  %v496 = vsub.f32 %v34, %v495
  %497 = vmatpush1.msra.mxu0 %v496
  %v498 = vand.u32 %v37, 4294901760
  %v499 = vsub.f32 %v37, %v498
  %500 = vmatprep.subr.mxu0 %v499
  %v501 = vand.u32 %v36, 4294901760
  %v502 = vsub.f32 %v36, %v501
  %503 = vmatpush1.msra.mxu0 %v502
  %v504 = vand.u32 %v39, 4294901760
  %v505 = vsub.f32 %v39, %v504
  %506 = vmatprep.subr.mxu0 %v505
  %v507 = vand.u32 %v38, 4294901760
  %v508 = vsub.f32 %v38, %v507
  %509 = vmatpush1.msra.mxu0 %v508
  %v510 = vand.u32 %v41, 4294901760
  %v511 = vsub.f32 %v41, %v510
  %512 = vmatprep.subr.mxu0 %v511
  %v513 = vand.u32 %v40, 4294901760
  %v514 = vsub.f32 %v40, %v513
  %515 = vmatpush1.msra.mxu0 %v514
  %v516 = vand.u32 %v43, 4294901760
  %v517 = vsub.f32 %v43, %v516
  %518 = vmatprep.subr.mxu0 %v517
  %v519 = vand.u32 %v42, 4294901760
  %v520 = vsub.f32 %v42, %v519
  %521 = vmatpush1.msra.mxu0 %v520
  %v522 = vand.u32 %v45, 4294901760
  %v523 = vsub.f32 %v45, %v522
  %524 = vmatprep.subr.mxu0 %v523
  %v525 = vand.u32 %v44, 4294901760
  %v526 = vsub.f32 %v44, %v525
  %527 = vmatpush1.msra.mxu0 %v526
  %v528 = vand.u32 %v47, 4294901760
  %v529 = vsub.f32 %v47, %v528
  %530 = vmatprep.subr.mxu0 %v529
  %v531 = vand.u32 %v46, 4294901760
  %v532 = vsub.f32 %v46, %v531
  %533 = vmatpush1.msra.mxu0 %v532
  %v534 = vand.u32 %v49, 4294901760
  %v535 = vsub.f32 %v49, %v534
  %536 = vmatprep.subr.mxu0 %v535
  %v537 = vand.u32 %v48, 4294901760
  %v538 = vsub.f32 %v48, %v537
  %539 = vmatpush1.msra.mxu0 %v538
  %v540 = vand.u32 %v51, 4294901760
  %v541 = vsub.f32 %v51, %v540
  %542 = vmatprep.subr.mxu0 %v541
  %v543 = vand.u32 %v50, 4294901760
  %v544 = vsub.f32 %v50, %v543
  %545 = vmatpush1.msra.mxu0 %v544
  %v546 = vand.u32 %v53, 4294901760
  %v547 = vsub.f32 %v53, %v546
  %548 = vmatprep.subr.mxu0 %v547
  %v549 = vand.u32 %v52, 4294901760
  %v550 = vsub.f32 %v52, %v549
  %551 = vmatpush1.msra.mxu0 %v550
  %v552 = vand.u32 %v55, 4294901760
  %v553 = vsub.f32 %v55, %v552
  %554 = vmatprep.subr.mxu0 %v553
  %v555 = vand.u32 %v54, 4294901760
  %v556 = vsub.f32 %v54, %v555
  %557 = vmatpush1.msra.mxu0 %v556
  %v558 = vand.u32 %v57, 4294901760
  %v559 = vsub.f32 %v57, %v558
  %560 = vmatprep.subr.mxu0 %v559
  %v561 = vand.u32 %v56, 4294901760
  %v562 = vsub.f32 %v56, %v561
  %563 = vmatpush1.msra.mxu0 %v562
  %v564 = vand.u32 %v59, 4294901760
  %v565 = vsub.f32 %v59, %v564
  %566 = vmatprep.subr.mxu0 %v565
  %v567 = vand.u32 %v58, 4294901760
  %v568 = vsub.f32 %v58, %v567
  %569 = vmatpush1.msra.mxu0 %v568
  %v570 = vand.u32 %v61, 4294901760
  %v571 = vsub.f32 %v61, %v570
  %572 = vmatprep.subr.mxu0 %v571
  %v573 = vand.u32 %v60, 4294901760
  %v574 = vsub.f32 %v60, %v573
  %575 = vmatpush1.msra.mxu0 %v574
  %v576 = vand.u32 %v63, 4294901760
  %v577 = vsub.f32 %v63, %v576
  %578 = vmatprep.subr.mxu0 %v577
  %v579 = vand.u32 %v62, 4294901760
  %v580 = vsub.f32 %v62, %v579
  %581 = vmatpush1.msra.mxu0 %v580
  %582 = vmatprep.subr.mxu0 0.0
  %583 = vmatpush1.msra.mxu0 0.0
  %584 = vmatprep.subr.mxu0 0.0
  %585 = vmatpush1.msra.mxu0 0.0
  %586 = vmatprep.subr.mxu0 0.0
  %587 = vmatpush1.msra.mxu0 0.0
  %588 = vmatprep.subr.mxu0 0.0
  %589 = vmatpush1.msra.mxu0 0.0
  %590 = vmatprep.subr.mxu0 0.0
  %591 = vmatpush1.msra.mxu0 0.0
  %592 = vmatprep.subr.mxu0 0.0
  %593 = vmatpush1.msra.mxu0 0.0
  %594 = vmatprep.subr.mxu0 0.0
  %595 = vmatpush1.msra.mxu0 0.0
  %596 = vmatprep.subr.mxu0 0.0
  %597 = vmatpush1.msra.mxu0 0.0
  %598 = vmatprep.subr.mxu0 0.0
  %599 = vmatpush1.msra.mxu0 0.0
  %600 = vmatprep.subr.mxu0 0.0
  %601 = vmatpush1.msra.mxu0 0.0
  %602 = vmatprep.subr.mxu0 0.0
  %603 = vmatpush1.msra.mxu0 0.0
  %604 = vmatprep.subr.mxu0 0.0
  %605 = vmatpush1.msra.mxu0 0.0
  %606 = vmatprep.subr.mxu0 0.0
  %607 = vmatpush1.msra.mxu0 0.0
  %608 = vmatprep.subr.mxu0 0.0
  %609 = vmatpush1.msra.mxu0 0.0
  %610 = vmatprep.subr.mxu0 0.0
  %611 = vmatpush1.msra.mxu0 0.0
  %612 = vmatprep.subr.mxu0 0.0
  %613 = vmatpush1.msra.mxu0 0.0
  %614 = vmatprep.mubr.f32.mxu0 0.0
  %v615 = vand.u32 %v96, 4294901760
  %v616 = vsub.f32 %v96, %v615
  %617 = vmatmul.mubr.f32.gmra.mrb[0].mxu0 %v616
  %v618 = vpop.f32.mrb[0].mxu0
  %v619 = vadd.f32 %v468, %v618
  %v620 = vpop.f32.mrb[0].mxu0
  %v621 = vadd.f32 %v470, %v620
  %622 = vmatprep.mubr.f32.mxu0 0.0
  %v623 = vand.u32 %v97, 4294901760
  %v624 = vsub.f32 %v97, %v623
  %625 = vmatmul.mubr.f32.gmra.mrb[0].mxu0 %v624
  %v626 = vpop.f32.mrb[0].mxu0
  %v627 = vadd.f32 %v475, %v626
  %v628 = vpop.f32.mrb[0].mxu0
  %v629 = vadd.f32 %v477, %v628
  %630 = vmatprep.mubr.f32.mxu0 0.0
  %v631 = vand.u32 %v98, 4294901760
  %v632 = vsub.f32 %v98, %v631
  %633 = vmatmul.mubr.f32.gmra.mrb[0].mxu0 %v632
  %v634 = vpop.f32.mrb[0].mxu0
  %v635 = vadd.f32 %v482, %v634
  %v636 = vpop.f32.mrb[0].mxu0
  %v637 = vadd.f32 %v484, %v636
  %638 = vdwg.mxu0
  %v639 = vand.u32 %v33, 4294901760
  %640 = vmatprep.subr.mxu0 %v639
  %v641 = vand.u32 %v32, 4294901760
  %642 = vmatpush1.msra.mxu0 %v641
  %v643 = vand.u32 %v35, 4294901760
  %644 = vmatprep.subr.mxu0 %v643
  %v645 = vand.u32 %v34, 4294901760
  %646 = vmatpush1.msra.mxu0 %v645
  %v647 = vand.u32 %v37, 4294901760
  %648 = vmatprep.subr.mxu0 %v647
  %v649 = vand.u32 %v36, 4294901760
  %650 = vmatpush1.msra.mxu0 %v649
  %v651 = vand.u32 %v39, 4294901760
  %652 = vmatprep.subr.mxu0 %v651
  %v653 = vand.u32 %v38, 4294901760
  %654 = vmatpush1.msra.mxu0 %v653
  %v655 = vand.u32 %v41, 4294901760
  %656 = vmatprep.subr.mxu0 %v655
  %v657 = vand.u32 %v40, 4294901760
  %658 = vmatpush1.msra.mxu0 %v657
  %v659 = vand.u32 %v43, 4294901760
  %660 = vmatprep.subr.mxu0 %v659
  %v661 = vand.u32 %v42, 4294901760
  %662 = vmatpush1.msra.mxu0 %v661
  %v663 = vand.u32 %v45, 4294901760
  %664 = vmatprep.subr.mxu0 %v663
  %v665 = vand.u32 %v44, 4294901760
  %666 = vmatpush1.msra.mxu0 %v665
  %v667 = vand.u32 %v47, 4294901760
  %668 = vmatprep.subr.mxu0 %v667
  %v669 = vand.u32 %v46, 4294901760
  %670 = vmatpush1.msra.mxu0 %v669
  %v671 = vand.u32 %v49, 4294901760
  %672 = vmatprep.subr.mxu0 %v671
  %v673 = vand.u32 %v48, 4294901760
  %674 = vmatpush1.msra.mxu0 %v673
  %v675 = vand.u32 %v51, 4294901760
  %676 = vmatprep.subr.mxu0 %v675
  %v677 = vand.u32 %v50, 4294901760
  %678 = vmatpush1.msra.mxu0 %v677
  %v679 = vand.u32 %v53, 4294901760
  %680 = vmatprep.subr.mxu0 %v679
  %v681 = vand.u32 %v52, 4294901760
  %682 = vmatpush1.msra.mxu0 %v681
  %v683 = vand.u32 %v55, 4294901760
  %684 = vmatprep.subr.mxu0 %v683
  %v685 = vand.u32 %v54, 4294901760
  %686 = vmatpush1.msra.mxu0 %v685
  %v687 = vand.u32 %v57, 4294901760
  %688 = vmatprep.subr.mxu0 %v687
  %v689 = vand.u32 %v56, 4294901760
  %690 = vmatpush1.msra.mxu0 %v689
  %v691 = vand.u32 %v59, 4294901760
  %692 = vmatprep.subr.mxu0 %v691
  %v693 = vand.u32 %v58, 4294901760
  %694 = vmatpush1.msra.mxu0 %v693
  %v695 = vand.u32 %v61, 4294901760
  %696 = vmatprep.subr.mxu0 %v695
  %v697 = vand.u32 %v60, 4294901760
  %698 = vmatpush1.msra.mxu0 %v697
  %v699 = vand.u32 %v63, 4294901760
  %700 = vmatprep.subr.mxu0 %v699
  %v701 = vand.u32 %v62, 4294901760
  %702 = vmatpush1.msra.mxu0 %v701
  %703 = vmatprep.subr.mxu0 0.0
  %704 = vmatpush1.msra.mxu0 0.0
  %705 = vmatprep.subr.mxu0 0.0
  %706 = vmatpush1.msra.mxu0 0.0
  %707 = vmatprep.subr.mxu0 0.0
  %708 = vmatpush1.msra.mxu0 0.0
  %709 = vmatprep.subr.mxu0 0.0
  %710 = vmatpush1.msra.mxu0 0.0
  %711 = vmatprep.subr.mxu0 0.0
  %712 = vmatpush1.msra.mxu0 0.0
  %713 = vmatprep.subr.mxu0 0.0
  %714 = vmatpush1.msra.mxu0 0.0
  %715 = vmatprep.subr.mxu0 0.0
  %716 = vmatpush1.msra.mxu0 0.0
  %717 = vmatprep.subr.mxu0 0.0
  %718 = vmatpush1.msra.mxu0 0.0
  %719 = vmatprep.subr.mxu0 0.0
  %720 = vmatpush1.msra.mxu0 0.0
  %721 = vmatprep.subr.mxu0 0.0
  %722 = vmatpush1.msra.mxu0 0.0
  %723 = vmatprep.subr.mxu0 0.0
  %724 = vmatpush1.msra.mxu0 0.0
  %725 = vmatprep.subr.mxu0 0.0
  %726 = vmatpush1.msra.mxu0 0.0
  %727 = vmatprep.subr.mxu0 0.0
  %728 = vmatpush1.msra.mxu0 0.0
  %729 = vmatprep.subr.mxu0 0.0
  %730 = vmatpush1.msra.mxu0 0.0
  %731 = vmatprep.subr.mxu0 0.0
  %732 = vmatpush1.msra.mxu0 0.0
  %733 = vmatprep.subr.mxu0 0.0
  %734 = vmatpush1.msra.mxu0 0.0
  %735 = vmatprep.mubr.f32.mxu0 0.0
  %v736 = vand.u32 %v96, 4294901760
  %v737 = vsub.f32 %v96, %v736
  %v738 = vand.u32 %v737, 4294901760
  %739 = vmatmul.mubr.f32.gmra.mrb[0].mxu0 %v738
  %v740 = vpop.f32.mrb[0].mxu0
  %v741 = vadd.f32 %v619, %v740
  %v742 = vpop.f32.mrb[0].mxu0
  %v743 = vadd.f32 %v621, %v742
  %744 = vmatprep.mubr.f32.mxu0 0.0
  %v745 = vand.u32 %v97, 4294901760
  %v746 = vsub.f32 %v97, %v745
  %v747 = vand.u32 %v746, 4294901760
  %748 = vmatmul.mubr.f32.gmra.mrb[0].mxu0 %v747
  %v749 = vpop.f32.mrb[0].mxu0
  %v750 = vadd.f32 %v627, %v749
  %v751 = vpop.f32.mrb[0].mxu0
  %v752 = vadd.f32 %v629, %v751
  %753 = vmatprep.mubr.f32.mxu0 0.0
  %v754 = vand.u32 %v98, 4294901760
  %v755 = vsub.f32 %v98, %v754
  %v756 = vand.u32 %v755, 4294901760
  %757 = vmatmul.mubr.f32.gmra.mrb[0].mxu0 %v756
  %v758 = vpop.f32.mrb[0].mxu0
  %v759 = vadd.f32 %v635, %v758
  %v760 = vpop.f32.mrb[0].mxu0
  %v761 = vadd.f32 %v637, %v760
  %762 = vdwg.mxu0
  %v763 = vand.u32 %v33, 4294901760
  %v764 = vsub.f32 %v33, %v763
  %v765 = vand.u32 %v764, 4294901760
  %766 = vmatprep.subr.mxu0 %v765
  %v767 = vand.u32 %v32, 4294901760
  %v768 = vsub.f32 %v32, %v767
  %v769 = vand.u32 %v768, 4294901760
  %770 = vmatpush1.msra.mxu0 %v769
  %v771 = vand.u32 %v35, 4294901760
  %v772 = vsub.f32 %v35, %v771
  %v773 = vand.u32 %v772, 4294901760
  %774 = vmatprep.subr.mxu0 %v773
  %v775 = vand.u32 %v34, 4294901760
  %v776 = vsub.f32 %v34, %v775
  %v777 = vand.u32 %v776, 4294901760
  %778 = vmatpush1.msra.mxu0 %v777
  %v779 = vand.u32 %v37, 4294901760
  %v780 = vsub.f32 %v37, %v779
  %v781 = vand.u32 %v780, 4294901760
  %782 = vmatprep.subr.mxu0 %v781
  %v783 = vand.u32 %v36, 4294901760
  %v784 = vsub.f32 %v36, %v783
  %v785 = vand.u32 %v784, 4294901760
  %786 = vmatpush1.msra.mxu0 %v785
  %v787 = vand.u32 %v39, 4294901760
  %v788 = vsub.f32 %v39, %v787
  %v789 = vand.u32 %v788, 4294901760
  %790 = vmatprep.subr.mxu0 %v789
  %v791 = vand.u32 %v38, 4294901760
  %v792 = vsub.f32 %v38, %v791
  %v793 = vand.u32 %v792, 4294901760
  %794 = vmatpush1.msra.mxu0 %v793
  %v795 = vand.u32 %v41, 4294901760
  %v796 = vsub.f32 %v41, %v795
  %v797 = vand.u32 %v796, 4294901760
  %798 = vmatprep.subr.mxu0 %v797
  %v799 = vand.u32 %v40, 4294901760
  %v800 = vsub.f32 %v40, %v799
  %v801 = vand.u32 %v800, 4294901760
  %802 = vmatpush1.msra.mxu0 %v801
  %v803 = vand.u32 %v43, 4294901760
  %v804 = vsub.f32 %v43, %v803
  %v805 = vand.u32 %v804, 4294901760
  %806 = vmatprep.subr.mxu0 %v805
  %v807 = vand.u32 %v42, 4294901760
  %v808 = vsub.f32 %v42, %v807
  %v809 = vand.u32 %v808, 4294901760
  %810 = vmatpush1.msra.mxu0 %v809
  %v811 = vand.u32 %v45, 4294901760
  %v812 = vsub.f32 %v45, %v811
  %v813 = vand.u32 %v812, 4294901760
  %814 = vmatprep.subr.mxu0 %v813
  %v815 = vand.u32 %v44, 4294901760
  %v816 = vsub.f32 %v44, %v815
  %v817 = vand.u32 %v816, 4294901760
  %818 = vmatpush1.msra.mxu0 %v817
  %v819 = vand.u32 %v47, 4294901760
  %v820 = vsub.f32 %v47, %v819
  %v821 = vand.u32 %v820, 4294901760
  %822 = vmatprep.subr.mxu0 %v821
  %v823 = vand.u32 %v46, 4294901760
  %v824 = vsub.f32 %v46, %v823
  %v825 = vand.u32 %v824, 4294901760
  %826 = vmatpush1.msra.mxu0 %v825
  %v827 = vand.u32 %v49, 4294901760
  %v828 = vsub.f32 %v49, %v827
  %v829 = vand.u32 %v828, 4294901760
  %830 = vmatprep.subr.mxu0 %v829
  %v831 = vand.u32 %v48, 4294901760
  %v832 = vsub.f32 %v48, %v831
  %v833 = vand.u32 %v832, 4294901760
  %834 = vmatpush1.msra.mxu0 %v833
  %v835 = vand.u32 %v51, 4294901760
  %v836 = vsub.f32 %v51, %v835
  %v837 = vand.u32 %v836, 4294901760
  %838 = vmatprep.subr.mxu0 %v837
  %v839 = vand.u32 %v50, 4294901760
  %v840 = vsub.f32 %v50, %v839
  %v841 = vand.u32 %v840, 4294901760
  %842 = vmatpush1.msra.mxu0 %v841
  %v843 = vand.u32 %v53, 4294901760
  %v844 = vsub.f32 %v53, %v843
  %v845 = vand.u32 %v844, 4294901760
  %846 = vmatprep.subr.mxu0 %v845
  %v847 = vand.u32 %v52, 4294901760
  %v848 = vsub.f32 %v52, %v847
  %v849 = vand.u32 %v848, 4294901760
  %850 = vmatpush1.msra.mxu0 %v849
  %v851 = vand.u32 %v55, 4294901760
  %v852 = vsub.f32 %v55, %v851
  %v853 = vand.u32 %v852, 4294901760
  %854 = vmatprep.subr.mxu0 %v853
  %v855 = vand.u32 %v54, 4294901760
  %v856 = vsub.f32 %v54, %v855
  %v857 = vand.u32 %v856, 4294901760
  %858 = vmatpush1.msra.mxu0 %v857
  %v859 = vand.u32 %v57, 4294901760
  %v860 = vsub.f32 %v57, %v859
  %v861 = vand.u32 %v860, 4294901760
  %862 = vmatprep.subr.mxu0 %v861
  %v863 = vand.u32 %v56, 4294901760
  %v864 = vsub.f32 %v56, %v863
  %v865 = vand.u32 %v864, 4294901760
  %866 = vmatpush1.msra.mxu0 %v865
  %v867 = vand.u32 %v59, 4294901760
  %v868 = vsub.f32 %v59, %v867
  %v869 = vand.u32 %v868, 4294901760
  %870 = vmatprep.subr.mxu0 %v869
  %v871 = vand.u32 %v58, 4294901760
  %v872 = vsub.f32 %v58, %v871
  %v873 = vand.u32 %v872, 4294901760
  %874 = vmatpush1.msra.mxu0 %v873
  %v875 = vand.u32 %v61, 4294901760
  %v876 = vsub.f32 %v61, %v875
  %v877 = vand.u32 %v876, 4294901760
  %878 = vmatprep.subr.mxu0 %v877
  %v879 = vand.u32 %v60, 4294901760
  %v880 = vsub.f32 %v60, %v879
  %v881 = vand.u32 %v880, 4294901760
  %882 = vmatpush1.msra.mxu0 %v881
  %v883 = vand.u32 %v63, 4294901760
  %v884 = vsub.f32 %v63, %v883
  %v885 = vand.u32 %v884, 4294901760
  %886 = vmatprep.subr.mxu0 %v885
  %v887 = vand.u32 %v62, 4294901760
  %v888 = vsub.f32 %v62, %v887
  %v889 = vand.u32 %v888, 4294901760
  %890 = vmatpush1.msra.mxu0 %v889
  %891 = vmatprep.subr.mxu0 0.0
  %892 = vmatpush1.msra.mxu0 0.0
  %893 = vmatprep.subr.mxu0 0.0
  %894 = vmatpush1.msra.mxu0 0.0
  %895 = vmatprep.subr.mxu0 0.0
  %896 = vmatpush1.msra.mxu0 0.0
  %897 = vmatprep.subr.mxu0 0.0
  %898 = vmatpush1.msra.mxu0 0.0
  %899 = vmatprep.subr.mxu0 0.0
  %900 = vmatpush1.msra.mxu0 0.0
  %901 = vmatprep.subr.mxu0 0.0
  %902 = vmatpush1.msra.mxu0 0.0
  %903 = vmatprep.subr.mxu0 0.0
  %904 = vmatpush1.msra.mxu0 0.0
  %905 = vmatprep.subr.mxu0 0.0
  %906 = vmatpush1.msra.mxu0 0.0
  %907 = vmatprep.subr.mxu0 0.0
  %908 = vmatpush1.msra.mxu0 0.0
  %909 = vmatprep.subr.mxu0 0.0
  %910 = vmatpush1.msra.mxu0 0.0
  %911 = vmatprep.subr.mxu0 0.0
  %912 = vmatpush1.msra.mxu0 0.0
  %913 = vmatprep.subr.mxu0 0.0
  %914 = vmatpush1.msra.mxu0 0.0
  %915 = vmatprep.subr.mxu0 0.0
  %916 = vmatpush1.msra.mxu0 0.0
  %917 = vmatprep.subr.mxu0 0.0
  %918 = vmatpush1.msra.mxu0 0.0
  %919 = vmatprep.subr.mxu0 0.0
  %920 = vmatpush1.msra.mxu0 0.0
  %921 = vmatprep.subr.mxu0 0.0
  %922 = vmatpush1.msra.mxu0 0.0
  %923 = vmatprep.mubr.f32.mxu0 0.0
  %v924 = vand.u32 %v96, 4294901760
  %925 = vmatmul.mubr.f32.gmra.mrb[0].mxu0 %v924
  %v926 = vpop.f32.mrb[0].mxu0
  %v927 = vadd.f32 %v741, %v926
  %v928 = vpop.f32.mrb[0].mxu0
  %v929 = vadd.f32 %v743, %v928
  %930 = vmatprep.mubr.f32.mxu0 0.0
  %v931 = vand.u32 %v97, 4294901760
  %932 = vmatmul.mubr.f32.gmra.mrb[0].mxu0 %v931
  %v933 = vpop.f32.mrb[0].mxu0
  %v934 = vadd.f32 %v750, %v933
  %v935 = vpop.f32.mrb[0].mxu0
  %v936 = vadd.f32 %v752, %v935
  %937 = vmatprep.mubr.f32.mxu0 0.0
  %v938 = vand.u32 %v98, 4294901760
  %939 = vmatmul.mubr.f32.gmra.mrb[0].mxu0 %v938
  %v940 = vpop.f32.mrb[0].mxu0
  %v941 = vadd.f32 %v759, %v940
  %v942 = vpop.f32.mrb[0].mxu0
  %v943 = vadd.f32 %v761, %v942
  %944 = vdwg.mxu0
  %v945 = vand.u32 %v33, 4294901760
  %946 = vmatprep.subr.mxu0 %v945
  %v947 = vand.u32 %v32, 4294901760
  %948 = vmatpush1.msra.mxu0 %v947
  %v949 = vand.u32 %v35, 4294901760
  %950 = vmatprep.subr.mxu0 %v949
  %v951 = vand.u32 %v34, 4294901760
  %952 = vmatpush1.msra.mxu0 %v951
  %v953 = vand.u32 %v37, 4294901760
  %954 = vmatprep.subr.mxu0 %v953
  %v955 = vand.u32 %v36, 4294901760
  %956 = vmatpush1.msra.mxu0 %v955
  %v957 = vand.u32 %v39, 4294901760
  %958 = vmatprep.subr.mxu0 %v957
  %v959 = vand.u32 %v38, 4294901760
  %960 = vmatpush1.msra.mxu0 %v959
  %v961 = vand.u32 %v41, 4294901760
  %962 = vmatprep.subr.mxu0 %v961
  %v963 = vand.u32 %v40, 4294901760
  %964 = vmatpush1.msra.mxu0 %v963
  %v965 = vand.u32 %v43, 4294901760
  %966 = vmatprep.subr.mxu0 %v965
  %v967 = vand.u32 %v42, 4294901760
  %968 = vmatpush1.msra.mxu0 %v967
  %v969 = vand.u32 %v45, 4294901760
  %970 = vmatprep.subr.mxu0 %v969
  %v971 = vand.u32 %v44, 4294901760
  %972 = vmatpush1.msra.mxu0 %v971
  %v973 = vand.u32 %v47, 4294901760
  %974 = vmatprep.subr.mxu0 %v973
  %v975 = vand.u32 %v46, 4294901760
  %976 = vmatpush1.msra.mxu0 %v975
  %v977 = vand.u32 %v49, 4294901760
  %978 = vmatprep.subr.mxu0 %v977
  %v979 = vand.u32 %v48, 4294901760
  %980 = vmatpush1.msra.mxu0 %v979
  %v981 = vand.u32 %v51, 4294901760
  %982 = vmatprep.subr.mxu0 %v981
  %v983 = vand.u32 %v50, 4294901760
  %984 = vmatpush1.msra.mxu0 %v983
  %v985 = vand.u32 %v53, 4294901760
  %986 = vmatprep.subr.mxu0 %v985
  %v987 = vand.u32 %v52, 4294901760
  %988 = vmatpush1.msra.mxu0 %v987
  %v989 = vand.u32 %v55, 4294901760
  %990 = vmatprep.subr.mxu0 %v989
  %v991 = vand.u32 %v54, 4294901760
  %992 = vmatpush1.msra.mxu0 %v991
  %v993 = vand.u32 %v57, 4294901760
  %994 = vmatprep.subr.mxu0 %v993
  %v995 = vand.u32 %v56, 4294901760
  %996 = vmatpush1.msra.mxu0 %v995
  %v997 = vand.u32 %v59, 4294901760
  %998 = vmatprep.subr.mxu0 %v997
  %v999 = vand.u32 %v58, 4294901760
  %1000 = vmatpush1.msra.mxu0 %v999
  %v1001 = vand.u32 %v61, 4294901760
  %1002 = vmatprep.subr.mxu0 %v1001
  %v1003 = vand.u32 %v60, 4294901760
  %1004 = vmatpush1.msra.mxu0 %v1003
  %v1005 = vand.u32 %v63, 4294901760
  %1006 = vmatprep.subr.mxu0 %v1005
  %v1007 = vand.u32 %v62, 4294901760
  %1008 = vmatpush1.msra.mxu0 %v1007
  %1009 = vmatprep.subr.mxu0 0.0
  %1010 = vmatpush1.msra.mxu0 0.0
  %1011 = vmatprep.subr.mxu0 0.0
  %1012 = vmatpush1.msra.mxu0 0.0
  %1013 = vmatprep.subr.mxu0 0.0
  %1014 = vmatpush1.msra.mxu0 0.0
  %1015 = vmatprep.subr.mxu0 0.0
  %1016 = vmatpush1.msra.mxu0 0.0
  %1017 = vmatprep.subr.mxu0 0.0
  %1018 = vmatpush1.msra.mxu0 0.0
  %1019 = vmatprep.subr.mxu0 0.0
  %1020 = vmatpush1.msra.mxu0 0.0
  %1021 = vmatprep.subr.mxu0 0.0
  %1022 = vmatpush1.msra.mxu0 0.0
  %1023 = vmatprep.subr.mxu0 0.0
  %1024 = vmatpush1.msra.mxu0 0.0
  %1025 = vmatprep.subr.mxu0 0.0
  %1026 = vmatpush1.msra.mxu0 0.0
  %1027 = vmatprep.subr.mxu0 0.0
  %1028 = vmatpush1.msra.mxu0 0.0
  %1029 = vmatprep.subr.mxu0 0.0
  %1030 = vmatpush1.msra.mxu0 0.0
  %1031 = vmatprep.subr.mxu0 0.0
  %1032 = vmatpush1.msra.mxu0 0.0
  %1033 = vmatprep.subr.mxu0 0.0
  %1034 = vmatpush1.msra.mxu0 0.0
  %1035 = vmatprep.subr.mxu0 0.0
  %1036 = vmatpush1.msra.mxu0 0.0
  %1037 = vmatprep.subr.mxu0 0.0
  %1038 = vmatpush1.msra.mxu0 0.0
  %1039 = vmatprep.subr.mxu0 0.0
  %1040 = vmatpush1.msra.mxu0 0.0
  %1041 = vmatprep.mubr.f32.mxu0 0.0
  %v1042 = vand.u32 %v96, 4294901760
  %1043 = vmatmul.mubr.f32.gmra.mrb[0].mxu0 %v1042
  %v1044 = vpop.f32.mrb[0].mxu0
  %v1045 = vadd.f32 %v927, %v1044
  %v1046 = vpop.f32.mrb[0].mxu0
  %v1047 = vadd.f32 %v929, %v1046
  %1048 = vmatprep.mubr.f32.mxu0 0.0
  %v1049 = vand.u32 %v97, 4294901760
  %1050 = vmatmul.mubr.f32.gmra.mrb[0].mxu0 %v1049
  %v1051 = vpop.f32.mrb[0].mxu0
  %v1052 = vadd.f32 %v934, %v1051
  %v1053 = vpop.f32.mrb[0].mxu0
  %v1054 = vadd.f32 %v936, %v1053
  %1055 = vmatprep.mubr.f32.mxu0 0.0
  %v1056 = vand.u32 %v98, 4294901760
  %1057 = vmatmul.mubr.f32.gmra.mrb[0].mxu0 %v1056
  %v1058 = vpop.f32.mrb[0].mxu0
  %v1059 = vadd.f32 %v941, %v1058
  %v1060 = vpop.f32.mrb[0].mxu0
  %v1061 = vadd.f32 %v943, %v1060
  %1062 = vdwg.mxu0
  %1065 = vrot.lane.b32.xlu0 %v1045, 64
  %v1066 = vpop.permute.xlu0 %1065
  %1067 = vrot.lane.b32.xlu0 %v1052, 64
  %v1068 = vpop.permute.xlu0 %1067
  %vm1069 = vcmask 130048
  %v1070 = vsel %vm1069, %v1045, 0
  %v1072 = vsel %vm1069, %v1052, 0
  %v1074 = vsel %vm1069, %v1066, 0
  %v1076 = vsel %vm1069, %v1068, 0
  %1078 = vmatprep.subr.mxu0 0.0
  %v1079 = vand.u32 %v1074, 4294901760
  %1080 = vmatpush1.xpose.msra.mxu0 %v1079
  %1081 = vmatprep.subr.mxu0 0.0
  %v1082 = vand.u32 %v1076, 4294901760
  %1083 = vmatpush1.xpose.msra.mxu0 %v1082
  %1084 = vmatprep.subr.mxu0 0.0
  %1085 = vmatpush1.xpose.msra.mxu0 0.0
  %1086 = vmatprep.subr.mxu0 0.0
  %1087 = vmatpush1.xpose.msra.mxu0 0.0
  %1088 = vmatprep.subr.mxu0 0.0
  %1089 = vmatpush1.xpose.msra.mxu0 0.0
  %1090 = vmatprep.subr.mxu0 0.0
  %1091 = vmatpush1.xpose.msra.mxu0 0.0
  %1092 = vmatprep.subr.mxu0 0.0
  %1093 = vmatpush1.xpose.msra.mxu0 0.0
  %1094 = vmatprep.subr.mxu0 0.0
  %1095 = vmatpush1.xpose.msra.mxu0 0.0
  %1096 = vmatprep.subr.mxu0 0.0
  %1097 = vmatpush1.xpose.msra.mxu0 0.0
  %1098 = vmatprep.subr.mxu0 0.0
  %1099 = vmatpush1.xpose.msra.mxu0 0.0
  %1100 = vmatprep.subr.mxu0 0.0
  %1101 = vmatpush1.xpose.msra.mxu0 0.0
  %1102 = vmatprep.subr.mxu0 0.0
  %1103 = vmatpush1.xpose.msra.mxu0 0.0
  %1104 = vmatprep.subr.mxu0 0.0
  %1105 = vmatpush1.xpose.msra.mxu0 0.0
  %1106 = vmatprep.subr.mxu0 0.0
  %1107 = vmatpush1.xpose.msra.mxu0 0.0
  %1108 = vmatprep.subr.mxu0 0.0
  %1109 = vmatpush1.xpose.msra.mxu0 0.0
  %1110 = vmatprep.subr.mxu0 0.0
  %1111 = vmatpush1.xpose.msra.mxu0 0.0
  %1112 = vmatprep.subr.mxu0 0.0
  %1113 = vmatpush1.xpose.msra.mxu0 0.0
  %1114 = vmatprep.subr.mxu0 0.0
  %1115 = vmatpush1.xpose.msra.mxu0 0.0
  %1116 = vmatprep.subr.mxu0 0.0
  %1117 = vmatpush1.xpose.msra.mxu0 0.0
  %1118 = vmatprep.subr.mxu0 0.0
  %1119 = vmatpush1.xpose.msra.mxu0 0.0
  %1120 = vmatprep.subr.mxu0 0.0
  %1121 = vmatpush1.xpose.msra.mxu0 0.0
  %1122 = vmatprep.subr.mxu0 0.0
  %1123 = vmatpush1.xpose.msra.mxu0 0.0
  %1124 = vmatprep.subr.mxu0 0.0
  %1125 = vmatpush1.xpose.msra.mxu0 0.0
  %1126 = vmatprep.subr.mxu0 0.0
  %1127 = vmatpush1.xpose.msra.mxu0 0.0
  %1128 = vmatprep.subr.mxu0 0.0
  %1129 = vmatpush1.xpose.msra.mxu0 0.0
  %1130 = vmatprep.subr.mxu0 0.0
  %1131 = vmatpush1.xpose.msra.mxu0 0.0
  %1132 = vmatprep.subr.mxu0 0.0
  %1133 = vmatpush1.xpose.msra.mxu0 0.0
  %1134 = vmatprep.subr.mxu0 0.0
  %1135 = vmatpush1.xpose.msra.mxu0 0.0
  %1136 = vmatprep.subr.mxu0 0.0
  %1137 = vmatpush1.xpose.msra.mxu0 0.0
  %1138 = vmatprep.subr.mxu0 0.0
  %1139 = vmatpush1.xpose.msra.mxu0 0.0
  %1140 = vmatprep.subr.mxu0 0.0
  %1141 = vmatpush1.xpose.msra.mxu0 0.0
  %1142 = vmatprep.subr.mxu0 0.0
  %1143 = vmatpush1.xpose.msra.mxu0 0.0
  %1144 = vmatprep.mubr.f32.mxu0 0.0
  %v1145 = vand.u32 %v1070, 4294901760
  %v1146 = vsub.f32 %v1070, %v1145
  %v1147 = vand.u32 %v1146, 4294901760
  %v1148 = vsub.f32 %v1146, %v1147
  %v1149 = vand.u32 %v1148, 4294901760
  %1150 = vmatmul.mubr.f32.gmra.mrb[0].mxu0 %v1149
  %v1151 = vpop.f32.mrb[0].mxu0
  %v1152 = vadd.f32 0.0, %v1151
  %v1153 = vpop.f32.mrb[0].mxu0
  %1154 = vmatprep.mubr.f32.mxu0 0.0
  %v1155 = vand.u32 %v1072, 4294901760
  %v1156 = vsub.f32 %v1072, %v1155
  %v1157 = vand.u32 %v1156, 4294901760
  %v1158 = vsub.f32 %v1156, %v1157
  %v1159 = vand.u32 %v1158, 4294901760
  %1160 = vmatmul.mubr.f32.gmra.mrb[0].mxu0 %v1159
  %v1161 = vpop.f32.mrb[0].mxu0
  %v1162 = vadd.f32 0.0, %v1161
  %v1163 = vpop.f32.mrb[0].mxu0
  %1164 = vdwg.mxu0
  %1165 = vmatprep.subr.mxu0 0.0
  %v1166 = vand.u32 %v1074, 4294901760
  %v1167 = vsub.f32 %v1074, %v1166
  %v1168 = vand.u32 %v1167, 4294901760
  %v1169 = vsub.f32 %v1167, %v1168
  %v1170 = vand.u32 %v1169, 4294901760
  %1171 = vmatpush1.xpose.msra.mxu0 %v1170
  %1172 = vmatprep.subr.mxu0 0.0
  %v1173 = vand.u32 %v1076, 4294901760
  %v1174 = vsub.f32 %v1076, %v1173
  %v1175 = vand.u32 %v1174, 4294901760
  %v1176 = vsub.f32 %v1174, %v1175
  %v1177 = vand.u32 %v1176, 4294901760
  %1178 = vmatpush1.xpose.msra.mxu0 %v1177
  %1179 = vmatprep.subr.mxu0 0.0
  %1180 = vmatpush1.xpose.msra.mxu0 0.0
  %1181 = vmatprep.subr.mxu0 0.0
  %1182 = vmatpush1.xpose.msra.mxu0 0.0
  %1183 = vmatprep.subr.mxu0 0.0
  %1184 = vmatpush1.xpose.msra.mxu0 0.0
  %1185 = vmatprep.subr.mxu0 0.0
  %1186 = vmatpush1.xpose.msra.mxu0 0.0
  %1187 = vmatprep.subr.mxu0 0.0
  %1188 = vmatpush1.xpose.msra.mxu0 0.0
  %1189 = vmatprep.subr.mxu0 0.0
  %1190 = vmatpush1.xpose.msra.mxu0 0.0
  %1191 = vmatprep.subr.mxu0 0.0
  %1192 = vmatpush1.xpose.msra.mxu0 0.0
  %1193 = vmatprep.subr.mxu0 0.0
  %1194 = vmatpush1.xpose.msra.mxu0 0.0
  %1195 = vmatprep.subr.mxu0 0.0
  %1196 = vmatpush1.xpose.msra.mxu0 0.0
  %1197 = vmatprep.subr.mxu0 0.0
  %1198 = vmatpush1.xpose.msra.mxu0 0.0
  %1199 = vmatprep.subr.mxu0 0.0
  %1200 = vmatpush1.xpose.msra.mxu0 0.0
  %1201 = vmatprep.subr.mxu0 0.0
  %1202 = vmatpush1.xpose.msra.mxu0 0.0
  %1203 = vmatprep.subr.mxu0 0.0
  %1204 = vmatpush1.xpose.msra.mxu0 0.0
  %1205 = vmatprep.subr.mxu0 0.0
  %1206 = vmatpush1.xpose.msra.mxu0 0.0
  %1207 = vmatprep.subr.mxu0 0.0
  %1208 = vmatpush1.xpose.msra.mxu0 0.0
  %1209 = vmatprep.subr.mxu0 0.0
  %1210 = vmatpush1.xpose.msra.mxu0 0.0
  %1211 = vmatprep.subr.mxu0 0.0
  %1212 = vmatpush1.xpose.msra.mxu0 0.0
  %1213 = vmatprep.subr.mxu0 0.0
  %1214 = vmatpush1.xpose.msra.mxu0 0.0
  %1215 = vmatprep.subr.mxu0 0.0
  %1216 = vmatpush1.xpose.msra.mxu0 0.0
  %1217 = vmatprep.subr.mxu0 0.0
  %1218 = vmatpush1.xpose.msra.mxu0 0.0
  %1219 = vmatprep.subr.mxu0 0.0
  %1220 = vmatpush1.xpose.msra.mxu0 0.0
  %1221 = vmatprep.subr.mxu0 0.0
  %1222 = vmatpush1.xpose.msra.mxu0 0.0
  %1223 = vmatprep.subr.mxu0 0.0
  %1224 = vmatpush1.xpose.msra.mxu0 0.0
  %1225 = vmatprep.subr.mxu0 0.0
  %1226 = vmatpush1.xpose.msra.mxu0 0.0
  %1227 = vmatprep.subr.mxu0 0.0
  %1228 = vmatpush1.xpose.msra.mxu0 0.0
  %1229 = vmatprep.subr.mxu0 0.0
  %1230 = vmatpush1.xpose.msra.mxu0 0.0
  %1231 = vmatprep.subr.mxu0 0.0
  %1232 = vmatpush1.xpose.msra.mxu0 0.0
  %1233 = vmatprep.subr.mxu0 0.0
  %1234 = vmatpush1.xpose.msra.mxu0 0.0
  %1235 = vmatprep.subr.mxu0 0.0
  %1236 = vmatpush1.xpose.msra.mxu0 0.0
  %1237 = vmatprep.subr.mxu0 0.0
  %1238 = vmatpush1.xpose.msra.mxu0 0.0
  %1239 = vmatprep.mubr.f32.mxu0 0.0
  %v1240 = vand.u32 %v1070, 4294901760
  %1241 = vmatmul.mubr.f32.gmra.mrb[0].mxu0 %v1240
  %v1242 = vpop.f32.mrb[0].mxu0
  %v1243 = vadd.f32 %v1152, %v1242
  %v1244 = vpop.f32.mrb[0].mxu0
  %1245 = vmatprep.mubr.f32.mxu0 0.0
  %v1246 = vand.u32 %v1072, 4294901760
  %1247 = vmatmul.mubr.f32.gmra.mrb[0].mxu0 %v1246
  %v1248 = vpop.f32.mrb[0].mxu0
  %v1249 = vadd.f32 %v1162, %v1248
  %v1250 = vpop.f32.mrb[0].mxu0
  %1251 = vdwg.mxu0
  %1252 = vmatprep.subr.mxu0 0.0
  %v1253 = vand.u32 %v1074, 4294901760
  %v1254 = vsub.f32 %v1074, %v1253
  %1255 = vmatpush1.xpose.msra.mxu0 %v1254
  %1256 = vmatprep.subr.mxu0 0.0
  %v1257 = vand.u32 %v1076, 4294901760
  %v1258 = vsub.f32 %v1076, %v1257
  %1259 = vmatpush1.xpose.msra.mxu0 %v1258
  %1260 = vmatprep.subr.mxu0 0.0
  %1261 = vmatpush1.xpose.msra.mxu0 0.0
  %1262 = vmatprep.subr.mxu0 0.0
  %1263 = vmatpush1.xpose.msra.mxu0 0.0
  %1264 = vmatprep.subr.mxu0 0.0
  %1265 = vmatpush1.xpose.msra.mxu0 0.0
  %1266 = vmatprep.subr.mxu0 0.0
  %1267 = vmatpush1.xpose.msra.mxu0 0.0
  %1268 = vmatprep.subr.mxu0 0.0
  %1269 = vmatpush1.xpose.msra.mxu0 0.0
  %1270 = vmatprep.subr.mxu0 0.0
  %1271 = vmatpush1.xpose.msra.mxu0 0.0
  %1272 = vmatprep.subr.mxu0 0.0
  %1273 = vmatpush1.xpose.msra.mxu0 0.0
  %1274 = vmatprep.subr.mxu0 0.0
  %1275 = vmatpush1.xpose.msra.mxu0 0.0
  %1276 = vmatprep.subr.mxu0 0.0
  %1277 = vmatpush1.xpose.msra.mxu0 0.0
  %1278 = vmatprep.subr.mxu0 0.0
  %1279 = vmatpush1.xpose.msra.mxu0 0.0
  %1280 = vmatprep.subr.mxu0 0.0
  %1281 = vmatpush1.xpose.msra.mxu0 0.0
  %1282 = vmatprep.subr.mxu0 0.0
  %1283 = vmatpush1.xpose.msra.mxu0 0.0
  %1284 = vmatprep.subr.mxu0 0.0
  %1285 = vmatpush1.xpose.msra.mxu0 0.0
  %1286 = vmatprep.subr.mxu0 0.0
  %1287 = vmatpush1.xpose.msra.mxu0 0.0
  %1288 = vmatprep.subr.mxu0 0.0
  %1289 = vmatpush1.xpose.msra.mxu0 0.0
  %1290 = vmatprep.subr.mxu0 0.0
  %1291 = vmatpush1.xpose.msra.mxu0 0.0
  %1292 = vmatprep.subr.mxu0 0.0
  %1293 = vmatpush1.xpose.msra.mxu0 0.0
  %1294 = vmatprep.subr.mxu0 0.0
  %1295 = vmatpush1.xpose.msra.mxu0 0.0
  %1296 = vmatprep.subr.mxu0 0.0
  %1297 = vmatpush1.xpose.msra.mxu0 0.0
  %1298 = vmatprep.subr.mxu0 0.0
  %1299 = vmatpush1.xpose.msra.mxu0 0.0
  %1300 = vmatprep.subr.mxu0 0.0
  %1301 = vmatpush1.xpose.msra.mxu0 0.0
  %1302 = vmatprep.subr.mxu0 0.0
  %1303 = vmatpush1.xpose.msra.mxu0 0.0
  %1304 = vmatprep.subr.mxu0 0.0
  %1305 = vmatpush1.xpose.msra.mxu0 0.0
  %1306 = vmatprep.subr.mxu0 0.0
  %1307 = vmatpush1.xpose.msra.mxu0 0.0
  %1308 = vmatprep.subr.mxu0 0.0
  %1309 = vmatpush1.xpose.msra.mxu0 0.0
  %1310 = vmatprep.subr.mxu0 0.0
  %1311 = vmatpush1.xpose.msra.mxu0 0.0
  %1312 = vmatprep.subr.mxu0 0.0
  %1313 = vmatpush1.xpose.msra.mxu0 0.0
  %1314 = vmatprep.subr.mxu0 0.0
  %1315 = vmatpush1.xpose.msra.mxu0 0.0
  %1316 = vmatprep.subr.mxu0 0.0
  %1317 = vmatpush1.xpose.msra.mxu0 0.0
  %1318 = vmatprep.subr.mxu0 0.0
  %1319 = vmatpush1.xpose.msra.mxu0 0.0
  %1320 = vmatprep.mubr.f32.mxu0 0.0
  %v1321 = vand.u32 %v1070, 4294901760
  %v1322 = vsub.f32 %v1070, %v1321
  %1323 = vmatmul.mubr.f32.gmra.mrb[0].mxu0 %v1322
  %v1324 = vpop.f32.mrb[0].mxu0
  %v1325 = vadd.f32 %v1243, %v1324
  %v1326 = vpop.f32.mrb[0].mxu0
  %1327 = vmatprep.mubr.f32.mxu0 0.0
  %v1328 = vand.u32 %v1072, 4294901760
  %v1329 = vsub.f32 %v1072, %v1328
  %1330 = vmatmul.mubr.f32.gmra.mrb[0].mxu0 %v1329
  %v1331 = vpop.f32.mrb[0].mxu0
  %v1332 = vadd.f32 %v1249, %v1331
  %v1333 = vpop.f32.mrb[0].mxu0
  %1334 = vdwg.mxu0
  %1335 = vmatprep.subr.mxu0 0.0
  %v1336 = vand.u32 %v1074, 4294901760
  %1337 = vmatpush1.xpose.msra.mxu0 %v1336
  %1338 = vmatprep.subr.mxu0 0.0
  %v1339 = vand.u32 %v1076, 4294901760
  %1340 = vmatpush1.xpose.msra.mxu0 %v1339
  %1341 = vmatprep.subr.mxu0 0.0
  %1342 = vmatpush1.xpose.msra.mxu0 0.0
  %1343 = vmatprep.subr.mxu0 0.0
  %1344 = vmatpush1.xpose.msra.mxu0 0.0
  %1345 = vmatprep.subr.mxu0 0.0
  %1346 = vmatpush1.xpose.msra.mxu0 0.0
  %1347 = vmatprep.subr.mxu0 0.0
  %1348 = vmatpush1.xpose.msra.mxu0 0.0
  %1349 = vmatprep.subr.mxu0 0.0
  %1350 = vmatpush1.xpose.msra.mxu0 0.0
  %1351 = vmatprep.subr.mxu0 0.0
  %1352 = vmatpush1.xpose.msra.mxu0 0.0
  %1353 = vmatprep.subr.mxu0 0.0
  %1354 = vmatpush1.xpose.msra.mxu0 0.0
  %1355 = vmatprep.subr.mxu0 0.0
  %1356 = vmatpush1.xpose.msra.mxu0 0.0
  %1357 = vmatprep.subr.mxu0 0.0
  %1358 = vmatpush1.xpose.msra.mxu0 0.0
  %1359 = vmatprep.subr.mxu0 0.0
  %1360 = vmatpush1.xpose.msra.mxu0 0.0
  %1361 = vmatprep.subr.mxu0 0.0
  %1362 = vmatpush1.xpose.msra.mxu0 0.0
  %1363 = vmatprep.subr.mxu0 0.0
  %1364 = vmatpush1.xpose.msra.mxu0 0.0
  %1365 = vmatprep.subr.mxu0 0.0
  %1366 = vmatpush1.xpose.msra.mxu0 0.0
  %1367 = vmatprep.subr.mxu0 0.0
  %1368 = vmatpush1.xpose.msra.mxu0 0.0
  %1369 = vmatprep.subr.mxu0 0.0
  %1370 = vmatpush1.xpose.msra.mxu0 0.0
  %1371 = vmatprep.subr.mxu0 0.0
  %1372 = vmatpush1.xpose.msra.mxu0 0.0
  %1373 = vmatprep.subr.mxu0 0.0
  %1374 = vmatpush1.xpose.msra.mxu0 0.0
  %1375 = vmatprep.subr.mxu0 0.0
  %1376 = vmatpush1.xpose.msra.mxu0 0.0
  %1377 = vmatprep.subr.mxu0 0.0
  %1378 = vmatpush1.xpose.msra.mxu0 0.0
  %1379 = vmatprep.subr.mxu0 0.0
  %1380 = vmatpush1.xpose.msra.mxu0 0.0
  %1381 = vmatprep.subr.mxu0 0.0
  %1382 = vmatpush1.xpose.msra.mxu0 0.0
  %1383 = vmatprep.subr.mxu0 0.0
  %1384 = vmatpush1.xpose.msra.mxu0 0.0
  %1385 = vmatprep.subr.mxu0 0.0
  %1386 = vmatpush1.xpose.msra.mxu0 0.0
  %1387 = vmatprep.subr.mxu0 0.0
  %1388 = vmatpush1.xpose.msra.mxu0 0.0
  %1389 = vmatprep.subr.mxu0 0.0
  %1390 = vmatpush1.xpose.msra.mxu0 0.0
  %1391 = vmatprep.subr.mxu0 0.0
  %1392 = vmatpush1.xpose.msra.mxu0 0.0
  %1393 = vmatprep.subr.mxu0 0.0
  %1394 = vmatpush1.xpose.msra.mxu0 0.0
  %1395 = vmatprep.subr.mxu0 0.0
  %1396 = vmatpush1.xpose.msra.mxu0 0.0
  %1397 = vmatprep.subr.mxu0 0.0
  %1398 = vmatpush1.xpose.msra.mxu0 0.0
  %1399 = vmatprep.subr.mxu0 0.0
  %1400 = vmatpush1.xpose.msra.mxu0 0.0
  %1401 = vmatprep.mubr.f32.mxu0 0.0
  %v1402 = vand.u32 %v1070, 4294901760
  %v1403 = vsub.f32 %v1070, %v1402
  %v1404 = vand.u32 %v1403, 4294901760
  %1405 = vmatmul.mubr.f32.gmra.mrb[0].mxu0 %v1404
  %v1406 = vpop.f32.mrb[0].mxu0
  %v1407 = vadd.f32 %v1325, %v1406
  %v1408 = vpop.f32.mrb[0].mxu0
  %1409 = vmatprep.mubr.f32.mxu0 0.0
  %v1410 = vand.u32 %v1072, 4294901760
  %v1411 = vsub.f32 %v1072, %v1410
  %v1412 = vand.u32 %v1411, 4294901760
  %1413 = vmatmul.mubr.f32.gmra.mrb[0].mxu0 %v1412
  %v1414 = vpop.f32.mrb[0].mxu0
  %v1415 = vadd.f32 %v1332, %v1414
  %v1416 = vpop.f32.mrb[0].mxu0
  %1417 = vdwg.mxu0
  %1418 = vmatprep.subr.mxu0 0.0
  %v1419 = vand.u32 %v1074, 4294901760
  %v1420 = vsub.f32 %v1074, %v1419
  %v1421 = vand.u32 %v1420, 4294901760
  %1422 = vmatpush1.xpose.msra.mxu0 %v1421
  %1423 = vmatprep.subr.mxu0 0.0
  %v1424 = vand.u32 %v1076, 4294901760
  %v1425 = vsub.f32 %v1076, %v1424
  %v1426 = vand.u32 %v1425, 4294901760
  %1427 = vmatpush1.xpose.msra.mxu0 %v1426
  %1428 = vmatprep.subr.mxu0 0.0
  %1429 = vmatpush1.xpose.msra.mxu0 0.0
  %1430 = vmatprep.subr.mxu0 0.0
  %1431 = vmatpush1.xpose.msra.mxu0 0.0
  %1432 = vmatprep.subr.mxu0 0.0
  %1433 = vmatpush1.xpose.msra.mxu0 0.0
  %1434 = vmatprep.subr.mxu0 0.0
  %1435 = vmatpush1.xpose.msra.mxu0 0.0
  %1436 = vmatprep.subr.mxu0 0.0
  %1437 = vmatpush1.xpose.msra.mxu0 0.0
  %1438 = vmatprep.subr.mxu0 0.0
  %1439 = vmatpush1.xpose.msra.mxu0 0.0
  %1440 = vmatprep.subr.mxu0 0.0
  %1441 = vmatpush1.xpose.msra.mxu0 0.0
  %1442 = vmatprep.subr.mxu0 0.0
  %1443 = vmatpush1.xpose.msra.mxu0 0.0
  %1444 = vmatprep.subr.mxu0 0.0
  %1445 = vmatpush1.xpose.msra.mxu0 0.0
  %1446 = vmatprep.subr.mxu0 0.0
  %1447 = vmatpush1.xpose.msra.mxu0 0.0
  %1448 = vmatprep.subr.mxu0 0.0
  %1449 = vmatpush1.xpose.msra.mxu0 0.0
  %1450 = vmatprep.subr.mxu0 0.0
  %1451 = vmatpush1.xpose.msra.mxu0 0.0
  %1452 = vmatprep.subr.mxu0 0.0
  %1453 = vmatpush1.xpose.msra.mxu0 0.0
  %1454 = vmatprep.subr.mxu0 0.0
  %1455 = vmatpush1.xpose.msra.mxu0 0.0
  %1456 = vmatprep.subr.mxu0 0.0
  %1457 = vmatpush1.xpose.msra.mxu0 0.0
  %1458 = vmatprep.subr.mxu0 0.0
  %1459 = vmatpush1.xpose.msra.mxu0 0.0
  %1460 = vmatprep.subr.mxu0 0.0
  %1461 = vmatpush1.xpose.msra.mxu0 0.0
  %1462 = vmatprep.subr.mxu0 0.0
  %1463 = vmatpush1.xpose.msra.mxu0 0.0
  %1464 = vmatprep.subr.mxu0 0.0
  %1465 = vmatpush1.xpose.msra.mxu0 0.0
  %1466 = vmatprep.subr.mxu0 0.0
  %1467 = vmatpush1.xpose.msra.mxu0 0.0
  %1468 = vmatprep.subr.mxu0 0.0
  %1469 = vmatpush1.xpose.msra.mxu0 0.0
  %1470 = vmatprep.subr.mxu0 0.0
  %1471 = vmatpush1.xpose.msra.mxu0 0.0
  %1472 = vmatprep.subr.mxu0 0.0
  %1473 = vmatpush1.xpose.msra.mxu0 0.0
  %1474 = vmatprep.subr.mxu0 0.0
  %1475 = vmatpush1.xpose.msra.mxu0 0.0
  %1476 = vmatprep.subr.mxu0 0.0
  %1477 = vmatpush1.xpose.msra.mxu0 0.0
  %1478 = vmatprep.subr.mxu0 0.0
  %1479 = vmatpush1.xpose.msra.mxu0 0.0
  %1480 = vmatprep.subr.mxu0 0.0
  %1481 = vmatpush1.xpose.msra.mxu0 0.0
  %1482 = vmatprep.subr.mxu0 0.0
  %1483 = vmatpush1.xpose.msra.mxu0 0.0
  %1484 = vmatprep.subr.mxu0 0.0
  %1485 = vmatpush1.xpose.msra.mxu0 0.0
  %1486 = vmatprep.subr.mxu0 0.0
  %1487 = vmatpush1.xpose.msra.mxu0 0.0
  %1488 = vmatprep.mubr.f32.mxu0 0.0
  %v1489 = vand.u32 %v1070, 4294901760
  %1490 = vmatmul.mubr.f32.gmra.mrb[0].mxu0 %v1489
  %v1491 = vpop.f32.mrb[0].mxu0
  %v1492 = vadd.f32 %v1407, %v1491
  %v1493 = vpop.f32.mrb[0].mxu0
  %1494 = vmatprep.mubr.f32.mxu0 0.0
  %v1495 = vand.u32 %v1072, 4294901760
  %1496 = vmatmul.mubr.f32.gmra.mrb[0].mxu0 %v1495
  %v1497 = vpop.f32.mrb[0].mxu0
  %v1498 = vadd.f32 %v1415, %v1497
  %v1499 = vpop.f32.mrb[0].mxu0
  %1500 = vdwg.mxu0
  %1501 = vmatprep.subr.mxu0 0.0
  %v1502 = vand.u32 %v1074, 4294901760
  %1503 = vmatpush1.xpose.msra.mxu0 %v1502
  %1504 = vmatprep.subr.mxu0 0.0
  %v1505 = vand.u32 %v1076, 4294901760
  %1506 = vmatpush1.xpose.msra.mxu0 %v1505
  %1507 = vmatprep.subr.mxu0 0.0
  %1508 = vmatpush1.xpose.msra.mxu0 0.0
  %1509 = vmatprep.subr.mxu0 0.0
  %1510 = vmatpush1.xpose.msra.mxu0 0.0
  %1511 = vmatprep.subr.mxu0 0.0
  %1512 = vmatpush1.xpose.msra.mxu0 0.0
  %1513 = vmatprep.subr.mxu0 0.0
  %1514 = vmatpush1.xpose.msra.mxu0 0.0
  %1515 = vmatprep.subr.mxu0 0.0
  %1516 = vmatpush1.xpose.msra.mxu0 0.0
  %1517 = vmatprep.subr.mxu0 0.0
  %1518 = vmatpush1.xpose.msra.mxu0 0.0
  %1519 = vmatprep.subr.mxu0 0.0
  %1520 = vmatpush1.xpose.msra.mxu0 0.0
  %1521 = vmatprep.subr.mxu0 0.0
  %1522 = vmatpush1.xpose.msra.mxu0 0.0
  %1523 = vmatprep.subr.mxu0 0.0
  %1524 = vmatpush1.xpose.msra.mxu0 0.0
  %1525 = vmatprep.subr.mxu0 0.0
  %1526 = vmatpush1.xpose.msra.mxu0 0.0
  %1527 = vmatprep.subr.mxu0 0.0
  %1528 = vmatpush1.xpose.msra.mxu0 0.0
  %1529 = vmatprep.subr.mxu0 0.0
  %1530 = vmatpush1.xpose.msra.mxu0 0.0
  %1531 = vmatprep.subr.mxu0 0.0
  %1532 = vmatpush1.xpose.msra.mxu0 0.0
  %1533 = vmatprep.subr.mxu0 0.0
  %1534 = vmatpush1.xpose.msra.mxu0 0.0
  %1535 = vmatprep.subr.mxu0 0.0
  %1536 = vmatpush1.xpose.msra.mxu0 0.0
  %1537 = vmatprep.subr.mxu0 0.0
  %1538 = vmatpush1.xpose.msra.mxu0 0.0
  %1539 = vmatprep.subr.mxu0 0.0
  %1540 = vmatpush1.xpose.msra.mxu0 0.0
  %1541 = vmatprep.subr.mxu0 0.0
  %1542 = vmatpush1.xpose.msra.mxu0 0.0
  %1543 = vmatprep.subr.mxu0 0.0
  %1544 = vmatpush1.xpose.msra.mxu0 0.0
  %1545 = vmatprep.subr.mxu0 0.0
  %1546 = vmatpush1.xpose.msra.mxu0 0.0
  %1547 = vmatprep.subr.mxu0 0.0
  %1548 = vmatpush1.xpose.msra.mxu0 0.0
  %1549 = vmatprep.subr.mxu0 0.0
  %1550 = vmatpush1.xpose.msra.mxu0 0.0
  %1551 = vmatprep.subr.mxu0 0.0
  %1552 = vmatpush1.xpose.msra.mxu0 0.0
  %1553 = vmatprep.subr.mxu0 0.0
  %1554 = vmatpush1.xpose.msra.mxu0 0.0
  %1555 = vmatprep.subr.mxu0 0.0
  %1556 = vmatpush1.xpose.msra.mxu0 0.0
  %1557 = vmatprep.subr.mxu0 0.0
  %1558 = vmatpush1.xpose.msra.mxu0 0.0
  %1559 = vmatprep.subr.mxu0 0.0
  %1560 = vmatpush1.xpose.msra.mxu0 0.0
  %1561 = vmatprep.subr.mxu0 0.0
  %1562 = vmatpush1.xpose.msra.mxu0 0.0
  %1563 = vmatprep.subr.mxu0 0.0
  %1564 = vmatpush1.xpose.msra.mxu0 0.0
  %1565 = vmatprep.subr.mxu0 0.0
  %1566 = vmatpush1.xpose.msra.mxu0 0.0
  %1567 = vmatprep.mubr.f32.mxu0 0.0
  %v1568 = vand.u32 %v1070, 4294901760
  %1569 = vmatmul.mubr.f32.gmra.mrb[0].mxu0 %v1568
  %v1570 = vpop.f32.mrb[0].mxu0
  %v1571 = vadd.f32 %v1492, %v1570
  %v1572 = vpop.f32.mrb[0].mxu0
  %1573 = vmatprep.mubr.f32.mxu0 0.0
  %v1574 = vand.u32 %v1072, 4294901760
  %1575 = vmatmul.mubr.f32.gmra.mrb[0].mxu0 %v1574
  %v1576 = vpop.f32.mrb[0].mxu0
  %v1577 = vadd.f32 %v1498, %v1576
  %v1578 = vpop.f32.mrb[0].mxu0
  %1579 = vdwg.mxu0
  %vm1580 = vcmask 72704
  %v1581 = vsel %vm1580, %v1571, -inf
  %1582 = vmax.xlane.f32.xlu0 %v1581
  %v1583 = vpop.xlane.xlu0 %1582
  %vm1584 = vcmask 65536
  %v1585 = vsel %vm1584, %v1577, -inf
  %1586 = vmax.xlane.f32.xlu0 %v1585
  %v1587 = vpop.xlane.xlu0 %1586
  %v1588 = vsub.f32 %v1571, %v1583
  %v1589 = vsub.f32 %v1577, %v1587
  %v1590 = vmul.f32 %v1588, 1.442695
  %v1591 = vpow.pop %v1590
  %v1592 = vmul.f32 %v1589, 1.442695
  %v1593 = vpow.pop %v1592
  %v1594 = vsel %vm1580, %v1591, 0.0
  %1595 = vadd.xlane.f32.xlu0 %v1594
  %v1596 = vpop.xlane.xlu0 %1595
  %v1597 = vsel %vm1584, %v1593, 0.0
  %1598 = vadd.xlane.f32.xlu0 %v1597
  %v1599 = vpop.xlane.xlu0 %1598
  %v1600 = vrcp.pop %v1596
  %v1601 = vmul.f32 %v1591, %v1600
  %v1602 = vrcp.pop %v1599
  %v1603 = vmul.f32 %v1593, %v1602
  %v1605 = vsel %vm1580, %v1601, 0
  %v1608 = vsel %vm1580, %v1603, 0
  %vm1610 = vcmask 1040384
  %v1612 = vsel %vm1610, %v1054, 0
  %1614 = vmatprep.subr.mxu0 0.0
  %v1615 = vand.u32 %v1047, 4294901760
  %1616 = vmatpush1.msra.mxu0 %v1615
  %1617 = vmatprep.subr.mxu0 0.0
  %v1618 = vand.u32 %v1612, 4294901760
  %1619 = vmatpush1.msra.mxu0 %v1618
  %1620 = vmatprep.subr.mxu0 0.0
  %1621 = vmatpush1.msra.mxu0 0.0
  %1622 = vmatprep.subr.mxu0 0.0
  %1623 = vmatpush1.msra.mxu0 0.0
  %1624 = vmatprep.subr.mxu0 0.0
  %1625 = vmatpush1.msra.mxu0 0.0
  %1626 = vmatprep.subr.mxu0 0.0
  %1627 = vmatpush1.msra.mxu0 0.0
  %1628 = vmatprep.subr.mxu0 0.0
  %1629 = vmatpush1.msra.mxu0 0.0
  %1630 = vmatprep.subr.mxu0 0.0
  %1631 = vmatpush1.msra.mxu0 0.0
  %1632 = vmatprep.subr.mxu0 0.0
  %1633 = vmatpush1.msra.mxu0 0.0
  %1634 = vmatprep.subr.mxu0 0.0
  %1635 = vmatpush1.msra.mxu0 0.0
  %1636 = vmatprep.subr.mxu0 0.0
  %1637 = vmatpush1.msra.mxu0 0.0
  %1638 = vmatprep.subr.mxu0 0.0
  %1639 = vmatpush1.msra.mxu0 0.0
  %1640 = vmatprep.subr.mxu0 0.0
  %1641 = vmatpush1.msra.mxu0 0.0
  %1642 = vmatprep.subr.mxu0 0.0
  %1643 = vmatpush1.msra.mxu0 0.0
  %1644 = vmatprep.subr.mxu0 0.0
  %1645 = vmatpush1.msra.mxu0 0.0
  %1646 = vmatprep.subr.mxu0 0.0
  %1647 = vmatpush1.msra.mxu0 0.0
  %1648 = vmatprep.subr.mxu0 0.0
  %1649 = vmatpush1.msra.mxu0 0.0
  %1650 = vmatprep.subr.mxu0 0.0
  %1651 = vmatpush1.msra.mxu0 0.0
  %1652 = vmatprep.subr.mxu0 0.0
  %1653 = vmatpush1.msra.mxu0 0.0
  %1654 = vmatprep.subr.mxu0 0.0
  %1655 = vmatpush1.msra.mxu0 0.0
  %1656 = vmatprep.subr.mxu0 0.0
  %1657 = vmatpush1.msra.mxu0 0.0
  %1658 = vmatprep.subr.mxu0 0.0
  %1659 = vmatpush1.msra.mxu0 0.0
  %1660 = vmatprep.subr.mxu0 0.0
  %1661 = vmatpush1.msra.mxu0 0.0
  %1662 = vmatprep.subr.mxu0 0.0
  %1663 = vmatpush1.msra.mxu0 0.0
  %1664 = vmatprep.subr.mxu0 0.0
  %1665 = vmatpush1.msra.mxu0 0.0
  %1666 = vmatprep.subr.mxu0 0.0
  %1667 = vmatpush1.msra.mxu0 0.0
  %1668 = vmatprep.subr.mxu0 0.0
  %1669 = vmatpush1.msra.mxu0 0.0
  %1670 = vmatprep.subr.mxu0 0.0
  %1671 = vmatpush1.msra.mxu0 0.0
  %1672 = vmatprep.subr.mxu0 0.0
  %1673 = vmatpush1.msra.mxu0 0.0
  %1674 = vmatprep.subr.mxu0 0.0
  %1675 = vmatpush1.msra.mxu0 0.0
  %1676 = vmatprep.subr.mxu0 0.0
  %1677 = vmatpush1.msra.mxu0 0.0
  %1678 = vmatprep.subr.mxu0 0.0
  %1679 = vmatpush1.msra.mxu0 0.0
  %1680 = vmatprep.mubr.f32.mxu0 0.0
  %v1681 = vand.u32 %v1605, 4294901760
  %v1682 = vsub.f32 %v1605, %v1681
  %v1683 = vand.u32 %v1682, 4294901760
  %v1684 = vsub.f32 %v1682, %v1683
  %v1685 = vand.u32 %v1684, 4294901760
  %1686 = vmatmul.mubr.f32.gmra.mrb[0].mxu0 %v1685
  %v1687 = vpop.f32.mrb[0].mxu0
  %v1688 = vadd.f32 0.0, %v1687
  %v1689 = vpop.f32.mrb[0].mxu0
  %1690 = vmatprep.mubr.f32.mxu0 0.0
  %v1691 = vand.u32 %v1608, 4294901760
  %v1692 = vsub.f32 %v1608, %v1691
  %v1693 = vand.u32 %v1692, 4294901760
  %v1694 = vsub.f32 %v1692, %v1693
  %v1695 = vand.u32 %v1694, 4294901760
  %1696 = vmatmul.mubr.f32.gmra.mrb[0].mxu0 %v1695
  %v1697 = vpop.f32.mrb[0].mxu0
  %v1698 = vadd.f32 0.0, %v1697
  %v1699 = vpop.f32.mrb[0].mxu0
  %1700 = vdwg.mxu0
  %1701 = vmatprep.subr.mxu0 0.0
  %v1702 = vand.u32 %v1047, 4294901760
  %v1703 = vsub.f32 %v1047, %v1702
  %v1704 = vand.u32 %v1703, 4294901760
  %v1705 = vsub.f32 %v1703, %v1704
  %v1706 = vand.u32 %v1705, 4294901760
  %1707 = vmatpush1.msra.mxu0 %v1706
  %1708 = vmatprep.subr.mxu0 0.0
  %v1709 = vand.u32 %v1612, 4294901760
  %v1710 = vsub.f32 %v1612, %v1709
  %v1711 = vand.u32 %v1710, 4294901760
  %v1712 = vsub.f32 %v1710, %v1711
  %v1713 = vand.u32 %v1712, 4294901760
  %1714 = vmatpush1.msra.mxu0 %v1713
  %1715 = vmatprep.subr.mxu0 0.0
  %1716 = vmatpush1.msra.mxu0 0.0
  %1717 = vmatprep.subr.mxu0 0.0
  %1718 = vmatpush1.msra.mxu0 0.0
  %1719 = vmatprep.subr.mxu0 0.0
  %1720 = vmatpush1.msra.mxu0 0.0
  %1721 = vmatprep.subr.mxu0 0.0
  %1722 = vmatpush1.msra.mxu0 0.0
  %1723 = vmatprep.subr.mxu0 0.0
  %1724 = vmatpush1.msra.mxu0 0.0
  %1725 = vmatprep.subr.mxu0 0.0
  %1726 = vmatpush1.msra.mxu0 0.0
  %1727 = vmatprep.subr.mxu0 0.0
  %1728 = vmatpush1.msra.mxu0 0.0
  %1729 = vmatprep.subr.mxu0 0.0
  %1730 = vmatpush1.msra.mxu0 0.0
  %1731 = vmatprep.subr.mxu0 0.0
  %1732 = vmatpush1.msra.mxu0 0.0
  %1733 = vmatprep.subr.mxu0 0.0
  %1734 = vmatpush1.msra.mxu0 0.0
  %1735 = vmatprep.subr.mxu0 0.0
  %1736 = vmatpush1.msra.mxu0 0.0
  %1737 = vmatprep.subr.mxu0 0.0
  %1738 = vmatpush1.msra.mxu0 0.0
  %1739 = vmatprep.subr.mxu0 0.0
  %1740 = vmatpush1.msra.mxu0 0.0
  %1741 = vmatprep.subr.mxu0 0.0
  %1742 = vmatpush1.msra.mxu0 0.0
  %1743 = vmatprep.subr.mxu0 0.0
  %1744 = vmatpush1.msra.mxu0 0.0
  %1745 = vmatprep.subr.mxu0 0.0
  %1746 = vmatpush1.msra.mxu0 0.0
  %1747 = vmatprep.subr.mxu0 0.0
  %1748 = vmatpush1.msra.mxu0 0.0
  %1749 = vmatprep.subr.mxu0 0.0
  %1750 = vmatpush1.msra.mxu0 0.0
  %1751 = vmatprep.subr.mxu0 0.0
  %1752 = vmatpush1.msra.mxu0 0.0
  %1753 = vmatprep.subr.mxu0 0.0
  %1754 = vmatpush1.msra.mxu0 0.0
  %1755 = vmatprep.subr.mxu0 0.0
  %1756 = vmatpush1.msra.mxu0 0.0
  %1757 = vmatprep.subr.mxu0 0.0
  %1758 = vmatpush1.msra.mxu0 0.0
  %1759 = vmatprep.subr.mxu0 0.0
  %1760 = vmatpush1.msra.mxu0 0.0
  %1761 = vmatprep.subr.mxu0 0.0
  %1762 = vmatpush1.msra.mxu0 0.0
  %1763 = vmatprep.subr.mxu0 0.0
  %1764 = vmatpush1.msra.mxu0 0.0
  %1765 = vmatprep.subr.mxu0 0.0
  %1766 = vmatpush1.msra.mxu0 0.0
  %1767 = vmatprep.subr.mxu0 0.0
  %1768 = vmatpush1.msra.mxu0 0.0
  %1769 = vmatprep.subr.mxu0 0.0
  %1770 = vmatpush1.msra.mxu0 0.0
  %1771 = vmatprep.subr.mxu0 0.0
  %1772 = vmatpush1.msra.mxu0 0.0
  %1773 = vmatprep.subr.mxu0 0.0
  %1774 = vmatpush1.msra.mxu0 0.0
  %1775 = vmatprep.mubr.f32.mxu0 0.0
  %v1776 = vand.u32 %v1605, 4294901760
  %1777 = vmatmul.mubr.f32.gmra.mrb[0].mxu0 %v1776
  %v1778 = vpop.f32.mrb[0].mxu0
  %v1779 = vadd.f32 %v1688, %v1778
  %v1780 = vpop.f32.mrb[0].mxu0
  %1781 = vmatprep.mubr.f32.mxu0 0.0
  %v1782 = vand.u32 %v1608, 4294901760
  %1783 = vmatmul.mubr.f32.gmra.mrb[0].mxu0 %v1782
  %v1784 = vpop.f32.mrb[0].mxu0
  %v1785 = vadd.f32 %v1698, %v1784
  %v1786 = vpop.f32.mrb[0].mxu0
  %1787 = vdwg.mxu0
  %1788 = vmatprep.subr.mxu0 0.0
  %v1789 = vand.u32 %v1047, 4294901760
  %v1790 = vsub.f32 %v1047, %v1789
  %1791 = vmatpush1.msra.mxu0 %v1790
  %1792 = vmatprep.subr.mxu0 0.0
  %v1793 = vand.u32 %v1612, 4294901760
  %v1794 = vsub.f32 %v1612, %v1793
  %1795 = vmatpush1.msra.mxu0 %v1794
  %1796 = vmatprep.subr.mxu0 0.0
  %1797 = vmatpush1.msra.mxu0 0.0
  %1798 = vmatprep.subr.mxu0 0.0
  %1799 = vmatpush1.msra.mxu0 0.0
  %1800 = vmatprep.subr.mxu0 0.0
  %1801 = vmatpush1.msra.mxu0 0.0
  %1802 = vmatprep.subr.mxu0 0.0
  %1803 = vmatpush1.msra.mxu0 0.0
  %1804 = vmatprep.subr.mxu0 0.0
  %1805 = vmatpush1.msra.mxu0 0.0
  %1806 = vmatprep.subr.mxu0 0.0
  %1807 = vmatpush1.msra.mxu0 0.0
  %1808 = vmatprep.subr.mxu0 0.0
  %1809 = vmatpush1.msra.mxu0 0.0
  %1810 = vmatprep.subr.mxu0 0.0
  %1811 = vmatpush1.msra.mxu0 0.0
  %1812 = vmatprep.subr.mxu0 0.0
  %1813 = vmatpush1.msra.mxu0 0.0
  %1814 = vmatprep.subr.mxu0 0.0
  %1815 = vmatpush1.msra.mxu0 0.0
  %1816 = vmatprep.subr.mxu0 0.0
  %1817 = vmatpush1.msra.mxu0 0.0
  %1818 = vmatprep.subr.mxu0 0.0
  %1819 = vmatpush1.msra.mxu0 0.0
  %1820 = vmatprep.subr.mxu0 0.0
  %1821 = vmatpush1.msra.mxu0 0.0
  %1822 = vmatprep.subr.mxu0 0.0
  %1823 = vmatpush1.msra.mxu0 0.0
  %1824 = vmatprep.subr.mxu0 0.0
  %1825 = vmatpush1.msra.mxu0 0.0
  %1826 = vmatprep.subr.mxu0 0.0
  %1827 = vmatpush1.msra.mxu0 0.0
  %1828 = vmatprep.subr.mxu0 0.0
  %1829 = vmatpush1.msra.mxu0 0.0
  %1830 = vmatprep.subr.mxu0 0.0
  %1831 = vmatpush1.msra.mxu0 0.0
  %1832 = vmatprep.subr.mxu0 0.0
  %1833 = vmatpush1.msra.mxu0 0.0
  %1834 = vmatprep.subr.mxu0 0.0
  %1835 = vmatpush1.msra.mxu0 0.0
  %1836 = vmatprep.subr.mxu0 0.0
  %1837 = vmatpush1.msra.mxu0 0.0
  %1838 = vmatprep.subr.mxu0 0.0
  %1839 = vmatpush1.msra.mxu0 0.0
  %1840 = vmatprep.subr.mxu0 0.0
  %1841 = vmatpush1.msra.mxu0 0.0
  %1842 = vmatprep.subr.mxu0 0.0
  %1843 = vmatpush1.msra.mxu0 0.0
  %1844 = vmatprep.subr.mxu0 0.0
  %1845 = vmatpush1.msra.mxu0 0.0
  %1846 = vmatprep.subr.mxu0 0.0
  %1847 = vmatpush1.msra.mxu0 0.0
  %1848 = vmatprep.subr.mxu0 0.0
  %1849 = vmatpush1.msra.mxu0 0.0
  %1850 = vmatprep.subr.mxu0 0.0
  %1851 = vmatpush1.msra.mxu0 0.0
  %1852 = vmatprep.subr.mxu0 0.0
  %1853 = vmatpush1.msra.mxu0 0.0
  %1854 = vmatprep.subr.mxu0 0.0
  %1855 = vmatpush1.msra.mxu0 0.0
  %1856 = vmatprep.mubr.f32.mxu0 0.0
  %v1857 = vand.u32 %v1605, 4294901760
  %v1858 = vsub.f32 %v1605, %v1857
  %1859 = vmatmul.mubr.f32.gmra.mrb[0].mxu0 %v1858
  %v1860 = vpop.f32.mrb[0].mxu0
  %v1861 = vadd.f32 %v1779, %v1860
  %v1862 = vpop.f32.mrb[0].mxu0
  %1863 = vmatprep.mubr.f32.mxu0 0.0
  %v1864 = vand.u32 %v1608, 4294901760
  %v1865 = vsub.f32 %v1608, %v1864
  %1866 = vmatmul.mubr.f32.gmra.mrb[0].mxu0 %v1865
  %v1867 = vpop.f32.mrb[0].mxu0
  %v1868 = vadd.f32 %v1785, %v1867
  %v1869 = vpop.f32.mrb[0].mxu0
  %1870 = vdwg.mxu0
  %1871 = vmatprep.subr.mxu0 0.0
  %v1872 = vand.u32 %v1047, 4294901760
  %1873 = vmatpush1.msra.mxu0 %v1872
  %1874 = vmatprep.subr.mxu0 0.0
  %v1875 = vand.u32 %v1612, 4294901760
  %1876 = vmatpush1.msra.mxu0 %v1875
  %1877 = vmatprep.subr.mxu0 0.0
  %1878 = vmatpush1.msra.mxu0 0.0
  %1879 = vmatprep.subr.mxu0 0.0
  %1880 = vmatpush1.msra.mxu0 0.0
  %1881 = vmatprep.subr.mxu0 0.0
  %1882 = vmatpush1.msra.mxu0 0.0
  %1883 = vmatprep.subr.mxu0 0.0
  %1884 = vmatpush1.msra.mxu0 0.0
  %1885 = vmatprep.subr.mxu0 0.0
  %1886 = vmatpush1.msra.mxu0 0.0
  %1887 = vmatprep.subr.mxu0 0.0
  %1888 = vmatpush1.msra.mxu0 0.0
  %1889 = vmatprep.subr.mxu0 0.0
  %1890 = vmatpush1.msra.mxu0 0.0
  %1891 = vmatprep.subr.mxu0 0.0
  %1892 = vmatpush1.msra.mxu0 0.0
  %1893 = vmatprep.subr.mxu0 0.0
  %1894 = vmatpush1.msra.mxu0 0.0
  %1895 = vmatprep.subr.mxu0 0.0
  %1896 = vmatpush1.msra.mxu0 0.0
  %1897 = vmatprep.subr.mxu0 0.0
  %1898 = vmatpush1.msra.mxu0 0.0
  %1899 = vmatprep.subr.mxu0 0.0
  %1900 = vmatpush1.msra.mxu0 0.0
  %1901 = vmatprep.subr.mxu0 0.0
  %1902 = vmatpush1.msra.mxu0 0.0
  %1903 = vmatprep.subr.mxu0 0.0
  %1904 = vmatpush1.msra.mxu0 0.0
  %1905 = vmatprep.subr.mxu0 0.0
  %1906 = vmatpush1.msra.mxu0 0.0
  %1907 = vmatprep.subr.mxu0 0.0
  %1908 = vmatpush1.msra.mxu0 0.0
  %1909 = vmatprep.subr.mxu0 0.0
  %1910 = vmatpush1.msra.mxu0 0.0
  %1911 = vmatprep.subr.mxu0 0.0
  %1912 = vmatpush1.msra.mxu0 0.0
  %1913 = vmatprep.subr.mxu0 0.0
  %1914 = vmatpush1.msra.mxu0 0.0
  %1915 = vmatprep.subr.mxu0 0.0
  %1916 = vmatpush1.msra.mxu0 0.0
  %1917 = vmatprep.subr.mxu0 0.0
  %1918 = vmatpush1.msra.mxu0 0.0
  %1919 = vmatprep.subr.mxu0 0.0
  %1920 = vmatpush1.msra.mxu0 0.0
  %1921 = vmatprep.subr.mxu0 0.0
  %1922 = vmatpush1.msra.mxu0 0.0
  %1923 = vmatprep.subr.mxu0 0.0
  %1924 = vmatpush1.msra.mxu0 0.0
  %1925 = vmatprep.subr.mxu0 0.0
  %1926 = vmatpush1.msra.mxu0 0.0
  %1927 = vmatprep.subr.mxu0 0.0
  %1928 = vmatpush1.msra.mxu0 0.0
  %1929 = vmatprep.subr.mxu0 0.0
  %1930 = vmatpush1.msra.mxu0 0.0
  %1931 = vmatprep.subr.mxu0 0.0
  %1932 = vmatpush1.msra.mxu0 0.0
  %1933 = vmatprep.subr.mxu0 0.0
  %1934 = vmatpush1.msra.mxu0 0.0
  %1935 = vmatprep.subr.mxu0 0.0
  %1936 = vmatpush1.msra.mxu0 0.0
  %1937 = vmatprep.mubr.f32.mxu0 0.0
  %v1938 = vand.u32 %v1605, 4294901760
  %v1939 = vsub.f32 %v1605, %v1938
  %v1940 = vand.u32 %v1939, 4294901760
  %1941 = vmatmul.mubr.f32.gmra.mrb[0].mxu0 %v1940
  %v1942 = vpop.f32.mrb[0].mxu0
  %v1943 = vadd.f32 %v1861, %v1942
  %v1944 = vpop.f32.mrb[0].mxu0
  %1945 = vmatprep.mubr.f32.mxu0 0.0
  %v1946 = vand.u32 %v1608, 4294901760
  %v1947 = vsub.f32 %v1608, %v1946
  %v1948 = vand.u32 %v1947, 4294901760
  %1949 = vmatmul.mubr.f32.gmra.mrb[0].mxu0 %v1948
  %v1950 = vpop.f32.mrb[0].mxu0
  %v1951 = vadd.f32 %v1868, %v1950
  %v1952 = vpop.f32.mrb[0].mxu0
  %1953 = vdwg.mxu0
  %1954 = vmatprep.subr.mxu0 0.0
  %v1955 = vand.u32 %v1047, 4294901760
  %v1956 = vsub.f32 %v1047, %v1955
  %v1957 = vand.u32 %v1956, 4294901760
  %1958 = vmatpush1.msra.mxu0 %v1957
  %1959 = vmatprep.subr.mxu0 0.0
  %v1960 = vand.u32 %v1612, 4294901760
  %v1961 = vsub.f32 %v1612, %v1960
  %v1962 = vand.u32 %v1961, 4294901760
  %1963 = vmatpush1.msra.mxu0 %v1962
  %1964 = vmatprep.subr.mxu0 0.0
  %1965 = vmatpush1.msra.mxu0 0.0
  %1966 = vmatprep.subr.mxu0 0.0
  %1967 = vmatpush1.msra.mxu0 0.0
  %1968 = vmatprep.subr.mxu0 0.0
  %1969 = vmatpush1.msra.mxu0 0.0
  %1970 = vmatprep.subr.mxu0 0.0
  %1971 = vmatpush1.msra.mxu0 0.0
  %1972 = vmatprep.subr.mxu0 0.0
  %1973 = vmatpush1.msra.mxu0 0.0
  %1974 = vmatprep.subr.mxu0 0.0
  %1975 = vmatpush1.msra.mxu0 0.0
  %1976 = vmatprep.subr.mxu0 0.0
  %1977 = vmatpush1.msra.mxu0 0.0
  %1978 = vmatprep.subr.mxu0 0.0
  %1979 = vmatpush1.msra.mxu0 0.0
  %1980 = vmatprep.subr.mxu0 0.0
  %1981 = vmatpush1.msra.mxu0 0.0
  %1982 = vmatprep.subr.mxu0 0.0
  %1983 = vmatpush1.msra.mxu0 0.0
  %1984 = vmatprep.subr.mxu0 0.0
  %1985 = vmatpush1.msra.mxu0 0.0
  %1986 = vmatprep.subr.mxu0 0.0
  %1987 = vmatpush1.msra.mxu0 0.0
  %1988 = vmatprep.subr.mxu0 0.0
  %1989 = vmatpush1.msra.mxu0 0.0
  %1990 = vmatprep.subr.mxu0 0.0
  %1991 = vmatpush1.msra.mxu0 0.0
  %1992 = vmatprep.subr.mxu0 0.0
  %1993 = vmatpush1.msra.mxu0 0.0
  %1994 = vmatprep.subr.mxu0 0.0
  %1995 = vmatpush1.msra.mxu0 0.0
  %1996 = vmatprep.subr.mxu0 0.0
  %1997 = vmatpush1.msra.mxu0 0.0
  %1998 = vmatprep.subr.mxu0 0.0
  %1999 = vmatpush1.msra.mxu0 0.0
  %2000 = vmatprep.subr.mxu0 0.0
  %2001 = vmatpush1.msra.mxu0 0.0
  %2002 = vmatprep.subr.mxu0 0.0
  %2003 = vmatpush1.msra.mxu0 0.0
  %2004 = vmatprep.subr.mxu0 0.0
  %2005 = vmatpush1.msra.mxu0 0.0
  %2006 = vmatprep.subr.mxu0 0.0
  %2007 = vmatpush1.msra.mxu0 0.0
  %2008 = vmatprep.subr.mxu0 0.0
  %2009 = vmatpush1.msra.mxu0 0.0
  %2010 = vmatprep.subr.mxu0 0.0
  %2011 = vmatpush1.msra.mxu0 0.0
  %2012 = vmatprep.subr.mxu0 0.0
  %2013 = vmatpush1.msra.mxu0 0.0
  %2014 = vmatprep.subr.mxu0 0.0
  %2015 = vmatpush1.msra.mxu0 0.0
  %2016 = vmatprep.subr.mxu0 0.0
  %2017 = vmatpush1.msra.mxu0 0.0
  %2018 = vmatprep.subr.mxu0 0.0
  %2019 = vmatpush1.msra.mxu0 0.0
  %2020 = vmatprep.subr.mxu0 0.0
  %2021 = vmatpush1.msra.mxu0 0.0
  %2022 = vmatprep.subr.mxu0 0.0
  %2023 = vmatpush1.msra.mxu0 0.0
  %2024 = vmatprep.mubr.f32.mxu0 0.0
  %v2025 = vand.u32 %v1605, 4294901760
  %2026 = vmatmul.mubr.f32.gmra.mrb[0].mxu0 %v2025
  %v2027 = vpop.f32.mrb[0].mxu0
  %v2028 = vadd.f32 %v1943, %v2027
  %v2029 = vpop.f32.mrb[0].mxu0
  %2030 = vmatprep.mubr.f32.mxu0 0.0
  %v2031 = vand.u32 %v1608, 4294901760
  %2032 = vmatmul.mubr.f32.gmra.mrb[0].mxu0 %v2031
  %v2033 = vpop.f32.mrb[0].mxu0
  %v2034 = vadd.f32 %v1951, %v2033
  %v2035 = vpop.f32.mrb[0].mxu0
  %2036 = vdwg.mxu0
  %2037 = vmatprep.subr.mxu0 0.0
  %v2038 = vand.u32 %v1047, 4294901760
  %2039 = vmatpush1.msra.mxu0 %v2038
  %2040 = vmatprep.subr.mxu0 0.0
  %v2041 = vand.u32 %v1612, 4294901760
  %2042 = vmatpush1.msra.mxu0 %v2041
  %2043 = vmatprep.subr.mxu0 0.0
  %2044 = vmatpush1.msra.mxu0 0.0
  %2045 = vmatprep.subr.mxu0 0.0
  %2046 = vmatpush1.msra.mxu0 0.0
  %2047 = vmatprep.subr.mxu0 0.0
  %2048 = vmatpush1.msra.mxu0 0.0
  %2049 = vmatprep.subr.mxu0 0.0
  %2050 = vmatpush1.msra.mxu0 0.0
  %2051 = vmatprep.subr.mxu0 0.0
  %2052 = vmatpush1.msra.mxu0 0.0
  %2053 = vmatprep.subr.mxu0 0.0
  %2054 = vmatpush1.msra.mxu0 0.0
  %2055 = vmatprep.subr.mxu0 0.0
  %2056 = vmatpush1.msra.mxu0 0.0
  %2057 = vmatprep.subr.mxu0 0.0
  %2058 = vmatpush1.msra.mxu0 0.0
  %2059 = vmatprep.subr.mxu0 0.0
  %2060 = vmatpush1.msra.mxu0 0.0
  %2061 = vmatprep.subr.mxu0 0.0
  %2062 = vmatpush1.msra.mxu0 0.0
  %2063 = vmatprep.subr.mxu0 0.0
  %2064 = vmatpush1.msra.mxu0 0.0
  %2065 = vmatprep.subr.mxu0 0.0
  %2066 = vmatpush1.msra.mxu0 0.0
  %2067 = vmatprep.subr.mxu0 0.0
  %2068 = vmatpush1.msra.mxu0 0.0
  %2069 = vmatprep.subr.mxu0 0.0
  %2070 = vmatpush1.msra.mxu0 0.0
  %2071 = vmatprep.subr.mxu0 0.0
  %2072 = vmatpush1.msra.mxu0 0.0
  %2073 = vmatprep.subr.mxu0 0.0
  %2074 = vmatpush1.msra.mxu0 0.0
  %2075 = vmatprep.subr.mxu0 0.0
  %2076 = vmatpush1.msra.mxu0 0.0
  %2077 = vmatprep.subr.mxu0 0.0
  %2078 = vmatpush1.msra.mxu0 0.0
  %2079 = vmatprep.subr.mxu0 0.0
  %2080 = vmatpush1.msra.mxu0 0.0
  %2081 = vmatprep.subr.mxu0 0.0
  %2082 = vmatpush1.msra.mxu0 0.0
  %2083 = vmatprep.subr.mxu0 0.0
  %2084 = vmatpush1.msra.mxu0 0.0
  %2085 = vmatprep.subr.mxu0 0.0
  %2086 = vmatpush1.msra.mxu0 0.0
  %2087 = vmatprep.subr.mxu0 0.0
  %2088 = vmatpush1.msra.mxu0 0.0
  %2089 = vmatprep.subr.mxu0 0.0
  %2090 = vmatpush1.msra.mxu0 0.0
  %2091 = vmatprep.subr.mxu0 0.0
  %2092 = vmatpush1.msra.mxu0 0.0
  %2093 = vmatprep.subr.mxu0 0.0
  %2094 = vmatpush1.msra.mxu0 0.0
  %2095 = vmatprep.subr.mxu0 0.0
  %2096 = vmatpush1.msra.mxu0 0.0
  %2097 = vmatprep.subr.mxu0 0.0
  %2098 = vmatpush1.msra.mxu0 0.0
  %2099 = vmatprep.subr.mxu0 0.0
  %2100 = vmatpush1.msra.mxu0 0.0
  %2101 = vmatprep.subr.mxu0 0.0
  %2102 = vmatpush1.msra.mxu0 0.0
  %2103 = vmatprep.mubr.f32.mxu0 0.0
  %v2104 = vand.u32 %v1605, 4294901760
  %2105 = vmatmul.mubr.f32.gmra.mrb[0].mxu0 %v2104
  %v2106 = vpop.f32.mrb[0].mxu0
  %v2107 = vadd.f32 %v2028, %v2106
  %v2108 = vpop.f32.mrb[0].mxu0
  %2109 = vmatprep.mubr.f32.mxu0 0.0
  %v2110 = vand.u32 %v1608, 4294901760
  %2111 = vmatmul.mubr.f32.gmra.mrb[0].mxu0 %v2110
  %v2112 = vpop.f32.mrb[0].mxu0
  %v2113 = vadd.f32 %v2034, %v2112
  %v2114 = vpop.f32.mrb[0].mxu0
  %2115 = vdwg.mxu0
  %2116 = vrot.lane.b32.xlu0 %v1045, 112
  %v2117 = vpop.permute.xlu0 %2116
  %2118 = vrot.lane.b32.xlu0 %v1052, 112
  %v2119 = vpop.permute.xlu0 %2118
  %2120 = vrot.lane.b32.xlu0 %v1045, 48
  %v2121 = vpop.permute.xlu0 %2120
  %2122 = vrot.lane.b32.xlu0 %v1052, 48
  %v2123 = vpop.permute.xlu0 %2122
  %v2124 = vsel %vm1069, %v2117, 0
  %v2126 = vsel %vm1069, %v2119, 0
  %v2128 = vsel %vm1069, %v2121, 0
  %v2130 = vsel %vm1069, %v2123, 0
  %2132 = vmatprep.subr.mxu0 0.0
  %v2133 = vand.u32 %v2128, 4294901760
  %2134 = vmatpush1.xpose.msra.mxu0 %v2133
  %2135 = vmatprep.subr.mxu0 0.0
  %v2136 = vand.u32 %v2130, 4294901760
  %2137 = vmatpush1.xpose.msra.mxu0 %v2136
  %2138 = vmatprep.subr.mxu0 0.0
  %2139 = vmatpush1.xpose.msra.mxu0 0.0
  %2140 = vmatprep.subr.mxu0 0.0
  %2141 = vmatpush1.xpose.msra.mxu0 0.0
  %2142 = vmatprep.subr.mxu0 0.0
  %2143 = vmatpush1.xpose.msra.mxu0 0.0
  %2144 = vmatprep.subr.mxu0 0.0
  %2145 = vmatpush1.xpose.msra.mxu0 0.0
  %2146 = vmatprep.subr.mxu0 0.0
  %2147 = vmatpush1.xpose.msra.mxu0 0.0
  %2148 = vmatprep.subr.mxu0 0.0
  %2149 = vmatpush1.xpose.msra.mxu0 0.0
  %2150 = vmatprep.subr.mxu0 0.0
  %2151 = vmatpush1.xpose.msra.mxu0 0.0
  %2152 = vmatprep.subr.mxu0 0.0
  %2153 = vmatpush1.xpose.msra.mxu0 0.0
  %2154 = vmatprep.subr.mxu0 0.0
  %2155 = vmatpush1.xpose.msra.mxu0 0.0
  %2156 = vmatprep.subr.mxu0 0.0
  %2157 = vmatpush1.xpose.msra.mxu0 0.0
  %2158 = vmatprep.subr.mxu0 0.0
  %2159 = vmatpush1.xpose.msra.mxu0 0.0
  %2160 = vmatprep.subr.mxu0 0.0
  %2161 = vmatpush1.xpose.msra.mxu0 0.0
  %2162 = vmatprep.subr.mxu0 0.0
  %2163 = vmatpush1.xpose.msra.mxu0 0.0
  %2164 = vmatprep.subr.mxu0 0.0
  %2165 = vmatpush1.xpose.msra.mxu0 0.0
  %2166 = vmatprep.subr.mxu0 0.0
  %2167 = vmatpush1.xpose.msra.mxu0 0.0
  %2168 = vmatprep.subr.mxu0 0.0
  %2169 = vmatpush1.xpose.msra.mxu0 0.0
  %2170 = vmatprep.subr.mxu0 0.0
  %2171 = vmatpush1.xpose.msra.mxu0 0.0
  %2172 = vmatprep.subr.mxu0 0.0
  %2173 = vmatpush1.xpose.msra.mxu0 0.0
  %2174 = vmatprep.subr.mxu0 0.0
  %2175 = vmatpush1.xpose.msra.mxu0 0.0
  %2176 = vmatprep.subr.mxu0 0.0
  %2177 = vmatpush1.xpose.msra.mxu0 0.0
  %2178 = vmatprep.subr.mxu0 0.0
  %2179 = vmatpush1.xpose.msra.mxu0 0.0
  %2180 = vmatprep.subr.mxu0 0.0
  %2181 = vmatpush1.xpose.msra.mxu0 0.0
  %2182 = vmatprep.subr.mxu0 0.0
  %2183 = vmatpush1.xpose.msra.mxu0 0.0
  %2184 = vmatprep.subr.mxu0 0.0
  %2185 = vmatpush1.xpose.msra.mxu0 0.0
  %2186 = vmatprep.subr.mxu0 0.0
  %2187 = vmatpush1.xpose.msra.mxu0 0.0
  %2188 = vmatprep.subr.mxu0 0.0
  %2189 = vmatpush1.xpose.msra.mxu0 0.0
  %2190 = vmatprep.subr.mxu0 0.0
  %2191 = vmatpush1.xpose.msra.mxu0 0.0
  %2192 = vmatprep.subr.mxu0 0.0
  %2193 = vmatpush1.xpose.msra.mxu0 0.0
  %2194 = vmatprep.subr.mxu0 0.0
  %2195 = vmatpush1.xpose.msra.mxu0 0.0
  %2196 = vmatprep.subr.mxu0 0.0
  %2197 = vmatpush1.xpose.msra.mxu0 0.0
  %2198 = vmatprep.mubr.f32.mxu0 0.0
  %v2199 = vand.u32 %v2124, 4294901760
  %v2200 = vsub.f32 %v2124, %v2199
  %v2201 = vand.u32 %v2200, 4294901760
  %v2202 = vsub.f32 %v2200, %v2201
  %v2203 = vand.u32 %v2202, 4294901760
  %2204 = vmatmul.mubr.f32.gmra.mrb[0].mxu0 %v2203
  %v2205 = vpop.f32.mrb[0].mxu0
  %v2206 = vadd.f32 0.0, %v2205
  %v2207 = vpop.f32.mrb[0].mxu0
  %2208 = vmatprep.mubr.f32.mxu0 0.0
  %v2209 = vand.u32 %v2126, 4294901760
  %v2210 = vsub.f32 %v2126, %v2209
  %v2211 = vand.u32 %v2210, 4294901760
  %v2212 = vsub.f32 %v2210, %v2211
  %v2213 = vand.u32 %v2212, 4294901760
  %2214 = vmatmul.mubr.f32.gmra.mrb[0].mxu0 %v2213
  %v2215 = vpop.f32.mrb[0].mxu0
  %v2216 = vadd.f32 0.0, %v2215
  %v2217 = vpop.f32.mrb[0].mxu0
  %2218 = vdwg.mxu0
  %2219 = vmatprep.subr.mxu0 0.0
  %v2220 = vand.u32 %v2128, 4294901760
  %v2221 = vsub.f32 %v2128, %v2220
  %v2222 = vand.u32 %v2221, 4294901760
  %v2223 = vsub.f32 %v2221, %v2222
  %v2224 = vand.u32 %v2223, 4294901760
  %2225 = vmatpush1.xpose.msra.mxu0 %v2224
  %2226 = vmatprep.subr.mxu0 0.0
  %v2227 = vand.u32 %v2130, 4294901760
  %v2228 = vsub.f32 %v2130, %v2227
  %v2229 = vand.u32 %v2228, 4294901760
  %v2230 = vsub.f32 %v2228, %v2229
  %v2231 = vand.u32 %v2230, 4294901760
  %2232 = vmatpush1.xpose.msra.mxu0 %v2231
  %2233 = vmatprep.subr.mxu0 0.0
  %2234 = vmatpush1.xpose.msra.mxu0 0.0
  %2235 = vmatprep.subr.mxu0 0.0
  %2236 = vmatpush1.xpose.msra.mxu0 0.0
  %2237 = vmatprep.subr.mxu0 0.0
  %2238 = vmatpush1.xpose.msra.mxu0 0.0
  %2239 = vmatprep.subr.mxu0 0.0
  %2240 = vmatpush1.xpose.msra.mxu0 0.0
  %2241 = vmatprep.subr.mxu0 0.0
  %2242 = vmatpush1.xpose.msra.mxu0 0.0
  %2243 = vmatprep.subr.mxu0 0.0
  %2244 = vmatpush1.xpose.msra.mxu0 0.0
  %2245 = vmatprep.subr.mxu0 0.0
  %2246 = vmatpush1.xpose.msra.mxu0 0.0
  %2247 = vmatprep.subr.mxu0 0.0
  %2248 = vmatpush1.xpose.msra.mxu0 0.0
  %2249 = vmatprep.subr.mxu0 0.0
  %2250 = vmatpush1.xpose.msra.mxu0 0.0
  %2251 = vmatprep.subr.mxu0 0.0
  %2252 = vmatpush1.xpose.msra.mxu0 0.0
  %2253 = vmatprep.subr.mxu0 0.0
  %2254 = vmatpush1.xpose.msra.mxu0 0.0
  %2255 = vmatprep.subr.mxu0 0.0
  %2256 = vmatpush1.xpose.msra.mxu0 0.0
  %2257 = vmatprep.subr.mxu0 0.0
  %2258 = vmatpush1.xpose.msra.mxu0 0.0
  %2259 = vmatprep.subr.mxu0 0.0
  %2260 = vmatpush1.xpose.msra.mxu0 0.0
  %2261 = vmatprep.subr.mxu0 0.0
  %2262 = vmatpush1.xpose.msra.mxu0 0.0
  %2263 = vmatprep.subr.mxu0 0.0
  %2264 = vmatpush1.xpose.msra.mxu0 0.0
  %2265 = vmatprep.subr.mxu0 0.0
  %2266 = vmatpush1.xpose.msra.mxu0 0.0
  %2267 = vmatprep.subr.mxu0 0.0
  %2268 = vmatpush1.xpose.msra.mxu0 0.0
  %2269 = vmatprep.subr.mxu0 0.0
  %2270 = vmatpush1.xpose.msra.mxu0 0.0
  %2271 = vmatprep.subr.mxu0 0.0
  %2272 = vmatpush1.xpose.msra.mxu0 0.0
  %2273 = vmatprep.subr.mxu0 0.0
  %2274 = vmatpush1.xpose.msra.mxu0 0.0
  %2275 = vmatprep.subr.mxu0 0.0
  %2276 = vmatpush1.xpose.msra.mxu0 0.0
  %2277 = vmatprep.subr.mxu0 0.0
  %2278 = vmatpush1.xpose.msra.mxu0 0.0
  %2279 = vmatprep.subr.mxu0 0.0
  %2280 = vmatpush1.xpose.msra.mxu0 0.0
  %2281 = vmatprep.subr.mxu0 0.0
  %2282 = vmatpush1.xpose.msra.mxu0 0.0
  %2283 = vmatprep.subr.mxu0 0.0
  %2284 = vmatpush1.xpose.msra.mxu0 0.0
  %2285 = vmatprep.subr.mxu0 0.0
  %2286 = vmatpush1.xpose.msra.mxu0 0.0
  %2287 = vmatprep.subr.mxu0 0.0
  %2288 = vmatpush1.xpose.msra.mxu0 0.0
  %2289 = vmatprep.subr.mxu0 0.0
  %2290 = vmatpush1.xpose.msra.mxu0 0.0
  %2291 = vmatprep.subr.mxu0 0.0
  %2292 = vmatpush1.xpose.msra.mxu0 0.0
  %2293 = vmatprep.mubr.f32.mxu0 0.0
  %v2294 = vand.u32 %v2124, 4294901760
  %2295 = vmatmul.mubr.f32.gmra.mrb[0].mxu0 %v2294
  %v2296 = vpop.f32.mrb[0].mxu0
  %v2297 = vadd.f32 %v2206, %v2296
  %v2298 = vpop.f32.mrb[0].mxu0
  %2299 = vmatprep.mubr.f32.mxu0 0.0
  %v2300 = vand.u32 %v2126, 4294901760
  %2301 = vmatmul.mubr.f32.gmra.mrb[0].mxu0 %v2300
  %v2302 = vpop.f32.mrb[0].mxu0
  %v2303 = vadd.f32 %v2216, %v2302
  %v2304 = vpop.f32.mrb[0].mxu0
  %2305 = vdwg.mxu0
  %2306 = vmatprep.subr.mxu0 0.0
  %v2307 = vand.u32 %v2128, 4294901760
  %v2308 = vsub.f32 %v2128, %v2307
  %2309 = vmatpush1.xpose.msra.mxu0 %v2308
  %2310 = vmatprep.subr.mxu0 0.0
  %v2311 = vand.u32 %v2130, 4294901760
  %v2312 = vsub.f32 %v2130, %v2311
  %2313 = vmatpush1.xpose.msra.mxu0 %v2312
  %2314 = vmatprep.subr.mxu0 0.0
  %2315 = vmatpush1.xpose.msra.mxu0 0.0
  %2316 = vmatprep.subr.mxu0 0.0
  %2317 = vmatpush1.xpose.msra.mxu0 0.0
  %2318 = vmatprep.subr.mxu0 0.0
  %2319 = vmatpush1.xpose.msra.mxu0 0.0
  %2320 = vmatprep.subr.mxu0 0.0
  %2321 = vmatpush1.xpose.msra.mxu0 0.0
  %2322 = vmatprep.subr.mxu0 0.0
  %2323 = vmatpush1.xpose.msra.mxu0 0.0
  %2324 = vmatprep.subr.mxu0 0.0
  %2325 = vmatpush1.xpose.msra.mxu0 0.0
  %2326 = vmatprep.subr.mxu0 0.0
  %2327 = vmatpush1.xpose.msra.mxu0 0.0
  %2328 = vmatprep.subr.mxu0 0.0
  %2329 = vmatpush1.xpose.msra.mxu0 0.0
  %2330 = vmatprep.subr.mxu0 0.0
  %2331 = vmatpush1.xpose.msra.mxu0 0.0
  %2332 = vmatprep.subr.mxu0 0.0
  %2333 = vmatpush1.xpose.msra.mxu0 0.0
  %2334 = vmatprep.subr.mxu0 0.0
  %2335 = vmatpush1.xpose.msra.mxu0 0.0
  %2336 = vmatprep.subr.mxu0 0.0
  %2337 = vmatpush1.xpose.msra.mxu0 0.0
  %2338 = vmatprep.subr.mxu0 0.0
  %2339 = vmatpush1.xpose.msra.mxu0 0.0
  %2340 = vmatprep.subr.mxu0 0.0
  %2341 = vmatpush1.xpose.msra.mxu0 0.0
  %2342 = vmatprep.subr.mxu0 0.0
  %2343 = vmatpush1.xpose.msra.mxu0 0.0
  %2344 = vmatprep.subr.mxu0 0.0
  %2345 = vmatpush1.xpose.msra.mxu0 0.0
  %2346 = vmatprep.subr.mxu0 0.0
  %2347 = vmatpush1.xpose.msra.mxu0 0.0
  %2348 = vmatprep.subr.mxu0 0.0
  %2349 = vmatpush1.xpose.msra.mxu0 0.0
  %2350 = vmatprep.subr.mxu0 0.0
  %2351 = vmatpush1.xpose.msra.mxu0 0.0
  %2352 = vmatprep.subr.mxu0 0.0
  %2353 = vmatpush1.xpose.msra.mxu0 0.0
  %2354 = vmatprep.subr.mxu0 0.0
  %2355 = vmatpush1.xpose.msra.mxu0 0.0
  %2356 = vmatprep.subr.mxu0 0.0
  %2357 = vmatpush1.xpose.msra.mxu0 0.0
  %2358 = vmatprep.subr.mxu0 0.0
  %2359 = vmatpush1.xpose.msra.mxu0 0.0
  %2360 = vmatprep.subr.mxu0 0.0
  %2361 = vmatpush1.xpose.msra.mxu0 0.0
  %2362 = vmatprep.subr.mxu0 0.0
  %2363 = vmatpush1.xpose.msra.mxu0 0.0
  %2364 = vmatprep.subr.mxu0 0.0
  %2365 = vmatpush1.xpose.msra.mxu0 0.0
  %2366 = vmatprep.subr.mxu0 0.0
  %2367 = vmatpush1.xpose.msra.mxu0 0.0
  %2368 = vmatprep.subr.mxu0 0.0
  %2369 = vmatpush1.xpose.msra.mxu0 0.0
  %2370 = vmatprep.subr.mxu0 0.0
  %2371 = vmatpush1.xpose.msra.mxu0 0.0
  %2372 = vmatprep.subr.mxu0 0.0
  %2373 = vmatpush1.xpose.msra.mxu0 0.0
  %2374 = vmatprep.mubr.f32.mxu0 0.0
  %v2375 = vand.u32 %v2124, 4294901760
  %v2376 = vsub.f32 %v2124, %v2375
  %2377 = vmatmul.mubr.f32.gmra.mrb[0].mxu0 %v2376
  %v2378 = vpop.f32.mrb[0].mxu0
  %v2379 = vadd.f32 %v2297, %v2378
  %v2380 = vpop.f32.mrb[0].mxu0
  %2381 = vmatprep.mubr.f32.mxu0 0.0
  %v2382 = vand.u32 %v2126, 4294901760
  %v2383 = vsub.f32 %v2126, %v2382
  %2384 = vmatmul.mubr.f32.gmra.mrb[0].mxu0 %v2383
  %v2385 = vpop.f32.mrb[0].mxu0
  %v2386 = vadd.f32 %v2303, %v2385
  %v2387 = vpop.f32.mrb[0].mxu0
  %2388 = vdwg.mxu0
  %2389 = vmatprep.subr.mxu0 0.0
  %v2390 = vand.u32 %v2128, 4294901760
  %2391 = vmatpush1.xpose.msra.mxu0 %v2390
  %2392 = vmatprep.subr.mxu0 0.0
  %v2393 = vand.u32 %v2130, 4294901760
  %2394 = vmatpush1.xpose.msra.mxu0 %v2393
  %2395 = vmatprep.subr.mxu0 0.0
  %2396 = vmatpush1.xpose.msra.mxu0 0.0
  %2397 = vmatprep.subr.mxu0 0.0
  %2398 = vmatpush1.xpose.msra.mxu0 0.0
  %2399 = vmatprep.subr.mxu0 0.0
  %2400 = vmatpush1.xpose.msra.mxu0 0.0
  %2401 = vmatprep.subr.mxu0 0.0
  %2402 = vmatpush1.xpose.msra.mxu0 0.0
  %2403 = vmatprep.subr.mxu0 0.0
  %2404 = vmatpush1.xpose.msra.mxu0 0.0
  %2405 = vmatprep.subr.mxu0 0.0
  %2406 = vmatpush1.xpose.msra.mxu0 0.0
  %2407 = vmatprep.subr.mxu0 0.0
  %2408 = vmatpush1.xpose.msra.mxu0 0.0
  %2409 = vmatprep.subr.mxu0 0.0
  %2410 = vmatpush1.xpose.msra.mxu0 0.0
  %2411 = vmatprep.subr.mxu0 0.0
  %2412 = vmatpush1.xpose.msra.mxu0 0.0
  %2413 = vmatprep.subr.mxu0 0.0
  %2414 = vmatpush1.xpose.msra.mxu0 0.0
  %2415 = vmatprep.subr.mxu0 0.0
  %2416 = vmatpush1.xpose.msra.mxu0 0.0
  %2417 = vmatprep.subr.mxu0 0.0
  %2418 = vmatpush1.xpose.msra.mxu0 0.0
  %2419 = vmatprep.subr.mxu0 0.0
  %2420 = vmatpush1.xpose.msra.mxu0 0.0
  %2421 = vmatprep.subr.mxu0 0.0
  %2422 = vmatpush1.xpose.msra.mxu0 0.0
  %2423 = vmatprep.subr.mxu0 0.0
  %2424 = vmatpush1.xpose.msra.mxu0 0.0
  %2425 = vmatprep.subr.mxu0 0.0
  %2426 = vmatpush1.xpose.msra.mxu0 0.0
  %2427 = vmatprep.subr.mxu0 0.0
  %2428 = vmatpush1.xpose.msra.mxu0 0.0
  %2429 = vmatprep.subr.mxu0 0.0
  %2430 = vmatpush1.xpose.msra.mxu0 0.0
  %2431 = vmatprep.subr.mxu0 0.0
  %2432 = vmatpush1.xpose.msra.mxu0 0.0
  %2433 = vmatprep.subr.mxu0 0.0
  %2434 = vmatpush1.xpose.msra.mxu0 0.0
  %2435 = vmatprep.subr.mxu0 0.0
  %2436 = vmatpush1.xpose.msra.mxu0 0.0
  %2437 = vmatprep.subr.mxu0 0.0
  %2438 = vmatpush1.xpose.msra.mxu0 0.0
  %2439 = vmatprep.subr.mxu0 0.0
  %2440 = vmatpush1.xpose.msra.mxu0 0.0
  %2441 = vmatprep.subr.mxu0 0.0
  %2442 = vmatpush1.xpose.msra.mxu0 0.0
  %2443 = vmatprep.subr.mxu0 0.0
  %2444 = vmatpush1.xpose.msra.mxu0 0.0
  %2445 = vmatprep.subr.mxu0 0.0
  %2446 = vmatpush1.xpose.msra.mxu0 0.0
  %2447 = vmatprep.subr.mxu0 0.0
  %2448 = vmatpush1.xpose.msra.mxu0 0.0
  %2449 = vmatprep.subr.mxu0 0.0
  %2450 = vmatpush1.xpose.msra.mxu0 0.0
  %2451 = vmatprep.subr.mxu0 0.0
  %2452 = vmatpush1.xpose.msra.mxu0 0.0
  %2453 = vmatprep.subr.mxu0 0.0
  %2454 = vmatpush1.xpose.msra.mxu0 0.0
  %2455 = vmatprep.mubr.f32.mxu0 0.0
  %v2456 = vand.u32 %v2124, 4294901760
  %v2457 = vsub.f32 %v2124, %v2456
  %v2458 = vand.u32 %v2457, 4294901760
  %2459 = vmatmul.mubr.f32.gmra.mrb[0].mxu0 %v2458
  %v2460 = vpop.f32.mrb[0].mxu0
  %v2461 = vadd.f32 %v2379, %v2460
  %v2462 = vpop.f32.mrb[0].mxu0
  %2463 = vmatprep.mubr.f32.mxu0 0.0
  %v2464 = vand.u32 %v2126, 4294901760
  %v2465 = vsub.f32 %v2126, %v2464
  %v2466 = vand.u32 %v2465, 4294901760
  %2467 = vmatmul.mubr.f32.gmra.mrb[0].mxu0 %v2466
  %v2468 = vpop.f32.mrb[0].mxu0
  %v2469 = vadd.f32 %v2386, %v2468
  %v2470 = vpop.f32.mrb[0].mxu0
  %2471 = vdwg.mxu0
  %2472 = vmatprep.subr.mxu0 0.0
  %v2473 = vand.u32 %v2128, 4294901760
  %v2474 = vsub.f32 %v2128, %v2473
  %v2475 = vand.u32 %v2474, 4294901760
  %2476 = vmatpush1.xpose.msra.mxu0 %v2475
  %2477 = vmatprep.subr.mxu0 0.0
  %v2478 = vand.u32 %v2130, 4294901760
  %v2479 = vsub.f32 %v2130, %v2478
  %v2480 = vand.u32 %v2479, 4294901760
  %2481 = vmatpush1.xpose.msra.mxu0 %v2480
  %2482 = vmatprep.subr.mxu0 0.0
  %2483 = vmatpush1.xpose.msra.mxu0 0.0
  %2484 = vmatprep.subr.mxu0 0.0
  %2485 = vmatpush1.xpose.msra.mxu0 0.0
  %2486 = vmatprep.subr.mxu0 0.0
  %2487 = vmatpush1.xpose.msra.mxu0 0.0
  %2488 = vmatprep.subr.mxu0 0.0
  %2489 = vmatpush1.xpose.msra.mxu0 0.0
  %2490 = vmatprep.subr.mxu0 0.0
  %2491 = vmatpush1.xpose.msra.mxu0 0.0
  %2492 = vmatprep.subr.mxu0 0.0
  %2493 = vmatpush1.xpose.msra.mxu0 0.0
  %2494 = vmatprep.subr.mxu0 0.0
  %2495 = vmatpush1.xpose.msra.mxu0 0.0
  %2496 = vmatprep.subr.mxu0 0.0
  %2497 = vmatpush1.xpose.msra.mxu0 0.0
  %2498 = vmatprep.subr.mxu0 0.0
  %2499 = vmatpush1.xpose.msra.mxu0 0.0
  %2500 = vmatprep.subr.mxu0 0.0
  %2501 = vmatpush1.xpose.msra.mxu0 0.0
  %2502 = vmatprep.subr.mxu0 0.0
  %2503 = vmatpush1.xpose.msra.mxu0 0.0
  %2504 = vmatprep.subr.mxu0 0.0
  %2505 = vmatpush1.xpose.msra.mxu0 0.0
  %2506 = vmatprep.subr.mxu0 0.0
  %2507 = vmatpush1.xpose.msra.mxu0 0.0
  %2508 = vmatprep.subr.mxu0 0.0
  %2509 = vmatpush1.xpose.msra.mxu0 0.0
  %2510 = vmatprep.subr.mxu0 0.0
  %2511 = vmatpush1.xpose.msra.mxu0 0.0
  %2512 = vmatprep.subr.mxu0 0.0
  %2513 = vmatpush1.xpose.msra.mxu0 0.0
  %2514 = vmatprep.subr.mxu0 0.0
  %2515 = vmatpush1.xpose.msra.mxu0 0.0
  %2516 = vmatprep.subr.mxu0 0.0
  %2517 = vmatpush1.xpose.msra.mxu0 0.0
  %2518 = vmatprep.subr.mxu0 0.0
  %2519 = vmatpush1.xpose.msra.mxu0 0.0
  %2520 = vmatprep.subr.mxu0 0.0
  %2521 = vmatpush1.xpose.msra.mxu0 0.0
  %2522 = vmatprep.subr.mxu0 0.0
  %2523 = vmatpush1.xpose.msra.mxu0 0.0
  %2524 = vmatprep.subr.mxu0 0.0
  %2525 = vmatpush1.xpose.msra.mxu0 0.0
  %2526 = vmatprep.subr.mxu0 0.0
  %2527 = vmatpush1.xpose.msra.mxu0 0.0
  %2528 = vmatprep.subr.mxu0 0.0
  %2529 = vmatpush1.xpose.msra.mxu0 0.0
  %2530 = vmatprep.subr.mxu0 0.0
  %2531 = vmatpush1.xpose.msra.mxu0 0.0
  %2532 = vmatprep.subr.mxu0 0.0
  %2533 = vmatpush1.xpose.msra.mxu0 0.0
  %2534 = vmatprep.subr.mxu0 0.0
  %2535 = vmatpush1.xpose.msra.mxu0 0.0
  %2536 = vmatprep.subr.mxu0 0.0
  %2537 = vmatpush1.xpose.msra.mxu0 0.0
  %2538 = vmatprep.subr.mxu0 0.0
  %2539 = vmatpush1.xpose.msra.mxu0 0.0
  %2540 = vmatprep.subr.mxu0 0.0
  %2541 = vmatpush1.xpose.msra.mxu0 0.0
  %2542 = vmatprep.mubr.f32.mxu0 0.0
  %v2543 = vand.u32 %v2124, 4294901760
  %2544 = vmatmul.mubr.f32.gmra.mrb[0].mxu0 %v2543
  %v2545 = vpop.f32.mrb[0].mxu0
  %v2546 = vadd.f32 %v2461, %v2545
  %v2547 = vpop.f32.mrb[0].mxu0
  %2548 = vmatprep.mubr.f32.mxu0 0.0
  %v2549 = vand.u32 %v2126, 4294901760
  %2550 = vmatmul.mubr.f32.gmra.mrb[0].mxu0 %v2549
  %v2551 = vpop.f32.mrb[0].mxu0
  %v2552 = vadd.f32 %v2469, %v2551
  %v2553 = vpop.f32.mrb[0].mxu0
  %2554 = vdwg.mxu0
  %2555 = vmatprep.subr.mxu0 0.0
  %v2556 = vand.u32 %v2128, 4294901760
  %2557 = vmatpush1.xpose.msra.mxu0 %v2556
  %2558 = vmatprep.subr.mxu0 0.0
  %v2559 = vand.u32 %v2130, 4294901760
  %2560 = vmatpush1.xpose.msra.mxu0 %v2559
  %2561 = vmatprep.subr.mxu0 0.0
  %2562 = vmatpush1.xpose.msra.mxu0 0.0
  %2563 = vmatprep.subr.mxu0 0.0
  %2564 = vmatpush1.xpose.msra.mxu0 0.0
  %2565 = vmatprep.subr.mxu0 0.0
  %2566 = vmatpush1.xpose.msra.mxu0 0.0
  %2567 = vmatprep.subr.mxu0 0.0
  %2568 = vmatpush1.xpose.msra.mxu0 0.0
  %2569 = vmatprep.subr.mxu0 0.0
  %2570 = vmatpush1.xpose.msra.mxu0 0.0
  %2571 = vmatprep.subr.mxu0 0.0
  %2572 = vmatpush1.xpose.msra.mxu0 0.0
  %2573 = vmatprep.subr.mxu0 0.0
  %2574 = vmatpush1.xpose.msra.mxu0 0.0
  %2575 = vmatprep.subr.mxu0 0.0
  %2576 = vmatpush1.xpose.msra.mxu0 0.0
  %2577 = vmatprep.subr.mxu0 0.0
  %2578 = vmatpush1.xpose.msra.mxu0 0.0
  %2579 = vmatprep.subr.mxu0 0.0
  %2580 = vmatpush1.xpose.msra.mxu0 0.0
  %2581 = vmatprep.subr.mxu0 0.0
  %2582 = vmatpush1.xpose.msra.mxu0 0.0
  %2583 = vmatprep.subr.mxu0 0.0
  %2584 = vmatpush1.xpose.msra.mxu0 0.0
  %2585 = vmatprep.subr.mxu0 0.0
  %2586 = vmatpush1.xpose.msra.mxu0 0.0
  %2587 = vmatprep.subr.mxu0 0.0
  %2588 = vmatpush1.xpose.msra.mxu0 0.0
  %2589 = vmatprep.subr.mxu0 0.0
  %2590 = vmatpush1.xpose.msra.mxu0 0.0
  %2591 = vmatprep.subr.mxu0 0.0
  %2592 = vmatpush1.xpose.msra.mxu0 0.0
  %2593 = vmatprep.subr.mxu0 0.0
  %2594 = vmatpush1.xpose.msra.mxu0 0.0
  %2595 = vmatprep.subr.mxu0 0.0
  %2596 = vmatpush1.xpose.msra.mxu0 0.0
  %2597 = vmatprep.subr.mxu0 0.0
  %2598 = vmatpush1.xpose.msra.mxu0 0.0
  %2599 = vmatprep.subr.mxu0 0.0
  %2600 = vmatpush1.xpose.msra.mxu0 0.0
  %2601 = vmatprep.subr.mxu0 0.0
  %2602 = vmatpush1.xpose.msra.mxu0 0.0
  %2603 = vmatprep.subr.mxu0 0.0
  %2604 = vmatpush1.xpose.msra.mxu0 0.0
  %2605 = vmatprep.subr.mxu0 0.0
  %2606 = vmatpush1.xpose.msra.mxu0 0.0
  %2607 = vmatprep.subr.mxu0 0.0
  %2608 = vmatpush1.xpose.msra.mxu0 0.0
  %2609 = vmatprep.subr.mxu0 0.0
  %2610 = vmatpush1.xpose.msra.mxu0 0.0
  %2611 = vmatprep.subr.mxu0 0.0
  %2612 = vmatpush1.xpose.msra.mxu0 0.0
  %2613 = vmatprep.subr.mxu0 0.0
  %2614 = vmatpush1.xpose.msra.mxu0 0.0
  %2615 = vmatprep.subr.mxu0 0.0
  %2616 = vmatpush1.xpose.msra.mxu0 0.0
  %2617 = vmatprep.subr.mxu0 0.0
  %2618 = vmatpush1.xpose.msra.mxu0 0.0
  %2619 = vmatprep.subr.mxu0 0.0
  %2620 = vmatpush1.xpose.msra.mxu0 0.0
  %2621 = vmatprep.mubr.f32.mxu0 0.0
  %v2622 = vand.u32 %v2124, 4294901760
  %2623 = vmatmul.mubr.f32.gmra.mrb[0].mxu0 %v2622
  %v2624 = vpop.f32.mrb[0].mxu0
  %v2625 = vadd.f32 %v2546, %v2624
  %v2626 = vpop.f32.mrb[0].mxu0
  %2627 = vmatprep.mubr.f32.mxu0 0.0
  %v2628 = vand.u32 %v2126, 4294901760
  %2629 = vmatmul.mubr.f32.gmra.mrb[0].mxu0 %v2628
  %v2630 = vpop.f32.mrb[0].mxu0
  %v2631 = vadd.f32 %v2552, %v2630
  %v2632 = vpop.f32.mrb[0].mxu0
  %2633 = vdwg.mxu0
  %v2634 = vsel %vm1580, %v2625, -inf
  %2635 = vmax.xlane.f32.xlu0 %v2634
  %v2636 = vpop.xlane.xlu0 %2635
  %v2637 = vsel %vm1584, %v2631, -inf
  %2638 = vmax.xlane.f32.xlu0 %v2637
  %v2639 = vpop.xlane.xlu0 %2638
  %v2640 = vsub.f32 %v2625, %v2636
  %v2641 = vsub.f32 %v2631, %v2639
  %v2642 = vmul.f32 %v2640, 1.442695
  %v2643 = vpow.pop %v2642
  %v2644 = vmul.f32 %v2641, 1.442695
  %v2645 = vpow.pop %v2644
  %v2646 = vsel %vm1580, %v2643, 0.0
  %2647 = vadd.xlane.f32.xlu0 %v2646
  %v2648 = vpop.xlane.xlu0 %2647
  %v2649 = vsel %vm1584, %v2645, 0.0
  %2650 = vadd.xlane.f32.xlu0 %v2649
  %v2651 = vpop.xlane.xlu0 %2650
  %v2652 = vrcp.pop %v2648
  %v2653 = vmul.f32 %v2643, %v2652
  %v2654 = vrcp.pop %v2651
  %v2655 = vmul.f32 %v2645, %v2654
  %2657 = vrot.lane.b32.xlu0 %v1047, 112
  %v2658 = vpop.permute.xlu0 %2657
  %2659 = vrot.lane.b32.xlu0 %v1054, 112
  %v2660 = vpop.permute.xlu0 %2659
  %v2663 = vsel %vm1580, %v2653, 0
  %v2666 = vsel %vm1580, %v2655, 0
  %v2668 = vsel %vm1610, %v2660, 0
  %2670 = vmatprep.subr.mxu0 0.0
  %v2671 = vand.u32 %v2658, 4294901760
  %2672 = vmatpush1.msra.mxu0 %v2671
  %2673 = vmatprep.subr.mxu0 0.0
  %v2674 = vand.u32 %v2668, 4294901760
  %2675 = vmatpush1.msra.mxu0 %v2674
  %2676 = vmatprep.subr.mxu0 0.0
  %2677 = vmatpush1.msra.mxu0 0.0
  %2678 = vmatprep.subr.mxu0 0.0
  %2679 = vmatpush1.msra.mxu0 0.0
  %2680 = vmatprep.subr.mxu0 0.0
  %2681 = vmatpush1.msra.mxu0 0.0
  %2682 = vmatprep.subr.mxu0 0.0
  %2683 = vmatpush1.msra.mxu0 0.0
  %2684 = vmatprep.subr.mxu0 0.0
  %2685 = vmatpush1.msra.mxu0 0.0
  %2686 = vmatprep.subr.mxu0 0.0
  %2687 = vmatpush1.msra.mxu0 0.0
  %2688 = vmatprep.subr.mxu0 0.0
  %2689 = vmatpush1.msra.mxu0 0.0
  %2690 = vmatprep.subr.mxu0 0.0
  %2691 = vmatpush1.msra.mxu0 0.0
  %2692 = vmatprep.subr.mxu0 0.0
  %2693 = vmatpush1.msra.mxu0 0.0
  %2694 = vmatprep.subr.mxu0 0.0
  %2695 = vmatpush1.msra.mxu0 0.0
  %2696 = vmatprep.subr.mxu0 0.0
  %2697 = vmatpush1.msra.mxu0 0.0
  %2698 = vmatprep.subr.mxu0 0.0
  %2699 = vmatpush1.msra.mxu0 0.0
  %2700 = vmatprep.subr.mxu0 0.0
  %2701 = vmatpush1.msra.mxu0 0.0
  %2702 = vmatprep.subr.mxu0 0.0
  %2703 = vmatpush1.msra.mxu0 0.0
  %2704 = vmatprep.subr.mxu0 0.0
  %2705 = vmatpush1.msra.mxu0 0.0
  %2706 = vmatprep.subr.mxu0 0.0
  %2707 = vmatpush1.msra.mxu0 0.0
  %2708 = vmatprep.subr.mxu0 0.0
  %2709 = vmatpush1.msra.mxu0 0.0
  %2710 = vmatprep.subr.mxu0 0.0
  %2711 = vmatpush1.msra.mxu0 0.0
  %2712 = vmatprep.subr.mxu0 0.0
  %2713 = vmatpush1.msra.mxu0 0.0
  %2714 = vmatprep.subr.mxu0 0.0
  %2715 = vmatpush1.msra.mxu0 0.0
  %2716 = vmatprep.subr.mxu0 0.0
  %2717 = vmatpush1.msra.mxu0 0.0
  %2718 = vmatprep.subr.mxu0 0.0
  %2719 = vmatpush1.msra.mxu0 0.0
  %2720 = vmatprep.subr.mxu0 0.0
  %2721 = vmatpush1.msra.mxu0 0.0
  %2722 = vmatprep.subr.mxu0 0.0
  %2723 = vmatpush1.msra.mxu0 0.0
  %2724 = vmatprep.subr.mxu0 0.0
  %2725 = vmatpush1.msra.mxu0 0.0
  %2726 = vmatprep.subr.mxu0 0.0
  %2727 = vmatpush1.msra.mxu0 0.0
  %2728 = vmatprep.subr.mxu0 0.0
  %2729 = vmatpush1.msra.mxu0 0.0
  %2730 = vmatprep.subr.mxu0 0.0
  %2731 = vmatpush1.msra.mxu0 0.0
  %2732 = vmatprep.subr.mxu0 0.0
  %2733 = vmatpush1.msra.mxu0 0.0
  %2734 = vmatprep.subr.mxu0 0.0
  %2735 = vmatpush1.msra.mxu0 0.0
  %2736 = vmatprep.mubr.f32.mxu0 0.0
  %v2737 = vand.u32 %v2663, 4294901760
  %v2738 = vsub.f32 %v2663, %v2737
  %v2739 = vand.u32 %v2738, 4294901760
  %v2740 = vsub.f32 %v2738, %v2739
  %v2741 = vand.u32 %v2740, 4294901760
  %2742 = vmatmul.mubr.f32.gmra.mrb[0].mxu0 %v2741
  %v2743 = vpop.f32.mrb[0].mxu0
  %v2744 = vadd.f32 0.0, %v2743
  %v2745 = vpop.f32.mrb[0].mxu0
  %2746 = vmatprep.mubr.f32.mxu0 0.0
  %v2747 = vand.u32 %v2666, 4294901760
  %v2748 = vsub.f32 %v2666, %v2747
  %v2749 = vand.u32 %v2748, 4294901760
  %v2750 = vsub.f32 %v2748, %v2749
  %v2751 = vand.u32 %v2750, 4294901760
  %2752 = vmatmul.mubr.f32.gmra.mrb[0].mxu0 %v2751
  %v2753 = vpop.f32.mrb[0].mxu0
  %v2754 = vadd.f32 0.0, %v2753
  %v2755 = vpop.f32.mrb[0].mxu0
  %2756 = vdwg.mxu0
  %2757 = vmatprep.subr.mxu0 0.0
  %v2758 = vand.u32 %v2658, 4294901760
  %v2759 = vsub.f32 %v2658, %v2758
  %v2760 = vand.u32 %v2759, 4294901760
  %v2761 = vsub.f32 %v2759, %v2760
  %v2762 = vand.u32 %v2761, 4294901760
  %2763 = vmatpush1.msra.mxu0 %v2762
  %2764 = vmatprep.subr.mxu0 0.0
  %v2765 = vand.u32 %v2668, 4294901760
  %v2766 = vsub.f32 %v2668, %v2765
  %v2767 = vand.u32 %v2766, 4294901760
  %v2768 = vsub.f32 %v2766, %v2767
  %v2769 = vand.u32 %v2768, 4294901760
  %2770 = vmatpush1.msra.mxu0 %v2769
  %2771 = vmatprep.subr.mxu0 0.0
  %2772 = vmatpush1.msra.mxu0 0.0
  %2773 = vmatprep.subr.mxu0 0.0
  %2774 = vmatpush1.msra.mxu0 0.0
  %2775 = vmatprep.subr.mxu0 0.0
  %2776 = vmatpush1.msra.mxu0 0.0
  %2777 = vmatprep.subr.mxu0 0.0
  %2778 = vmatpush1.msra.mxu0 0.0
  %2779 = vmatprep.subr.mxu0 0.0
  %2780 = vmatpush1.msra.mxu0 0.0
  %2781 = vmatprep.subr.mxu0 0.0
  %2782 = vmatpush1.msra.mxu0 0.0
  %2783 = vmatprep.subr.mxu0 0.0
  %2784 = vmatpush1.msra.mxu0 0.0
  %2785 = vmatprep.subr.mxu0 0.0
  %2786 = vmatpush1.msra.mxu0 0.0
  %2787 = vmatprep.subr.mxu0 0.0
  %2788 = vmatpush1.msra.mxu0 0.0
  %2789 = vmatprep.subr.mxu0 0.0
  %2790 = vmatpush1.msra.mxu0 0.0
  %2791 = vmatprep.subr.mxu0 0.0
  %2792 = vmatpush1.msra.mxu0 0.0
  %2793 = vmatprep.subr.mxu0 0.0
  %2794 = vmatpush1.msra.mxu0 0.0
  %2795 = vmatprep.subr.mxu0 0.0
  %2796 = vmatpush1.msra.mxu0 0.0
  %2797 = vmatprep.subr.mxu0 0.0
  %2798 = vmatpush1.msra.mxu0 0.0
  %2799 = vmatprep.subr.mxu0 0.0
  %2800 = vmatpush1.msra.mxu0 0.0
  %2801 = vmatprep.subr.mxu0 0.0
  %2802 = vmatpush1.msra.mxu0 0.0
  %2803 = vmatprep.subr.mxu0 0.0
  %2804 = vmatpush1.msra.mxu0 0.0
  %2805 = vmatprep.subr.mxu0 0.0
  %2806 = vmatpush1.msra.mxu0 0.0
  %2807 = vmatprep.subr.mxu0 0.0
  %2808 = vmatpush1.msra.mxu0 0.0
  %2809 = vmatprep.subr.mxu0 0.0
  %2810 = vmatpush1.msra.mxu0 0.0
  %2811 = vmatprep.subr.mxu0 0.0
  %2812 = vmatpush1.msra.mxu0 0.0
  %2813 = vmatprep.subr.mxu0 0.0
  %2814 = vmatpush1.msra.mxu0 0.0
  %2815 = vmatprep.subr.mxu0 0.0
  %2816 = vmatpush1.msra.mxu0 0.0
  %2817 = vmatprep.subr.mxu0 0.0
  %2818 = vmatpush1.msra.mxu0 0.0
  %2819 = vmatprep.subr.mxu0 0.0
  %2820 = vmatpush1.msra.mxu0 0.0
  %2821 = vmatprep.subr.mxu0 0.0
  %2822 = vmatpush1.msra.mxu0 0.0
  %2823 = vmatprep.subr.mxu0 0.0
  %2824 = vmatpush1.msra.mxu0 0.0
  %2825 = vmatprep.subr.mxu0 0.0
  %2826 = vmatpush1.msra.mxu0 0.0
  %2827 = vmatprep.subr.mxu0 0.0
  %2828 = vmatpush1.msra.mxu0 0.0
  %2829 = vmatprep.subr.mxu0 0.0
  %2830 = vmatpush1.msra.mxu0 0.0
  %2831 = vmatprep.mubr.f32.mxu0 0.0
  %v2832 = vand.u32 %v2663, 4294901760
  %2833 = vmatmul.mubr.f32.gmra.mrb[0].mxu0 %v2832
  %v2834 = vpop.f32.mrb[0].mxu0
  %v2835 = vadd.f32 %v2744, %v2834
  %v2836 = vpop.f32.mrb[0].mxu0
  %2837 = vmatprep.mubr.f32.mxu0 0.0
  %v2838 = vand.u32 %v2666, 4294901760
  %2839 = vmatmul.mubr.f32.gmra.mrb[0].mxu0 %v2838
  %v2840 = vpop.f32.mrb[0].mxu0
  %v2841 = vadd.f32 %v2754, %v2840
  %v2842 = vpop.f32.mrb[0].mxu0
  %2843 = vdwg.mxu0
  %2844 = vmatprep.subr.mxu0 0.0
  %v2845 = vand.u32 %v2658, 4294901760
  %v2846 = vsub.f32 %v2658, %v2845
  %2847 = vmatpush1.msra.mxu0 %v2846
  %2848 = vmatprep.subr.mxu0 0.0
  %v2849 = vand.u32 %v2668, 4294901760
  %v2850 = vsub.f32 %v2668, %v2849
  %2851 = vmatpush1.msra.mxu0 %v2850
  %2852 = vmatprep.subr.mxu0 0.0
  %2853 = vmatpush1.msra.mxu0 0.0
  %2854 = vmatprep.subr.mxu0 0.0
  %2855 = vmatpush1.msra.mxu0 0.0
  %2856 = vmatprep.subr.mxu0 0.0
  %2857 = vmatpush1.msra.mxu0 0.0
  %2858 = vmatprep.subr.mxu0 0.0
  %2859 = vmatpush1.msra.mxu0 0.0
  %2860 = vmatprep.subr.mxu0 0.0
  %2861 = vmatpush1.msra.mxu0 0.0
  %2862 = vmatprep.subr.mxu0 0.0
  %2863 = vmatpush1.msra.mxu0 0.0
  %2864 = vmatprep.subr.mxu0 0.0
  %2865 = vmatpush1.msra.mxu0 0.0
  %2866 = vmatprep.subr.mxu0 0.0
  %2867 = vmatpush1.msra.mxu0 0.0
  %2868 = vmatprep.subr.mxu0 0.0
  %2869 = vmatpush1.msra.mxu0 0.0
  %2870 = vmatprep.subr.mxu0 0.0
  %2871 = vmatpush1.msra.mxu0 0.0
  %2872 = vmatprep.subr.mxu0 0.0
  %2873 = vmatpush1.msra.mxu0 0.0
  %2874 = vmatprep.subr.mxu0 0.0
  %2875 = vmatpush1.msra.mxu0 0.0
  %2876 = vmatprep.subr.mxu0 0.0
  %2877 = vmatpush1.msra.mxu0 0.0
  %2878 = vmatprep.subr.mxu0 0.0
  %2879 = vmatpush1.msra.mxu0 0.0
  %2880 = vmatprep.subr.mxu0 0.0
  %2881 = vmatpush1.msra.mxu0 0.0
  %2882 = vmatprep.subr.mxu0 0.0
  %2883 = vmatpush1.msra.mxu0 0.0
  %2884 = vmatprep.subr.mxu0 0.0
  %2885 = vmatpush1.msra.mxu0 0.0
  %2886 = vmatprep.subr.mxu0 0.0
  %2887 = vmatpush1.msra.mxu0 0.0
  %2888 = vmatprep.subr.mxu0 0.0
  %2889 = vmatpush1.msra.mxu0 0.0
  %2890 = vmatprep.subr.mxu0 0.0
  %2891 = vmatpush1.msra.mxu0 0.0
  %2892 = vmatprep.subr.mxu0 0.0
  %2893 = vmatpush1.msra.mxu0 0.0
  %2894 = vmatprep.subr.mxu0 0.0
  %2895 = vmatpush1.msra.mxu0 0.0
  %2896 = vmatprep.subr.mxu0 0.0
  %2897 = vmatpush1.msra.mxu0 0.0
  %2898 = vmatprep.subr.mxu0 0.0
  %2899 = vmatpush1.msra.mxu0 0.0
  %2900 = vmatprep.subr.mxu0 0.0
  %2901 = vmatpush1.msra.mxu0 0.0
  %2902 = vmatprep.subr.mxu0 0.0
  %2903 = vmatpush1.msra.mxu0 0.0
  %2904 = vmatprep.subr.mxu0 0.0
  %2905 = vmatpush1.msra.mxu0 0.0
  %2906 = vmatprep.subr.mxu0 0.0
  %2907 = vmatpush1.msra.mxu0 0.0
  %2908 = vmatprep.subr.mxu0 0.0
  %2909 = vmatpush1.msra.mxu0 0.0
  %2910 = vmatprep.subr.mxu0 0.0
  %2911 = vmatpush1.msra.mxu0 0.0
  %2912 = vmatprep.mubr.f32.mxu0 0.0
  %v2913 = vand.u32 %v2663, 4294901760
  %v2914 = vsub.f32 %v2663, %v2913
  %2915 = vmatmul.mubr.f32.gmra.mrb[0].mxu0 %v2914
  %v2916 = vpop.f32.mrb[0].mxu0
  %v2917 = vadd.f32 %v2835, %v2916
  %v2918 = vpop.f32.mrb[0].mxu0
  %2919 = vmatprep.mubr.f32.mxu0 0.0
  %v2920 = vand.u32 %v2666, 4294901760
  %v2921 = vsub.f32 %v2666, %v2920
  %2922 = vmatmul.mubr.f32.gmra.mrb[0].mxu0 %v2921
  %v2923 = vpop.f32.mrb[0].mxu0
  %v2924 = vadd.f32 %v2841, %v2923
  %v2925 = vpop.f32.mrb[0].mxu0
  %2926 = vdwg.mxu0
  %2927 = vmatprep.subr.mxu0 0.0
  %v2928 = vand.u32 %v2658, 4294901760
  %2929 = vmatpush1.msra.mxu0 %v2928
  %2930 = vmatprep.subr.mxu0 0.0
  %v2931 = vand.u32 %v2668, 4294901760
  %2932 = vmatpush1.msra.mxu0 %v2931
  %2933 = vmatprep.subr.mxu0 0.0
  %2934 = vmatpush1.msra.mxu0 0.0
  %2935 = vmatprep.subr.mxu0 0.0
  %2936 = vmatpush1.msra.mxu0 0.0
  %2937 = vmatprep.subr.mxu0 0.0
  %2938 = vmatpush1.msra.mxu0 0.0
  %2939 = vmatprep.subr.mxu0 0.0
  %2940 = vmatpush1.msra.mxu0 0.0
  %2941 = vmatprep.subr.mxu0 0.0
  %2942 = vmatpush1.msra.mxu0 0.0
  %2943 = vmatprep.subr.mxu0 0.0
  %2944 = vmatpush1.msra.mxu0 0.0
  %2945 = vmatprep.subr.mxu0 0.0
  %2946 = vmatpush1.msra.mxu0 0.0
  %2947 = vmatprep.subr.mxu0 0.0
  %2948 = vmatpush1.msra.mxu0 0.0
  %2949 = vmatprep.subr.mxu0 0.0
  %2950 = vmatpush1.msra.mxu0 0.0
  %2951 = vmatprep.subr.mxu0 0.0
  %2952 = vmatpush1.msra.mxu0 0.0
  %2953 = vmatprep.subr.mxu0 0.0
  %2954 = vmatpush1.msra.mxu0 0.0
  %2955 = vmatprep.subr.mxu0 0.0
  %2956 = vmatpush1.msra.mxu0 0.0
  %2957 = vmatprep.subr.mxu0 0.0
  %2958 = vmatpush1.msra.mxu0 0.0
  %2959 = vmatprep.subr.mxu0 0.0
  %2960 = vmatpush1.msra.mxu0 0.0
  %2961 = vmatprep.subr.mxu0 0.0
  %2962 = vmatpush1.msra.mxu0 0.0
  %2963 = vmatprep.subr.mxu0 0.0
  %2964 = vmatpush1.msra.mxu0 0.0
  %2965 = vmatprep.subr.mxu0 0.0
  %2966 = vmatpush1.msra.mxu0 0.0
  %2967 = vmatprep.subr.mxu0 0.0
  %2968 = vmatpush1.msra.mxu0 0.0
  %2969 = vmatprep.subr.mxu0 0.0
  %2970 = vmatpush1.msra.mxu0 0.0
  %2971 = vmatprep.subr.mxu0 0.0
  %2972 = vmatpush1.msra.mxu0 0.0
  %2973 = vmatprep.subr.mxu0 0.0
  %2974 = vmatpush1.msra.mxu0 0.0
  %2975 = vmatprep.subr.mxu0 0.0
  %2976 = vmatpush1.msra.mxu0 0.0
  %2977 = vmatprep.subr.mxu0 0.0
  %2978 = vmatpush1.msra.mxu0 0.0
  %2979 = vmatprep.subr.mxu0 0.0
  %2980 = vmatpush1.msra.mxu0 0.0
  %2981 = vmatprep.subr.mxu0 0.0
  %2982 = vmatpush1.msra.mxu0 0.0
  %2983 = vmatprep.subr.mxu0 0.0
  %2984 = vmatpush1.msra.mxu0 0.0
  %2985 = vmatprep.subr.mxu0 0.0
  %2986 = vmatpush1.msra.mxu0 0.0
  %2987 = vmatprep.subr.mxu0 0.0
  %2988 = vmatpush1.msra.mxu0 0.0
  %2989 = vmatprep.subr.mxu0 0.0
  %2990 = vmatpush1.msra.mxu0 0.0
  %2991 = vmatprep.subr.mxu0 0.0
  %2992 = vmatpush1.msra.mxu0 0.0
  %2993 = vmatprep.mubr.f32.mxu0 0.0
  %v2994 = vand.u32 %v2663, 4294901760
  %v2995 = vsub.f32 %v2663, %v2994
  %v2996 = vand.u32 %v2995, 4294901760
  %2997 = vmatmul.mubr.f32.gmra.mrb[0].mxu0 %v2996
  %v2998 = vpop.f32.mrb[0].mxu0
  %v2999 = vadd.f32 %v2917, %v2998
  %v3000 = vpop.f32.mrb[0].mxu0
  %3001 = vmatprep.mubr.f32.mxu0 0.0
  %v3002 = vand.u32 %v2666, 4294901760
  %v3003 = vsub.f32 %v2666, %v3002
  %v3004 = vand.u32 %v3003, 4294901760
  %3005 = vmatmul.mubr.f32.gmra.mrb[0].mxu0 %v3004
  %v3006 = vpop.f32.mrb[0].mxu0
  %v3007 = vadd.f32 %v2924, %v3006
  %v3008 = vpop.f32.mrb[0].mxu0
  %3009 = vdwg.mxu0
  %3010 = vmatprep.subr.mxu0 0.0
  %v3011 = vand.u32 %v2658, 4294901760
  %v3012 = vsub.f32 %v2658, %v3011
  %v3013 = vand.u32 %v3012, 4294901760
  %3014 = vmatpush1.msra.mxu0 %v3013
  %3015 = vmatprep.subr.mxu0 0.0
  %v3016 = vand.u32 %v2668, 4294901760
  %v3017 = vsub.f32 %v2668, %v3016
  %v3018 = vand.u32 %v3017, 4294901760
  %3019 = vmatpush1.msra.mxu0 %v3018
  %3020 = vmatprep.subr.mxu0 0.0
  %3021 = vmatpush1.msra.mxu0 0.0
  %3022 = vmatprep.subr.mxu0 0.0
  %3023 = vmatpush1.msra.mxu0 0.0
  %3024 = vmatprep.subr.mxu0 0.0
  %3025 = vmatpush1.msra.mxu0 0.0
  %3026 = vmatprep.subr.mxu0 0.0
  %3027 = vmatpush1.msra.mxu0 0.0
  %3028 = vmatprep.subr.mxu0 0.0
  %3029 = vmatpush1.msra.mxu0 0.0
  %3030 = vmatprep.subr.mxu0 0.0
  %3031 = vmatpush1.msra.mxu0 0.0
  %3032 = vmatprep.subr.mxu0 0.0
  %3033 = vmatpush1.msra.mxu0 0.0
  %3034 = vmatprep.subr.mxu0 0.0
  %3035 = vmatpush1.msra.mxu0 0.0
  %3036 = vmatprep.subr.mxu0 0.0
  %3037 = vmatpush1.msra.mxu0 0.0
  %3038 = vmatprep.subr.mxu0 0.0
  %3039 = vmatpush1.msra.mxu0 0.0
  %3040 = vmatprep.subr.mxu0 0.0
  %3041 = vmatpush1.msra.mxu0 0.0
  %3042 = vmatprep.subr.mxu0 0.0
  %3043 = vmatpush1.msra.mxu0 0.0
  %3044 = vmatprep.subr.mxu0 0.0
  %3045 = vmatpush1.msra.mxu0 0.0
  %3046 = vmatprep.subr.mxu0 0.0
  %3047 = vmatpush1.msra.mxu0 0.0
  %3048 = vmatprep.subr.mxu0 0.0
  %3049 = vmatpush1.msra.mxu0 0.0
  %3050 = vmatprep.subr.mxu0 0.0
  %3051 = vmatpush1.msra.mxu0 0.0
  %3052 = vmatprep.subr.mxu0 0.0
  %3053 = vmatpush1.msra.mxu0 0.0
  %3054 = vmatprep.subr.mxu0 0.0
  %3055 = vmatpush1.msra.mxu0 0.0
  %3056 = vmatprep.subr.mxu0 0.0
  %3057 = vmatpush1.msra.mxu0 0.0
  %3058 = vmatprep.subr.mxu0 0.0
  %3059 = vmatpush1.msra.mxu0 0.0
  %3060 = vmatprep.subr.mxu0 0.0
  %3061 = vmatpush1.msra.mxu0 0.0
  %3062 = vmatprep.subr.mxu0 0.0
  %3063 = vmatpush1.msra.mxu0 0.0
  %3064 = vmatprep.subr.mxu0 0.0
  %3065 = vmatpush1.msra.mxu0 0.0
  %3066 = vmatprep.subr.mxu0 0.0
  %3067 = vmatpush1.msra.mxu0 0.0
  %3068 = vmatprep.subr.mxu0 0.0
  %3069 = vmatpush1.msra.mxu0 0.0
  %3070 = vmatprep.subr.mxu0 0.0
  %3071 = vmatpush1.msra.mxu0 0.0
  %3072 = vmatprep.subr.mxu0 0.0
  %3073 = vmatpush1.msra.mxu0 0.0
  %3074 = vmatprep.subr.mxu0 0.0
  %3075 = vmatpush1.msra.mxu0 0.0
  %3076 = vmatprep.subr.mxu0 0.0
  %3077 = vmatpush1.msra.mxu0 0.0
  %3078 = vmatprep.subr.mxu0 0.0
  %3079 = vmatpush1.msra.mxu0 0.0
  %3080 = vmatprep.mubr.f32.mxu0 0.0
  %v3081 = vand.u32 %v2663, 4294901760
  %3082 = vmatmul.mubr.f32.gmra.mrb[0].mxu0 %v3081
  %v3083 = vpop.f32.mrb[0].mxu0
  %v3084 = vadd.f32 %v2999, %v3083
  %v3085 = vpop.f32.mrb[0].mxu0
  %3086 = vmatprep.mubr.f32.mxu0 0.0
  %v3087 = vand.u32 %v2666, 4294901760
  %3088 = vmatmul.mubr.f32.gmra.mrb[0].mxu0 %v3087
  %v3089 = vpop.f32.mrb[0].mxu0
  %v3090 = vadd.f32 %v3007, %v3089
  %v3091 = vpop.f32.mrb[0].mxu0
  %3092 = vdwg.mxu0
  %3093 = vmatprep.subr.mxu0 0.0
  %v3094 = vand.u32 %v2658, 4294901760
  %3095 = vmatpush1.msra.mxu0 %v3094
  %3096 = vmatprep.subr.mxu0 0.0
  %v3097 = vand.u32 %v2668, 4294901760
  %3098 = vmatpush1.msra.mxu0 %v3097
  %3099 = vmatprep.subr.mxu0 0.0
  %3100 = vmatpush1.msra.mxu0 0.0
  %3101 = vmatprep.subr.mxu0 0.0
  %3102 = vmatpush1.msra.mxu0 0.0
  %3103 = vmatprep.subr.mxu0 0.0
  %3104 = vmatpush1.msra.mxu0 0.0
  %3105 = vmatprep.subr.mxu0 0.0
  %3106 = vmatpush1.msra.mxu0 0.0
  %3107 = vmatprep.subr.mxu0 0.0
  %3108 = vmatpush1.msra.mxu0 0.0
  %3109 = vmatprep.subr.mxu0 0.0
  %3110 = vmatpush1.msra.mxu0 0.0
  %3111 = vmatprep.subr.mxu0 0.0
  %3112 = vmatpush1.msra.mxu0 0.0
  %3113 = vmatprep.subr.mxu0 0.0
  %3114 = vmatpush1.msra.mxu0 0.0
  %3115 = vmatprep.subr.mxu0 0.0
  %3116 = vmatpush1.msra.mxu0 0.0
  %3117 = vmatprep.subr.mxu0 0.0
  %3118 = vmatpush1.msra.mxu0 0.0
  %3119 = vmatprep.subr.mxu0 0.0
  %3120 = vmatpush1.msra.mxu0 0.0
  %3121 = vmatprep.subr.mxu0 0.0
  %3122 = vmatpush1.msra.mxu0 0.0
  %3123 = vmatprep.subr.mxu0 0.0
  %3124 = vmatpush1.msra.mxu0 0.0
  %3125 = vmatprep.subr.mxu0 0.0
  %3126 = vmatpush1.msra.mxu0 0.0
  %3127 = vmatprep.subr.mxu0 0.0
  %3128 = vmatpush1.msra.mxu0 0.0
  %3129 = vmatprep.subr.mxu0 0.0
  %3130 = vmatpush1.msra.mxu0 0.0
  %3131 = vmatprep.subr.mxu0 0.0
  %3132 = vmatpush1.msra.mxu0 0.0
  %3133 = vmatprep.subr.mxu0 0.0
  %3134 = vmatpush1.msra.mxu0 0.0
  %3135 = vmatprep.subr.mxu0 0.0
  %3136 = vmatpush1.msra.mxu0 0.0
  %3137 = vmatprep.subr.mxu0 0.0
  %3138 = vmatpush1.msra.mxu0 0.0
  %3139 = vmatprep.subr.mxu0 0.0
  %3140 = vmatpush1.msra.mxu0 0.0
  %3141 = vmatprep.subr.mxu0 0.0
  %3142 = vmatpush1.msra.mxu0 0.0
  %3143 = vmatprep.subr.mxu0 0.0
  %3144 = vmatpush1.msra.mxu0 0.0
  %3145 = vmatprep.subr.mxu0 0.0
  %3146 = vmatpush1.msra.mxu0 0.0
  %3147 = vmatprep.subr.mxu0 0.0
  %3148 = vmatpush1.msra.mxu0 0.0
  %3149 = vmatprep.subr.mxu0 0.0
  %3150 = vmatpush1.msra.mxu0 0.0
  %3151 = vmatprep.subr.mxu0 0.0
  %3152 = vmatpush1.msra.mxu0 0.0
  %3153 = vmatprep.subr.mxu0 0.0
  %3154 = vmatpush1.msra.mxu0 0.0
  %3155 = vmatprep.subr.mxu0 0.0
  %3156 = vmatpush1.msra.mxu0 0.0
  %3157 = vmatprep.subr.mxu0 0.0
  %3158 = vmatpush1.msra.mxu0 0.0
  %3159 = vmatprep.mubr.f32.mxu0 0.0
  %v3160 = vand.u32 %v2663, 4294901760
  %3161 = vmatmul.mubr.f32.gmra.mrb[0].mxu0 %v3160
  %v3162 = vpop.f32.mrb[0].mxu0
  %v3163 = vadd.f32 %v3084, %v3162
  %v3164 = vpop.f32.mrb[0].mxu0
  %3165 = vmatprep.mubr.f32.mxu0 0.0
  %v3166 = vand.u32 %v2666, 4294901760
  %3167 = vmatmul.mubr.f32.gmra.mrb[0].mxu0 %v3166
  %v3168 = vpop.f32.mrb[0].mxu0
  %v3169 = vadd.f32 %v3090, %v3168
  %v3170 = vpop.f32.mrb[0].mxu0
  %3171 = vdwg.mxu0
  %3172 = vrot.lane.b32.xlu0 %v1045, 96
  %v3173 = vpop.permute.xlu0 %3172
  %3174 = vrot.lane.b32.xlu0 %v1052, 96
  %v3175 = vpop.permute.xlu0 %3174
  %3176 = vrot.lane.b32.xlu0 %v1045, 32
  %v3177 = vpop.permute.xlu0 %3176
  %3178 = vrot.lane.b32.xlu0 %v1052, 32
  %v3179 = vpop.permute.xlu0 %3178
  %v3180 = vsel %vm1069, %v3173, 0
  %v3182 = vsel %vm1069, %v3175, 0
  %v3184 = vsel %vm1069, %v3177, 0
  %v3186 = vsel %vm1069, %v3179, 0
  %3188 = vmatprep.subr.mxu0 0.0
  %v3189 = vand.u32 %v3184, 4294901760
  %3190 = vmatpush1.xpose.msra.mxu0 %v3189
  %3191 = vmatprep.subr.mxu0 0.0
  %v3192 = vand.u32 %v3186, 4294901760
  %3193 = vmatpush1.xpose.msra.mxu0 %v3192
  %3194 = vmatprep.subr.mxu0 0.0
  %3195 = vmatpush1.xpose.msra.mxu0 0.0
  %3196 = vmatprep.subr.mxu0 0.0
  %3197 = vmatpush1.xpose.msra.mxu0 0.0
  %3198 = vmatprep.subr.mxu0 0.0
  %3199 = vmatpush1.xpose.msra.mxu0 0.0
  %3200 = vmatprep.subr.mxu0 0.0
  %3201 = vmatpush1.xpose.msra.mxu0 0.0
  %3202 = vmatprep.subr.mxu0 0.0
  %3203 = vmatpush1.xpose.msra.mxu0 0.0
  %3204 = vmatprep.subr.mxu0 0.0
  %3205 = vmatpush1.xpose.msra.mxu0 0.0
  %3206 = vmatprep.subr.mxu0 0.0
  %3207 = vmatpush1.xpose.msra.mxu0 0.0
  %3208 = vmatprep.subr.mxu0 0.0
  %3209 = vmatpush1.xpose.msra.mxu0 0.0
  %3210 = vmatprep.subr.mxu0 0.0
  %3211 = vmatpush1.xpose.msra.mxu0 0.0
  %3212 = vmatprep.subr.mxu0 0.0
  %3213 = vmatpush1.xpose.msra.mxu0 0.0
  %3214 = vmatprep.subr.mxu0 0.0
  %3215 = vmatpush1.xpose.msra.mxu0 0.0
  %3216 = vmatprep.subr.mxu0 0.0
  %3217 = vmatpush1.xpose.msra.mxu0 0.0
  %3218 = vmatprep.subr.mxu0 0.0
  %3219 = vmatpush1.xpose.msra.mxu0 0.0
  %3220 = vmatprep.subr.mxu0 0.0
  %3221 = vmatpush1.xpose.msra.mxu0 0.0
  %3222 = vmatprep.subr.mxu0 0.0
  %3223 = vmatpush1.xpose.msra.mxu0 0.0
  %3224 = vmatprep.subr.mxu0 0.0
  %3225 = vmatpush1.xpose.msra.mxu0 0.0
  %3226 = vmatprep.subr.mxu0 0.0
  %3227 = vmatpush1.xpose.msra.mxu0 0.0
  %3228 = vmatprep.subr.mxu0 0.0
  %3229 = vmatpush1.xpose.msra.mxu0 0.0
  %3230 = vmatprep.subr.mxu0 0.0
  %3231 = vmatpush1.xpose.msra.mxu0 0.0
  %3232 = vmatprep.subr.mxu0 0.0
  %3233 = vmatpush1.xpose.msra.mxu0 0.0
  %3234 = vmatprep.subr.mxu0 0.0
  %3235 = vmatpush1.xpose.msra.mxu0 0.0
  %3236 = vmatprep.subr.mxu0 0.0
  %3237 = vmatpush1.xpose.msra.mxu0 0.0
  %3238 = vmatprep.subr.mxu0 0.0
  %3239 = vmatpush1.xpose.msra.mxu0 0.0
  %3240 = vmatprep.subr.mxu0 0.0
  %3241 = vmatpush1.xpose.msra.mxu0 0.0
  %3242 = vmatprep.subr.mxu0 0.0
  %3243 = vmatpush1.xpose.msra.mxu0 0.0
  %3244 = vmatprep.subr.mxu0 0.0
  %3245 = vmatpush1.xpose.msra.mxu0 0.0
  %3246 = vmatprep.subr.mxu0 0.0
  %3247 = vmatpush1.xpose.msra.mxu0 0.0
  %3248 = vmatprep.subr.mxu0 0.0
  %3249 = vmatpush1.xpose.msra.mxu0 0.0
  %3250 = vmatprep.subr.mxu0 0.0
  %3251 = vmatpush1.xpose.msra.mxu0 0.0
  %3252 = vmatprep.subr.mxu0 0.0
  %3253 = vmatpush1.xpose.msra.mxu0 0.0
  %3254 = vmatprep.mubr.f32.mxu0 0.0
  %v3255 = vand.u32 %v3180, 4294901760
  %v3256 = vsub.f32 %v3180, %v3255
  %v3257 = vand.u32 %v3256, 4294901760
  %v3258 = vsub.f32 %v3256, %v3257
  %v3259 = vand.u32 %v3258, 4294901760
  %3260 = vmatmul.mubr.f32.gmra.mrb[0].mxu0 %v3259
  %v3261 = vpop.f32.mrb[0].mxu0
  %v3262 = vadd.f32 0.0, %v3261
  %v3263 = vpop.f32.mrb[0].mxu0
  %3264 = vmatprep.mubr.f32.mxu0 0.0
  %v3265 = vand.u32 %v3182, 4294901760
  %v3266 = vsub.f32 %v3182, %v3265
  %v3267 = vand.u32 %v3266, 4294901760
  %v3268 = vsub.f32 %v3266, %v3267
  %v3269 = vand.u32 %v3268, 4294901760
  %3270 = vmatmul.mubr.f32.gmra.mrb[0].mxu0 %v3269
  %v3271 = vpop.f32.mrb[0].mxu0
  %v3272 = vadd.f32 0.0, %v3271
  %v3273 = vpop.f32.mrb[0].mxu0
  %3274 = vdwg.mxu0
  %3275 = vmatprep.subr.mxu0 0.0
  %v3276 = vand.u32 %v3184, 4294901760
  %v3277 = vsub.f32 %v3184, %v3276
  %v3278 = vand.u32 %v3277, 4294901760
  %v3279 = vsub.f32 %v3277, %v3278
  %v3280 = vand.u32 %v3279, 4294901760
  %3281 = vmatpush1.xpose.msra.mxu0 %v3280
  %3282 = vmatprep.subr.mxu0 0.0
  %v3283 = vand.u32 %v3186, 4294901760
  %v3284 = vsub.f32 %v3186, %v3283
  %v3285 = vand.u32 %v3284, 4294901760
  %v3286 = vsub.f32 %v3284, %v3285
  %v3287 = vand.u32 %v3286, 4294901760
  %3288 = vmatpush1.xpose.msra.mxu0 %v3287
  %3289 = vmatprep.subr.mxu0 0.0
  %3290 = vmatpush1.xpose.msra.mxu0 0.0
  %3291 = vmatprep.subr.mxu0 0.0
  %3292 = vmatpush1.xpose.msra.mxu0 0.0
  %3293 = vmatprep.subr.mxu0 0.0
  %3294 = vmatpush1.xpose.msra.mxu0 0.0
  %3295 = vmatprep.subr.mxu0 0.0
  %3296 = vmatpush1.xpose.msra.mxu0 0.0
  %3297 = vmatprep.subr.mxu0 0.0
  %3298 = vmatpush1.xpose.msra.mxu0 0.0
  %3299 = vmatprep.subr.mxu0 0.0
  %3300 = vmatpush1.xpose.msra.mxu0 0.0
  %3301 = vmatprep.subr.mxu0 0.0
  %3302 = vmatpush1.xpose.msra.mxu0 0.0
  %3303 = vmatprep.subr.mxu0 0.0
  %3304 = vmatpush1.xpose.msra.mxu0 0.0
  %3305 = vmatprep.subr.mxu0 0.0
  %3306 = vmatpush1.xpose.msra.mxu0 0.0
  %3307 = vmatprep.subr.mxu0 0.0
  %3308 = vmatpush1.xpose.msra.mxu0 0.0
  %3309 = vmatprep.subr.mxu0 0.0
  %3310 = vmatpush1.xpose.msra.mxu0 0.0
  %3311 = vmatprep.subr.mxu0 0.0
  %3312 = vmatpush1.xpose.msra.mxu0 0.0
  %3313 = vmatprep.subr.mxu0 0.0
  %3314 = vmatpush1.xpose.msra.mxu0 0.0
  %3315 = vmatprep.subr.mxu0 0.0
  %3316 = vmatpush1.xpose.msra.mxu0 0.0
  %3317 = vmatprep.subr.mxu0 0.0
  %3318 = vmatpush1.xpose.msra.mxu0 0.0
  %3319 = vmatprep.subr.mxu0 0.0
  %3320 = vmatpush1.xpose.msra.mxu0 0.0
  %3321 = vmatprep.subr.mxu0 0.0
  %3322 = vmatpush1.xpose.msra.mxu0 0.0
  %3323 = vmatprep.subr.mxu0 0.0
  %3324 = vmatpush1.xpose.msra.mxu0 0.0
  %3325 = vmatprep.subr.mxu0 0.0
  %3326 = vmatpush1.xpose.msra.mxu0 0.0
  %3327 = vmatprep.subr.mxu0 0.0
  %3328 = vmatpush1.xpose.msra.mxu0 0.0
  %3329 = vmatprep.subr.mxu0 0.0
  %3330 = vmatpush1.xpose.msra.mxu0 0.0
  %3331 = vmatprep.subr.mxu0 0.0
  %3332 = vmatpush1.xpose.msra.mxu0 0.0
  %3333 = vmatprep.subr.mxu0 0.0
  %3334 = vmatpush1.xpose.msra.mxu0 0.0
  %3335 = vmatprep.subr.mxu0 0.0
  %3336 = vmatpush1.xpose.msra.mxu0 0.0
  %3337 = vmatprep.subr.mxu0 0.0
  %3338 = vmatpush1.xpose.msra.mxu0 0.0
  %3339 = vmatprep.subr.mxu0 0.0
  %3340 = vmatpush1.xpose.msra.mxu0 0.0
  %3341 = vmatprep.subr.mxu0 0.0
  %3342 = vmatpush1.xpose.msra.mxu0 0.0
  %3343 = vmatprep.subr.mxu0 0.0
  %3344 = vmatpush1.xpose.msra.mxu0 0.0
  %3345 = vmatprep.subr.mxu0 0.0
  %3346 = vmatpush1.xpose.msra.mxu0 0.0
  %3347 = vmatprep.subr.mxu0 0.0
  %3348 = vmatpush1.xpose.msra.mxu0 0.0
  %3349 = vmatprep.mubr.f32.mxu0 0.0
  %v3350 = vand.u32 %v3180, 4294901760
  %3351 = vmatmul.mubr.f32.gmra.mrb[0].mxu0 %v3350
  %v3352 = vpop.f32.mrb[0].mxu0
  %v3353 = vadd.f32 %v3262, %v3352
  %v3354 = vpop.f32.mrb[0].mxu0
  %3355 = vmatprep.mubr.f32.mxu0 0.0
  %v3356 = vand.u32 %v3182, 4294901760
  %3357 = vmatmul.mubr.f32.gmra.mrb[0].mxu0 %v3356
  %v3358 = vpop.f32.mrb[0].mxu0
  %v3359 = vadd.f32 %v3272, %v3358
  %v3360 = vpop.f32.mrb[0].mxu0
  %3361 = vdwg.mxu0
  %3362 = vmatprep.subr.mxu0 0.0
  %v3363 = vand.u32 %v3184, 4294901760
  %v3364 = vsub.f32 %v3184, %v3363
  %3365 = vmatpush1.xpose.msra.mxu0 %v3364
  %3366 = vmatprep.subr.mxu0 0.0
  %v3367 = vand.u32 %v3186, 4294901760
  %v3368 = vsub.f32 %v3186, %v3367
  %3369 = vmatpush1.xpose.msra.mxu0 %v3368
  %3370 = vmatprep.subr.mxu0 0.0
  %3371 = vmatpush1.xpose.msra.mxu0 0.0
  %3372 = vmatprep.subr.mxu0 0.0
  %3373 = vmatpush1.xpose.msra.mxu0 0.0
  %3374 = vmatprep.subr.mxu0 0.0
  %3375 = vmatpush1.xpose.msra.mxu0 0.0
  %3376 = vmatprep.subr.mxu0 0.0
  %3377 = vmatpush1.xpose.msra.mxu0 0.0
  %3378 = vmatprep.subr.mxu0 0.0
  %3379 = vmatpush1.xpose.msra.mxu0 0.0
  %3380 = vmatprep.subr.mxu0 0.0
  %3381 = vmatpush1.xpose.msra.mxu0 0.0
  %3382 = vmatprep.subr.mxu0 0.0
  %3383 = vmatpush1.xpose.msra.mxu0 0.0
  %3384 = vmatprep.subr.mxu0 0.0
  %3385 = vmatpush1.xpose.msra.mxu0 0.0
  %3386 = vmatprep.subr.mxu0 0.0
  %3387 = vmatpush1.xpose.msra.mxu0 0.0
  %3388 = vmatprep.subr.mxu0 0.0
  %3389 = vmatpush1.xpose.msra.mxu0 0.0
  %3390 = vmatprep.subr.mxu0 0.0
  %3391 = vmatpush1.xpose.msra.mxu0 0.0
  %3392 = vmatprep.subr.mxu0 0.0
  %3393 = vmatpush1.xpose.msra.mxu0 0.0
  %3394 = vmatprep.subr.mxu0 0.0
  %3395 = vmatpush1.xpose.msra.mxu0 0.0
  %3396 = vmatprep.subr.mxu0 0.0
  %3397 = vmatpush1.xpose.msra.mxu0 0.0
  %3398 = vmatprep.subr.mxu0 0.0
  %3399 = vmatpush1.xpose.msra.mxu0 0.0
  %3400 = vmatprep.subr.mxu0 0.0
  %3401 = vmatpush1.xpose.msra.mxu0 0.0
  %3402 = vmatprep.subr.mxu0 0.0
  %3403 = vmatpush1.xpose.msra.mxu0 0.0
  %3404 = vmatprep.subr.mxu0 0.0
  %3405 = vmatpush1.xpose.msra.mxu0 0.0
  %3406 = vmatprep.subr.mxu0 0.0
  %3407 = vmatpush1.xpose.msra.mxu0 0.0
  %3408 = vmatprep.subr.mxu0 0.0
  %3409 = vmatpush1.xpose.msra.mxu0 0.0
  %3410 = vmatprep.subr.mxu0 0.0
  %3411 = vmatpush1.xpose.msra.mxu0 0.0
  %3412 = vmatprep.subr.mxu0 0.0
  %3413 = vmatpush1.xpose.msra.mxu0 0.0
  %3414 = vmatprep.subr.mxu0 0.0
  %3415 = vmatpush1.xpose.msra.mxu0 0.0
  %3416 = vmatprep.subr.mxu0 0.0
  %3417 = vmatpush1.xpose.msra.mxu0 0.0
  %3418 = vmatprep.subr.mxu0 0.0
  %3419 = vmatpush1.xpose.msra.mxu0 0.0
  %3420 = vmatprep.subr.mxu0 0.0
  %3421 = vmatpush1.xpose.msra.mxu0 0.0
  %3422 = vmatprep.subr.mxu0 0.0
  %3423 = vmatpush1.xpose.msra.mxu0 0.0
  %3424 = vmatprep.subr.mxu0 0.0
  %3425 = vmatpush1.xpose.msra.mxu0 0.0
  %3426 = vmatprep.subr.mxu0 0.0
  %3427 = vmatpush1.xpose.msra.mxu0 0.0
  %3428 = vmatprep.subr.mxu0 0.0
  %3429 = vmatpush1.xpose.msra.mxu0 0.0
  %3430 = vmatprep.mubr.f32.mxu0 0.0
  %v3431 = vand.u32 %v3180, 4294901760
  %v3432 = vsub.f32 %v3180, %v3431
  %3433 = vmatmul.mubr.f32.gmra.mrb[0].mxu0 %v3432
  %v3434 = vpop.f32.mrb[0].mxu0
  %v3435 = vadd.f32 %v3353, %v3434
  %v3436 = vpop.f32.mrb[0].mxu0
  %3437 = vmatprep.mubr.f32.mxu0 0.0
  %v3438 = vand.u32 %v3182, 4294901760
  %v3439 = vsub.f32 %v3182, %v3438
  %3440 = vmatmul.mubr.f32.gmra.mrb[0].mxu0 %v3439
  %v3441 = vpop.f32.mrb[0].mxu0
  %v3442 = vadd.f32 %v3359, %v3441
  %v3443 = vpop.f32.mrb[0].mxu0
  %3444 = vdwg.mxu0
  %3445 = vmatprep.subr.mxu0 0.0
  %v3446 = vand.u32 %v3184, 4294901760
  %3447 = vmatpush1.xpose.msra.mxu0 %v3446
  %3448 = vmatprep.subr.mxu0 0.0
  %v3449 = vand.u32 %v3186, 4294901760
  %3450 = vmatpush1.xpose.msra.mxu0 %v3449
  %3451 = vmatprep.subr.mxu0 0.0
  %3452 = vmatpush1.xpose.msra.mxu0 0.0
  %3453 = vmatprep.subr.mxu0 0.0
  %3454 = vmatpush1.xpose.msra.mxu0 0.0
  %3455 = vmatprep.subr.mxu0 0.0
  %3456 = vmatpush1.xpose.msra.mxu0 0.0
  %3457 = vmatprep.subr.mxu0 0.0
  %3458 = vmatpush1.xpose.msra.mxu0 0.0
  %3459 = vmatprep.subr.mxu0 0.0
  %3460 = vmatpush1.xpose.msra.mxu0 0.0
  %3461 = vmatprep.subr.mxu0 0.0
  %3462 = vmatpush1.xpose.msra.mxu0 0.0
  %3463 = vmatprep.subr.mxu0 0.0
  %3464 = vmatpush1.xpose.msra.mxu0 0.0
  %3465 = vmatprep.subr.mxu0 0.0
  %3466 = vmatpush1.xpose.msra.mxu0 0.0
  %3467 = vmatprep.subr.mxu0 0.0
  %3468 = vmatpush1.xpose.msra.mxu0 0.0
  %3469 = vmatprep.subr.mxu0 0.0
  %3470 = vmatpush1.xpose.msra.mxu0 0.0
  %3471 = vmatprep.subr.mxu0 0.0
  %3472 = vmatpush1.xpose.msra.mxu0 0.0
  %3473 = vmatprep.subr.mxu0 0.0
  %3474 = vmatpush1.xpose.msra.mxu0 0.0
  %3475 = vmatprep.subr.mxu0 0.0
  %3476 = vmatpush1.xpose.msra.mxu0 0.0
  %3477 = vmatprep.subr.mxu0 0.0
  %3478 = vmatpush1.xpose.msra.mxu0 0.0
  %3479 = vmatprep.subr.mxu0 0.0
  %3480 = vmatpush1.xpose.msra.mxu0 0.0
  %3481 = vmatprep.subr.mxu0 0.0
  %3482 = vmatpush1.xpose.msra.mxu0 0.0
  %3483 = vmatprep.subr.mxu0 0.0
  %3484 = vmatpush1.xpose.msra.mxu0 0.0
  %3485 = vmatprep.subr.mxu0 0.0
  %3486 = vmatpush1.xpose.msra.mxu0 0.0
  %3487 = vmatprep.subr.mxu0 0.0
  %3488 = vmatpush1.xpose.msra.mxu0 0.0
  %3489 = vmatprep.subr.mxu0 0.0
  %3490 = vmatpush1.xpose.msra.mxu0 0.0
  %3491 = vmatprep.subr.mxu0 0.0
  %3492 = vmatpush1.xpose.msra.mxu0 0.0
  %3493 = vmatprep.subr.mxu0 0.0
  %3494 = vmatpush1.xpose.msra.mxu0 0.0
  %3495 = vmatprep.subr.mxu0 0.0
  %3496 = vmatpush1.xpose.msra.mxu0 0.0
  %3497 = vmatprep.subr.mxu0 0.0
  %3498 = vmatpush1.xpose.msra.mxu0 0.0
  %3499 = vmatprep.subr.mxu0 0.0
  %3500 = vmatpush1.xpose.msra.mxu0 0.0
  %3501 = vmatprep.subr.mxu0 0.0
  %3502 = vmatpush1.xpose.msra.mxu0 0.0
  %3503 = vmatprep.subr.mxu0 0.0
  %3504 = vmatpush1.xpose.msra.mxu0 0.0
  %3505 = vmatprep.subr.mxu0 0.0
  %3506 = vmatpush1.xpose.msra.mxu0 0.0
  %3507 = vmatprep.subr.mxu0 0.0
  %3508 = vmatpush1.xpose.msra.mxu0 0.0
  %3509 = vmatprep.subr.mxu0 0.0
  %3510 = vmatpush1.xpose.msra.mxu0 0.0
  %3511 = vmatprep.mubr.f32.mxu0 0.0
  %v3512 = vand.u32 %v3180, 4294901760
  %v3513 = vsub.f32 %v3180, %v3512
  %v3514 = vand.u32 %v3513, 4294901760
  %3515 = vmatmul.mubr.f32.gmra.mrb[0].mxu0 %v3514
  %v3516 = vpop.f32.mrb[0].mxu0
  %v3517 = vadd.f32 %v3435, %v3516
  %v3518 = vpop.f32.mrb[0].mxu0
  %3519 = vmatprep.mubr.f32.mxu0 0.0
  %v3520 = vand.u32 %v3182, 4294901760
  %v3521 = vsub.f32 %v3182, %v3520
  %v3522 = vand.u32 %v3521, 4294901760
  %3523 = vmatmul.mubr.f32.gmra.mrb[0].mxu0 %v3522
  %v3524 = vpop.f32.mrb[0].mxu0
  %v3525 = vadd.f32 %v3442, %v3524
  %v3526 = vpop.f32.mrb[0].mxu0
  %3527 = vdwg.mxu0
  %3528 = vmatprep.subr.mxu0 0.0
  %v3529 = vand.u32 %v3184, 4294901760
  %v3530 = vsub.f32 %v3184, %v3529
  %v3531 = vand.u32 %v3530, 4294901760
  %3532 = vmatpush1.xpose.msra.mxu0 %v3531
  %3533 = vmatprep.subr.mxu0 0.0
  %v3534 = vand.u32 %v3186, 4294901760
  %v3535 = vsub.f32 %v3186, %v3534
  %v3536 = vand.u32 %v3535, 4294901760
  %3537 = vmatpush1.xpose.msra.mxu0 %v3536
  %3538 = vmatprep.subr.mxu0 0.0
  %3539 = vmatpush1.xpose.msra.mxu0 0.0
  %3540 = vmatprep.subr.mxu0 0.0
  %3541 = vmatpush1.xpose.msra.mxu0 0.0
  %3542 = vmatprep.subr.mxu0 0.0
  %3543 = vmatpush1.xpose.msra.mxu0 0.0
  %3544 = vmatprep.subr.mxu0 0.0
  %3545 = vmatpush1.xpose.msra.mxu0 0.0
  %3546 = vmatprep.subr.mxu0 0.0
  %3547 = vmatpush1.xpose.msra.mxu0 0.0
  %3548 = vmatprep.subr.mxu0 0.0
  %3549 = vmatpush1.xpose.msra.mxu0 0.0
  %3550 = vmatprep.subr.mxu0 0.0
  %3551 = vmatpush1.xpose.msra.mxu0 0.0
  %3552 = vmatprep.subr.mxu0 0.0
  %3553 = vmatpush1.xpose.msra.mxu0 0.0
  %3554 = vmatprep.subr.mxu0 0.0
  %3555 = vmatpush1.xpose.msra.mxu0 0.0
  %3556 = vmatprep.subr.mxu0 0.0
  %3557 = vmatpush1.xpose.msra.mxu0 0.0
  %3558 = vmatprep.subr.mxu0 0.0
  %3559 = vmatpush1.xpose.msra.mxu0 0.0
  %3560 = vmatprep.subr.mxu0 0.0
  %3561 = vmatpush1.xpose.msra.mxu0 0.0
  %3562 = vmatprep.subr.mxu0 0.0
  %3563 = vmatpush1.xpose.msra.mxu0 0.0
  %3564 = vmatprep.subr.mxu0 0.0
  %3565 = vmatpush1.xpose.msra.mxu0 0.0
  %3566 = vmatprep.subr.mxu0 0.0
  %3567 = vmatpush1.xpose.msra.mxu0 0.0
  %3568 = vmatprep.subr.mxu0 0.0
  %3569 = vmatpush1.xpose.msra.mxu0 0.0
  %3570 = vmatprep.subr.mxu0 0.0
  %3571 = vmatpush1.xpose.msra.mxu0 0.0
  %3572 = vmatprep.subr.mxu0 0.0
  %3573 = vmatpush1.xpose.msra.mxu0 0.0
  %3574 = vmatprep.subr.mxu0 0.0
  %3575 = vmatpush1.xpose.msra.mxu0 0.0
  %3576 = vmatprep.subr.mxu0 0.0
  %3577 = vmatpush1.xpose.msra.mxu0 0.0
  %3578 = vmatprep.subr.mxu0 0.0
  %3579 = vmatpush1.xpose.msra.mxu0 0.0
  %3580 = vmatprep.subr.mxu0 0.0
  %3581 = vmatpush1.xpose.msra.mxu0 0.0
  %3582 = vmatprep.subr.mxu0 0.0
  %3583 = vmatpush1.xpose.msra.mxu0 0.0
  %3584 = vmatprep.subr.mxu0 0.0
  %3585 = vmatpush1.xpose.msra.mxu0 0.0
  %3586 = vmatprep.subr.mxu0 0.0
  %3587 = vmatpush1.xpose.msra.mxu0 0.0
  %3588 = vmatprep.subr.mxu0 0.0
  %3589 = vmatpush1.xpose.msra.mxu0 0.0
  %3590 = vmatprep.subr.mxu0 0.0
  %3591 = vmatpush1.xpose.msra.mxu0 0.0
  %3592 = vmatprep.subr.mxu0 0.0
  %3593 = vmatpush1.xpose.msra.mxu0 0.0
  %3594 = vmatprep.subr.mxu0 0.0
  %3595 = vmatpush1.xpose.msra.mxu0 0.0
  %3596 = vmatprep.subr.mxu0 0.0
  %3597 = vmatpush1.xpose.msra.mxu0 0.0
  %3598 = vmatprep.mubr.f32.mxu0 0.0
  %v3599 = vand.u32 %v3180, 4294901760
  %3600 = vmatmul.mubr.f32.gmra.mrb[0].mxu0 %v3599
  %v3601 = vpop.f32.mrb[0].mxu0
  %v3602 = vadd.f32 %v3517, %v3601
  %v3603 = vpop.f32.mrb[0].mxu0
  %3604 = vmatprep.mubr.f32.mxu0 0.0
  %v3605 = vand.u32 %v3182, 4294901760
  %3606 = vmatmul.mubr.f32.gmra.mrb[0].mxu0 %v3605
  %v3607 = vpop.f32.mrb[0].mxu0
  %v3608 = vadd.f32 %v3525, %v3607
  %v3609 = vpop.f32.mrb[0].mxu0
  %3610 = vdwg.mxu0
  %3611 = vmatprep.subr.mxu0 0.0
  %v3612 = vand.u32 %v3184, 4294901760
  %3613 = vmatpush1.xpose.msra.mxu0 %v3612
  %3614 = vmatprep.subr.mxu0 0.0
  %v3615 = vand.u32 %v3186, 4294901760
  %3616 = vmatpush1.xpose.msra.mxu0 %v3615
  %3617 = vmatprep.subr.mxu0 0.0
  %3618 = vmatpush1.xpose.msra.mxu0 0.0
  %3619 = vmatprep.subr.mxu0 0.0
  %3620 = vmatpush1.xpose.msra.mxu0 0.0
  %3621 = vmatprep.subr.mxu0 0.0
  %3622 = vmatpush1.xpose.msra.mxu0 0.0
  %3623 = vmatprep.subr.mxu0 0.0
  %3624 = vmatpush1.xpose.msra.mxu0 0.0
  %3625 = vmatprep.subr.mxu0 0.0
  %3626 = vmatpush1.xpose.msra.mxu0 0.0
  %3627 = vmatprep.subr.mxu0 0.0
  %3628 = vmatpush1.xpose.msra.mxu0 0.0
  %3629 = vmatprep.subr.mxu0 0.0
  %3630 = vmatpush1.xpose.msra.mxu0 0.0
  %3631 = vmatprep.subr.mxu0 0.0
  %3632 = vmatpush1.xpose.msra.mxu0 0.0
  %3633 = vmatprep.subr.mxu0 0.0
  %3634 = vmatpush1.xpose.msra.mxu0 0.0
  %3635 = vmatprep.subr.mxu0 0.0
  %3636 = vmatpush1.xpose.msra.mxu0 0.0
  %3637 = vmatprep.subr.mxu0 0.0
  %3638 = vmatpush1.xpose.msra.mxu0 0.0
  %3639 = vmatprep.subr.mxu0 0.0
  %3640 = vmatpush1.xpose.msra.mxu0 0.0
  %3641 = vmatprep.subr.mxu0 0.0
  %3642 = vmatpush1.xpose.msra.mxu0 0.0
  %3643 = vmatprep.subr.mxu0 0.0
  %3644 = vmatpush1.xpose.msra.mxu0 0.0
  %3645 = vmatprep.subr.mxu0 0.0
  %3646 = vmatpush1.xpose.msra.mxu0 0.0
  %3647 = vmatprep.subr.mxu0 0.0
  %3648 = vmatpush1.xpose.msra.mxu0 0.0
  %3649 = vmatprep.subr.mxu0 0.0
  %3650 = vmatpush1.xpose.msra.mxu0 0.0
  %3651 = vmatprep.subr.mxu0 0.0
  %3652 = vmatpush1.xpose.msra.mxu0 0.0
  %3653 = vmatprep.subr.mxu0 0.0
  %3654 = vmatpush1.xpose.msra.mxu0 0.0
  %3655 = vmatprep.subr.mxu0 0.0
  %3656 = vmatpush1.xpose.msra.mxu0 0.0
  %3657 = vmatprep.subr.mxu0 0.0
  %3658 = vmatpush1.xpose.msra.mxu0 0.0
  %3659 = vmatprep.subr.mxu0 0.0
  %3660 = vmatpush1.xpose.msra.mxu0 0.0
  %3661 = vmatprep.subr.mxu0 0.0
  %3662 = vmatpush1.xpose.msra.mxu0 0.0
  %3663 = vmatprep.subr.mxu0 0.0
  %3664 = vmatpush1.xpose.msra.mxu0 0.0
  %3665 = vmatprep.subr.mxu0 0.0
  %3666 = vmatpush1.xpose.msra.mxu0 0.0
  %3667 = vmatprep.subr.mxu0 0.0
  %3668 = vmatpush1.xpose.msra.mxu0 0.0
  %3669 = vmatprep.subr.mxu0 0.0
  %3670 = vmatpush1.xpose.msra.mxu0 0.0
  %3671 = vmatprep.subr.mxu0 0.0
  %3672 = vmatpush1.xpose.msra.mxu0 0.0
  %3673 = vmatprep.subr.mxu0 0.0
  %3674 = vmatpush1.xpose.msra.mxu0 0.0
  %3675 = vmatprep.subr.mxu0 0.0
  %3676 = vmatpush1.xpose.msra.mxu0 0.0
  %3677 = vmatprep.mubr.f32.mxu0 0.0
  %v3678 = vand.u32 %v3180, 4294901760
  %3679 = vmatmul.mubr.f32.gmra.mrb[0].mxu0 %v3678
  %v3680 = vpop.f32.mrb[0].mxu0
  %v3681 = vadd.f32 %v3602, %v3680
  %v3682 = vpop.f32.mrb[0].mxu0
  %3683 = vmatprep.mubr.f32.mxu0 0.0
  %v3684 = vand.u32 %v3182, 4294901760
  %3685 = vmatmul.mubr.f32.gmra.mrb[0].mxu0 %v3684
  %v3686 = vpop.f32.mrb[0].mxu0
  %v3687 = vadd.f32 %v3608, %v3686
  %v3688 = vpop.f32.mrb[0].mxu0
  %3689 = vdwg.mxu0
  %v3690 = vsel %vm1580, %v3681, -inf
  %3691 = vmax.xlane.f32.xlu0 %v3690
  %v3692 = vpop.xlane.xlu0 %3691
  %v3693 = vsel %vm1584, %v3687, -inf
  %3694 = vmax.xlane.f32.xlu0 %v3693
  %v3695 = vpop.xlane.xlu0 %3694
  %v3696 = vsub.f32 %v3681, %v3692
  %v3697 = vsub.f32 %v3687, %v3695
  %v3698 = vmul.f32 %v3696, 1.442695
  %v3699 = vpow.pop %v3698
  %v3700 = vmul.f32 %v3697, 1.442695
  %v3701 = vpow.pop %v3700
  %v3702 = vsel %vm1580, %v3699, 0.0
  %3703 = vadd.xlane.f32.xlu0 %v3702
  %v3704 = vpop.xlane.xlu0 %3703
  %v3705 = vsel %vm1584, %v3701, 0.0
  %3706 = vadd.xlane.f32.xlu0 %v3705
  %v3707 = vpop.xlane.xlu0 %3706
  %v3708 = vrcp.pop %v3704
  %v3709 = vmul.f32 %v3699, %v3708
  %v3710 = vrcp.pop %v3707
  %v3711 = vmul.f32 %v3701, %v3710
  %3712 = vrot.lane.b32.xlu0 %v1047, 96
  %v3713 = vpop.permute.xlu0 %3712
  %3714 = vrot.lane.b32.xlu0 %v1054, 96
  %v3715 = vpop.permute.xlu0 %3714
  %v3718 = vsel %vm1580, %v3709, 0
  %v3721 = vsel %vm1580, %v3711, 0
  %v3723 = vsel %vm1610, %v3715, 0
  %3725 = vmatprep.subr.mxu0 0.0
  %v3726 = vand.u32 %v3713, 4294901760
  %3727 = vmatpush1.msra.mxu0 %v3726
  %3728 = vmatprep.subr.mxu0 0.0
  %v3729 = vand.u32 %v3723, 4294901760
  %3730 = vmatpush1.msra.mxu0 %v3729
  %3731 = vmatprep.subr.mxu0 0.0
  %3732 = vmatpush1.msra.mxu0 0.0
  %3733 = vmatprep.subr.mxu0 0.0
  %3734 = vmatpush1.msra.mxu0 0.0
  %3735 = vmatprep.subr.mxu0 0.0
  %3736 = vmatpush1.msra.mxu0 0.0
  %3737 = vmatprep.subr.mxu0 0.0
  %3738 = vmatpush1.msra.mxu0 0.0
  %3739 = vmatprep.subr.mxu0 0.0
  %3740 = vmatpush1.msra.mxu0 0.0
  %3741 = vmatprep.subr.mxu0 0.0
  %3742 = vmatpush1.msra.mxu0 0.0
  %3743 = vmatprep.subr.mxu0 0.0
  %3744 = vmatpush1.msra.mxu0 0.0
  %3745 = vmatprep.subr.mxu0 0.0
  %3746 = vmatpush1.msra.mxu0 0.0
  %3747 = vmatprep.subr.mxu0 0.0
  %3748 = vmatpush1.msra.mxu0 0.0
  %3749 = vmatprep.subr.mxu0 0.0
  %3750 = vmatpush1.msra.mxu0 0.0
  %3751 = vmatprep.subr.mxu0 0.0
  %3752 = vmatpush1.msra.mxu0 0.0
  %3753 = vmatprep.subr.mxu0 0.0
  %3754 = vmatpush1.msra.mxu0 0.0
  %3755 = vmatprep.subr.mxu0 0.0
  %3756 = vmatpush1.msra.mxu0 0.0
  %3757 = vmatprep.subr.mxu0 0.0
  %3758 = vmatpush1.msra.mxu0 0.0
  %3759 = vmatprep.subr.mxu0 0.0
  %3760 = vmatpush1.msra.mxu0 0.0
  %3761 = vmatprep.subr.mxu0 0.0
  %3762 = vmatpush1.msra.mxu0 0.0
  %3763 = vmatprep.subr.mxu0 0.0
  %3764 = vmatpush1.msra.mxu0 0.0
  %3765 = vmatprep.subr.mxu0 0.0
  %3766 = vmatpush1.msra.mxu0 0.0
  %3767 = vmatprep.subr.mxu0 0.0
  %3768 = vmatpush1.msra.mxu0 0.0
  %3769 = vmatprep.subr.mxu0 0.0
  %3770 = vmatpush1.msra.mxu0 0.0
  %3771 = vmatprep.subr.mxu0 0.0
  %3772 = vmatpush1.msra.mxu0 0.0
  %3773 = vmatprep.subr.mxu0 0.0
  %3774 = vmatpush1.msra.mxu0 0.0
  %3775 = vmatprep.subr.mxu0 0.0
  %3776 = vmatpush1.msra.mxu0 0.0
  %3777 = vmatprep.subr.mxu0 0.0
  %3778 = vmatpush1.msra.mxu0 0.0
  %3779 = vmatprep.subr.mxu0 0.0
  %3780 = vmatpush1.msra.mxu0 0.0
  %3781 = vmatprep.subr.mxu0 0.0
  %3782 = vmatpush1.msra.mxu0 0.0
  %3783 = vmatprep.subr.mxu0 0.0
  %3784 = vmatpush1.msra.mxu0 0.0
  %3785 = vmatprep.subr.mxu0 0.0
  %3786 = vmatpush1.msra.mxu0 0.0
  %3787 = vmatprep.subr.mxu0 0.0
  %3788 = vmatpush1.msra.mxu0 0.0
  %3789 = vmatprep.subr.mxu0 0.0
  %3790 = vmatpush1.msra.mxu0 0.0
  %3791 = vmatprep.mubr.f32.mxu0 0.0
  %v3792 = vand.u32 %v3718, 4294901760
  %v3793 = vsub.f32 %v3718, %v3792
  %v3794 = vand.u32 %v3793, 4294901760
  %v3795 = vsub.f32 %v3793, %v3794
  %v3796 = vand.u32 %v3795, 4294901760
  %3797 = vmatmul.mubr.f32.gmra.mrb[0].mxu0 %v3796
  %v3798 = vpop.f32.mrb[0].mxu0
  %v3799 = vadd.f32 0.0, %v3798
  %v3800 = vpop.f32.mrb[0].mxu0
  %3801 = vmatprep.mubr.f32.mxu0 0.0
  %v3802 = vand.u32 %v3721, 4294901760
  %v3803 = vsub.f32 %v3721, %v3802
  %v3804 = vand.u32 %v3803, 4294901760
  %v3805 = vsub.f32 %v3803, %v3804
  %v3806 = vand.u32 %v3805, 4294901760
  %3807 = vmatmul.mubr.f32.gmra.mrb[0].mxu0 %v3806
  %v3808 = vpop.f32.mrb[0].mxu0
  %v3809 = vadd.f32 0.0, %v3808
  %v3810 = vpop.f32.mrb[0].mxu0
  %3811 = vdwg.mxu0
  %3812 = vmatprep.subr.mxu0 0.0
  %v3813 = vand.u32 %v3713, 4294901760
  %v3814 = vsub.f32 %v3713, %v3813
  %v3815 = vand.u32 %v3814, 4294901760
  %v3816 = vsub.f32 %v3814, %v3815
  %v3817 = vand.u32 %v3816, 4294901760
  %3818 = vmatpush1.msra.mxu0 %v3817
  %3819 = vmatprep.subr.mxu0 0.0
  %v3820 = vand.u32 %v3723, 4294901760
  %v3821 = vsub.f32 %v3723, %v3820
  %v3822 = vand.u32 %v3821, 4294901760
  %v3823 = vsub.f32 %v3821, %v3822
  %v3824 = vand.u32 %v3823, 4294901760
  %3825 = vmatpush1.msra.mxu0 %v3824
  %3826 = vmatprep.subr.mxu0 0.0
  %3827 = vmatpush1.msra.mxu0 0.0
  %3828 = vmatprep.subr.mxu0 0.0
  %3829 = vmatpush1.msra.mxu0 0.0
  %3830 = vmatprep.subr.mxu0 0.0
  %3831 = vmatpush1.msra.mxu0 0.0
  %3832 = vmatprep.subr.mxu0 0.0
  %3833 = vmatpush1.msra.mxu0 0.0
  %3834 = vmatprep.subr.mxu0 0.0
  %3835 = vmatpush1.msra.mxu0 0.0
  %3836 = vmatprep.subr.mxu0 0.0
  %3837 = vmatpush1.msra.mxu0 0.0
  %3838 = vmatprep.subr.mxu0 0.0
  %3839 = vmatpush1.msra.mxu0 0.0
  %3840 = vmatprep.subr.mxu0 0.0
  %3841 = vmatpush1.msra.mxu0 0.0
  %3842 = vmatprep.subr.mxu0 0.0
  %3843 = vmatpush1.msra.mxu0 0.0
  %3844 = vmatprep.subr.mxu0 0.0
  %3845 = vmatpush1.msra.mxu0 0.0
  %3846 = vmatprep.subr.mxu0 0.0
  %3847 = vmatpush1.msra.mxu0 0.0
  %3848 = vmatprep.subr.mxu0 0.0
  %3849 = vmatpush1.msra.mxu0 0.0
  %3850 = vmatprep.subr.mxu0 0.0
  %3851 = vmatpush1.msra.mxu0 0.0
  %3852 = vmatprep.subr.mxu0 0.0
  %3853 = vmatpush1.msra.mxu0 0.0
  %3854 = vmatprep.subr.mxu0 0.0
  %3855 = vmatpush1.msra.mxu0 0.0
  %3856 = vmatprep.subr.mxu0 0.0
  %3857 = vmatpush1.msra.mxu0 0.0
  %3858 = vmatprep.subr.mxu0 0.0
  %3859 = vmatpush1.msra.mxu0 0.0
  %3860 = vmatprep.subr.mxu0 0.0
  %3861 = vmatpush1.msra.mxu0 0.0
  %3862 = vmatprep.subr.mxu0 0.0
  %3863 = vmatpush1.msra.mxu0 0.0
  %3864 = vmatprep.subr.mxu0 0.0
  %3865 = vmatpush1.msra.mxu0 0.0
  %3866 = vmatprep.subr.mxu0 0.0
  %3867 = vmatpush1.msra.mxu0 0.0
  %3868 = vmatprep.subr.mxu0 0.0
  %3869 = vmatpush1.msra.mxu0 0.0
  %3870 = vmatprep.subr.mxu0 0.0
  %3871 = vmatpush1.msra.mxu0 0.0
  %3872 = vmatprep.subr.mxu0 0.0
  %3873 = vmatpush1.msra.mxu0 0.0
  %3874 = vmatprep.subr.mxu0 0.0
  %3875 = vmatpush1.msra.mxu0 0.0
  %3876 = vmatprep.subr.mxu0 0.0
  %3877 = vmatpush1.msra.mxu0 0.0
  %3878 = vmatprep.subr.mxu0 0.0
  %3879 = vmatpush1.msra.mxu0 0.0
  %3880 = vmatprep.subr.mxu0 0.0
  %3881 = vmatpush1.msra.mxu0 0.0
  %3882 = vmatprep.subr.mxu0 0.0
  %3883 = vmatpush1.msra.mxu0 0.0
  %3884 = vmatprep.subr.mxu0 0.0
  %3885 = vmatpush1.msra.mxu0 0.0
  %3886 = vmatprep.mubr.f32.mxu0 0.0
  %v3887 = vand.u32 %v3718, 4294901760
  %3888 = vmatmul.mubr.f32.gmra.mrb[0].mxu0 %v3887
  %v3889 = vpop.f32.mrb[0].mxu0
  %v3890 = vadd.f32 %v3799, %v3889
  %v3891 = vpop.f32.mrb[0].mxu0
  %3892 = vmatprep.mubr.f32.mxu0 0.0
  %v3893 = vand.u32 %v3721, 4294901760
  %3894 = vmatmul.mubr.f32.gmra.mrb[0].mxu0 %v3893
  %v3895 = vpop.f32.mrb[0].mxu0
  %v3896 = vadd.f32 %v3809, %v3895
  %v3897 = vpop.f32.mrb[0].mxu0
  %3898 = vdwg.mxu0
  %3899 = vmatprep.subr.mxu0 0.0
  %v3900 = vand.u32 %v3713, 4294901760
  %v3901 = vsub.f32 %v3713, %v3900
  %3902 = vmatpush1.msra.mxu0 %v3901
  %3903 = vmatprep.subr.mxu0 0.0
  %v3904 = vand.u32 %v3723, 4294901760
  %v3905 = vsub.f32 %v3723, %v3904
  %3906 = vmatpush1.msra.mxu0 %v3905
  %3907 = vmatprep.subr.mxu0 0.0
  %3908 = vmatpush1.msra.mxu0 0.0
  %3909 = vmatprep.subr.mxu0 0.0
  %3910 = vmatpush1.msra.mxu0 0.0
  %3911 = vmatprep.subr.mxu0 0.0
  %3912 = vmatpush1.msra.mxu0 0.0
  %3913 = vmatprep.subr.mxu0 0.0
  %3914 = vmatpush1.msra.mxu0 0.0
  %3915 = vmatprep.subr.mxu0 0.0
  %3916 = vmatpush1.msra.mxu0 0.0
  %3917 = vmatprep.subr.mxu0 0.0
  %3918 = vmatpush1.msra.mxu0 0.0
  %3919 = vmatprep.subr.mxu0 0.0
  %3920 = vmatpush1.msra.mxu0 0.0
  %3921 = vmatprep.subr.mxu0 0.0
  %3922 = vmatpush1.msra.mxu0 0.0
  %3923 = vmatprep.subr.mxu0 0.0
  %3924 = vmatpush1.msra.mxu0 0.0
  %3925 = vmatprep.subr.mxu0 0.0
  %3926 = vmatpush1.msra.mxu0 0.0
  %3927 = vmatprep.subr.mxu0 0.0
  %3928 = vmatpush1.msra.mxu0 0.0
  %3929 = vmatprep.subr.mxu0 0.0
  %3930 = vmatpush1.msra.mxu0 0.0
  %3931 = vmatprep.subr.mxu0 0.0
  %3932 = vmatpush1.msra.mxu0 0.0
  %3933 = vmatprep.subr.mxu0 0.0
  %3934 = vmatpush1.msra.mxu0 0.0
  %3935 = vmatprep.subr.mxu0 0.0
  %3936 = vmatpush1.msra.mxu0 0.0
  %3937 = vmatprep.subr.mxu0 0.0
  %3938 = vmatpush1.msra.mxu0 0.0
  %3939 = vmatprep.subr.mxu0 0.0
  %3940 = vmatpush1.msra.mxu0 0.0
  %3941 = vmatprep.subr.mxu0 0.0
  %3942 = vmatpush1.msra.mxu0 0.0
  %3943 = vmatprep.subr.mxu0 0.0
  %3944 = vmatpush1.msra.mxu0 0.0
  %3945 = vmatprep.subr.mxu0 0.0
  %3946 = vmatpush1.msra.mxu0 0.0
  %3947 = vmatprep.subr.mxu0 0.0
  %3948 = vmatpush1.msra.mxu0 0.0
  %3949 = vmatprep.subr.mxu0 0.0
  %3950 = vmatpush1.msra.mxu0 0.0
  %3951 = vmatprep.subr.mxu0 0.0
  %3952 = vmatpush1.msra.mxu0 0.0
  %3953 = vmatprep.subr.mxu0 0.0
  %3954 = vmatpush1.msra.mxu0 0.0
  %3955 = vmatprep.subr.mxu0 0.0
  %3956 = vmatpush1.msra.mxu0 0.0
  %3957 = vmatprep.subr.mxu0 0.0
  %3958 = vmatpush1.msra.mxu0 0.0
  %3959 = vmatprep.subr.mxu0 0.0
  %3960 = vmatpush1.msra.mxu0 0.0
  %3961 = vmatprep.subr.mxu0 0.0
  %3962 = vmatpush1.msra.mxu0 0.0
  %3963 = vmatprep.subr.mxu0 0.0
  %3964 = vmatpush1.msra.mxu0 0.0
  %3965 = vmatprep.subr.mxu0 0.0
  %3966 = vmatpush1.msra.mxu0 0.0
  %3967 = vmatprep.mubr.f32.mxu0 0.0
  %v3968 = vand.u32 %v3718, 4294901760
  %v3969 = vsub.f32 %v3718, %v3968
  %3970 = vmatmul.mubr.f32.gmra.mrb[0].mxu0 %v3969
  %v3971 = vpop.f32.mrb[0].mxu0
  %v3972 = vadd.f32 %v3890, %v3971
  %v3973 = vpop.f32.mrb[0].mxu0
  %3974 = vmatprep.mubr.f32.mxu0 0.0
  %v3975 = vand.u32 %v3721, 4294901760
  %v3976 = vsub.f32 %v3721, %v3975
  %3977 = vmatmul.mubr.f32.gmra.mrb[0].mxu0 %v3976
  %v3978 = vpop.f32.mrb[0].mxu0
  %v3979 = vadd.f32 %v3896, %v3978
  %v3980 = vpop.f32.mrb[0].mxu0
  %3981 = vdwg.mxu0
  %3982 = vmatprep.subr.mxu0 0.0
  %v3983 = vand.u32 %v3713, 4294901760
  %3984 = vmatpush1.msra.mxu0 %v3983
  %3985 = vmatprep.subr.mxu0 0.0
  %v3986 = vand.u32 %v3723, 4294901760
  %3987 = vmatpush1.msra.mxu0 %v3986
  %3988 = vmatprep.subr.mxu0 0.0
  %3989 = vmatpush1.msra.mxu0 0.0
  %3990 = vmatprep.subr.mxu0 0.0
  %3991 = vmatpush1.msra.mxu0 0.0
  %3992 = vmatprep.subr.mxu0 0.0
  %3993 = vmatpush1.msra.mxu0 0.0
  %3994 = vmatprep.subr.mxu0 0.0
  %3995 = vmatpush1.msra.mxu0 0.0
  %3996 = vmatprep.subr.mxu0 0.0
  %3997 = vmatpush1.msra.mxu0 0.0
  %3998 = vmatprep.subr.mxu0 0.0
  %3999 = vmatpush1.msra.mxu0 0.0
  %4000 = vmatprep.subr.mxu0 0.0
  %4001 = vmatpush1.msra.mxu0 0.0
  %4002 = vmatprep.subr.mxu0 0.0
  %4003 = vmatpush1.msra.mxu0 0.0
  %4004 = vmatprep.subr.mxu0 0.0
  %4005 = vmatpush1.msra.mxu0 0.0
  %4006 = vmatprep.subr.mxu0 0.0
  %4007 = vmatpush1.msra.mxu0 0.0
  %4008 = vmatprep.subr.mxu0 0.0
  %4009 = vmatpush1.msra.mxu0 0.0
  %4010 = vmatprep.subr.mxu0 0.0
  %4011 = vmatpush1.msra.mxu0 0.0
  %4012 = vmatprep.subr.mxu0 0.0
  %4013 = vmatpush1.msra.mxu0 0.0
  %4014 = vmatprep.subr.mxu0 0.0
  %4015 = vmatpush1.msra.mxu0 0.0
  %4016 = vmatprep.subr.mxu0 0.0
  %4017 = vmatpush1.msra.mxu0 0.0
  %4018 = vmatprep.subr.mxu0 0.0
  %4019 = vmatpush1.msra.mxu0 0.0
  %4020 = vmatprep.subr.mxu0 0.0
  %4021 = vmatpush1.msra.mxu0 0.0
  %4022 = vmatprep.subr.mxu0 0.0
  %4023 = vmatpush1.msra.mxu0 0.0
  %4024 = vmatprep.subr.mxu0 0.0
  %4025 = vmatpush1.msra.mxu0 0.0
  %4026 = vmatprep.subr.mxu0 0.0
  %4027 = vmatpush1.msra.mxu0 0.0
  %4028 = vmatprep.subr.mxu0 0.0
  %4029 = vmatpush1.msra.mxu0 0.0
  %4030 = vmatprep.subr.mxu0 0.0
  %4031 = vmatpush1.msra.mxu0 0.0
  %4032 = vmatprep.subr.mxu0 0.0
  %4033 = vmatpush1.msra.mxu0 0.0
  %4034 = vmatprep.subr.mxu0 0.0
  %4035 = vmatpush1.msra.mxu0 0.0
  %4036 = vmatprep.subr.mxu0 0.0
  %4037 = vmatpush1.msra.mxu0 0.0
  %4038 = vmatprep.subr.mxu0 0.0
  %4039 = vmatpush1.msra.mxu0 0.0
  %4040 = vmatprep.subr.mxu0 0.0
  %4041 = vmatpush1.msra.mxu0 0.0
  %4042 = vmatprep.subr.mxu0 0.0
  %4043 = vmatpush1.msra.mxu0 0.0
  %4044 = vmatprep.subr.mxu0 0.0
  %4045 = vmatpush1.msra.mxu0 0.0
  %4046 = vmatprep.subr.mxu0 0.0
  %4047 = vmatpush1.msra.mxu0 0.0
  %4048 = vmatprep.mubr.f32.mxu0 0.0
  %v4049 = vand.u32 %v3718, 4294901760
  %v4050 = vsub.f32 %v3718, %v4049
  %v4051 = vand.u32 %v4050, 4294901760
  %4052 = vmatmul.mubr.f32.gmra.mrb[0].mxu0 %v4051
  %v4053 = vpop.f32.mrb[0].mxu0
  %v4054 = vadd.f32 %v3972, %v4053
  %v4055 = vpop.f32.mrb[0].mxu0
  %4056 = vmatprep.mubr.f32.mxu0 0.0
  %v4057 = vand.u32 %v3721, 4294901760
  %v4058 = vsub.f32 %v3721, %v4057
  %v4059 = vand.u32 %v4058, 4294901760
  %4060 = vmatmul.mubr.f32.gmra.mrb[0].mxu0 %v4059
  %v4061 = vpop.f32.mrb[0].mxu0
  %v4062 = vadd.f32 %v3979, %v4061
  %v4063 = vpop.f32.mrb[0].mxu0
  %4064 = vdwg.mxu0
  %4065 = vmatprep.subr.mxu0 0.0
  %v4066 = vand.u32 %v3713, 4294901760
  %v4067 = vsub.f32 %v3713, %v4066
  %v4068 = vand.u32 %v4067, 4294901760
  %4069 = vmatpush1.msra.mxu0 %v4068
  %4070 = vmatprep.subr.mxu0 0.0
  %v4071 = vand.u32 %v3723, 4294901760
  %v4072 = vsub.f32 %v3723, %v4071
  %v4073 = vand.u32 %v4072, 4294901760
  %4074 = vmatpush1.msra.mxu0 %v4073
  %4075 = vmatprep.subr.mxu0 0.0
  %4076 = vmatpush1.msra.mxu0 0.0
  %4077 = vmatprep.subr.mxu0 0.0
  %4078 = vmatpush1.msra.mxu0 0.0
  %4079 = vmatprep.subr.mxu0 0.0
  %4080 = vmatpush1.msra.mxu0 0.0
  %4081 = vmatprep.subr.mxu0 0.0
  %4082 = vmatpush1.msra.mxu0 0.0
  %4083 = vmatprep.subr.mxu0 0.0
  %4084 = vmatpush1.msra.mxu0 0.0
  %4085 = vmatprep.subr.mxu0 0.0
  %4086 = vmatpush1.msra.mxu0 0.0
  %4087 = vmatprep.subr.mxu0 0.0
  %4088 = vmatpush1.msra.mxu0 0.0
  %4089 = vmatprep.subr.mxu0 0.0
  %4090 = vmatpush1.msra.mxu0 0.0
  %4091 = vmatprep.subr.mxu0 0.0
  %4092 = vmatpush1.msra.mxu0 0.0
  %4093 = vmatprep.subr.mxu0 0.0
  %4094 = vmatpush1.msra.mxu0 0.0
  %4095 = vmatprep.subr.mxu0 0.0
  %4096 = vmatpush1.msra.mxu0 0.0
  %4097 = vmatprep.subr.mxu0 0.0
  %4098 = vmatpush1.msra.mxu0 0.0
  %4099 = vmatprep.subr.mxu0 0.0
  %4100 = vmatpush1.msra.mxu0 0.0
  %4101 = vmatprep.subr.mxu0 0.0
  %4102 = vmatpush1.msra.mxu0 0.0
  %4103 = vmatprep.subr.mxu0 0.0
  %4104 = vmatpush1.msra.mxu0 0.0
  %4105 = vmatprep.subr.mxu0 0.0
  %4106 = vmatpush1.msra.mxu0 0.0
  %4107 = vmatprep.subr.mxu0 0.0
  %4108 = vmatpush1.msra.mxu0 0.0
  %4109 = vmatprep.subr.mxu0 0.0
  %4110 = vmatpush1.msra.mxu0 0.0
  %4111 = vmatprep.subr.mxu0 0.0
  %4112 = vmatpush1.msra.mxu0 0.0
  %4113 = vmatprep.subr.mxu0 0.0
  %4114 = vmatpush1.msra.mxu0 0.0
  %4115 = vmatprep.subr.mxu0 0.0
  %4116 = vmatpush1.msra.mxu0 0.0
  %4117 = vmatprep.subr.mxu0 0.0
  %4118 = vmatpush1.msra.mxu0 0.0
  %4119 = vmatprep.subr.mxu0 0.0
  %4120 = vmatpush1.msra.mxu0 0.0
  %4121 = vmatprep.subr.mxu0 0.0
  %4122 = vmatpush1.msra.mxu0 0.0
  %4123 = vmatprep.subr.mxu0 0.0
  %4124 = vmatpush1.msra.mxu0 0.0
  %4125 = vmatprep.subr.mxu0 0.0
  %4126 = vmatpush1.msra.mxu0 0.0
  %4127 = vmatprep.subr.mxu0 0.0
  %4128 = vmatpush1.msra.mxu0 0.0
  %4129 = vmatprep.subr.mxu0 0.0
  %4130 = vmatpush1.msra.mxu0 0.0
  %4131 = vmatprep.subr.mxu0 0.0
  %4132 = vmatpush1.msra.mxu0 0.0
  %4133 = vmatprep.subr.mxu0 0.0
  %4134 = vmatpush1.msra.mxu0 0.0
  %4135 = vmatprep.mubr.f32.mxu0 0.0
  %v4136 = vand.u32 %v3718, 4294901760
  %4137 = vmatmul.mubr.f32.gmra.mrb[0].mxu0 %v4136
  %v4138 = vpop.f32.mrb[0].mxu0
  %v4139 = vadd.f32 %v4054, %v4138
  %v4140 = vpop.f32.mrb[0].mxu0
  %4141 = vmatprep.mubr.f32.mxu0 0.0
  %v4142 = vand.u32 %v3721, 4294901760
  %4143 = vmatmul.mubr.f32.gmra.mrb[0].mxu0 %v4142
  %v4144 = vpop.f32.mrb[0].mxu0
  %v4145 = vadd.f32 %v4062, %v4144
  %v4146 = vpop.f32.mrb[0].mxu0
  %4147 = vdwg.mxu0
  %4148 = vmatprep.subr.mxu0 0.0
  %v4149 = vand.u32 %v3713, 4294901760
  %4150 = vmatpush1.msra.mxu0 %v4149
  %4151 = vmatprep.subr.mxu0 0.0
  %v4152 = vand.u32 %v3723, 4294901760
  %4153 = vmatpush1.msra.mxu0 %v4152
  %4154 = vmatprep.subr.mxu0 0.0
  %4155 = vmatpush1.msra.mxu0 0.0
  %4156 = vmatprep.subr.mxu0 0.0
  %4157 = vmatpush1.msra.mxu0 0.0
  %4158 = vmatprep.subr.mxu0 0.0
  %4159 = vmatpush1.msra.mxu0 0.0
  %4160 = vmatprep.subr.mxu0 0.0
  %4161 = vmatpush1.msra.mxu0 0.0
  %4162 = vmatprep.subr.mxu0 0.0
  %4163 = vmatpush1.msra.mxu0 0.0
  %4164 = vmatprep.subr.mxu0 0.0
  %4165 = vmatpush1.msra.mxu0 0.0
  %4166 = vmatprep.subr.mxu0 0.0
  %4167 = vmatpush1.msra.mxu0 0.0
  %4168 = vmatprep.subr.mxu0 0.0
  %4169 = vmatpush1.msra.mxu0 0.0
  %4170 = vmatprep.subr.mxu0 0.0
  %4171 = vmatpush1.msra.mxu0 0.0
  %4172 = vmatprep.subr.mxu0 0.0
  %4173 = vmatpush1.msra.mxu0 0.0
  %4174 = vmatprep.subr.mxu0 0.0
  %4175 = vmatpush1.msra.mxu0 0.0
  %4176 = vmatprep.subr.mxu0 0.0
  %4177 = vmatpush1.msra.mxu0 0.0
  %4178 = vmatprep.subr.mxu0 0.0
  %4179 = vmatpush1.msra.mxu0 0.0
  %4180 = vmatprep.subr.mxu0 0.0
  %4181 = vmatpush1.msra.mxu0 0.0
  %4182 = vmatprep.subr.mxu0 0.0
  %4183 = vmatpush1.msra.mxu0 0.0
  %4184 = vmatprep.subr.mxu0 0.0
  %4185 = vmatpush1.msra.mxu0 0.0
  %4186 = vmatprep.subr.mxu0 0.0
  %4187 = vmatpush1.msra.mxu0 0.0
  %4188 = vmatprep.subr.mxu0 0.0
  %4189 = vmatpush1.msra.mxu0 0.0
  %4190 = vmatprep.subr.mxu0 0.0
  %4191 = vmatpush1.msra.mxu0 0.0
  %4192 = vmatprep.subr.mxu0 0.0
  %4193 = vmatpush1.msra.mxu0 0.0
  %4194 = vmatprep.subr.mxu0 0.0
  %4195 = vmatpush1.msra.mxu0 0.0
  %4196 = vmatprep.subr.mxu0 0.0
  %4197 = vmatpush1.msra.mxu0 0.0
  %4198 = vmatprep.subr.mxu0 0.0
  %4199 = vmatpush1.msra.mxu0 0.0
  %4200 = vmatprep.subr.mxu0 0.0
  %4201 = vmatpush1.msra.mxu0 0.0
  %4202 = vmatprep.subr.mxu0 0.0
  %4203 = vmatpush1.msra.mxu0 0.0
  %4204 = vmatprep.subr.mxu0 0.0
  %4205 = vmatpush1.msra.mxu0 0.0
  %4206 = vmatprep.subr.mxu0 0.0
  %4207 = vmatpush1.msra.mxu0 0.0
  %4208 = vmatprep.subr.mxu0 0.0
  %4209 = vmatpush1.msra.mxu0 0.0
  %4210 = vmatprep.subr.mxu0 0.0
  %4211 = vmatpush1.msra.mxu0 0.0
  %4212 = vmatprep.subr.mxu0 0.0
  %4213 = vmatpush1.msra.mxu0 0.0
  %4214 = vmatprep.mubr.f32.mxu0 0.0
  %v4215 = vand.u32 %v3718, 4294901760
  %4216 = vmatmul.mubr.f32.gmra.mrb[0].mxu0 %v4215
  %v4217 = vpop.f32.mrb[0].mxu0
  %v4218 = vadd.f32 %v4139, %v4217
  %v4219 = vpop.f32.mrb[0].mxu0
  %4220 = vmatprep.mubr.f32.mxu0 0.0
  %v4221 = vand.u32 %v3721, 4294901760
  %4222 = vmatmul.mubr.f32.gmra.mrb[0].mxu0 %v4221
  %v4223 = vpop.f32.mrb[0].mxu0
  %v4224 = vadd.f32 %v4145, %v4223
  %v4225 = vpop.f32.mrb[0].mxu0
  %4226 = vdwg.mxu0
  %4227 = vrot.lane.b32.xlu0 %v1045, 80
  %v4228 = vpop.permute.xlu0 %4227
  %4229 = vrot.lane.b32.xlu0 %v1052, 80
  %v4230 = vpop.permute.xlu0 %4229
  %4231 = vrot.lane.b32.xlu0 %v1045, 16
  %v4232 = vpop.permute.xlu0 %4231
  %4233 = vrot.lane.b32.xlu0 %v1052, 16
  %v4234 = vpop.permute.xlu0 %4233
  %v4235 = vsel %vm1069, %v4228, 0
  %v4237 = vsel %vm1069, %v4230, 0
  %v4239 = vsel %vm1069, %v4232, 0
  %v4241 = vsel %vm1069, %v4234, 0
  %4243 = vmatprep.subr.mxu0 0.0
  %v4244 = vand.u32 %v4239, 4294901760
  %4245 = vmatpush1.xpose.msra.mxu0 %v4244
  %4246 = vmatprep.subr.mxu0 0.0
  %v4247 = vand.u32 %v4241, 4294901760
  %4248 = vmatpush1.xpose.msra.mxu0 %v4247
  %4249 = vmatprep.subr.mxu0 0.0
  %4250 = vmatpush1.xpose.msra.mxu0 0.0
  %4251 = vmatprep.subr.mxu0 0.0
  %4252 = vmatpush1.xpose.msra.mxu0 0.0
  %4253 = vmatprep.subr.mxu0 0.0
  %4254 = vmatpush1.xpose.msra.mxu0 0.0
  %4255 = vmatprep.subr.mxu0 0.0
  %4256 = vmatpush1.xpose.msra.mxu0 0.0
  %4257 = vmatprep.subr.mxu0 0.0
  %4258 = vmatpush1.xpose.msra.mxu0 0.0
  %4259 = vmatprep.subr.mxu0 0.0
  %4260 = vmatpush1.xpose.msra.mxu0 0.0
  %4261 = vmatprep.subr.mxu0 0.0
  %4262 = vmatpush1.xpose.msra.mxu0 0.0
  %4263 = vmatprep.subr.mxu0 0.0
  %4264 = vmatpush1.xpose.msra.mxu0 0.0
  %4265 = vmatprep.subr.mxu0 0.0
  %4266 = vmatpush1.xpose.msra.mxu0 0.0
  %4267 = vmatprep.subr.mxu0 0.0
  %4268 = vmatpush1.xpose.msra.mxu0 0.0
  %4269 = vmatprep.subr.mxu0 0.0
  %4270 = vmatpush1.xpose.msra.mxu0 0.0
  %4271 = vmatprep.subr.mxu0 0.0
  %4272 = vmatpush1.xpose.msra.mxu0 0.0
  %4273 = vmatprep.subr.mxu0 0.0
  %4274 = vmatpush1.xpose.msra.mxu0 0.0
  %4275 = vmatprep.subr.mxu0 0.0
  %4276 = vmatpush1.xpose.msra.mxu0 0.0
  %4277 = vmatprep.subr.mxu0 0.0
  %4278 = vmatpush1.xpose.msra.mxu0 0.0
  %4279 = vmatprep.subr.mxu0 0.0
  %4280 = vmatpush1.xpose.msra.mxu0 0.0
  %4281 = vmatprep.subr.mxu0 0.0
  %4282 = vmatpush1.xpose.msra.mxu0 0.0
  %4283 = vmatprep.subr.mxu0 0.0
  %4284 = vmatpush1.xpose.msra.mxu0 0.0
  %4285 = vmatprep.subr.mxu0 0.0
  %4286 = vmatpush1.xpose.msra.mxu0 0.0
  %4287 = vmatprep.subr.mxu0 0.0
  %4288 = vmatpush1.xpose.msra.mxu0 0.0
  %4289 = vmatprep.subr.mxu0 0.0
  %4290 = vmatpush1.xpose.msra.mxu0 0.0
  %4291 = vmatprep.subr.mxu0 0.0
  %4292 = vmatpush1.xpose.msra.mxu0 0.0
  %4293 = vmatprep.subr.mxu0 0.0
  %4294 = vmatpush1.xpose.msra.mxu0 0.0
  %4295 = vmatprep.subr.mxu0 0.0
  %4296 = vmatpush1.xpose.msra.mxu0 0.0
  %4297 = vmatprep.subr.mxu0 0.0
  %4298 = vmatpush1.xpose.msra.mxu0 0.0
  %4299 = vmatprep.subr.mxu0 0.0
  %4300 = vmatpush1.xpose.msra.mxu0 0.0
  %4301 = vmatprep.subr.mxu0 0.0
  %4302 = vmatpush1.xpose.msra.mxu0 0.0
  %4303 = vmatprep.subr.mxu0 0.0
  %4304 = vmatpush1.xpose.msra.mxu0 0.0
  %4305 = vmatprep.subr.mxu0 0.0
  %4306 = vmatpush1.xpose.msra.mxu0 0.0
  %4307 = vmatprep.subr.mxu0 0.0
  %4308 = vmatpush1.xpose.msra.mxu0 0.0
  %4309 = vmatprep.mubr.f32.mxu0 0.0
  %v4310 = vand.u32 %v4235, 4294901760
  %v4311 = vsub.f32 %v4235, %v4310
  %v4312 = vand.u32 %v4311, 4294901760
  %v4313 = vsub.f32 %v4311, %v4312
  %v4314 = vand.u32 %v4313, 4294901760
  %4315 = vmatmul.mubr.f32.gmra.mrb[0].mxu0 %v4314
  %v4316 = vpop.f32.mrb[0].mxu0
  %v4317 = vadd.f32 0.0, %v4316
  %v4318 = vpop.f32.mrb[0].mxu0
  %4319 = vmatprep.mubr.f32.mxu0 0.0
  %v4320 = vand.u32 %v4237, 4294901760
  %v4321 = vsub.f32 %v4237, %v4320
  %v4322 = vand.u32 %v4321, 4294901760
  %v4323 = vsub.f32 %v4321, %v4322
  %v4324 = vand.u32 %v4323, 4294901760
  %4325 = vmatmul.mubr.f32.gmra.mrb[0].mxu0 %v4324
  %v4326 = vpop.f32.mrb[0].mxu0
  %v4327 = vadd.f32 0.0, %v4326
  %v4328 = vpop.f32.mrb[0].mxu0
  %4329 = vdwg.mxu0
  %4330 = vmatprep.subr.mxu0 0.0
  %v4331 = vand.u32 %v4239, 4294901760
  %v4332 = vsub.f32 %v4239, %v4331
  %v4333 = vand.u32 %v4332, 4294901760
  %v4334 = vsub.f32 %v4332, %v4333
  %v4335 = vand.u32 %v4334, 4294901760
  %4336 = vmatpush1.xpose.msra.mxu0 %v4335
  %4337 = vmatprep.subr.mxu0 0.0
  %v4338 = vand.u32 %v4241, 4294901760
  %v4339 = vsub.f32 %v4241, %v4338
  %v4340 = vand.u32 %v4339, 4294901760
  %v4341 = vsub.f32 %v4339, %v4340
  %v4342 = vand.u32 %v4341, 4294901760
  %4343 = vmatpush1.xpose.msra.mxu0 %v4342
  %4344 = vmatprep.subr.mxu0 0.0
  %4345 = vmatpush1.xpose.msra.mxu0 0.0
  %4346 = vmatprep.subr.mxu0 0.0
  %4347 = vmatpush1.xpose.msra.mxu0 0.0
  %4348 = vmatprep.subr.mxu0 0.0
  %4349 = vmatpush1.xpose.msra.mxu0 0.0
  %4350 = vmatprep.subr.mxu0 0.0
  %4351 = vmatpush1.xpose.msra.mxu0 0.0
  %4352 = vmatprep.subr.mxu0 0.0
  %4353 = vmatpush1.xpose.msra.mxu0 0.0
  %4354 = vmatprep.subr.mxu0 0.0
  %4355 = vmatpush1.xpose.msra.mxu0 0.0
  %4356 = vmatprep.subr.mxu0 0.0
  %4357 = vmatpush1.xpose.msra.mxu0 0.0
  %4358 = vmatprep.subr.mxu0 0.0
  %4359 = vmatpush1.xpose.msra.mxu0 0.0
  %4360 = vmatprep.subr.mxu0 0.0
  %4361 = vmatpush1.xpose.msra.mxu0 0.0
  %4362 = vmatprep.subr.mxu0 0.0
  %4363 = vmatpush1.xpose.msra.mxu0 0.0
  %4364 = vmatprep.subr.mxu0 0.0
  %4365 = vmatpush1.xpose.msra.mxu0 0.0
  %4366 = vmatprep.subr.mxu0 0.0
  %4367 = vmatpush1.xpose.msra.mxu0 0.0
  %4368 = vmatprep.subr.mxu0 0.0
  %4369 = vmatpush1.xpose.msra.mxu0 0.0
  %4370 = vmatprep.subr.mxu0 0.0
  %4371 = vmatpush1.xpose.msra.mxu0 0.0
  %4372 = vmatprep.subr.mxu0 0.0
  %4373 = vmatpush1.xpose.msra.mxu0 0.0
  %4374 = vmatprep.subr.mxu0 0.0
  %4375 = vmatpush1.xpose.msra.mxu0 0.0
  %4376 = vmatprep.subr.mxu0 0.0
  %4377 = vmatpush1.xpose.msra.mxu0 0.0
  %4378 = vmatprep.subr.mxu0 0.0
  %4379 = vmatpush1.xpose.msra.mxu0 0.0
  %4380 = vmatprep.subr.mxu0 0.0
  %4381 = vmatpush1.xpose.msra.mxu0 0.0
  %4382 = vmatprep.subr.mxu0 0.0
  %4383 = vmatpush1.xpose.msra.mxu0 0.0
  %4384 = vmatprep.subr.mxu0 0.0
  %4385 = vmatpush1.xpose.msra.mxu0 0.0
  %4386 = vmatprep.subr.mxu0 0.0
  %4387 = vmatpush1.xpose.msra.mxu0 0.0
  %4388 = vmatprep.subr.mxu0 0.0
  %4389 = vmatpush1.xpose.msra.mxu0 0.0
  %4390 = vmatprep.subr.mxu0 0.0
  %4391 = vmatpush1.xpose.msra.mxu0 0.0
  %4392 = vmatprep.subr.mxu0 0.0
  %4393 = vmatpush1.xpose.msra.mxu0 0.0
  %4394 = vmatprep.subr.mxu0 0.0
  %4395 = vmatpush1.xpose.msra.mxu0 0.0
  %4396 = vmatprep.subr.mxu0 0.0
  %4397 = vmatpush1.xpose.msra.mxu0 0.0
  %4398 = vmatprep.subr.mxu0 0.0
  %4399 = vmatpush1.xpose.msra.mxu0 0.0
  %4400 = vmatprep.subr.mxu0 0.0
  %4401 = vmatpush1.xpose.msra.mxu0 0.0
  %4402 = vmatprep.subr.mxu0 0.0
  %4403 = vmatpush1.xpose.msra.mxu0 0.0
  %4404 = vmatprep.mubr.f32.mxu0 0.0
  %v4405 = vand.u32 %v4235, 4294901760
  %4406 = vmatmul.mubr.f32.gmra.mrb[0].mxu0 %v4405
  %v4407 = vpop.f32.mrb[0].mxu0
  %v4408 = vadd.f32 %v4317, %v4407
  %v4409 = vpop.f32.mrb[0].mxu0
  %4410 = vmatprep.mubr.f32.mxu0 0.0
  %v4411 = vand.u32 %v4237, 4294901760
  %4412 = vmatmul.mubr.f32.gmra.mrb[0].mxu0 %v4411
  %v4413 = vpop.f32.mrb[0].mxu0
  %v4414 = vadd.f32 %v4327, %v4413
  %v4415 = vpop.f32.mrb[0].mxu0
  %4416 = vdwg.mxu0
  %4417 = vmatprep.subr.mxu0 0.0
  %v4418 = vand.u32 %v4239, 4294901760
  %v4419 = vsub.f32 %v4239, %v4418
  %4420 = vmatpush1.xpose.msra.mxu0 %v4419
  %4421 = vmatprep.subr.mxu0 0.0
  %v4422 = vand.u32 %v4241, 4294901760
  %v4423 = vsub.f32 %v4241, %v4422
  %4424 = vmatpush1.xpose.msra.mxu0 %v4423
  %4425 = vmatprep.subr.mxu0 0.0
  %4426 = vmatpush1.xpose.msra.mxu0 0.0
  %4427 = vmatprep.subr.mxu0 0.0
  %4428 = vmatpush1.xpose.msra.mxu0 0.0
  %4429 = vmatprep.subr.mxu0 0.0
  %4430 = vmatpush1.xpose.msra.mxu0 0.0
  %4431 = vmatprep.subr.mxu0 0.0
  %4432 = vmatpush1.xpose.msra.mxu0 0.0
  %4433 = vmatprep.subr.mxu0 0.0
  %4434 = vmatpush1.xpose.msra.mxu0 0.0
  %4435 = vmatprep.subr.mxu0 0.0
  %4436 = vmatpush1.xpose.msra.mxu0 0.0
  %4437 = vmatprep.subr.mxu0 0.0
  %4438 = vmatpush1.xpose.msra.mxu0 0.0
  %4439 = vmatprep.subr.mxu0 0.0
  %4440 = vmatpush1.xpose.msra.mxu0 0.0
  %4441 = vmatprep.subr.mxu0 0.0
  %4442 = vmatpush1.xpose.msra.mxu0 0.0
  %4443 = vmatprep.subr.mxu0 0.0
  %4444 = vmatpush1.xpose.msra.mxu0 0.0
  %4445 = vmatprep.subr.mxu0 0.0
  %4446 = vmatpush1.xpose.msra.mxu0 0.0
  %4447 = vmatprep.subr.mxu0 0.0
  %4448 = vmatpush1.xpose.msra.mxu0 0.0
  %4449 = vmatprep.subr.mxu0 0.0
  %4450 = vmatpush1.xpose.msra.mxu0 0.0
  %4451 = vmatprep.subr.mxu0 0.0
  %4452 = vmatpush1.xpose.msra.mxu0 0.0
  %4453 = vmatprep.subr.mxu0 0.0
  %4454 = vmatpush1.xpose.msra.mxu0 0.0
  %4455 = vmatprep.subr.mxu0 0.0
  %4456 = vmatpush1.xpose.msra.mxu0 0.0
  %4457 = vmatprep.subr.mxu0 0.0
  %4458 = vmatpush1.xpose.msra.mxu0 0.0
  %4459 = vmatprep.subr.mxu0 0.0
  %4460 = vmatpush1.xpose.msra.mxu0 0.0
  %4461 = vmatprep.subr.mxu0 0.0
  %4462 = vmatpush1.xpose.msra.mxu0 0.0
  %4463 = vmatprep.subr.mxu0 0.0
  %4464 = vmatpush1.xpose.msra.mxu0 0.0
  %4465 = vmatprep.subr.mxu0 0.0
  %4466 = vmatpush1.xpose.msra.mxu0 0.0
  %4467 = vmatprep.subr.mxu0 0.0
  %4468 = vmatpush1.xpose.msra.mxu0 0.0
  %4469 = vmatprep.subr.mxu0 0.0
  %4470 = vmatpush1.xpose.msra.mxu0 0.0
  %4471 = vmatprep.subr.mxu0 0.0
  %4472 = vmatpush1.xpose.msra.mxu0 0.0
  %4473 = vmatprep.subr.mxu0 0.0
  %4474 = vmatpush1.xpose.msra.mxu0 0.0
  %4475 = vmatprep.subr.mxu0 0.0
  %4476 = vmatpush1.xpose.msra.mxu0 0.0
  %4477 = vmatprep.subr.mxu0 0.0
  %4478 = vmatpush1.xpose.msra.mxu0 0.0
  %4479 = vmatprep.subr.mxu0 0.0
  %4480 = vmatpush1.xpose.msra.mxu0 0.0
  %4481 = vmatprep.subr.mxu0 0.0
  %4482 = vmatpush1.xpose.msra.mxu0 0.0
  %4483 = vmatprep.subr.mxu0 0.0
  %4484 = vmatpush1.xpose.msra.mxu0 0.0
  %4485 = vmatprep.mubr.f32.mxu0 0.0
  %v4486 = vand.u32 %v4235, 4294901760
  %v4487 = vsub.f32 %v4235, %v4486
  %4488 = vmatmul.mubr.f32.gmra.mrb[0].mxu0 %v4487
  %v4489 = vpop.f32.mrb[0].mxu0
  %v4490 = vadd.f32 %v4408, %v4489
  %v4491 = vpop.f32.mrb[0].mxu0
  %4492 = vmatprep.mubr.f32.mxu0 0.0
  %v4493 = vand.u32 %v4237, 4294901760
  %v4494 = vsub.f32 %v4237, %v4493
  %4495 = vmatmul.mubr.f32.gmra.mrb[0].mxu0 %v4494
  %v4496 = vpop.f32.mrb[0].mxu0
  %v4497 = vadd.f32 %v4414, %v4496
  %v4498 = vpop.f32.mrb[0].mxu0
  %4499 = vdwg.mxu0
  %4500 = vmatprep.subr.mxu0 0.0
  %v4501 = vand.u32 %v4239, 4294901760
  %4502 = vmatpush1.xpose.msra.mxu0 %v4501
  %4503 = vmatprep.subr.mxu0 0.0
  %v4504 = vand.u32 %v4241, 4294901760
  %4505 = vmatpush1.xpose.msra.mxu0 %v4504
  %4506 = vmatprep.subr.mxu0 0.0
  %4507 = vmatpush1.xpose.msra.mxu0 0.0
  %4508 = vmatprep.subr.mxu0 0.0
  %4509 = vmatpush1.xpose.msra.mxu0 0.0
  %4510 = vmatprep.subr.mxu0 0.0
  %4511 = vmatpush1.xpose.msra.mxu0 0.0
  %4512 = vmatprep.subr.mxu0 0.0
  %4513 = vmatpush1.xpose.msra.mxu0 0.0
  %4514 = vmatprep.subr.mxu0 0.0
  %4515 = vmatpush1.xpose.msra.mxu0 0.0
  %4516 = vmatprep.subr.mxu0 0.0
  %4517 = vmatpush1.xpose.msra.mxu0 0.0
  %4518 = vmatprep.subr.mxu0 0.0
  %4519 = vmatpush1.xpose.msra.mxu0 0.0
  %4520 = vmatprep.subr.mxu0 0.0
  %4521 = vmatpush1.xpose.msra.mxu0 0.0
  %4522 = vmatprep.subr.mxu0 0.0
  %4523 = vmatpush1.xpose.msra.mxu0 0.0
  %4524 = vmatprep.subr.mxu0 0.0
  %4525 = vmatpush1.xpose.msra.mxu0 0.0
  %4526 = vmatprep.subr.mxu0 0.0
  %4527 = vmatpush1.xpose.msra.mxu0 0.0
  %4528 = vmatprep.subr.mxu0 0.0
  %4529 = vmatpush1.xpose.msra.mxu0 0.0
  %4530 = vmatprep.subr.mxu0 0.0
  %4531 = vmatpush1.xpose.msra.mxu0 0.0
  %4532 = vmatprep.subr.mxu0 0.0
  %4533 = vmatpush1.xpose.msra.mxu0 0.0
  %4534 = vmatprep.subr.mxu0 0.0
  %4535 = vmatpush1.xpose.msra.mxu0 0.0
  %4536 = vmatprep.subr.mxu0 0.0
  %4537 = vmatpush1.xpose.msra.mxu0 0.0
  %4538 = vmatprep.subr.mxu0 0.0
  %4539 = vmatpush1.xpose.msra.mxu0 0.0
  %4540 = vmatprep.subr.mxu0 0.0
  %4541 = vmatpush1.xpose.msra.mxu0 0.0
  %4542 = vmatprep.subr.mxu0 0.0
  %4543 = vmatpush1.xpose.msra.mxu0 0.0
  %4544 = vmatprep.subr.mxu0 0.0
  %4545 = vmatpush1.xpose.msra.mxu0 0.0
  %4546 = vmatprep.subr.mxu0 0.0
  %4547 = vmatpush1.xpose.msra.mxu0 0.0
  %4548 = vmatprep.subr.mxu0 0.0
  %4549 = vmatpush1.xpose.msra.mxu0 0.0
  %4550 = vmatprep.subr.mxu0 0.0
  %4551 = vmatpush1.xpose.msra.mxu0 0.0
  %4552 = vmatprep.subr.mxu0 0.0
  %4553 = vmatpush1.xpose.msra.mxu0 0.0
  %4554 = vmatprep.subr.mxu0 0.0
  %4555 = vmatpush1.xpose.msra.mxu0 0.0
  %4556 = vmatprep.subr.mxu0 0.0
  %4557 = vmatpush1.xpose.msra.mxu0 0.0
  %4558 = vmatprep.subr.mxu0 0.0
  %4559 = vmatpush1.xpose.msra.mxu0 0.0
  %4560 = vmatprep.subr.mxu0 0.0
  %4561 = vmatpush1.xpose.msra.mxu0 0.0
  %4562 = vmatprep.subr.mxu0 0.0
  %4563 = vmatpush1.xpose.msra.mxu0 0.0
  %4564 = vmatprep.subr.mxu0 0.0
  %4565 = vmatpush1.xpose.msra.mxu0 0.0
  %4566 = vmatprep.mubr.f32.mxu0 0.0
  %v4567 = vand.u32 %v4235, 4294901760
  %v4568 = vsub.f32 %v4235, %v4567
  %v4569 = vand.u32 %v4568, 4294901760
  %4570 = vmatmul.mubr.f32.gmra.mrb[0].mxu0 %v4569
  %v4571 = vpop.f32.mrb[0].mxu0
  %v4572 = vadd.f32 %v4490, %v4571
  %v4573 = vpop.f32.mrb[0].mxu0
  %4574 = vmatprep.mubr.f32.mxu0 0.0
  %v4575 = vand.u32 %v4237, 4294901760
  %v4576 = vsub.f32 %v4237, %v4575
  %v4577 = vand.u32 %v4576, 4294901760
  %4578 = vmatmul.mubr.f32.gmra.mrb[0].mxu0 %v4577
  %v4579 = vpop.f32.mrb[0].mxu0
  %v4580 = vadd.f32 %v4497, %v4579
  %v4581 = vpop.f32.mrb[0].mxu0
  %4582 = vdwg.mxu0
  %4583 = vmatprep.subr.mxu0 0.0
  %v4584 = vand.u32 %v4239, 4294901760
  %v4585 = vsub.f32 %v4239, %v4584
  %v4586 = vand.u32 %v4585, 4294901760
  %4587 = vmatpush1.xpose.msra.mxu0 %v4586
  %4588 = vmatprep.subr.mxu0 0.0
  %v4589 = vand.u32 %v4241, 4294901760
  %v4590 = vsub.f32 %v4241, %v4589
  %v4591 = vand.u32 %v4590, 4294901760
  %4592 = vmatpush1.xpose.msra.mxu0 %v4591
  %4593 = vmatprep.subr.mxu0 0.0
  %4594 = vmatpush1.xpose.msra.mxu0 0.0
  %4595 = vmatprep.subr.mxu0 0.0
  %4596 = vmatpush1.xpose.msra.mxu0 0.0
  %4597 = vmatprep.subr.mxu0 0.0
  %4598 = vmatpush1.xpose.msra.mxu0 0.0
  %4599 = vmatprep.subr.mxu0 0.0
  %4600 = vmatpush1.xpose.msra.mxu0 0.0
  %4601 = vmatprep.subr.mxu0 0.0
  %4602 = vmatpush1.xpose.msra.mxu0 0.0
  %4603 = vmatprep.subr.mxu0 0.0
  %4604 = vmatpush1.xpose.msra.mxu0 0.0
  %4605 = vmatprep.subr.mxu0 0.0
  %4606 = vmatpush1.xpose.msra.mxu0 0.0
  %4607 = vmatprep.subr.mxu0 0.0
  %4608 = vmatpush1.xpose.msra.mxu0 0.0
  %4609 = vmatprep.subr.mxu0 0.0
  %4610 = vmatpush1.xpose.msra.mxu0 0.0
  %4611 = vmatprep.subr.mxu0 0.0
  %4612 = vmatpush1.xpose.msra.mxu0 0.0
  %4613 = vmatprep.subr.mxu0 0.0
  %4614 = vmatpush1.xpose.msra.mxu0 0.0
  %4615 = vmatprep.subr.mxu0 0.0
  %4616 = vmatpush1.xpose.msra.mxu0 0.0
  %4617 = vmatprep.subr.mxu0 0.0
  %4618 = vmatpush1.xpose.msra.mxu0 0.0
  %4619 = vmatprep.subr.mxu0 0.0
  %4620 = vmatpush1.xpose.msra.mxu0 0.0
  %4621 = vmatprep.subr.mxu0 0.0
  %4622 = vmatpush1.xpose.msra.mxu0 0.0
  %4623 = vmatprep.subr.mxu0 0.0
  %4624 = vmatpush1.xpose.msra.mxu0 0.0
  %4625 = vmatprep.subr.mxu0 0.0
  %4626 = vmatpush1.xpose.msra.mxu0 0.0
  %4627 = vmatprep.subr.mxu0 0.0
  %4628 = vmatpush1.xpose.msra.mxu0 0.0
  %4629 = vmatprep.subr.mxu0 0.0
  %4630 = vmatpush1.xpose.msra.mxu0 0.0
  %4631 = vmatprep.subr.mxu0 0.0
  %4632 = vmatpush1.xpose.msra.mxu0 0.0
  %4633 = vmatprep.subr.mxu0 0.0
  %4634 = vmatpush1.xpose.msra.mxu0 0.0
  %4635 = vmatprep.subr.mxu0 0.0
  %4636 = vmatpush1.xpose.msra.mxu0 0.0
  %4637 = vmatprep.subr.mxu0 0.0
  %4638 = vmatpush1.xpose.msra.mxu0 0.0
  %4639 = vmatprep.subr.mxu0 0.0
  %4640 = vmatpush1.xpose.msra.mxu0 0.0
  %4641 = vmatprep.subr.mxu0 0.0
  %4642 = vmatpush1.xpose.msra.mxu0 0.0
  %4643 = vmatprep.subr.mxu0 0.0
  %4644 = vmatpush1.xpose.msra.mxu0 0.0
  %4645 = vmatprep.subr.mxu0 0.0
  %4646 = vmatpush1.xpose.msra.mxu0 0.0
  %4647 = vmatprep.subr.mxu0 0.0
  %4648 = vmatpush1.xpose.msra.mxu0 0.0
  %4649 = vmatprep.subr.mxu0 0.0
  %4650 = vmatpush1.xpose.msra.mxu0 0.0
  %4651 = vmatprep.subr.mxu0 0.0
  %4652 = vmatpush1.xpose.msra.mxu0 0.0
  %4653 = vmatprep.mubr.f32.mxu0 0.0
  %v4654 = vand.u32 %v4235, 4294901760
  %4655 = vmatmul.mubr.f32.gmra.mrb[0].mxu0 %v4654
  %v4656 = vpop.f32.mrb[0].mxu0
  %v4657 = vadd.f32 %v4572, %v4656
  %v4658 = vpop.f32.mrb[0].mxu0
  %4659 = vmatprep.mubr.f32.mxu0 0.0
  %v4660 = vand.u32 %v4237, 4294901760
  %4661 = vmatmul.mubr.f32.gmra.mrb[0].mxu0 %v4660
  %v4662 = vpop.f32.mrb[0].mxu0
  %v4663 = vadd.f32 %v4580, %v4662
  %v4664 = vpop.f32.mrb[0].mxu0
  %4665 = vdwg.mxu0
  %4666 = vmatprep.subr.mxu0 0.0
  %v4667 = vand.u32 %v4239, 4294901760
  %4668 = vmatpush1.xpose.msra.mxu0 %v4667
  %4669 = vmatprep.subr.mxu0 0.0
  %v4670 = vand.u32 %v4241, 4294901760
  %4671 = vmatpush1.xpose.msra.mxu0 %v4670
  %4672 = vmatprep.subr.mxu0 0.0
  %4673 = vmatpush1.xpose.msra.mxu0 0.0
  %4674 = vmatprep.subr.mxu0 0.0
  %4675 = vmatpush1.xpose.msra.mxu0 0.0
  %4676 = vmatprep.subr.mxu0 0.0
  %4677 = vmatpush1.xpose.msra.mxu0 0.0
  %4678 = vmatprep.subr.mxu0 0.0
  %4679 = vmatpush1.xpose.msra.mxu0 0.0
  %4680 = vmatprep.subr.mxu0 0.0
  %4681 = vmatpush1.xpose.msra.mxu0 0.0
  %4682 = vmatprep.subr.mxu0 0.0
  %4683 = vmatpush1.xpose.msra.mxu0 0.0
  %4684 = vmatprep.subr.mxu0 0.0
  %4685 = vmatpush1.xpose.msra.mxu0 0.0
  %4686 = vmatprep.subr.mxu0 0.0
  %4687 = vmatpush1.xpose.msra.mxu0 0.0
  %4688 = vmatprep.subr.mxu0 0.0
  %4689 = vmatpush1.xpose.msra.mxu0 0.0
  %4690 = vmatprep.subr.mxu0 0.0
  %4691 = vmatpush1.xpose.msra.mxu0 0.0
  %4692 = vmatprep.subr.mxu0 0.0
  %4693 = vmatpush1.xpose.msra.mxu0 0.0
  %4694 = vmatprep.subr.mxu0 0.0
  %4695 = vmatpush1.xpose.msra.mxu0 0.0
  %4696 = vmatprep.subr.mxu0 0.0
  %4697 = vmatpush1.xpose.msra.mxu0 0.0
  %4698 = vmatprep.subr.mxu0 0.0
  %4699 = vmatpush1.xpose.msra.mxu0 0.0
  %4700 = vmatprep.subr.mxu0 0.0
  %4701 = vmatpush1.xpose.msra.mxu0 0.0
  %4702 = vmatprep.subr.mxu0 0.0
  %4703 = vmatpush1.xpose.msra.mxu0 0.0
  %4704 = vmatprep.subr.mxu0 0.0
  %4705 = vmatpush1.xpose.msra.mxu0 0.0
  %4706 = vmatprep.subr.mxu0 0.0
  %4707 = vmatpush1.xpose.msra.mxu0 0.0
  %4708 = vmatprep.subr.mxu0 0.0
  %4709 = vmatpush1.xpose.msra.mxu0 0.0
  %4710 = vmatprep.subr.mxu0 0.0
  %4711 = vmatpush1.xpose.msra.mxu0 0.0
  %4712 = vmatprep.subr.mxu0 0.0
  %4713 = vmatpush1.xpose.msra.mxu0 0.0
  %4714 = vmatprep.subr.mxu0 0.0
  %4715 = vmatpush1.xpose.msra.mxu0 0.0
  %4716 = vmatprep.subr.mxu0 0.0
  %4717 = vmatpush1.xpose.msra.mxu0 0.0
  %4718 = vmatprep.subr.mxu0 0.0
  %4719 = vmatpush1.xpose.msra.mxu0 0.0
  %4720 = vmatprep.subr.mxu0 0.0
  %4721 = vmatpush1.xpose.msra.mxu0 0.0
  %4722 = vmatprep.subr.mxu0 0.0
  %4723 = vmatpush1.xpose.msra.mxu0 0.0
  %4724 = vmatprep.subr.mxu0 0.0
  %4725 = vmatpush1.xpose.msra.mxu0 0.0
  %4726 = vmatprep.subr.mxu0 0.0
  %4727 = vmatpush1.xpose.msra.mxu0 0.0
  %4728 = vmatprep.subr.mxu0 0.0
  %4729 = vmatpush1.xpose.msra.mxu0 0.0
  %4730 = vmatprep.subr.mxu0 0.0
  %4731 = vmatpush1.xpose.msra.mxu0 0.0
  %4732 = vmatprep.mubr.f32.mxu0 0.0
  %v4733 = vand.u32 %v4235, 4294901760
  %4734 = vmatmul.mubr.f32.gmra.mrb[0].mxu0 %v4733
  %v4735 = vpop.f32.mrb[0].mxu0
  %v4736 = vadd.f32 %v4657, %v4735
  %v4737 = vpop.f32.mrb[0].mxu0
  %4738 = vmatprep.mubr.f32.mxu0 0.0
  %v4739 = vand.u32 %v4237, 4294901760
  %4740 = vmatmul.mubr.f32.gmra.mrb[0].mxu0 %v4739
  %v4741 = vpop.f32.mrb[0].mxu0
  %v4742 = vadd.f32 %v4663, %v4741
  %v4743 = vpop.f32.mrb[0].mxu0
  %4744 = vdwg.mxu0
  %v4745 = vsel %vm1580, %v4736, -inf
  %4746 = vmax.xlane.f32.xlu0 %v4745
  %v4747 = vpop.xlane.xlu0 %4746
  %v4748 = vsel %vm1584, %v4742, -inf
  %4749 = vmax.xlane.f32.xlu0 %v4748
  %v4750 = vpop.xlane.xlu0 %4749
  %v4751 = vsub.f32 %v4736, %v4747
  %v4752 = vsub.f32 %v4742, %v4750
  %v4753 = vmul.f32 %v4751, 1.442695
  %v4754 = vpow.pop %v4753
  %v4755 = vmul.f32 %v4752, 1.442695
  %v4756 = vpow.pop %v4755
  %v4757 = vsel %vm1580, %v4754, 0.0
  %4758 = vadd.xlane.f32.xlu0 %v4757
  %v4759 = vpop.xlane.xlu0 %4758
  %v4760 = vsel %vm1584, %v4756, 0.0
  %4761 = vadd.xlane.f32.xlu0 %v4760
  %v4762 = vpop.xlane.xlu0 %4761
  %v4763 = vrcp.pop %v4759
  %v4764 = vmul.f32 %v4754, %v4763
  %v4765 = vrcp.pop %v4762
  %v4766 = vmul.f32 %v4756, %v4765
  %4767 = vrot.lane.b32.xlu0 %v1047, 80
  %v4768 = vpop.permute.xlu0 %4767
  %4769 = vrot.lane.b32.xlu0 %v1054, 80
  %v4770 = vpop.permute.xlu0 %4769
  %v4773 = vsel %vm1580, %v4764, 0
  %v4776 = vsel %vm1580, %v4766, 0
  %v4778 = vsel %vm1610, %v4770, 0
  %4780 = vmatprep.subr.mxu0 0.0
  %v4781 = vand.u32 %v4768, 4294901760
  %4782 = vmatpush1.msra.mxu0 %v4781
  %4783 = vmatprep.subr.mxu0 0.0
  %v4784 = vand.u32 %v4778, 4294901760
  %4785 = vmatpush1.msra.mxu0 %v4784
  %4786 = vmatprep.subr.mxu0 0.0
  %4787 = vmatpush1.msra.mxu0 0.0
  %4788 = vmatprep.subr.mxu0 0.0
  %4789 = vmatpush1.msra.mxu0 0.0
  %4790 = vmatprep.subr.mxu0 0.0
  %4791 = vmatpush1.msra.mxu0 0.0
  %4792 = vmatprep.subr.mxu0 0.0
  %4793 = vmatpush1.msra.mxu0 0.0
  %4794 = vmatprep.subr.mxu0 0.0
  %4795 = vmatpush1.msra.mxu0 0.0
  %4796 = vmatprep.subr.mxu0 0.0
  %4797 = vmatpush1.msra.mxu0 0.0
  %4798 = vmatprep.subr.mxu0 0.0
  %4799 = vmatpush1.msra.mxu0 0.0
  %4800 = vmatprep.subr.mxu0 0.0
  %4801 = vmatpush1.msra.mxu0 0.0
  %4802 = vmatprep.subr.mxu0 0.0
  %4803 = vmatpush1.msra.mxu0 0.0
  %4804 = vmatprep.subr.mxu0 0.0
  %4805 = vmatpush1.msra.mxu0 0.0
  %4806 = vmatprep.subr.mxu0 0.0
  %4807 = vmatpush1.msra.mxu0 0.0
  %4808 = vmatprep.subr.mxu0 0.0
  %4809 = vmatpush1.msra.mxu0 0.0
  %4810 = vmatprep.subr.mxu0 0.0
  %4811 = vmatpush1.msra.mxu0 0.0
  %4812 = vmatprep.subr.mxu0 0.0
  %4813 = vmatpush1.msra.mxu0 0.0
  %4814 = vmatprep.subr.mxu0 0.0
  %4815 = vmatpush1.msra.mxu0 0.0
  %4816 = vmatprep.subr.mxu0 0.0
  %4817 = vmatpush1.msra.mxu0 0.0
  %4818 = vmatprep.subr.mxu0 0.0
  %4819 = vmatpush1.msra.mxu0 0.0
  %4820 = vmatprep.subr.mxu0 0.0
  %4821 = vmatpush1.msra.mxu0 0.0
  %4822 = vmatprep.subr.mxu0 0.0
  %4823 = vmatpush1.msra.mxu0 0.0
  %4824 = vmatprep.subr.mxu0 0.0
  %4825 = vmatpush1.msra.mxu0 0.0
  %4826 = vmatprep.subr.mxu0 0.0
  %4827 = vmatpush1.msra.mxu0 0.0
  %4828 = vmatprep.subr.mxu0 0.0
  %4829 = vmatpush1.msra.mxu0 0.0
  %4830 = vmatprep.subr.mxu0 0.0
  %4831 = vmatpush1.msra.mxu0 0.0
  %4832 = vmatprep.subr.mxu0 0.0
  %4833 = vmatpush1.msra.mxu0 0.0
  %4834 = vmatprep.subr.mxu0 0.0
  %4835 = vmatpush1.msra.mxu0 0.0
  %4836 = vmatprep.subr.mxu0 0.0
  %4837 = vmatpush1.msra.mxu0 0.0
  %4838 = vmatprep.subr.mxu0 0.0
  %4839 = vmatpush1.msra.mxu0 0.0
  %4840 = vmatprep.subr.mxu0 0.0
  %4841 = vmatpush1.msra.mxu0 0.0
  %4842 = vmatprep.subr.mxu0 0.0
  %4843 = vmatpush1.msra.mxu0 0.0
  %4844 = vmatprep.subr.mxu0 0.0
  %4845 = vmatpush1.msra.mxu0 0.0
  %4846 = vmatprep.mubr.f32.mxu0 0.0
  %v4847 = vand.u32 %v4773, 4294901760
  %v4848 = vsub.f32 %v4773, %v4847
  %v4849 = vand.u32 %v4848, 4294901760
  %v4850 = vsub.f32 %v4848, %v4849
  %v4851 = vand.u32 %v4850, 4294901760
  %4852 = vmatmul.mubr.f32.gmra.mrb[0].mxu0 %v4851
  %v4853 = vpop.f32.mrb[0].mxu0
  %v4854 = vadd.f32 0.0, %v4853
  %v4855 = vpop.f32.mrb[0].mxu0
  %4856 = vmatprep.mubr.f32.mxu0 0.0
  %v4857 = vand.u32 %v4776, 4294901760
  %v4858 = vsub.f32 %v4776, %v4857
  %v4859 = vand.u32 %v4858, 4294901760
  %v4860 = vsub.f32 %v4858, %v4859
  %v4861 = vand.u32 %v4860, 4294901760
  %4862 = vmatmul.mubr.f32.gmra.mrb[0].mxu0 %v4861
  %v4863 = vpop.f32.mrb[0].mxu0
  %v4864 = vadd.f32 0.0, %v4863
  %v4865 = vpop.f32.mrb[0].mxu0
  %4866 = vdwg.mxu0
  %4867 = vmatprep.subr.mxu0 0.0
  %v4868 = vand.u32 %v4768, 4294901760
  %v4869 = vsub.f32 %v4768, %v4868
  %v4870 = vand.u32 %v4869, 4294901760
  %v4871 = vsub.f32 %v4869, %v4870
  %v4872 = vand.u32 %v4871, 4294901760
  %4873 = vmatpush1.msra.mxu0 %v4872
  %4874 = vmatprep.subr.mxu0 0.0
  %v4875 = vand.u32 %v4778, 4294901760
  %v4876 = vsub.f32 %v4778, %v4875
  %v4877 = vand.u32 %v4876, 4294901760
  %v4878 = vsub.f32 %v4876, %v4877
  %v4879 = vand.u32 %v4878, 4294901760
  %4880 = vmatpush1.msra.mxu0 %v4879
  %4881 = vmatprep.subr.mxu0 0.0
  %4882 = vmatpush1.msra.mxu0 0.0
  %4883 = vmatprep.subr.mxu0 0.0
  %4884 = vmatpush1.msra.mxu0 0.0
  %4885 = vmatprep.subr.mxu0 0.0
  %4886 = vmatpush1.msra.mxu0 0.0
  %4887 = vmatprep.subr.mxu0 0.0
  %4888 = vmatpush1.msra.mxu0 0.0
  %4889 = vmatprep.subr.mxu0 0.0
  %4890 = vmatpush1.msra.mxu0 0.0
  %4891 = vmatprep.subr.mxu0 0.0
  %4892 = vmatpush1.msra.mxu0 0.0
  %4893 = vmatprep.subr.mxu0 0.0
  %4894 = vmatpush1.msra.mxu0 0.0
  %4895 = vmatprep.subr.mxu0 0.0
  %4896 = vmatpush1.msra.mxu0 0.0
  %4897 = vmatprep.subr.mxu0 0.0
  %4898 = vmatpush1.msra.mxu0 0.0
  %4899 = vmatprep.subr.mxu0 0.0
  %4900 = vmatpush1.msra.mxu0 0.0
  %4901 = vmatprep.subr.mxu0 0.0
  %4902 = vmatpush1.msra.mxu0 0.0
  %4903 = vmatprep.subr.mxu0 0.0
  %4904 = vmatpush1.msra.mxu0 0.0
  %4905 = vmatprep.subr.mxu0 0.0
  %4906 = vmatpush1.msra.mxu0 0.0
  %4907 = vmatprep.subr.mxu0 0.0
  %4908 = vmatpush1.msra.mxu0 0.0
  %4909 = vmatprep.subr.mxu0 0.0
  %4910 = vmatpush1.msra.mxu0 0.0
  %4911 = vmatprep.subr.mxu0 0.0
  %4912 = vmatpush1.msra.mxu0 0.0
  %4913 = vmatprep.subr.mxu0 0.0
  %4914 = vmatpush1.msra.mxu0 0.0
  %4915 = vmatprep.subr.mxu0 0.0
  %4916 = vmatpush1.msra.mxu0 0.0
  %4917 = vmatprep.subr.mxu0 0.0
  %4918 = vmatpush1.msra.mxu0 0.0
  %4919 = vmatprep.subr.mxu0 0.0
  %4920 = vmatpush1.msra.mxu0 0.0
  %4921 = vmatprep.subr.mxu0 0.0
  %4922 = vmatpush1.msra.mxu0 0.0
  %4923 = vmatprep.subr.mxu0 0.0
  %4924 = vmatpush1.msra.mxu0 0.0
  %4925 = vmatprep.subr.mxu0 0.0
  %4926 = vmatpush1.msra.mxu0 0.0
  %4927 = vmatprep.subr.mxu0 0.0
  %4928 = vmatpush1.msra.mxu0 0.0
  %4929 = vmatprep.subr.mxu0 0.0
  %4930 = vmatpush1.msra.mxu0 0.0
  %4931 = vmatprep.subr.mxu0 0.0
  %4932 = vmatpush1.msra.mxu0 0.0
  %4933 = vmatprep.subr.mxu0 0.0
  %4934 = vmatpush1.msra.mxu0 0.0
  %4935 = vmatprep.subr.mxu0 0.0
  %4936 = vmatpush1.msra.mxu0 0.0
  %4937 = vmatprep.subr.mxu0 0.0
  %4938 = vmatpush1.msra.mxu0 0.0
  %4939 = vmatprep.subr.mxu0 0.0
  %4940 = vmatpush1.msra.mxu0 0.0
  %4941 = vmatprep.mubr.f32.mxu0 0.0
  %v4942 = vand.u32 %v4773, 4294901760
  %4943 = vmatmul.mubr.f32.gmra.mrb[0].mxu0 %v4942
  %v4944 = vpop.f32.mrb[0].mxu0
  %v4945 = vadd.f32 %v4854, %v4944
  %v4946 = vpop.f32.mrb[0].mxu0
  %4947 = vmatprep.mubr.f32.mxu0 0.0
  %v4948 = vand.u32 %v4776, 4294901760
  %4949 = vmatmul.mubr.f32.gmra.mrb[0].mxu0 %v4948
  %v4950 = vpop.f32.mrb[0].mxu0
  %v4951 = vadd.f32 %v4864, %v4950
  %v4952 = vpop.f32.mrb[0].mxu0
  %4953 = vdwg.mxu0
  %4954 = vmatprep.subr.mxu0 0.0
  %v4955 = vand.u32 %v4768, 4294901760
  %v4956 = vsub.f32 %v4768, %v4955
  %4957 = vmatpush1.msra.mxu0 %v4956
  %4958 = vmatprep.subr.mxu0 0.0
  %v4959 = vand.u32 %v4778, 4294901760
  %v4960 = vsub.f32 %v4778, %v4959
  %4961 = vmatpush1.msra.mxu0 %v4960
  %4962 = vmatprep.subr.mxu0 0.0
  %4963 = vmatpush1.msra.mxu0 0.0
  %4964 = vmatprep.subr.mxu0 0.0
  %4965 = vmatpush1.msra.mxu0 0.0
  %4966 = vmatprep.subr.mxu0 0.0
  %4967 = vmatpush1.msra.mxu0 0.0
  %4968 = vmatprep.subr.mxu0 0.0
  %4969 = vmatpush1.msra.mxu0 0.0
  %4970 = vmatprep.subr.mxu0 0.0
  %4971 = vmatpush1.msra.mxu0 0.0
  %4972 = vmatprep.subr.mxu0 0.0
  %4973 = vmatpush1.msra.mxu0 0.0
  %4974 = vmatprep.subr.mxu0 0.0
  %4975 = vmatpush1.msra.mxu0 0.0
  %4976 = vmatprep.subr.mxu0 0.0
  %4977 = vmatpush1.msra.mxu0 0.0
  %4978 = vmatprep.subr.mxu0 0.0
  %4979 = vmatpush1.msra.mxu0 0.0
  %4980 = vmatprep.subr.mxu0 0.0
  %4981 = vmatpush1.msra.mxu0 0.0
  %4982 = vmatprep.subr.mxu0 0.0
  %4983 = vmatpush1.msra.mxu0 0.0
  %4984 = vmatprep.subr.mxu0 0.0
  %4985 = vmatpush1.msra.mxu0 0.0
  %4986 = vmatprep.subr.mxu0 0.0
  %4987 = vmatpush1.msra.mxu0 0.0
  %4988 = vmatprep.subr.mxu0 0.0
  %4989 = vmatpush1.msra.mxu0 0.0
  %4990 = vmatprep.subr.mxu0 0.0
  %4991 = vmatpush1.msra.mxu0 0.0
  %4992 = vmatprep.subr.mxu0 0.0
  %4993 = vmatpush1.msra.mxu0 0.0
  %4994 = vmatprep.subr.mxu0 0.0
  %4995 = vmatpush1.msra.mxu0 0.0
  %4996 = vmatprep.subr.mxu0 0.0
  %4997 = vmatpush1.msra.mxu0 0.0
  %4998 = vmatprep.subr.mxu0 0.0
  %4999 = vmatpush1.msra.mxu0 0.0
  %5000 = vmatprep.subr.mxu0 0.0
  %5001 = vmatpush1.msra.mxu0 0.0
  %5002 = vmatprep.subr.mxu0 0.0
  %5003 = vmatpush1.msra.mxu0 0.0
  %5004 = vmatprep.subr.mxu0 0.0
  %5005 = vmatpush1.msra.mxu0 0.0
  %5006 = vmatprep.subr.mxu0 0.0
  %5007 = vmatpush1.msra.mxu0 0.0
  %5008 = vmatprep.subr.mxu0 0.0
  %5009 = vmatpush1.msra.mxu0 0.0
  %5010 = vmatprep.subr.mxu0 0.0
  %5011 = vmatpush1.msra.mxu0 0.0
  %5012 = vmatprep.subr.mxu0 0.0
  %5013 = vmatpush1.msra.mxu0 0.0
  %5014 = vmatprep.subr.mxu0 0.0
  %5015 = vmatpush1.msra.mxu0 0.0
  %5016 = vmatprep.subr.mxu0 0.0
  %5017 = vmatpush1.msra.mxu0 0.0
  %5018 = vmatprep.subr.mxu0 0.0
  %5019 = vmatpush1.msra.mxu0 0.0
  %5020 = vmatprep.subr.mxu0 0.0
  %5021 = vmatpush1.msra.mxu0 0.0
  %5022 = vmatprep.mubr.f32.mxu0 0.0
  %v5023 = vand.u32 %v4773, 4294901760
  %v5024 = vsub.f32 %v4773, %v5023
  %5025 = vmatmul.mubr.f32.gmra.mrb[0].mxu0 %v5024
  %v5026 = vpop.f32.mrb[0].mxu0
  %v5027 = vadd.f32 %v4945, %v5026
  %v5028 = vpop.f32.mrb[0].mxu0
  %5029 = vmatprep.mubr.f32.mxu0 0.0
  %v5030 = vand.u32 %v4776, 4294901760
  %v5031 = vsub.f32 %v4776, %v5030
  %5032 = vmatmul.mubr.f32.gmra.mrb[0].mxu0 %v5031
  %v5033 = vpop.f32.mrb[0].mxu0
  %v5034 = vadd.f32 %v4951, %v5033
  %v5035 = vpop.f32.mrb[0].mxu0
  %5036 = vdwg.mxu0
  %5037 = vmatprep.subr.mxu0 0.0
  %v5038 = vand.u32 %v4768, 4294901760
  %5039 = vmatpush1.msra.mxu0 %v5038
  %5040 = vmatprep.subr.mxu0 0.0
  %v5041 = vand.u32 %v4778, 4294901760
  %5042 = vmatpush1.msra.mxu0 %v5041
  %5043 = vmatprep.subr.mxu0 0.0
  %5044 = vmatpush1.msra.mxu0 0.0
  %5045 = vmatprep.subr.mxu0 0.0
  %5046 = vmatpush1.msra.mxu0 0.0
  %5047 = vmatprep.subr.mxu0 0.0
  %5048 = vmatpush1.msra.mxu0 0.0
  %5049 = vmatprep.subr.mxu0 0.0
  %5050 = vmatpush1.msra.mxu0 0.0
  %5051 = vmatprep.subr.mxu0 0.0
  %5052 = vmatpush1.msra.mxu0 0.0
  %5053 = vmatprep.subr.mxu0 0.0
  %5054 = vmatpush1.msra.mxu0 0.0
  %5055 = vmatprep.subr.mxu0 0.0
  %5056 = vmatpush1.msra.mxu0 0.0
  %5057 = vmatprep.subr.mxu0 0.0
  %5058 = vmatpush1.msra.mxu0 0.0
  %5059 = vmatprep.subr.mxu0 0.0
  %5060 = vmatpush1.msra.mxu0 0.0
  %5061 = vmatprep.subr.mxu0 0.0
  %5062 = vmatpush1.msra.mxu0 0.0
  %5063 = vmatprep.subr.mxu0 0.0
  %5064 = vmatpush1.msra.mxu0 0.0
  %5065 = vmatprep.subr.mxu0 0.0
  %5066 = vmatpush1.msra.mxu0 0.0
  %5067 = vmatprep.subr.mxu0 0.0
  %5068 = vmatpush1.msra.mxu0 0.0
  %5069 = vmatprep.subr.mxu0 0.0
  %5070 = vmatpush1.msra.mxu0 0.0
  %5071 = vmatprep.subr.mxu0 0.0
  %5072 = vmatpush1.msra.mxu0 0.0
  %5073 = vmatprep.subr.mxu0 0.0
  %5074 = vmatpush1.msra.mxu0 0.0
  %5075 = vmatprep.subr.mxu0 0.0
  %5076 = vmatpush1.msra.mxu0 0.0
  %5077 = vmatprep.subr.mxu0 0.0
  %5078 = vmatpush1.msra.mxu0 0.0
  %5079 = vmatprep.subr.mxu0 0.0
  %5080 = vmatpush1.msra.mxu0 0.0
  %5081 = vmatprep.subr.mxu0 0.0
  %5082 = vmatpush1.msra.mxu0 0.0
  %5083 = vmatprep.subr.mxu0 0.0
  %5084 = vmatpush1.msra.mxu0 0.0
  %5085 = vmatprep.subr.mxu0 0.0
  %5086 = vmatpush1.msra.mxu0 0.0
  %5087 = vmatprep.subr.mxu0 0.0
  %5088 = vmatpush1.msra.mxu0 0.0
  %5089 = vmatprep.subr.mxu0 0.0
  %5090 = vmatpush1.msra.mxu0 0.0
  %5091 = vmatprep.subr.mxu0 0.0
  %5092 = vmatpush1.msra.mxu0 0.0
  %5093 = vmatprep.subr.mxu0 0.0
  %5094 = vmatpush1.msra.mxu0 0.0
  %5095 = vmatprep.subr.mxu0 0.0
  %5096 = vmatpush1.msra.mxu0 0.0
  %5097 = vmatprep.subr.mxu0 0.0
  %5098 = vmatpush1.msra.mxu0 0.0
  %5099 = vmatprep.subr.mxu0 0.0
  %5100 = vmatpush1.msra.mxu0 0.0
  %5101 = vmatprep.subr.mxu0 0.0
  %5102 = vmatpush1.msra.mxu0 0.0
  %5103 = vmatprep.mubr.f32.mxu0 0.0
  %v5104 = vand.u32 %v4773, 4294901760
  %v5105 = vsub.f32 %v4773, %v5104
  %v5106 = vand.u32 %v5105, 4294901760
  %5107 = vmatmul.mubr.f32.gmra.mrb[0].mxu0 %v5106
  %v5108 = vpop.f32.mrb[0].mxu0
  %v5109 = vadd.f32 %v5027, %v5108
  %v5110 = vpop.f32.mrb[0].mxu0
  %5111 = vmatprep.mubr.f32.mxu0 0.0
  %v5112 = vand.u32 %v4776, 4294901760
  %v5113 = vsub.f32 %v4776, %v5112
  %v5114 = vand.u32 %v5113, 4294901760
  %5115 = vmatmul.mubr.f32.gmra.mrb[0].mxu0 %v5114
  %v5116 = vpop.f32.mrb[0].mxu0
  %v5117 = vadd.f32 %v5034, %v5116
  %v5118 = vpop.f32.mrb[0].mxu0
  %5119 = vdwg.mxu0
  %5120 = vmatprep.subr.mxu0 0.0
  %v5121 = vand.u32 %v4768, 4294901760
  %v5122 = vsub.f32 %v4768, %v5121
  %v5123 = vand.u32 %v5122, 4294901760
  %5124 = vmatpush1.msra.mxu0 %v5123
  %5125 = vmatprep.subr.mxu0 0.0
  %v5126 = vand.u32 %v4778, 4294901760
  %v5127 = vsub.f32 %v4778, %v5126
  %v5128 = vand.u32 %v5127, 4294901760
  %5129 = vmatpush1.msra.mxu0 %v5128
  %5130 = vmatprep.subr.mxu0 0.0
  %5131 = vmatpush1.msra.mxu0 0.0
  %5132 = vmatprep.subr.mxu0 0.0
  %5133 = vmatpush1.msra.mxu0 0.0
  %5134 = vmatprep.subr.mxu0 0.0
  %5135 = vmatpush1.msra.mxu0 0.0
  %5136 = vmatprep.subr.mxu0 0.0
  %5137 = vmatpush1.msra.mxu0 0.0
  %5138 = vmatprep.subr.mxu0 0.0
  %5139 = vmatpush1.msra.mxu0 0.0
  %5140 = vmatprep.subr.mxu0 0.0
  %5141 = vmatpush1.msra.mxu0 0.0
  %5142 = vmatprep.subr.mxu0 0.0
  %5143 = vmatpush1.msra.mxu0 0.0
  %5144 = vmatprep.subr.mxu0 0.0
  %5145 = vmatpush1.msra.mxu0 0.0
  %5146 = vmatprep.subr.mxu0 0.0
  %5147 = vmatpush1.msra.mxu0 0.0
  %5148 = vmatprep.subr.mxu0 0.0
  %5149 = vmatpush1.msra.mxu0 0.0
  %5150 = vmatprep.subr.mxu0 0.0
  %5151 = vmatpush1.msra.mxu0 0.0
  %5152 = vmatprep.subr.mxu0 0.0
  %5153 = vmatpush1.msra.mxu0 0.0
  %5154 = vmatprep.subr.mxu0 0.0
  %5155 = vmatpush1.msra.mxu0 0.0
  %5156 = vmatprep.subr.mxu0 0.0
  %5157 = vmatpush1.msra.mxu0 0.0
  %5158 = vmatprep.subr.mxu0 0.0
  %5159 = vmatpush1.msra.mxu0 0.0
  %5160 = vmatprep.subr.mxu0 0.0
  %5161 = vmatpush1.msra.mxu0 0.0
  %5162 = vmatprep.subr.mxu0 0.0
  %5163 = vmatpush1.msra.mxu0 0.0
  %5164 = vmatprep.subr.mxu0 0.0
  %5165 = vmatpush1.msra.mxu0 0.0
  %5166 = vmatprep.subr.mxu0 0.0
  %5167 = vmatpush1.msra.mxu0 0.0
  %5168 = vmatprep.subr.mxu0 0.0
  %5169 = vmatpush1.msra.mxu0 0.0
  %5170 = vmatprep.subr.mxu0 0.0
  %5171 = vmatpush1.msra.mxu0 0.0
  %5172 = vmatprep.subr.mxu0 0.0
  %5173 = vmatpush1.msra.mxu0 0.0
  %5174 = vmatprep.subr.mxu0 0.0
  %5175 = vmatpush1.msra.mxu0 0.0
  %5176 = vmatprep.subr.mxu0 0.0
  %5177 = vmatpush1.msra.mxu0 0.0
  %5178 = vmatprep.subr.mxu0 0.0
  %5179 = vmatpush1.msra.mxu0 0.0
  %5180 = vmatprep.subr.mxu0 0.0
  %5181 = vmatpush1.msra.mxu0 0.0
  %5182 = vmatprep.subr.mxu0 0.0
  %5183 = vmatpush1.msra.mxu0 0.0
  %5184 = vmatprep.subr.mxu0 0.0
  %5185 = vmatpush1.msra.mxu0 0.0
  %5186 = vmatprep.subr.mxu0 0.0
  %5187 = vmatpush1.msra.mxu0 0.0
  %5188 = vmatprep.subr.mxu0 0.0
  %5189 = vmatpush1.msra.mxu0 0.0
  %5190 = vmatprep.mubr.f32.mxu0 0.0
  %v5191 = vand.u32 %v4773, 4294901760
  %5192 = vmatmul.mubr.f32.gmra.mrb[0].mxu0 %v5191
  %v5193 = vpop.f32.mrb[0].mxu0
  %v5194 = vadd.f32 %v5109, %v5193
  %v5195 = vpop.f32.mrb[0].mxu0
  %5196 = vmatprep.mubr.f32.mxu0 0.0
  %v5197 = vand.u32 %v4776, 4294901760
  %5198 = vmatmul.mubr.f32.gmra.mrb[0].mxu0 %v5197
  %v5199 = vpop.f32.mrb[0].mxu0
  %v5200 = vadd.f32 %v5117, %v5199
  %v5201 = vpop.f32.mrb[0].mxu0
  %5202 = vdwg.mxu0
  %5203 = vmatprep.subr.mxu0 0.0
  %v5204 = vand.u32 %v4768, 4294901760
  %5205 = vmatpush1.msra.mxu0 %v5204
  %5206 = vmatprep.subr.mxu0 0.0
  %v5207 = vand.u32 %v4778, 4294901760
  %5208 = vmatpush1.msra.mxu0 %v5207
  %5209 = vmatprep.subr.mxu0 0.0
  %5210 = vmatpush1.msra.mxu0 0.0
  %5211 = vmatprep.subr.mxu0 0.0
  %5212 = vmatpush1.msra.mxu0 0.0
  %5213 = vmatprep.subr.mxu0 0.0
  %5214 = vmatpush1.msra.mxu0 0.0
  %5215 = vmatprep.subr.mxu0 0.0
  %5216 = vmatpush1.msra.mxu0 0.0
  %5217 = vmatprep.subr.mxu0 0.0
  %5218 = vmatpush1.msra.mxu0 0.0
  %5219 = vmatprep.subr.mxu0 0.0
  %5220 = vmatpush1.msra.mxu0 0.0
  %5221 = vmatprep.subr.mxu0 0.0
  %5222 = vmatpush1.msra.mxu0 0.0
  %5223 = vmatprep.subr.mxu0 0.0
  %5224 = vmatpush1.msra.mxu0 0.0
  %5225 = vmatprep.subr.mxu0 0.0
  %5226 = vmatpush1.msra.mxu0 0.0
  %5227 = vmatprep.subr.mxu0 0.0
  %5228 = vmatpush1.msra.mxu0 0.0
  %5229 = vmatprep.subr.mxu0 0.0
  %5230 = vmatpush1.msra.mxu0 0.0
  %5231 = vmatprep.subr.mxu0 0.0
  %5232 = vmatpush1.msra.mxu0 0.0
  %5233 = vmatprep.subr.mxu0 0.0
  %5234 = vmatpush1.msra.mxu0 0.0
  %5235 = vmatprep.subr.mxu0 0.0
  %5236 = vmatpush1.msra.mxu0 0.0
  %5237 = vmatprep.subr.mxu0 0.0
  %5238 = vmatpush1.msra.mxu0 0.0
  %5239 = vmatprep.subr.mxu0 0.0
  %5240 = vmatpush1.msra.mxu0 0.0
  %5241 = vmatprep.subr.mxu0 0.0
  %5242 = vmatpush1.msra.mxu0 0.0
  %5243 = vmatprep.subr.mxu0 0.0
  %5244 = vmatpush1.msra.mxu0 0.0
  %5245 = vmatprep.subr.mxu0 0.0
  %5246 = vmatpush1.msra.mxu0 0.0
  %5247 = vmatprep.subr.mxu0 0.0
  %5248 = vmatpush1.msra.mxu0 0.0
  %5249 = vmatprep.subr.mxu0 0.0
  %5250 = vmatpush1.msra.mxu0 0.0
  %5251 = vmatprep.subr.mxu0 0.0
  %5252 = vmatpush1.msra.mxu0 0.0
  %5253 = vmatprep.subr.mxu0 0.0
  %5254 = vmatpush1.msra.mxu0 0.0
  %5255 = vmatprep.subr.mxu0 0.0
  %5256 = vmatpush1.msra.mxu0 0.0
  %5257 = vmatprep.subr.mxu0 0.0
  %5258 = vmatpush1.msra.mxu0 0.0
  %5259 = vmatprep.subr.mxu0 0.0
  %5260 = vmatpush1.msra.mxu0 0.0
  %5261 = vmatprep.subr.mxu0 0.0
  %5262 = vmatpush1.msra.mxu0 0.0
  %5263 = vmatprep.subr.mxu0 0.0
  %5264 = vmatpush1.msra.mxu0 0.0
  %5265 = vmatprep.subr.mxu0 0.0
  %5266 = vmatpush1.msra.mxu0 0.0
  %5267 = vmatprep.subr.mxu0 0.0
  %5268 = vmatpush1.msra.mxu0 0.0
  %5269 = vmatprep.mubr.f32.mxu0 0.0
  %v5270 = vand.u32 %v4773, 4294901760
  %5271 = vmatmul.mubr.f32.gmra.mrb[0].mxu0 %v5270
  %v5272 = vpop.f32.mrb[0].mxu0
  %v5273 = vadd.f32 %v5194, %v5272
  %v5274 = vpop.f32.mrb[0].mxu0
  %5275 = vmatprep.mubr.f32.mxu0 0.0
  %v5276 = vand.u32 %v4776, 4294901760
  %5277 = vmatmul.mubr.f32.gmra.mrb[0].mxu0 %v5276
  %v5278 = vpop.f32.mrb[0].mxu0
  %v5279 = vadd.f32 %v5200, %v5278
  %v5280 = vpop.f32.mrb[0].mxu0
  %5281 = vdwg.mxu0
  %5284 = vrot.lane.b32.xlu0 %v3163, 16
  %v5285 = vpop.permute.xlu0 %5284
  %5286 = vrot.lane.b32.xlu0 %v3169, 16
  %v5287 = vpop.permute.xlu0 %5286
  %5292 = vrot.lane.b32.xlu0 %v4218, 32
  %v5293 = vpop.permute.xlu0 %5292
  %5294 = vrot.lane.b32.xlu0 %v4224, 32
  %v5295 = vpop.permute.xlu0 %5294
  %5300 = vrot.lane.b32.xlu0 %v5273, 48
  %v5301 = vpop.permute.xlu0 %5300
  %5302 = vrot.lane.b32.xlu0 %v5279, 48
  %v5303 = vpop.permute.xlu0 %5302
  %v5306 = vsel %vm1069, %v2107, %v5285
  %v5307 = vsel %vm1069, %v2113, %v5287
  %vm5308 = vcmask 261120
  %v5309 = vsel %vm5308, %v5306, %v5293
  %v5310 = vsel %vm5308, %v5307, %v5295
  %vm5311 = vcmask 392192
  %v5312 = vsel %vm5311, %v5309, %v5301
  %v5313 = vsel %vm5311, %v5310, %v5303
  %vm5315 = vcmask 1046528
  %v5316 = vrot.slane %v1052, 1
  %v5317 = vrot.slane %v1059, 1
  %v5318 = vsel %vm5315, %v5316, %v5317
  %5319 = vrot.lane.b32.xlu0 %v5318, 64
  %v5320 = vpop.permute.xlu0 %5319
  %5321 = vrot.lane.b32.xlu0 %v5317, 64
  %v5322 = vpop.permute.xlu0 %5321
  %v5323 = vsel %vm1069, %v5318, 0
  %v5325 = vsel %vm1069, %v5317, 0
  %v5327 = vsel %vm1069, %v5320, 0
  %v5329 = vsel %vm1069, %v5322, 0
  %5331 = vmatprep.subr.mxu0 0.0
  %v5332 = vand.u32 %v5327, 4294901760
  %5333 = vmatpush1.xpose.msra.mxu0 %v5332
  %5334 = vmatprep.subr.mxu0 0.0
  %v5335 = vand.u32 %v5329, 4294901760
  %5336 = vmatpush1.xpose.msra.mxu0 %v5335
  %5337 = vmatprep.subr.mxu0 0.0
  %5338 = vmatpush1.xpose.msra.mxu0 0.0
  %5339 = vmatprep.subr.mxu0 0.0
  %5340 = vmatpush1.xpose.msra.mxu0 0.0
  %5341 = vmatprep.subr.mxu0 0.0
  %5342 = vmatpush1.xpose.msra.mxu0 0.0
  %5343 = vmatprep.subr.mxu0 0.0
  %5344 = vmatpush1.xpose.msra.mxu0 0.0
  %5345 = vmatprep.subr.mxu0 0.0
  %5346 = vmatpush1.xpose.msra.mxu0 0.0
  %5347 = vmatprep.subr.mxu0 0.0
  %5348 = vmatpush1.xpose.msra.mxu0 0.0
  %5349 = vmatprep.subr.mxu0 0.0
  %5350 = vmatpush1.xpose.msra.mxu0 0.0
  %5351 = vmatprep.subr.mxu0 0.0
  %5352 = vmatpush1.xpose.msra.mxu0 0.0
  %5353 = vmatprep.subr.mxu0 0.0
  %5354 = vmatpush1.xpose.msra.mxu0 0.0
  %5355 = vmatprep.subr.mxu0 0.0
  %5356 = vmatpush1.xpose.msra.mxu0 0.0
  %5357 = vmatprep.subr.mxu0 0.0
  %5358 = vmatpush1.xpose.msra.mxu0 0.0
  %5359 = vmatprep.subr.mxu0 0.0
  %5360 = vmatpush1.xpose.msra.mxu0 0.0
  %5361 = vmatprep.subr.mxu0 0.0
  %5362 = vmatpush1.xpose.msra.mxu0 0.0
  %5363 = vmatprep.subr.mxu0 0.0
  %5364 = vmatpush1.xpose.msra.mxu0 0.0
  %5365 = vmatprep.subr.mxu0 0.0
  %5366 = vmatpush1.xpose.msra.mxu0 0.0
  %5367 = vmatprep.subr.mxu0 0.0
  %5368 = vmatpush1.xpose.msra.mxu0 0.0
  %5369 = vmatprep.subr.mxu0 0.0
  %5370 = vmatpush1.xpose.msra.mxu0 0.0
  %5371 = vmatprep.subr.mxu0 0.0
  %5372 = vmatpush1.xpose.msra.mxu0 0.0
  %5373 = vmatprep.subr.mxu0 0.0
  %5374 = vmatpush1.xpose.msra.mxu0 0.0
  %5375 = vmatprep.subr.mxu0 0.0
  %5376 = vmatpush1.xpose.msra.mxu0 0.0
  %5377 = vmatprep.subr.mxu0 0.0
  %5378 = vmatpush1.xpose.msra.mxu0 0.0
  %5379 = vmatprep.subr.mxu0 0.0
  %5380 = vmatpush1.xpose.msra.mxu0 0.0
  %5381 = vmatprep.subr.mxu0 0.0
  %5382 = vmatpush1.xpose.msra.mxu0 0.0
  %5383 = vmatprep.subr.mxu0 0.0
  %5384 = vmatpush1.xpose.msra.mxu0 0.0
  %5385 = vmatprep.subr.mxu0 0.0
  %5386 = vmatpush1.xpose.msra.mxu0 0.0
  %5387 = vmatprep.subr.mxu0 0.0
  %5388 = vmatpush1.xpose.msra.mxu0 0.0
  %5389 = vmatprep.subr.mxu0 0.0
  %5390 = vmatpush1.xpose.msra.mxu0 0.0
  %5391 = vmatprep.subr.mxu0 0.0
  %5392 = vmatpush1.xpose.msra.mxu0 0.0
  %5393 = vmatprep.subr.mxu0 0.0
  %5394 = vmatpush1.xpose.msra.mxu0 0.0
  %5395 = vmatprep.subr.mxu0 0.0
  %5396 = vmatpush1.xpose.msra.mxu0 0.0
  %5397 = vmatprep.mubr.f32.mxu0 0.0
  %v5398 = vand.u32 %v5323, 4294901760
  %v5399 = vsub.f32 %v5323, %v5398
  %v5400 = vand.u32 %v5399, 4294901760
  %v5401 = vsub.f32 %v5399, %v5400
  %v5402 = vand.u32 %v5401, 4294901760
  %5403 = vmatmul.mubr.f32.gmra.mrb[0].mxu0 %v5402
  %v5404 = vpop.f32.mrb[0].mxu0
  %v5405 = vadd.f32 0.0, %v5404
  %v5406 = vpop.f32.mrb[0].mxu0
  %5407 = vmatprep.mubr.f32.mxu0 0.0
  %v5408 = vand.u32 %v5325, 4294901760
  %v5409 = vsub.f32 %v5325, %v5408
  %v5410 = vand.u32 %v5409, 4294901760
  %v5411 = vsub.f32 %v5409, %v5410
  %v5412 = vand.u32 %v5411, 4294901760
  %5413 = vmatmul.mubr.f32.gmra.mrb[0].mxu0 %v5412
  %v5414 = vpop.f32.mrb[0].mxu0
  %v5415 = vadd.f32 0.0, %v5414
  %v5416 = vpop.f32.mrb[0].mxu0
  %5417 = vdwg.mxu0
  %5418 = vmatprep.subr.mxu0 0.0
  %v5419 = vand.u32 %v5327, 4294901760
  %v5420 = vsub.f32 %v5327, %v5419
  %v5421 = vand.u32 %v5420, 4294901760
  %v5422 = vsub.f32 %v5420, %v5421
  %v5423 = vand.u32 %v5422, 4294901760
  %5424 = vmatpush1.xpose.msra.mxu0 %v5423
  %5425 = vmatprep.subr.mxu0 0.0
  %v5426 = vand.u32 %v5329, 4294901760
  %v5427 = vsub.f32 %v5329, %v5426
  %v5428 = vand.u32 %v5427, 4294901760
  %v5429 = vsub.f32 %v5427, %v5428
  %v5430 = vand.u32 %v5429, 4294901760
  %5431 = vmatpush1.xpose.msra.mxu0 %v5430
  %5432 = vmatprep.subr.mxu0 0.0
  %5433 = vmatpush1.xpose.msra.mxu0 0.0
  %5434 = vmatprep.subr.mxu0 0.0
  %5435 = vmatpush1.xpose.msra.mxu0 0.0
  %5436 = vmatprep.subr.mxu0 0.0
  %5437 = vmatpush1.xpose.msra.mxu0 0.0
  %5438 = vmatprep.subr.mxu0 0.0
  %5439 = vmatpush1.xpose.msra.mxu0 0.0
  %5440 = vmatprep.subr.mxu0 0.0
  %5441 = vmatpush1.xpose.msra.mxu0 0.0
  %5442 = vmatprep.subr.mxu0 0.0
  %5443 = vmatpush1.xpose.msra.mxu0 0.0
  %5444 = vmatprep.subr.mxu0 0.0
  %5445 = vmatpush1.xpose.msra.mxu0 0.0
  %5446 = vmatprep.subr.mxu0 0.0
  %5447 = vmatpush1.xpose.msra.mxu0 0.0
  %5448 = vmatprep.subr.mxu0 0.0
  %5449 = vmatpush1.xpose.msra.mxu0 0.0
  %5450 = vmatprep.subr.mxu0 0.0
  %5451 = vmatpush1.xpose.msra.mxu0 0.0
  %5452 = vmatprep.subr.mxu0 0.0
  %5453 = vmatpush1.xpose.msra.mxu0 0.0
  %5454 = vmatprep.subr.mxu0 0.0
  %5455 = vmatpush1.xpose.msra.mxu0 0.0
  %5456 = vmatprep.subr.mxu0 0.0
  %5457 = vmatpush1.xpose.msra.mxu0 0.0
  %5458 = vmatprep.subr.mxu0 0.0
  %5459 = vmatpush1.xpose.msra.mxu0 0.0
  %5460 = vmatprep.subr.mxu0 0.0
  %5461 = vmatpush1.xpose.msra.mxu0 0.0
  %5462 = vmatprep.subr.mxu0 0.0
  %5463 = vmatpush1.xpose.msra.mxu0 0.0
  %5464 = vmatprep.subr.mxu0 0.0
  %5465 = vmatpush1.xpose.msra.mxu0 0.0
  %5466 = vmatprep.subr.mxu0 0.0
  %5467 = vmatpush1.xpose.msra.mxu0 0.0
  %5468 = vmatprep.subr.mxu0 0.0
  %5469 = vmatpush1.xpose.msra.mxu0 0.0
  %5470 = vmatprep.subr.mxu0 0.0
  %5471 = vmatpush1.xpose.msra.mxu0 0.0
  %5472 = vmatprep.subr.mxu0 0.0
  %5473 = vmatpush1.xpose.msra.mxu0 0.0
  %5474 = vmatprep.subr.mxu0 0.0
  %5475 = vmatpush1.xpose.msra.mxu0 0.0
  %5476 = vmatprep.subr.mxu0 0.0
  %5477 = vmatpush1.xpose.msra.mxu0 0.0
  %5478 = vmatprep.subr.mxu0 0.0
  %5479 = vmatpush1.xpose.msra.mxu0 0.0
  %5480 = vmatprep.subr.mxu0 0.0
  %5481 = vmatpush1.xpose.msra.mxu0 0.0
  %5482 = vmatprep.subr.mxu0 0.0
  %5483 = vmatpush1.xpose.msra.mxu0 0.0
  %5484 = vmatprep.subr.mxu0 0.0
  %5485 = vmatpush1.xpose.msra.mxu0 0.0
  %5486 = vmatprep.subr.mxu0 0.0
  %5487 = vmatpush1.xpose.msra.mxu0 0.0
  %5488 = vmatprep.subr.mxu0 0.0
  %5489 = vmatpush1.xpose.msra.mxu0 0.0
  %5490 = vmatprep.subr.mxu0 0.0
  %5491 = vmatpush1.xpose.msra.mxu0 0.0
  %5492 = vmatprep.mubr.f32.mxu0 0.0
  %v5493 = vand.u32 %v5323, 4294901760
  %5494 = vmatmul.mubr.f32.gmra.mrb[0].mxu0 %v5493
  %v5495 = vpop.f32.mrb[0].mxu0
  %v5496 = vadd.f32 %v5405, %v5495
  %v5497 = vpop.f32.mrb[0].mxu0
  %5498 = vmatprep.mubr.f32.mxu0 0.0
  %v5499 = vand.u32 %v5325, 4294901760
  %5500 = vmatmul.mubr.f32.gmra.mrb[0].mxu0 %v5499
  %v5501 = vpop.f32.mrb[0].mxu0
  %v5502 = vadd.f32 %v5415, %v5501
  %v5503 = vpop.f32.mrb[0].mxu0
  %5504 = vdwg.mxu0
  %5505 = vmatprep.subr.mxu0 0.0
  %v5506 = vand.u32 %v5327, 4294901760
  %v5507 = vsub.f32 %v5327, %v5506
  %5508 = vmatpush1.xpose.msra.mxu0 %v5507
  %5509 = vmatprep.subr.mxu0 0.0
  %v5510 = vand.u32 %v5329, 4294901760
  %v5511 = vsub.f32 %v5329, %v5510
  %5512 = vmatpush1.xpose.msra.mxu0 %v5511
  %5513 = vmatprep.subr.mxu0 0.0
  %5514 = vmatpush1.xpose.msra.mxu0 0.0
  %5515 = vmatprep.subr.mxu0 0.0
  %5516 = vmatpush1.xpose.msra.mxu0 0.0
  %5517 = vmatprep.subr.mxu0 0.0
  %5518 = vmatpush1.xpose.msra.mxu0 0.0
  %5519 = vmatprep.subr.mxu0 0.0
  %5520 = vmatpush1.xpose.msra.mxu0 0.0
  %5521 = vmatprep.subr.mxu0 0.0
  %5522 = vmatpush1.xpose.msra.mxu0 0.0
  %5523 = vmatprep.subr.mxu0 0.0
  %5524 = vmatpush1.xpose.msra.mxu0 0.0
  %5525 = vmatprep.subr.mxu0 0.0
  %5526 = vmatpush1.xpose.msra.mxu0 0.0
  %5527 = vmatprep.subr.mxu0 0.0
  %5528 = vmatpush1.xpose.msra.mxu0 0.0
  %5529 = vmatprep.subr.mxu0 0.0
  %5530 = vmatpush1.xpose.msra.mxu0 0.0
  %5531 = vmatprep.subr.mxu0 0.0
  %5532 = vmatpush1.xpose.msra.mxu0 0.0
  %5533 = vmatprep.subr.mxu0 0.0
  %5534 = vmatpush1.xpose.msra.mxu0 0.0
  %5535 = vmatprep.subr.mxu0 0.0
  %5536 = vmatpush1.xpose.msra.mxu0 0.0
  %5537 = vmatprep.subr.mxu0 0.0
  %5538 = vmatpush1.xpose.msra.mxu0 0.0
  %5539 = vmatprep.subr.mxu0 0.0
  %5540 = vmatpush1.xpose.msra.mxu0 0.0
  %5541 = vmatprep.subr.mxu0 0.0
  %5542 = vmatpush1.xpose.msra.mxu0 0.0
  %5543 = vmatprep.subr.mxu0 0.0
  %5544 = vmatpush1.xpose.msra.mxu0 0.0
  %5545 = vmatprep.subr.mxu0 0.0
  %5546 = vmatpush1.xpose.msra.mxu0 0.0
  %5547 = vmatprep.subr.mxu0 0.0
  %5548 = vmatpush1.xpose.msra.mxu0 0.0
  %5549 = vmatprep.subr.mxu0 0.0
  %5550 = vmatpush1.xpose.msra.mxu0 0.0
  %5551 = vmatprep.subr.mxu0 0.0
  %5552 = vmatpush1.xpose.msra.mxu0 0.0
  %5553 = vmatprep.subr.mxu0 0.0
  %5554 = vmatpush1.xpose.msra.mxu0 0.0
  %5555 = vmatprep.subr.mxu0 0.0
  %5556 = vmatpush1.xpose.msra.mxu0 0.0
  %5557 = vmatprep.subr.mxu0 0.0
  %5558 = vmatpush1.xpose.msra.mxu0 0.0
  %5559 = vmatprep.subr.mxu0 0.0
  %5560 = vmatpush1.xpose.msra.mxu0 0.0
  %5561 = vmatprep.subr.mxu0 0.0
  %5562 = vmatpush1.xpose.msra.mxu0 0.0
  %5563 = vmatprep.subr.mxu0 0.0
  %5564 = vmatpush1.xpose.msra.mxu0 0.0
  %5565 = vmatprep.subr.mxu0 0.0
  %5566 = vmatpush1.xpose.msra.mxu0 0.0
  %5567 = vmatprep.subr.mxu0 0.0
  %5568 = vmatpush1.xpose.msra.mxu0 0.0
  %5569 = vmatprep.subr.mxu0 0.0
  %5570 = vmatpush1.xpose.msra.mxu0 0.0
  %5571 = vmatprep.subr.mxu0 0.0
  %5572 = vmatpush1.xpose.msra.mxu0 0.0
  %5573 = vmatprep.mubr.f32.mxu0 0.0
  %v5574 = vand.u32 %v5323, 4294901760
  %v5575 = vsub.f32 %v5323, %v5574
  %5576 = vmatmul.mubr.f32.gmra.mrb[0].mxu0 %v5575
  %v5577 = vpop.f32.mrb[0].mxu0
  %v5578 = vadd.f32 %v5496, %v5577
  %v5579 = vpop.f32.mrb[0].mxu0
  %5580 = vmatprep.mubr.f32.mxu0 0.0
  %v5581 = vand.u32 %v5325, 4294901760
  %v5582 = vsub.f32 %v5325, %v5581
  %5583 = vmatmul.mubr.f32.gmra.mrb[0].mxu0 %v5582
  %v5584 = vpop.f32.mrb[0].mxu0
  %v5585 = vadd.f32 %v5502, %v5584
  %v5586 = vpop.f32.mrb[0].mxu0
  %5587 = vdwg.mxu0
  %5588 = vmatprep.subr.mxu0 0.0
  %v5589 = vand.u32 %v5327, 4294901760
  %5590 = vmatpush1.xpose.msra.mxu0 %v5589
  %5591 = vmatprep.subr.mxu0 0.0
  %v5592 = vand.u32 %v5329, 4294901760
  %5593 = vmatpush1.xpose.msra.mxu0 %v5592
  %5594 = vmatprep.subr.mxu0 0.0
  %5595 = vmatpush1.xpose.msra.mxu0 0.0
  %5596 = vmatprep.subr.mxu0 0.0
  %5597 = vmatpush1.xpose.msra.mxu0 0.0
  %5598 = vmatprep.subr.mxu0 0.0
  %5599 = vmatpush1.xpose.msra.mxu0 0.0
  %5600 = vmatprep.subr.mxu0 0.0
  %5601 = vmatpush1.xpose.msra.mxu0 0.0
  %5602 = vmatprep.subr.mxu0 0.0
  %5603 = vmatpush1.xpose.msra.mxu0 0.0
  %5604 = vmatprep.subr.mxu0 0.0
  %5605 = vmatpush1.xpose.msra.mxu0 0.0
  %5606 = vmatprep.subr.mxu0 0.0
  %5607 = vmatpush1.xpose.msra.mxu0 0.0
  %5608 = vmatprep.subr.mxu0 0.0
  %5609 = vmatpush1.xpose.msra.mxu0 0.0
  %5610 = vmatprep.subr.mxu0 0.0
  %5611 = vmatpush1.xpose.msra.mxu0 0.0
  %5612 = vmatprep.subr.mxu0 0.0
  %5613 = vmatpush1.xpose.msra.mxu0 0.0
  %5614 = vmatprep.subr.mxu0 0.0
  %5615 = vmatpush1.xpose.msra.mxu0 0.0
  %5616 = vmatprep.subr.mxu0 0.0
  %5617 = vmatpush1.xpose.msra.mxu0 0.0
  %5618 = vmatprep.subr.mxu0 0.0
  %5619 = vmatpush1.xpose.msra.mxu0 0.0
  %5620 = vmatprep.subr.mxu0 0.0
  %5621 = vmatpush1.xpose.msra.mxu0 0.0
  %5622 = vmatprep.subr.mxu0 0.0
  %5623 = vmatpush1.xpose.msra.mxu0 0.0
  %5624 = vmatprep.subr.mxu0 0.0
  %5625 = vmatpush1.xpose.msra.mxu0 0.0
  %5626 = vmatprep.subr.mxu0 0.0
  %5627 = vmatpush1.xpose.msra.mxu0 0.0
  %5628 = vmatprep.subr.mxu0 0.0
  %5629 = vmatpush1.xpose.msra.mxu0 0.0
  %5630 = vmatprep.subr.mxu0 0.0
  %5631 = vmatpush1.xpose.msra.mxu0 0.0
  %5632 = vmatprep.subr.mxu0 0.0
  %5633 = vmatpush1.xpose.msra.mxu0 0.0
  %5634 = vmatprep.subr.mxu0 0.0
  %5635 = vmatpush1.xpose.msra.mxu0 0.0
  %5636 = vmatprep.subr.mxu0 0.0
  %5637 = vmatpush1.xpose.msra.mxu0 0.0
  %5638 = vmatprep.subr.mxu0 0.0
  %5639 = vmatpush1.xpose.msra.mxu0 0.0
  %5640 = vmatprep.subr.mxu0 0.0
  %5641 = vmatpush1.xpose.msra.mxu0 0.0
  %5642 = vmatprep.subr.mxu0 0.0
  %5643 = vmatpush1.xpose.msra.mxu0 0.0
  %5644 = vmatprep.subr.mxu0 0.0
  %5645 = vmatpush1.xpose.msra.mxu0 0.0
  %5646 = vmatprep.subr.mxu0 0.0
  %5647 = vmatpush1.xpose.msra.mxu0 0.0
  %5648 = vmatprep.subr.mxu0 0.0
  %5649 = vmatpush1.xpose.msra.mxu0 0.0
  %5650 = vmatprep.subr.mxu0 0.0
  %5651 = vmatpush1.xpose.msra.mxu0 0.0
  %5652 = vmatprep.subr.mxu0 0.0
  %5653 = vmatpush1.xpose.msra.mxu0 0.0
  %5654 = vmatprep.mubr.f32.mxu0 0.0
  %v5655 = vand.u32 %v5323, 4294901760
  %v5656 = vsub.f32 %v5323, %v5655
  %v5657 = vand.u32 %v5656, 4294901760
  %5658 = vmatmul.mubr.f32.gmra.mrb[0].mxu0 %v5657
  %v5659 = vpop.f32.mrb[0].mxu0
  %v5660 = vadd.f32 %v5578, %v5659
  %v5661 = vpop.f32.mrb[0].mxu0
  %5662 = vmatprep.mubr.f32.mxu0 0.0
  %v5663 = vand.u32 %v5325, 4294901760
  %v5664 = vsub.f32 %v5325, %v5663
  %v5665 = vand.u32 %v5664, 4294901760
  %5666 = vmatmul.mubr.f32.gmra.mrb[0].mxu0 %v5665
  %v5667 = vpop.f32.mrb[0].mxu0
  %v5668 = vadd.f32 %v5585, %v5667
  %v5669 = vpop.f32.mrb[0].mxu0
  %5670 = vdwg.mxu0
  %5671 = vmatprep.subr.mxu0 0.0
  %v5672 = vand.u32 %v5327, 4294901760
  %v5673 = vsub.f32 %v5327, %v5672
  %v5674 = vand.u32 %v5673, 4294901760
  %5675 = vmatpush1.xpose.msra.mxu0 %v5674
  %5676 = vmatprep.subr.mxu0 0.0
  %v5677 = vand.u32 %v5329, 4294901760
  %v5678 = vsub.f32 %v5329, %v5677
  %v5679 = vand.u32 %v5678, 4294901760
  %5680 = vmatpush1.xpose.msra.mxu0 %v5679
  %5681 = vmatprep.subr.mxu0 0.0
  %5682 = vmatpush1.xpose.msra.mxu0 0.0
  %5683 = vmatprep.subr.mxu0 0.0
  %5684 = vmatpush1.xpose.msra.mxu0 0.0
  %5685 = vmatprep.subr.mxu0 0.0
  %5686 = vmatpush1.xpose.msra.mxu0 0.0
  %5687 = vmatprep.subr.mxu0 0.0
  %5688 = vmatpush1.xpose.msra.mxu0 0.0
  %5689 = vmatprep.subr.mxu0 0.0
  %5690 = vmatpush1.xpose.msra.mxu0 0.0
  %5691 = vmatprep.subr.mxu0 0.0
  %5692 = vmatpush1.xpose.msra.mxu0 0.0
  %5693 = vmatprep.subr.mxu0 0.0
  %5694 = vmatpush1.xpose.msra.mxu0 0.0
  %5695 = vmatprep.subr.mxu0 0.0
  %5696 = vmatpush1.xpose.msra.mxu0 0.0
  %5697 = vmatprep.subr.mxu0 0.0
  %5698 = vmatpush1.xpose.msra.mxu0 0.0
  %5699 = vmatprep.subr.mxu0 0.0
  %5700 = vmatpush1.xpose.msra.mxu0 0.0
  %5701 = vmatprep.subr.mxu0 0.0
  %5702 = vmatpush1.xpose.msra.mxu0 0.0
  %5703 = vmatprep.subr.mxu0 0.0
  %5704 = vmatpush1.xpose.msra.mxu0 0.0
  %5705 = vmatprep.subr.mxu0 0.0
  %5706 = vmatpush1.xpose.msra.mxu0 0.0
  %5707 = vmatprep.subr.mxu0 0.0
  %5708 = vmatpush1.xpose.msra.mxu0 0.0
  %5709 = vmatprep.subr.mxu0 0.0
  %5710 = vmatpush1.xpose.msra.mxu0 0.0
  %5711 = vmatprep.subr.mxu0 0.0
  %5712 = vmatpush1.xpose.msra.mxu0 0.0
  %5713 = vmatprep.subr.mxu0 0.0
  %5714 = vmatpush1.xpose.msra.mxu0 0.0
  %5715 = vmatprep.subr.mxu0 0.0
  %5716 = vmatpush1.xpose.msra.mxu0 0.0
  %5717 = vmatprep.subr.mxu0 0.0
  %5718 = vmatpush1.xpose.msra.mxu0 0.0
  %5719 = vmatprep.subr.mxu0 0.0
  %5720 = vmatpush1.xpose.msra.mxu0 0.0
  %5721 = vmatprep.subr.mxu0 0.0
  %5722 = vmatpush1.xpose.msra.mxu0 0.0
  %5723 = vmatprep.subr.mxu0 0.0
  %5724 = vmatpush1.xpose.msra.mxu0 0.0
  %5725 = vmatprep.subr.mxu0 0.0
  %5726 = vmatpush1.xpose.msra.mxu0 0.0
  %5727 = vmatprep.subr.mxu0 0.0
  %5728 = vmatpush1.xpose.msra.mxu0 0.0
  %5729 = vmatprep.subr.mxu0 0.0
  %5730 = vmatpush1.xpose.msra.mxu0 0.0
  %5731 = vmatprep.subr.mxu0 0.0
  %5732 = vmatpush1.xpose.msra.mxu0 0.0
  %5733 = vmatprep.subr.mxu0 0.0
  %5734 = vmatpush1.xpose.msra.mxu0 0.0
  %5735 = vmatprep.subr.mxu0 0.0
  %5736 = vmatpush1.xpose.msra.mxu0 0.0
  %5737 = vmatprep.subr.mxu0 0.0
  %5738 = vmatpush1.xpose.msra.mxu0 0.0
  %5739 = vmatprep.subr.mxu0 0.0
  %5740 = vmatpush1.xpose.msra.mxu0 0.0
  %5741 = vmatprep.mubr.f32.mxu0 0.0
  %v5742 = vand.u32 %v5323, 4294901760
  %5743 = vmatmul.mubr.f32.gmra.mrb[0].mxu0 %v5742
  %v5744 = vpop.f32.mrb[0].mxu0
  %v5745 = vadd.f32 %v5660, %v5744
  %v5746 = vpop.f32.mrb[0].mxu0
  %5747 = vmatprep.mubr.f32.mxu0 0.0
  %v5748 = vand.u32 %v5325, 4294901760
  %5749 = vmatmul.mubr.f32.gmra.mrb[0].mxu0 %v5748
  %v5750 = vpop.f32.mrb[0].mxu0
  %v5751 = vadd.f32 %v5668, %v5750
  %v5752 = vpop.f32.mrb[0].mxu0
  %5753 = vdwg.mxu0
  %5754 = vmatprep.subr.mxu0 0.0
  %v5755 = vand.u32 %v5327, 4294901760
  %5756 = vmatpush1.xpose.msra.mxu0 %v5755
  %5757 = vmatprep.subr.mxu0 0.0
  %v5758 = vand.u32 %v5329, 4294901760
  %5759 = vmatpush1.xpose.msra.mxu0 %v5758
  %5760 = vmatprep.subr.mxu0 0.0
  %5761 = vmatpush1.xpose.msra.mxu0 0.0
  %5762 = vmatprep.subr.mxu0 0.0
  %5763 = vmatpush1.xpose.msra.mxu0 0.0
  %5764 = vmatprep.subr.mxu0 0.0
  %5765 = vmatpush1.xpose.msra.mxu0 0.0
  %5766 = vmatprep.subr.mxu0 0.0
  %5767 = vmatpush1.xpose.msra.mxu0 0.0
  %5768 = vmatprep.subr.mxu0 0.0
  %5769 = vmatpush1.xpose.msra.mxu0 0.0
  %5770 = vmatprep.subr.mxu0 0.0
  %5771 = vmatpush1.xpose.msra.mxu0 0.0
  %5772 = vmatprep.subr.mxu0 0.0
  %5773 = vmatpush1.xpose.msra.mxu0 0.0
  %5774 = vmatprep.subr.mxu0 0.0
  %5775 = vmatpush1.xpose.msra.mxu0 0.0
  %5776 = vmatprep.subr.mxu0 0.0
  %5777 = vmatpush1.xpose.msra.mxu0 0.0
  %5778 = vmatprep.subr.mxu0 0.0
  %5779 = vmatpush1.xpose.msra.mxu0 0.0
  %5780 = vmatprep.subr.mxu0 0.0
  %5781 = vmatpush1.xpose.msra.mxu0 0.0
  %5782 = vmatprep.subr.mxu0 0.0
  %5783 = vmatpush1.xpose.msra.mxu0 0.0
  %5784 = vmatprep.subr.mxu0 0.0
  %5785 = vmatpush1.xpose.msra.mxu0 0.0
  %5786 = vmatprep.subr.mxu0 0.0
  %5787 = vmatpush1.xpose.msra.mxu0 0.0
  %5788 = vmatprep.subr.mxu0 0.0
  %5789 = vmatpush1.xpose.msra.mxu0 0.0
  %5790 = vmatprep.subr.mxu0 0.0
  %5791 = vmatpush1.xpose.msra.mxu0 0.0
  %5792 = vmatprep.subr.mxu0 0.0
  %5793 = vmatpush1.xpose.msra.mxu0 0.0
  %5794 = vmatprep.subr.mxu0 0.0
  %5795 = vmatpush1.xpose.msra.mxu0 0.0
  %5796 = vmatprep.subr.mxu0 0.0
  %5797 = vmatpush1.xpose.msra.mxu0 0.0
  %5798 = vmatprep.subr.mxu0 0.0
  %5799 = vmatpush1.xpose.msra.mxu0 0.0
  %5800 = vmatprep.subr.mxu0 0.0
  %5801 = vmatpush1.xpose.msra.mxu0 0.0
  %5802 = vmatprep.subr.mxu0 0.0
  %5803 = vmatpush1.xpose.msra.mxu0 0.0
  %5804 = vmatprep.subr.mxu0 0.0
  %5805 = vmatpush1.xpose.msra.mxu0 0.0
  %5806 = vmatprep.subr.mxu0 0.0
  %5807 = vmatpush1.xpose.msra.mxu0 0.0
  %5808 = vmatprep.subr.mxu0 0.0
  %5809 = vmatpush1.xpose.msra.mxu0 0.0
  %5810 = vmatprep.subr.mxu0 0.0
  %5811 = vmatpush1.xpose.msra.mxu0 0.0
  %5812 = vmatprep.subr.mxu0 0.0
  %5813 = vmatpush1.xpose.msra.mxu0 0.0
  %5814 = vmatprep.subr.mxu0 0.0
  %5815 = vmatpush1.xpose.msra.mxu0 0.0
  %5816 = vmatprep.subr.mxu0 0.0
  %5817 = vmatpush1.xpose.msra.mxu0 0.0
  %5818 = vmatprep.subr.mxu0 0.0
  %5819 = vmatpush1.xpose.msra.mxu0 0.0
  %5820 = vmatprep.mubr.f32.mxu0 0.0
  %v5821 = vand.u32 %v5323, 4294901760
  %5822 = vmatmul.mubr.f32.gmra.mrb[0].mxu0 %v5821
  %v5823 = vpop.f32.mrb[0].mxu0
  %v5824 = vadd.f32 %v5745, %v5823
  %v5825 = vpop.f32.mrb[0].mxu0
  %5826 = vmatprep.mubr.f32.mxu0 0.0
  %v5827 = vand.u32 %v5325, 4294901760
  %5828 = vmatmul.mubr.f32.gmra.mrb[0].mxu0 %v5827
  %v5829 = vpop.f32.mrb[0].mxu0
  %v5830 = vadd.f32 %v5751, %v5829
  %v5831 = vpop.f32.mrb[0].mxu0
  %5832 = vdwg.mxu0
  %v5833 = vsel %vm1580, %v5824, -inf
  %5834 = vmax.xlane.f32.xlu0 %v5833
  %v5835 = vpop.xlane.xlu0 %5834
  %v5836 = vsel %vm1584, %v5830, -inf
  %5837 = vmax.xlane.f32.xlu0 %v5836
  %v5838 = vpop.xlane.xlu0 %5837
  %v5839 = vsub.f32 %v5824, %v5835
  %v5840 = vsub.f32 %v5830, %v5838
  %v5841 = vmul.f32 %v5839, 1.442695
  %v5842 = vpow.pop %v5841
  %v5843 = vmul.f32 %v5840, 1.442695
  %v5844 = vpow.pop %v5843
  %v5845 = vsel %vm1580, %v5842, 0.0
  %5846 = vadd.xlane.f32.xlu0 %v5845
  %v5847 = vpop.xlane.xlu0 %5846
  %v5848 = vsel %vm1584, %v5844, 0.0
  %5849 = vadd.xlane.f32.xlu0 %v5848
  %v5850 = vpop.xlane.xlu0 %5849
  %v5851 = vrcp.pop %v5847
  %v5852 = vmul.f32 %v5842, %v5851
  %v5853 = vrcp.pop %v5850
  %v5854 = vmul.f32 %v5844, %v5853
  %v5856 = vrot.slane %v1054, 1
  %v5857 = vrot.slane %v1061, 1
  %v5858 = vsel %vm5315, %v5856, %v5857
  %v5861 = vsel %vm1580, %v5852, 0
  %v5864 = vsel %vm1580, %v5854, 0
  %v5866 = vsel %vm1610, %v5857, 0
  %5868 = vmatprep.subr.mxu0 0.0
  %v5869 = vand.u32 %v5858, 4294901760
  %5870 = vmatpush1.msra.mxu0 %v5869
  %5871 = vmatprep.subr.mxu0 0.0
  %v5872 = vand.u32 %v5866, 4294901760
  %5873 = vmatpush1.msra.mxu0 %v5872
  %5874 = vmatprep.subr.mxu0 0.0
  %5875 = vmatpush1.msra.mxu0 0.0
  %5876 = vmatprep.subr.mxu0 0.0
  %5877 = vmatpush1.msra.mxu0 0.0
  %5878 = vmatprep.subr.mxu0 0.0
  %5879 = vmatpush1.msra.mxu0 0.0
  %5880 = vmatprep.subr.mxu0 0.0
  %5881 = vmatpush1.msra.mxu0 0.0
  %5882 = vmatprep.subr.mxu0 0.0
  %5883 = vmatpush1.msra.mxu0 0.0
  %5884 = vmatprep.subr.mxu0 0.0
  %5885 = vmatpush1.msra.mxu0 0.0
  %5886 = vmatprep.subr.mxu0 0.0
  %5887 = vmatpush1.msra.mxu0 0.0
  %5888 = vmatprep.subr.mxu0 0.0
  %5889 = vmatpush1.msra.mxu0 0.0
  %5890 = vmatprep.subr.mxu0 0.0
  %5891 = vmatpush1.msra.mxu0 0.0
  %5892 = vmatprep.subr.mxu0 0.0
  %5893 = vmatpush1.msra.mxu0 0.0
  %5894 = vmatprep.subr.mxu0 0.0
  %5895 = vmatpush1.msra.mxu0 0.0
  %5896 = vmatprep.subr.mxu0 0.0
  %5897 = vmatpush1.msra.mxu0 0.0
  %5898 = vmatprep.subr.mxu0 0.0
  %5899 = vmatpush1.msra.mxu0 0.0
  %5900 = vmatprep.subr.mxu0 0.0
  %5901 = vmatpush1.msra.mxu0 0.0
  %5902 = vmatprep.subr.mxu0 0.0
  %5903 = vmatpush1.msra.mxu0 0.0
  %5904 = vmatprep.subr.mxu0 0.0
  %5905 = vmatpush1.msra.mxu0 0.0
  %5906 = vmatprep.subr.mxu0 0.0
  %5907 = vmatpush1.msra.mxu0 0.0
  %5908 = vmatprep.subr.mxu0 0.0
  %5909 = vmatpush1.msra.mxu0 0.0
  %5910 = vmatprep.subr.mxu0 0.0
  %5911 = vmatpush1.msra.mxu0 0.0
  %5912 = vmatprep.subr.mxu0 0.0
  %5913 = vmatpush1.msra.mxu0 0.0
  %5914 = vmatprep.subr.mxu0 0.0
  %5915 = vmatpush1.msra.mxu0 0.0
  %5916 = vmatprep.subr.mxu0 0.0
  %5917 = vmatpush1.msra.mxu0 0.0
  %5918 = vmatprep.subr.mxu0 0.0
  %5919 = vmatpush1.msra.mxu0 0.0
  %5920 = vmatprep.subr.mxu0 0.0
  %5921 = vmatpush1.msra.mxu0 0.0
  %5922 = vmatprep.subr.mxu0 0.0
  %5923 = vmatpush1.msra.mxu0 0.0
  %5924 = vmatprep.subr.mxu0 0.0
  %5925 = vmatpush1.msra.mxu0 0.0
  %5926 = vmatprep.subr.mxu0 0.0
  %5927 = vmatpush1.msra.mxu0 0.0
  %5928 = vmatprep.subr.mxu0 0.0
  %5929 = vmatpush1.msra.mxu0 0.0
  %5930 = vmatprep.subr.mxu0 0.0
  %5931 = vmatpush1.msra.mxu0 0.0
  %5932 = vmatprep.subr.mxu0 0.0
  %5933 = vmatpush1.msra.mxu0 0.0
  %5934 = vmatprep.mubr.f32.mxu0 0.0
  %v5935 = vand.u32 %v5861, 4294901760
  %v5936 = vsub.f32 %v5861, %v5935
  %v5937 = vand.u32 %v5936, 4294901760
  %v5938 = vsub.f32 %v5936, %v5937
  %v5939 = vand.u32 %v5938, 4294901760
  %5940 = vmatmul.mubr.f32.gmra.mrb[0].mxu0 %v5939
  %v5941 = vpop.f32.mrb[0].mxu0
  %v5942 = vadd.f32 0.0, %v5941
  %v5943 = vpop.f32.mrb[0].mxu0
  %5944 = vmatprep.mubr.f32.mxu0 0.0
  %v5945 = vand.u32 %v5864, 4294901760
  %v5946 = vsub.f32 %v5864, %v5945
  %v5947 = vand.u32 %v5946, 4294901760
  %v5948 = vsub.f32 %v5946, %v5947
  %v5949 = vand.u32 %v5948, 4294901760
  %5950 = vmatmul.mubr.f32.gmra.mrb[0].mxu0 %v5949
  %v5951 = vpop.f32.mrb[0].mxu0
  %v5952 = vadd.f32 0.0, %v5951
  %v5953 = vpop.f32.mrb[0].mxu0
  %5954 = vdwg.mxu0
  %5955 = vmatprep.subr.mxu0 0.0
  %v5956 = vand.u32 %v5858, 4294901760
  %v5957 = vsub.f32 %v5858, %v5956
  %v5958 = vand.u32 %v5957, 4294901760
  %v5959 = vsub.f32 %v5957, %v5958
  %v5960 = vand.u32 %v5959, 4294901760
  %5961 = vmatpush1.msra.mxu0 %v5960
  %5962 = vmatprep.subr.mxu0 0.0
  %v5963 = vand.u32 %v5866, 4294901760
  %v5964 = vsub.f32 %v5866, %v5963
  %v5965 = vand.u32 %v5964, 4294901760
  %v5966 = vsub.f32 %v5964, %v5965
  %v5967 = vand.u32 %v5966, 4294901760
  %5968 = vmatpush1.msra.mxu0 %v5967
  %5969 = vmatprep.subr.mxu0 0.0
  %5970 = vmatpush1.msra.mxu0 0.0
  %5971 = vmatprep.subr.mxu0 0.0
  %5972 = vmatpush1.msra.mxu0 0.0
  %5973 = vmatprep.subr.mxu0 0.0
  %5974 = vmatpush1.msra.mxu0 0.0
  %5975 = vmatprep.subr.mxu0 0.0
  %5976 = vmatpush1.msra.mxu0 0.0
  %5977 = vmatprep.subr.mxu0 0.0
  %5978 = vmatpush1.msra.mxu0 0.0
  %5979 = vmatprep.subr.mxu0 0.0
  %5980 = vmatpush1.msra.mxu0 0.0
  %5981 = vmatprep.subr.mxu0 0.0
  %5982 = vmatpush1.msra.mxu0 0.0
  %5983 = vmatprep.subr.mxu0 0.0
  %5984 = vmatpush1.msra.mxu0 0.0
  %5985 = vmatprep.subr.mxu0 0.0
  %5986 = vmatpush1.msra.mxu0 0.0
  %5987 = vmatprep.subr.mxu0 0.0
  %5988 = vmatpush1.msra.mxu0 0.0
  %5989 = vmatprep.subr.mxu0 0.0
  %5990 = vmatpush1.msra.mxu0 0.0
  %5991 = vmatprep.subr.mxu0 0.0
  %5992 = vmatpush1.msra.mxu0 0.0
  %5993 = vmatprep.subr.mxu0 0.0
  %5994 = vmatpush1.msra.mxu0 0.0
  %5995 = vmatprep.subr.mxu0 0.0
  %5996 = vmatpush1.msra.mxu0 0.0
  %5997 = vmatprep.subr.mxu0 0.0
  %5998 = vmatpush1.msra.mxu0 0.0
  %5999 = vmatprep.subr.mxu0 0.0
  %6000 = vmatpush1.msra.mxu0 0.0
  %6001 = vmatprep.subr.mxu0 0.0
  %6002 = vmatpush1.msra.mxu0 0.0
  %6003 = vmatprep.subr.mxu0 0.0
  %6004 = vmatpush1.msra.mxu0 0.0
  %6005 = vmatprep.subr.mxu0 0.0
  %6006 = vmatpush1.msra.mxu0 0.0
  %6007 = vmatprep.subr.mxu0 0.0
  %6008 = vmatpush1.msra.mxu0 0.0
  %6009 = vmatprep.subr.mxu0 0.0
  %6010 = vmatpush1.msra.mxu0 0.0
  %6011 = vmatprep.subr.mxu0 0.0
  %6012 = vmatpush1.msra.mxu0 0.0
  %6013 = vmatprep.subr.mxu0 0.0
  %6014 = vmatpush1.msra.mxu0 0.0
  %6015 = vmatprep.subr.mxu0 0.0
  %6016 = vmatpush1.msra.mxu0 0.0
  %6017 = vmatprep.subr.mxu0 0.0
  %6018 = vmatpush1.msra.mxu0 0.0
  %6019 = vmatprep.subr.mxu0 0.0
  %6020 = vmatpush1.msra.mxu0 0.0
  %6021 = vmatprep.subr.mxu0 0.0
  %6022 = vmatpush1.msra.mxu0 0.0
  %6023 = vmatprep.subr.mxu0 0.0
  %6024 = vmatpush1.msra.mxu0 0.0
  %6025 = vmatprep.subr.mxu0 0.0
  %6026 = vmatpush1.msra.mxu0 0.0
  %6027 = vmatprep.subr.mxu0 0.0
  %6028 = vmatpush1.msra.mxu0 0.0
  %6029 = vmatprep.mubr.f32.mxu0 0.0
  %v6030 = vand.u32 %v5861, 4294901760
  %6031 = vmatmul.mubr.f32.gmra.mrb[0].mxu0 %v6030
  %v6032 = vpop.f32.mrb[0].mxu0
  %v6033 = vadd.f32 %v5942, %v6032
  %v6034 = vpop.f32.mrb[0].mxu0
  %6035 = vmatprep.mubr.f32.mxu0 0.0
  %v6036 = vand.u32 %v5864, 4294901760
  %6037 = vmatmul.mubr.f32.gmra.mrb[0].mxu0 %v6036
  %v6038 = vpop.f32.mrb[0].mxu0
  %v6039 = vadd.f32 %v5952, %v6038
  %v6040 = vpop.f32.mrb[0].mxu0
  %6041 = vdwg.mxu0
  %6042 = vmatprep.subr.mxu0 0.0
  %v6043 = vand.u32 %v5858, 4294901760
  %v6044 = vsub.f32 %v5858, %v6043
  %6045 = vmatpush1.msra.mxu0 %v6044
  %6046 = vmatprep.subr.mxu0 0.0
  %v6047 = vand.u32 %v5866, 4294901760
  %v6048 = vsub.f32 %v5866, %v6047
  %6049 = vmatpush1.msra.mxu0 %v6048
  %6050 = vmatprep.subr.mxu0 0.0
  %6051 = vmatpush1.msra.mxu0 0.0
  %6052 = vmatprep.subr.mxu0 0.0
  %6053 = vmatpush1.msra.mxu0 0.0
  %6054 = vmatprep.subr.mxu0 0.0
  %6055 = vmatpush1.msra.mxu0 0.0
  %6056 = vmatprep.subr.mxu0 0.0
  %6057 = vmatpush1.msra.mxu0 0.0
  %6058 = vmatprep.subr.mxu0 0.0
  %6059 = vmatpush1.msra.mxu0 0.0
  %6060 = vmatprep.subr.mxu0 0.0
  %6061 = vmatpush1.msra.mxu0 0.0
  %6062 = vmatprep.subr.mxu0 0.0
  %6063 = vmatpush1.msra.mxu0 0.0
  %6064 = vmatprep.subr.mxu0 0.0
  %6065 = vmatpush1.msra.mxu0 0.0
  %6066 = vmatprep.subr.mxu0 0.0
  %6067 = vmatpush1.msra.mxu0 0.0
  %6068 = vmatprep.subr.mxu0 0.0
  %6069 = vmatpush1.msra.mxu0 0.0
  %6070 = vmatprep.subr.mxu0 0.0
  %6071 = vmatpush1.msra.mxu0 0.0
  %6072 = vmatprep.subr.mxu0 0.0
  %6073 = vmatpush1.msra.mxu0 0.0
  %6074 = vmatprep.subr.mxu0 0.0
  %6075 = vmatpush1.msra.mxu0 0.0
  %6076 = vmatprep.subr.mxu0 0.0
  %6077 = vmatpush1.msra.mxu0 0.0
  %6078 = vmatprep.subr.mxu0 0.0
  %6079 = vmatpush1.msra.mxu0 0.0
  %6080 = vmatprep.subr.mxu0 0.0
  %6081 = vmatpush1.msra.mxu0 0.0
  %6082 = vmatprep.subr.mxu0 0.0
  %6083 = vmatpush1.msra.mxu0 0.0
  %6084 = vmatprep.subr.mxu0 0.0
  %6085 = vmatpush1.msra.mxu0 0.0
  %6086 = vmatprep.subr.mxu0 0.0
  %6087 = vmatpush1.msra.mxu0 0.0
  %6088 = vmatprep.subr.mxu0 0.0
  %6089 = vmatpush1.msra.mxu0 0.0
  %6090 = vmatprep.subr.mxu0 0.0
  %6091 = vmatpush1.msra.mxu0 0.0
  %6092 = vmatprep.subr.mxu0 0.0
  %6093 = vmatpush1.msra.mxu0 0.0
  %6094 = vmatprep.subr.mxu0 0.0
  %6095 = vmatpush1.msra.mxu0 0.0
  %6096 = vmatprep.subr.mxu0 0.0
  %6097 = vmatpush1.msra.mxu0 0.0
  %6098 = vmatprep.subr.mxu0 0.0
  %6099 = vmatpush1.msra.mxu0 0.0
  %6100 = vmatprep.subr.mxu0 0.0
  %6101 = vmatpush1.msra.mxu0 0.0
  %6102 = vmatprep.subr.mxu0 0.0
  %6103 = vmatpush1.msra.mxu0 0.0
  %6104 = vmatprep.subr.mxu0 0.0
  %6105 = vmatpush1.msra.mxu0 0.0
  %6106 = vmatprep.subr.mxu0 0.0
  %6107 = vmatpush1.msra.mxu0 0.0
  %6108 = vmatprep.subr.mxu0 0.0
  %6109 = vmatpush1.msra.mxu0 0.0
  %6110 = vmatprep.mubr.f32.mxu0 0.0
  %v6111 = vand.u32 %v5861, 4294901760
  %v6112 = vsub.f32 %v5861, %v6111
  %6113 = vmatmul.mubr.f32.gmra.mrb[0].mxu0 %v6112
  %v6114 = vpop.f32.mrb[0].mxu0
  %v6115 = vadd.f32 %v6033, %v6114
  %v6116 = vpop.f32.mrb[0].mxu0
  %6117 = vmatprep.mubr.f32.mxu0 0.0
  %v6118 = vand.u32 %v5864, 4294901760
  %v6119 = vsub.f32 %v5864, %v6118
  %6120 = vmatmul.mubr.f32.gmra.mrb[0].mxu0 %v6119
  %v6121 = vpop.f32.mrb[0].mxu0
  %v6122 = vadd.f32 %v6039, %v6121
  %v6123 = vpop.f32.mrb[0].mxu0
  %6124 = vdwg.mxu0
  %6125 = vmatprep.subr.mxu0 0.0
  %v6126 = vand.u32 %v5858, 4294901760
  %6127 = vmatpush1.msra.mxu0 %v6126
  %6128 = vmatprep.subr.mxu0 0.0
  %v6129 = vand.u32 %v5866, 4294901760
  %6130 = vmatpush1.msra.mxu0 %v6129
  %6131 = vmatprep.subr.mxu0 0.0
  %6132 = vmatpush1.msra.mxu0 0.0
  %6133 = vmatprep.subr.mxu0 0.0
  %6134 = vmatpush1.msra.mxu0 0.0
  %6135 = vmatprep.subr.mxu0 0.0
  %6136 = vmatpush1.msra.mxu0 0.0
  %6137 = vmatprep.subr.mxu0 0.0
  %6138 = vmatpush1.msra.mxu0 0.0
  %6139 = vmatprep.subr.mxu0 0.0
  %6140 = vmatpush1.msra.mxu0 0.0
  %6141 = vmatprep.subr.mxu0 0.0
  %6142 = vmatpush1.msra.mxu0 0.0
  %6143 = vmatprep.subr.mxu0 0.0
  %6144 = vmatpush1.msra.mxu0 0.0
  %6145 = vmatprep.subr.mxu0 0.0
  %6146 = vmatpush1.msra.mxu0 0.0
  %6147 = vmatprep.subr.mxu0 0.0
  %6148 = vmatpush1.msra.mxu0 0.0
  %6149 = vmatprep.subr.mxu0 0.0
  %6150 = vmatpush1.msra.mxu0 0.0
  %6151 = vmatprep.subr.mxu0 0.0
  %6152 = vmatpush1.msra.mxu0 0.0
  %6153 = vmatprep.subr.mxu0 0.0
  %6154 = vmatpush1.msra.mxu0 0.0
  %6155 = vmatprep.subr.mxu0 0.0
  %6156 = vmatpush1.msra.mxu0 0.0
  %6157 = vmatprep.subr.mxu0 0.0
  %6158 = vmatpush1.msra.mxu0 0.0
  %6159 = vmatprep.subr.mxu0 0.0
  %6160 = vmatpush1.msra.mxu0 0.0
  %6161 = vmatprep.subr.mxu0 0.0
  %6162 = vmatpush1.msra.mxu0 0.0
  %6163 = vmatprep.subr.mxu0 0.0
  %6164 = vmatpush1.msra.mxu0 0.0
  %6165 = vmatprep.subr.mxu0 0.0
  %6166 = vmatpush1.msra.mxu0 0.0
  %6167 = vmatprep.subr.mxu0 0.0
  %6168 = vmatpush1.msra.mxu0 0.0
  %6169 = vmatprep.subr.mxu0 0.0
  %6170 = vmatpush1.msra.mxu0 0.0
  %6171 = vmatprep.subr.mxu0 0.0
  %6172 = vmatpush1.msra.mxu0 0.0
  %6173 = vmatprep.subr.mxu0 0.0
  %6174 = vmatpush1.msra.mxu0 0.0
  %6175 = vmatprep.subr.mxu0 0.0
  %6176 = vmatpush1.msra.mxu0 0.0
  %6177 = vmatprep.subr.mxu0 0.0
  %6178 = vmatpush1.msra.mxu0 0.0
  %6179 = vmatprep.subr.mxu0 0.0
  %6180 = vmatpush1.msra.mxu0 0.0
  %6181 = vmatprep.subr.mxu0 0.0
  %6182 = vmatpush1.msra.mxu0 0.0
  %6183 = vmatprep.subr.mxu0 0.0
  %6184 = vmatpush1.msra.mxu0 0.0
  %6185 = vmatprep.subr.mxu0 0.0
  %6186 = vmatpush1.msra.mxu0 0.0
  %6187 = vmatprep.subr.mxu0 0.0
  %6188 = vmatpush1.msra.mxu0 0.0
  %6189 = vmatprep.subr.mxu0 0.0
  %6190 = vmatpush1.msra.mxu0 0.0
  %6191 = vmatprep.mubr.f32.mxu0 0.0
  %v6192 = vand.u32 %v5861, 4294901760
  %v6193 = vsub.f32 %v5861, %v6192
  %v6194 = vand.u32 %v6193, 4294901760
  %6195 = vmatmul.mubr.f32.gmra.mrb[0].mxu0 %v6194
  %v6196 = vpop.f32.mrb[0].mxu0
  %v6197 = vadd.f32 %v6115, %v6196
  %v6198 = vpop.f32.mrb[0].mxu0
  %6199 = vmatprep.mubr.f32.mxu0 0.0
  %v6200 = vand.u32 %v5864, 4294901760
  %v6201 = vsub.f32 %v5864, %v6200
  %v6202 = vand.u32 %v6201, 4294901760
  %6203 = vmatmul.mubr.f32.gmra.mrb[0].mxu0 %v6202
  %v6204 = vpop.f32.mrb[0].mxu0
  %v6205 = vadd.f32 %v6122, %v6204
  %v6206 = vpop.f32.mrb[0].mxu0
  %6207 = vdwg.mxu0
  %6208 = vmatprep.subr.mxu0 0.0
  %v6209 = vand.u32 %v5858, 4294901760
  %v6210 = vsub.f32 %v5858, %v6209
  %v6211 = vand.u32 %v6210, 4294901760
  %6212 = vmatpush1.msra.mxu0 %v6211
  %6213 = vmatprep.subr.mxu0 0.0
  %v6214 = vand.u32 %v5866, 4294901760
  %v6215 = vsub.f32 %v5866, %v6214
  %v6216 = vand.u32 %v6215, 4294901760
  %6217 = vmatpush1.msra.mxu0 %v6216
  %6218 = vmatprep.subr.mxu0 0.0
  %6219 = vmatpush1.msra.mxu0 0.0
  %6220 = vmatprep.subr.mxu0 0.0
  %6221 = vmatpush1.msra.mxu0 0.0
  %6222 = vmatprep.subr.mxu0 0.0
  %6223 = vmatpush1.msra.mxu0 0.0
  %6224 = vmatprep.subr.mxu0 0.0
  %6225 = vmatpush1.msra.mxu0 0.0
  %6226 = vmatprep.subr.mxu0 0.0
  %6227 = vmatpush1.msra.mxu0 0.0
  %6228 = vmatprep.subr.mxu0 0.0
  %6229 = vmatpush1.msra.mxu0 0.0
  %6230 = vmatprep.subr.mxu0 0.0
  %6231 = vmatpush1.msra.mxu0 0.0
  %6232 = vmatprep.subr.mxu0 0.0
  %6233 = vmatpush1.msra.mxu0 0.0
  %6234 = vmatprep.subr.mxu0 0.0
  %6235 = vmatpush1.msra.mxu0 0.0
  %6236 = vmatprep.subr.mxu0 0.0
  %6237 = vmatpush1.msra.mxu0 0.0
  %6238 = vmatprep.subr.mxu0 0.0
  %6239 = vmatpush1.msra.mxu0 0.0
  %6240 = vmatprep.subr.mxu0 0.0
  %6241 = vmatpush1.msra.mxu0 0.0
  %6242 = vmatprep.subr.mxu0 0.0
  %6243 = vmatpush1.msra.mxu0 0.0
  %6244 = vmatprep.subr.mxu0 0.0
  %6245 = vmatpush1.msra.mxu0 0.0
  %6246 = vmatprep.subr.mxu0 0.0
  %6247 = vmatpush1.msra.mxu0 0.0
  %6248 = vmatprep.subr.mxu0 0.0
  %6249 = vmatpush1.msra.mxu0 0.0
  %6250 = vmatprep.subr.mxu0 0.0
  %6251 = vmatpush1.msra.mxu0 0.0
  %6252 = vmatprep.subr.mxu0 0.0
  %6253 = vmatpush1.msra.mxu0 0.0
  %6254 = vmatprep.subr.mxu0 0.0
  %6255 = vmatpush1.msra.mxu0 0.0
  %6256 = vmatprep.subr.mxu0 0.0
  %6257 = vmatpush1.msra.mxu0 0.0
  %6258 = vmatprep.subr.mxu0 0.0
  %6259 = vmatpush1.msra.mxu0 0.0
  %6260 = vmatprep.subr.mxu0 0.0
  %6261 = vmatpush1.msra.mxu0 0.0
  %6262 = vmatprep.subr.mxu0 0.0
  %6263 = vmatpush1.msra.mxu0 0.0
  %6264 = vmatprep.subr.mxu0 0.0
  %6265 = vmatpush1.msra.mxu0 0.0
  %6266 = vmatprep.subr.mxu0 0.0
  %6267 = vmatpush1.msra.mxu0 0.0
  %6268 = vmatprep.subr.mxu0 0.0
  %6269 = vmatpush1.msra.mxu0 0.0
  %6270 = vmatprep.subr.mxu0 0.0
  %6271 = vmatpush1.msra.mxu0 0.0
  %6272 = vmatprep.subr.mxu0 0.0
  %6273 = vmatpush1.msra.mxu0 0.0
  %6274 = vmatprep.subr.mxu0 0.0
  %6275 = vmatpush1.msra.mxu0 0.0
  %6276 = vmatprep.subr.mxu0 0.0
  %6277 = vmatpush1.msra.mxu0 0.0
  %6278 = vmatprep.mubr.f32.mxu0 0.0
  %v6279 = vand.u32 %v5861, 4294901760
  %6280 = vmatmul.mubr.f32.gmra.mrb[0].mxu0 %v6279
  %v6281 = vpop.f32.mrb[0].mxu0
  %v6282 = vadd.f32 %v6197, %v6281
  %v6283 = vpop.f32.mrb[0].mxu0
  %6284 = vmatprep.mubr.f32.mxu0 0.0
  %v6285 = vand.u32 %v5864, 4294901760
  %6286 = vmatmul.mubr.f32.gmra.mrb[0].mxu0 %v6285
  %v6287 = vpop.f32.mrb[0].mxu0
  %v6288 = vadd.f32 %v6205, %v6287
  %v6289 = vpop.f32.mrb[0].mxu0
  %6290 = vdwg.mxu0
  %6291 = vmatprep.subr.mxu0 0.0
  %v6292 = vand.u32 %v5858, 4294901760
  %6293 = vmatpush1.msra.mxu0 %v6292
  %6294 = vmatprep.subr.mxu0 0.0
  %v6295 = vand.u32 %v5866, 4294901760
  %6296 = vmatpush1.msra.mxu0 %v6295
  %6297 = vmatprep.subr.mxu0 0.0
  %6298 = vmatpush1.msra.mxu0 0.0
  %6299 = vmatprep.subr.mxu0 0.0
  %6300 = vmatpush1.msra.mxu0 0.0
  %6301 = vmatprep.subr.mxu0 0.0
  %6302 = vmatpush1.msra.mxu0 0.0
  %6303 = vmatprep.subr.mxu0 0.0
  %6304 = vmatpush1.msra.mxu0 0.0
  %6305 = vmatprep.subr.mxu0 0.0
  %6306 = vmatpush1.msra.mxu0 0.0
  %6307 = vmatprep.subr.mxu0 0.0
  %6308 = vmatpush1.msra.mxu0 0.0
  %6309 = vmatprep.subr.mxu0 0.0
  %6310 = vmatpush1.msra.mxu0 0.0
  %6311 = vmatprep.subr.mxu0 0.0
  %6312 = vmatpush1.msra.mxu0 0.0
  %6313 = vmatprep.subr.mxu0 0.0
  %6314 = vmatpush1.msra.mxu0 0.0
  %6315 = vmatprep.subr.mxu0 0.0
  %6316 = vmatpush1.msra.mxu0 0.0
  %6317 = vmatprep.subr.mxu0 0.0
  %6318 = vmatpush1.msra.mxu0 0.0
  %6319 = vmatprep.subr.mxu0 0.0
  %6320 = vmatpush1.msra.mxu0 0.0
  %6321 = vmatprep.subr.mxu0 0.0
  %6322 = vmatpush1.msra.mxu0 0.0
  %6323 = vmatprep.subr.mxu0 0.0
  %6324 = vmatpush1.msra.mxu0 0.0
  %6325 = vmatprep.subr.mxu0 0.0
  %6326 = vmatpush1.msra.mxu0 0.0
  %6327 = vmatprep.subr.mxu0 0.0
  %6328 = vmatpush1.msra.mxu0 0.0
  %6329 = vmatprep.subr.mxu0 0.0
  %6330 = vmatpush1.msra.mxu0 0.0
  %6331 = vmatprep.subr.mxu0 0.0
  %6332 = vmatpush1.msra.mxu0 0.0
  %6333 = vmatprep.subr.mxu0 0.0
  %6334 = vmatpush1.msra.mxu0 0.0
  %6335 = vmatprep.subr.mxu0 0.0
  %6336 = vmatpush1.msra.mxu0 0.0
  %6337 = vmatprep.subr.mxu0 0.0
  %6338 = vmatpush1.msra.mxu0 0.0
  %6339 = vmatprep.subr.mxu0 0.0
  %6340 = vmatpush1.msra.mxu0 0.0
  %6341 = vmatprep.subr.mxu0 0.0
  %6342 = vmatpush1.msra.mxu0 0.0
  %6343 = vmatprep.subr.mxu0 0.0
  %6344 = vmatpush1.msra.mxu0 0.0
  %6345 = vmatprep.subr.mxu0 0.0
  %6346 = vmatpush1.msra.mxu0 0.0
  %6347 = vmatprep.subr.mxu0 0.0
  %6348 = vmatpush1.msra.mxu0 0.0
  %6349 = vmatprep.subr.mxu0 0.0
  %6350 = vmatpush1.msra.mxu0 0.0
  %6351 = vmatprep.subr.mxu0 0.0
  %6352 = vmatpush1.msra.mxu0 0.0
  %6353 = vmatprep.subr.mxu0 0.0
  %6354 = vmatpush1.msra.mxu0 0.0
  %6355 = vmatprep.subr.mxu0 0.0
  %6356 = vmatpush1.msra.mxu0 0.0
  %6357 = vmatprep.mubr.f32.mxu0 0.0
  %v6358 = vand.u32 %v5861, 4294901760
  %6359 = vmatmul.mubr.f32.gmra.mrb[0].mxu0 %v6358
  %v6360 = vpop.f32.mrb[0].mxu0
  %v6361 = vadd.f32 %v6282, %v6360
  %v6362 = vpop.f32.mrb[0].mxu0
  %6363 = vmatprep.mubr.f32.mxu0 0.0
  %v6364 = vand.u32 %v5864, 4294901760
  %6365 = vmatmul.mubr.f32.gmra.mrb[0].mxu0 %v6364
  %v6366 = vpop.f32.mrb[0].mxu0
  %v6367 = vadd.f32 %v6288, %v6366
  %v6368 = vpop.f32.mrb[0].mxu0
  %6369 = vdwg.mxu0
  %6370 = vrot.lane.b32.xlu0 %v5318, 112
  %v6371 = vpop.permute.xlu0 %6370
  %6372 = vrot.lane.b32.xlu0 %v5317, 112
  %v6373 = vpop.permute.xlu0 %6372
  %6374 = vrot.lane.b32.xlu0 %v5318, 48
  %v6375 = vpop.permute.xlu0 %6374
  %6376 = vrot.lane.b32.xlu0 %v5317, 48
  %v6377 = vpop.permute.xlu0 %6376
  %v6378 = vsel %vm1069, %v6371, 0
  %v6380 = vsel %vm1069, %v6373, 0
  %v6382 = vsel %vm1069, %v6375, 0
  %v6384 = vsel %vm1069, %v6377, 0
  %6386 = vmatprep.subr.mxu0 0.0
  %v6387 = vand.u32 %v6382, 4294901760
  %6388 = vmatpush1.xpose.msra.mxu0 %v6387
  %6389 = vmatprep.subr.mxu0 0.0
  %v6390 = vand.u32 %v6384, 4294901760
  %6391 = vmatpush1.xpose.msra.mxu0 %v6390
  %6392 = vmatprep.subr.mxu0 0.0
  %6393 = vmatpush1.xpose.msra.mxu0 0.0
  %6394 = vmatprep.subr.mxu0 0.0
  %6395 = vmatpush1.xpose.msra.mxu0 0.0
  %6396 = vmatprep.subr.mxu0 0.0
  %6397 = vmatpush1.xpose.msra.mxu0 0.0
  %6398 = vmatprep.subr.mxu0 0.0
  %6399 = vmatpush1.xpose.msra.mxu0 0.0
  %6400 = vmatprep.subr.mxu0 0.0
  %6401 = vmatpush1.xpose.msra.mxu0 0.0
  %6402 = vmatprep.subr.mxu0 0.0
  %6403 = vmatpush1.xpose.msra.mxu0 0.0
  %6404 = vmatprep.subr.mxu0 0.0
  %6405 = vmatpush1.xpose.msra.mxu0 0.0
  %6406 = vmatprep.subr.mxu0 0.0
  %6407 = vmatpush1.xpose.msra.mxu0 0.0
  %6408 = vmatprep.subr.mxu0 0.0
  %6409 = vmatpush1.xpose.msra.mxu0 0.0
  %6410 = vmatprep.subr.mxu0 0.0
  %6411 = vmatpush1.xpose.msra.mxu0 0.0
  %6412 = vmatprep.subr.mxu0 0.0
  %6413 = vmatpush1.xpose.msra.mxu0 0.0
  %6414 = vmatprep.subr.mxu0 0.0
  %6415 = vmatpush1.xpose.msra.mxu0 0.0
  %6416 = vmatprep.subr.mxu0 0.0
  %6417 = vmatpush1.xpose.msra.mxu0 0.0
  %6418 = vmatprep.subr.mxu0 0.0
  %6419 = vmatpush1.xpose.msra.mxu0 0.0
  %6420 = vmatprep.subr.mxu0 0.0
  %6421 = vmatpush1.xpose.msra.mxu0 0.0
  %6422 = vmatprep.subr.mxu0 0.0
  %6423 = vmatpush1.xpose.msra.mxu0 0.0
  %6424 = vmatprep.subr.mxu0 0.0
  %6425 = vmatpush1.xpose.msra.mxu0 0.0
  %6426 = vmatprep.subr.mxu0 0.0
  %6427 = vmatpush1.xpose.msra.mxu0 0.0
  %6428 = vmatprep.subr.mxu0 0.0
  %6429 = vmatpush1.xpose.msra.mxu0 0.0
  %6430 = vmatprep.subr.mxu0 0.0
  %6431 = vmatpush1.xpose.msra.mxu0 0.0
  %6432 = vmatprep.subr.mxu0 0.0
  %6433 = vmatpush1.xpose.msra.mxu0 0.0
  %6434 = vmatprep.subr.mxu0 0.0
  %6435 = vmatpush1.xpose.msra.mxu0 0.0
  %6436 = vmatprep.subr.mxu0 0.0
  %6437 = vmatpush1.xpose.msra.mxu0 0.0
  %6438 = vmatprep.subr.mxu0 0.0
  %6439 = vmatpush1.xpose.msra.mxu0 0.0
  %6440 = vmatprep.subr.mxu0 0.0
  %6441 = vmatpush1.xpose.msra.mxu0 0.0
  %6442 = vmatprep.subr.mxu0 0.0
  %6443 = vmatpush1.xpose.msra.mxu0 0.0
  %6444 = vmatprep.subr.mxu0 0.0
  %6445 = vmatpush1.xpose.msra.mxu0 0.0
  %6446 = vmatprep.subr.mxu0 0.0
  %6447 = vmatpush1.xpose.msra.mxu0 0.0
  %6448 = vmatprep.subr.mxu0 0.0
  %6449 = vmatpush1.xpose.msra.mxu0 0.0
  %6450 = vmatprep.subr.mxu0 0.0
  %6451 = vmatpush1.xpose.msra.mxu0 0.0
  %6452 = vmatprep.mubr.f32.mxu0 0.0
  %v6453 = vand.u32 %v6378, 4294901760
  %v6454 = vsub.f32 %v6378, %v6453
  %v6455 = vand.u32 %v6454, 4294901760
  %v6456 = vsub.f32 %v6454, %v6455
  %v6457 = vand.u32 %v6456, 4294901760
  %6458 = vmatmul.mubr.f32.gmra.mrb[0].mxu0 %v6457
  %v6459 = vpop.f32.mrb[0].mxu0
  %v6460 = vadd.f32 0.0, %v6459
  %v6461 = vpop.f32.mrb[0].mxu0
  %6462 = vmatprep.mubr.f32.mxu0 0.0
  %v6463 = vand.u32 %v6380, 4294901760
  %v6464 = vsub.f32 %v6380, %v6463
  %v6465 = vand.u32 %v6464, 4294901760
  %v6466 = vsub.f32 %v6464, %v6465
  %v6467 = vand.u32 %v6466, 4294901760
  %6468 = vmatmul.mubr.f32.gmra.mrb[0].mxu0 %v6467
  %v6469 = vpop.f32.mrb[0].mxu0
  %v6470 = vadd.f32 0.0, %v6469
  %v6471 = vpop.f32.mrb[0].mxu0
  %6472 = vdwg.mxu0
  %6473 = vmatprep.subr.mxu0 0.0
  %v6474 = vand.u32 %v6382, 4294901760
  %v6475 = vsub.f32 %v6382, %v6474
  %v6476 = vand.u32 %v6475, 4294901760
  %v6477 = vsub.f32 %v6475, %v6476
  %v6478 = vand.u32 %v6477, 4294901760
  %6479 = vmatpush1.xpose.msra.mxu0 %v6478
  %6480 = vmatprep.subr.mxu0 0.0
  %v6481 = vand.u32 %v6384, 4294901760
  %v6482 = vsub.f32 %v6384, %v6481
  %v6483 = vand.u32 %v6482, 4294901760
  %v6484 = vsub.f32 %v6482, %v6483
  %v6485 = vand.u32 %v6484, 4294901760
  %6486 = vmatpush1.xpose.msra.mxu0 %v6485
  %6487 = vmatprep.subr.mxu0 0.0
  %6488 = vmatpush1.xpose.msra.mxu0 0.0
  %6489 = vmatprep.subr.mxu0 0.0
  %6490 = vmatpush1.xpose.msra.mxu0 0.0
  %6491 = vmatprep.subr.mxu0 0.0
  %6492 = vmatpush1.xpose.msra.mxu0 0.0
  %6493 = vmatprep.subr.mxu0 0.0
  %6494 = vmatpush1.xpose.msra.mxu0 0.0
  %6495 = vmatprep.subr.mxu0 0.0
  %6496 = vmatpush1.xpose.msra.mxu0 0.0
  %6497 = vmatprep.subr.mxu0 0.0
  %6498 = vmatpush1.xpose.msra.mxu0 0.0
  %6499 = vmatprep.subr.mxu0 0.0
  %6500 = vmatpush1.xpose.msra.mxu0 0.0
  %6501 = vmatprep.subr.mxu0 0.0
  %6502 = vmatpush1.xpose.msra.mxu0 0.0
  %6503 = vmatprep.subr.mxu0 0.0
  %6504 = vmatpush1.xpose.msra.mxu0 0.0
  %6505 = vmatprep.subr.mxu0 0.0
  %6506 = vmatpush1.xpose.msra.mxu0 0.0
  %6507 = vmatprep.subr.mxu0 0.0
  %6508 = vmatpush1.xpose.msra.mxu0 0.0
  %6509 = vmatprep.subr.mxu0 0.0
  %6510 = vmatpush1.xpose.msra.mxu0 0.0
  %6511 = vmatprep.subr.mxu0 0.0
  %6512 = vmatpush1.xpose.msra.mxu0 0.0
  %6513 = vmatprep.subr.mxu0 0.0
  %6514 = vmatpush1.xpose.msra.mxu0 0.0
  %6515 = vmatprep.subr.mxu0 0.0
  %6516 = vmatpush1.xpose.msra.mxu0 0.0
  %6517 = vmatprep.subr.mxu0 0.0
  %6518 = vmatpush1.xpose.msra.mxu0 0.0
  %6519 = vmatprep.subr.mxu0 0.0
  %6520 = vmatpush1.xpose.msra.mxu0 0.0
  %6521 = vmatprep.subr.mxu0 0.0
  %6522 = vmatpush1.xpose.msra.mxu0 0.0
  %6523 = vmatprep.subr.mxu0 0.0
  %6524 = vmatpush1.xpose.msra.mxu0 0.0
  %6525 = vmatprep.subr.mxu0 0.0
  %6526 = vmatpush1.xpose.msra.mxu0 0.0
  %6527 = vmatprep.subr.mxu0 0.0
  %6528 = vmatpush1.xpose.msra.mxu0 0.0
  %6529 = vmatprep.subr.mxu0 0.0
  %6530 = vmatpush1.xpose.msra.mxu0 0.0
  %6531 = vmatprep.subr.mxu0 0.0
  %6532 = vmatpush1.xpose.msra.mxu0 0.0
  %6533 = vmatprep.subr.mxu0 0.0
  %6534 = vmatpush1.xpose.msra.mxu0 0.0
  %6535 = vmatprep.subr.mxu0 0.0
  %6536 = vmatpush1.xpose.msra.mxu0 0.0
  %6537 = vmatprep.subr.mxu0 0.0
  %6538 = vmatpush1.xpose.msra.mxu0 0.0
  %6539 = vmatprep.subr.mxu0 0.0
  %6540 = vmatpush1.xpose.msra.mxu0 0.0
  %6541 = vmatprep.subr.mxu0 0.0
  %6542 = vmatpush1.xpose.msra.mxu0 0.0
  %6543 = vmatprep.subr.mxu0 0.0
  %6544 = vmatpush1.xpose.msra.mxu0 0.0
  %6545 = vmatprep.subr.mxu0 0.0
  %6546 = vmatpush1.xpose.msra.mxu0 0.0
  %6547 = vmatprep.mubr.f32.mxu0 0.0
  %v6548 = vand.u32 %v6378, 4294901760
  %6549 = vmatmul.mubr.f32.gmra.mrb[0].mxu0 %v6548
  %v6550 = vpop.f32.mrb[0].mxu0
  %v6551 = vadd.f32 %v6460, %v6550
  %v6552 = vpop.f32.mrb[0].mxu0
  %6553 = vmatprep.mubr.f32.mxu0 0.0
  %v6554 = vand.u32 %v6380, 4294901760
  %6555 = vmatmul.mubr.f32.gmra.mrb[0].mxu0 %v6554
  %v6556 = vpop.f32.mrb[0].mxu0
  %v6557 = vadd.f32 %v6470, %v6556
  %v6558 = vpop.f32.mrb[0].mxu0
  %6559 = vdwg.mxu0
  %6560 = vmatprep.subr.mxu0 0.0
  %v6561 = vand.u32 %v6382, 4294901760
  %v6562 = vsub.f32 %v6382, %v6561
  %6563 = vmatpush1.xpose.msra.mxu0 %v6562
  %6564 = vmatprep.subr.mxu0 0.0
  %v6565 = vand.u32 %v6384, 4294901760
  %v6566 = vsub.f32 %v6384, %v6565
  %6567 = vmatpush1.xpose.msra.mxu0 %v6566
  %6568 = vmatprep.subr.mxu0 0.0
  %6569 = vmatpush1.xpose.msra.mxu0 0.0
  %6570 = vmatprep.subr.mxu0 0.0
  %6571 = vmatpush1.xpose.msra.mxu0 0.0
  %6572 = vmatprep.subr.mxu0 0.0
  %6573 = vmatpush1.xpose.msra.mxu0 0.0
  %6574 = vmatprep.subr.mxu0 0.0
  %6575 = vmatpush1.xpose.msra.mxu0 0.0
  %6576 = vmatprep.subr.mxu0 0.0
  %6577 = vmatpush1.xpose.msra.mxu0 0.0
  %6578 = vmatprep.subr.mxu0 0.0
  %6579 = vmatpush1.xpose.msra.mxu0 0.0
  %6580 = vmatprep.subr.mxu0 0.0
  %6581 = vmatpush1.xpose.msra.mxu0 0.0
  %6582 = vmatprep.subr.mxu0 0.0
  %6583 = vmatpush1.xpose.msra.mxu0 0.0
  %6584 = vmatprep.subr.mxu0 0.0
  %6585 = vmatpush1.xpose.msra.mxu0 0.0
  %6586 = vmatprep.subr.mxu0 0.0
  %6587 = vmatpush1.xpose.msra.mxu0 0.0
  %6588 = vmatprep.subr.mxu0 0.0
  %6589 = vmatpush1.xpose.msra.mxu0 0.0
  %6590 = vmatprep.subr.mxu0 0.0
  %6591 = vmatpush1.xpose.msra.mxu0 0.0
  %6592 = vmatprep.subr.mxu0 0.0
  %6593 = vmatpush1.xpose.msra.mxu0 0.0
  %6594 = vmatprep.subr.mxu0 0.0
  %6595 = vmatpush1.xpose.msra.mxu0 0.0
  %6596 = vmatprep.subr.mxu0 0.0
  %6597 = vmatpush1.xpose.msra.mxu0 0.0
  %6598 = vmatprep.subr.mxu0 0.0
  %6599 = vmatpush1.xpose.msra.mxu0 0.0
  %6600 = vmatprep.subr.mxu0 0.0
  %6601 = vmatpush1.xpose.msra.mxu0 0.0
  %6602 = vmatprep.subr.mxu0 0.0
  %6603 = vmatpush1.xpose.msra.mxu0 0.0
  %6604 = vmatprep.subr.mxu0 0.0
  %6605 = vmatpush1.xpose.msra.mxu0 0.0
  %6606 = vmatprep.subr.mxu0 0.0
  %6607 = vmatpush1.xpose.msra.mxu0 0.0
  %6608 = vmatprep.subr.mxu0 0.0
  %6609 = vmatpush1.xpose.msra.mxu0 0.0
  %6610 = vmatprep.subr.mxu0 0.0
  %6611 = vmatpush1.xpose.msra.mxu0 0.0
  %6612 = vmatprep.subr.mxu0 0.0
  %6613 = vmatpush1.xpose.msra.mxu0 0.0
  %6614 = vmatprep.subr.mxu0 0.0
  %6615 = vmatpush1.xpose.msra.mxu0 0.0
  %6616 = vmatprep.subr.mxu0 0.0
  %6617 = vmatpush1.xpose.msra.mxu0 0.0
  %6618 = vmatprep.subr.mxu0 0.0
  %6619 = vmatpush1.xpose.msra.mxu0 0.0
  %6620 = vmatprep.subr.mxu0 0.0
  %6621 = vmatpush1.xpose.msra.mxu0 0.0
  %6622 = vmatprep.subr.mxu0 0.0
  %6623 = vmatpush1.xpose.msra.mxu0 0.0
  %6624 = vmatprep.subr.mxu0 0.0
  %6625 = vmatpush1.xpose.msra.mxu0 0.0
  %6626 = vmatprep.subr.mxu0 0.0
  %6627 = vmatpush1.xpose.msra.mxu0 0.0
  %6628 = vmatprep.mubr.f32.mxu0 0.0
  %v6629 = vand.u32 %v6378, 4294901760
  %v6630 = vsub.f32 %v6378, %v6629
  %6631 = vmatmul.mubr.f32.gmra.mrb[0].mxu0 %v6630
  %v6632 = vpop.f32.mrb[0].mxu0
  %v6633 = vadd.f32 %v6551, %v6632
  %v6634 = vpop.f32.mrb[0].mxu0
  %6635 = vmatprep.mubr.f32.mxu0 0.0
  %v6636 = vand.u32 %v6380, 4294901760
  %v6637 = vsub.f32 %v6380, %v6636
  %6638 = vmatmul.mubr.f32.gmra.mrb[0].mxu0 %v6637
  %v6639 = vpop.f32.mrb[0].mxu0
  %v6640 = vadd.f32 %v6557, %v6639
  %v6641 = vpop.f32.mrb[0].mxu0
  %6642 = vdwg.mxu0
  %6643 = vmatprep.subr.mxu0 0.0
  %v6644 = vand.u32 %v6382, 4294901760
  %6645 = vmatpush1.xpose.msra.mxu0 %v6644
  %6646 = vmatprep.subr.mxu0 0.0
  %v6647 = vand.u32 %v6384, 4294901760
  %6648 = vmatpush1.xpose.msra.mxu0 %v6647
  %6649 = vmatprep.subr.mxu0 0.0
  %6650 = vmatpush1.xpose.msra.mxu0 0.0
  %6651 = vmatprep.subr.mxu0 0.0
  %6652 = vmatpush1.xpose.msra.mxu0 0.0
  %6653 = vmatprep.subr.mxu0 0.0
  %6654 = vmatpush1.xpose.msra.mxu0 0.0
  %6655 = vmatprep.subr.mxu0 0.0
  %6656 = vmatpush1.xpose.msra.mxu0 0.0
  %6657 = vmatprep.subr.mxu0 0.0
  %6658 = vmatpush1.xpose.msra.mxu0 0.0
  %6659 = vmatprep.subr.mxu0 0.0
  %6660 = vmatpush1.xpose.msra.mxu0 0.0
  %6661 = vmatprep.subr.mxu0 0.0
  %6662 = vmatpush1.xpose.msra.mxu0 0.0
  %6663 = vmatprep.subr.mxu0 0.0
  %6664 = vmatpush1.xpose.msra.mxu0 0.0
  %6665 = vmatprep.subr.mxu0 0.0
  %6666 = vmatpush1.xpose.msra.mxu0 0.0
  %6667 = vmatprep.subr.mxu0 0.0
  %6668 = vmatpush1.xpose.msra.mxu0 0.0
  %6669 = vmatprep.subr.mxu0 0.0
  %6670 = vmatpush1.xpose.msra.mxu0 0.0
  %6671 = vmatprep.subr.mxu0 0.0
  %6672 = vmatpush1.xpose.msra.mxu0 0.0
  %6673 = vmatprep.subr.mxu0 0.0
  %6674 = vmatpush1.xpose.msra.mxu0 0.0
  %6675 = vmatprep.subr.mxu0 0.0
  %6676 = vmatpush1.xpose.msra.mxu0 0.0
  %6677 = vmatprep.subr.mxu0 0.0
  %6678 = vmatpush1.xpose.msra.mxu0 0.0
  %6679 = vmatprep.subr.mxu0 0.0
  %6680 = vmatpush1.xpose.msra.mxu0 0.0
  %6681 = vmatprep.subr.mxu0 0.0
  %6682 = vmatpush1.xpose.msra.mxu0 0.0
  %6683 = vmatprep.subr.mxu0 0.0
  %6684 = vmatpush1.xpose.msra.mxu0 0.0
  %6685 = vmatprep.subr.mxu0 0.0
  %6686 = vmatpush1.xpose.msra.mxu0 0.0
  %6687 = vmatprep.subr.mxu0 0.0
  %6688 = vmatpush1.xpose.msra.mxu0 0.0
  %6689 = vmatprep.subr.mxu0 0.0
  %6690 = vmatpush1.xpose.msra.mxu0 0.0
  %6691 = vmatprep.subr.mxu0 0.0
  %6692 = vmatpush1.xpose.msra.mxu0 0.0
  %6693 = vmatprep.subr.mxu0 0.0
  %6694 = vmatpush1.xpose.msra.mxu0 0.0
  %6695 = vmatprep.subr.mxu0 0.0
  %6696 = vmatpush1.xpose.msra.mxu0 0.0
  %6697 = vmatprep.subr.mxu0 0.0
  %6698 = vmatpush1.xpose.msra.mxu0 0.0
  %6699 = vmatprep.subr.mxu0 0.0
  %6700 = vmatpush1.xpose.msra.mxu0 0.0
  %6701 = vmatprep.subr.mxu0 0.0
  %6702 = vmatpush1.xpose.msra.mxu0 0.0
  %6703 = vmatprep.subr.mxu0 0.0
  %6704 = vmatpush1.xpose.msra.mxu0 0.0
  %6705 = vmatprep.subr.mxu0 0.0
  %6706 = vmatpush1.xpose.msra.mxu0 0.0
  %6707 = vmatprep.subr.mxu0 0.0
  %6708 = vmatpush1.xpose.msra.mxu0 0.0
  %6709 = vmatprep.mubr.f32.mxu0 0.0
  %v6710 = vand.u32 %v6378, 4294901760
  %v6711 = vsub.f32 %v6378, %v6710
  %v6712 = vand.u32 %v6711, 4294901760
  %6713 = vmatmul.mubr.f32.gmra.mrb[0].mxu0 %v6712
  %v6714 = vpop.f32.mrb[0].mxu0
  %v6715 = vadd.f32 %v6633, %v6714
  %v6716 = vpop.f32.mrb[0].mxu0
  %6717 = vmatprep.mubr.f32.mxu0 0.0
  %v6718 = vand.u32 %v6380, 4294901760
  %v6719 = vsub.f32 %v6380, %v6718
  %v6720 = vand.u32 %v6719, 4294901760
  %6721 = vmatmul.mubr.f32.gmra.mrb[0].mxu0 %v6720
  %v6722 = vpop.f32.mrb[0].mxu0
  %v6723 = vadd.f32 %v6640, %v6722
  %v6724 = vpop.f32.mrb[0].mxu0
  %6725 = vdwg.mxu0
  %6726 = vmatprep.subr.mxu0 0.0
  %v6727 = vand.u32 %v6382, 4294901760
  %v6728 = vsub.f32 %v6382, %v6727
  %v6729 = vand.u32 %v6728, 4294901760
  %6730 = vmatpush1.xpose.msra.mxu0 %v6729
  %6731 = vmatprep.subr.mxu0 0.0
  %v6732 = vand.u32 %v6384, 4294901760
  %v6733 = vsub.f32 %v6384, %v6732
  %v6734 = vand.u32 %v6733, 4294901760
  %6735 = vmatpush1.xpose.msra.mxu0 %v6734
  %6736 = vmatprep.subr.mxu0 0.0
  %6737 = vmatpush1.xpose.msra.mxu0 0.0
  %6738 = vmatprep.subr.mxu0 0.0
  %6739 = vmatpush1.xpose.msra.mxu0 0.0
  %6740 = vmatprep.subr.mxu0 0.0
  %6741 = vmatpush1.xpose.msra.mxu0 0.0
  %6742 = vmatprep.subr.mxu0 0.0
  %6743 = vmatpush1.xpose.msra.mxu0 0.0
  %6744 = vmatprep.subr.mxu0 0.0
  %6745 = vmatpush1.xpose.msra.mxu0 0.0
  %6746 = vmatprep.subr.mxu0 0.0
  %6747 = vmatpush1.xpose.msra.mxu0 0.0
  %6748 = vmatprep.subr.mxu0 0.0
  %6749 = vmatpush1.xpose.msra.mxu0 0.0
  %6750 = vmatprep.subr.mxu0 0.0
  %6751 = vmatpush1.xpose.msra.mxu0 0.0
  %6752 = vmatprep.subr.mxu0 0.0
  %6753 = vmatpush1.xpose.msra.mxu0 0.0
  %6754 = vmatprep.subr.mxu0 0.0
  %6755 = vmatpush1.xpose.msra.mxu0 0.0
  %6756 = vmatprep.subr.mxu0 0.0
  %6757 = vmatpush1.xpose.msra.mxu0 0.0
  %6758 = vmatprep.subr.mxu0 0.0
  %6759 = vmatpush1.xpose.msra.mxu0 0.0
  %6760 = vmatprep.subr.mxu0 0.0
  %6761 = vmatpush1.xpose.msra.mxu0 0.0
  %6762 = vmatprep.subr.mxu0 0.0
  %6763 = vmatpush1.xpose.msra.mxu0 0.0
  %6764 = vmatprep.subr.mxu0 0.0
  %6765 = vmatpush1.xpose.msra.mxu0 0.0
  %6766 = vmatprep.subr.mxu0 0.0
  %6767 = vmatpush1.xpose.msra.mxu0 0.0
  %6768 = vmatprep.subr.mxu0 0.0
  %6769 = vmatpush1.xpose.msra.mxu0 0.0
  %6770 = vmatprep.subr.mxu0 0.0
  %6771 = vmatpush1.xpose.msra.mxu0 0.0
  %6772 = vmatprep.subr.mxu0 0.0
  %6773 = vmatpush1.xpose.msra.mxu0 0.0
  %6774 = vmatprep.subr.mxu0 0.0
  %6775 = vmatpush1.xpose.msra.mxu0 0.0
  %6776 = vmatprep.subr.mxu0 0.0
  %6777 = vmatpush1.xpose.msra.mxu0 0.0
  %6778 = vmatprep.subr.mxu0 0.0
  %6779 = vmatpush1.xpose.msra.mxu0 0.0
  %6780 = vmatprep.subr.mxu0 0.0
  %6781 = vmatpush1.xpose.msra.mxu0 0.0
  %6782 = vmatprep.subr.mxu0 0.0
  %6783 = vmatpush1.xpose.msra.mxu0 0.0
  %6784 = vmatprep.subr.mxu0 0.0
  %6785 = vmatpush1.xpose.msra.mxu0 0.0
  %6786 = vmatprep.subr.mxu0 0.0
  %6787 = vmatpush1.xpose.msra.mxu0 0.0
  %6788 = vmatprep.subr.mxu0 0.0
  %6789 = vmatpush1.xpose.msra.mxu0 0.0
  %6790 = vmatprep.subr.mxu0 0.0
  %6791 = vmatpush1.xpose.msra.mxu0 0.0
  %6792 = vmatprep.subr.mxu0 0.0
  %6793 = vmatpush1.xpose.msra.mxu0 0.0
  %6794 = vmatprep.subr.mxu0 0.0
  %6795 = vmatpush1.xpose.msra.mxu0 0.0
  %6796 = vmatprep.mubr.f32.mxu0 0.0
  %v6797 = vand.u32 %v6378, 4294901760
  %6798 = vmatmul.mubr.f32.gmra.mrb[0].mxu0 %v6797
  %v6799 = vpop.f32.mrb[0].mxu0
  %v6800 = vadd.f32 %v6715, %v6799
  %v6801 = vpop.f32.mrb[0].mxu0
  %6802 = vmatprep.mubr.f32.mxu0 0.0
  %v6803 = vand.u32 %v6380, 4294901760
  %6804 = vmatmul.mubr.f32.gmra.mrb[0].mxu0 %v6803
  %v6805 = vpop.f32.mrb[0].mxu0
  %v6806 = vadd.f32 %v6723, %v6805
  %v6807 = vpop.f32.mrb[0].mxu0
  %6808 = vdwg.mxu0
  %6809 = vmatprep.subr.mxu0 0.0
  %v6810 = vand.u32 %v6382, 4294901760
  %6811 = vmatpush1.xpose.msra.mxu0 %v6810
  %6812 = vmatprep.subr.mxu0 0.0
  %v6813 = vand.u32 %v6384, 4294901760
  %6814 = vmatpush1.xpose.msra.mxu0 %v6813
  %6815 = vmatprep.subr.mxu0 0.0
  %6816 = vmatpush1.xpose.msra.mxu0 0.0
  %6817 = vmatprep.subr.mxu0 0.0
  %6818 = vmatpush1.xpose.msra.mxu0 0.0
  %6819 = vmatprep.subr.mxu0 0.0
  %6820 = vmatpush1.xpose.msra.mxu0 0.0
  %6821 = vmatprep.subr.mxu0 0.0
  %6822 = vmatpush1.xpose.msra.mxu0 0.0
  %6823 = vmatprep.subr.mxu0 0.0
  %6824 = vmatpush1.xpose.msra.mxu0 0.0
  %6825 = vmatprep.subr.mxu0 0.0
  %6826 = vmatpush1.xpose.msra.mxu0 0.0
  %6827 = vmatprep.subr.mxu0 0.0
  %6828 = vmatpush1.xpose.msra.mxu0 0.0
  %6829 = vmatprep.subr.mxu0 0.0
  %6830 = vmatpush1.xpose.msra.mxu0 0.0
  %6831 = vmatprep.subr.mxu0 0.0
  %6832 = vmatpush1.xpose.msra.mxu0 0.0
  %6833 = vmatprep.subr.mxu0 0.0
  %6834 = vmatpush1.xpose.msra.mxu0 0.0
  %6835 = vmatprep.subr.mxu0 0.0
  %6836 = vmatpush1.xpose.msra.mxu0 0.0
  %6837 = vmatprep.subr.mxu0 0.0
  %6838 = vmatpush1.xpose.msra.mxu0 0.0
  %6839 = vmatprep.subr.mxu0 0.0
  %6840 = vmatpush1.xpose.msra.mxu0 0.0
  %6841 = vmatprep.subr.mxu0 0.0
  %6842 = vmatpush1.xpose.msra.mxu0 0.0
  %6843 = vmatprep.subr.mxu0 0.0
  %6844 = vmatpush1.xpose.msra.mxu0 0.0
  %6845 = vmatprep.subr.mxu0 0.0
  %6846 = vmatpush1.xpose.msra.mxu0 0.0
  %6847 = vmatprep.subr.mxu0 0.0
  %6848 = vmatpush1.xpose.msra.mxu0 0.0
  %6849 = vmatprep.subr.mxu0 0.0
  %6850 = vmatpush1.xpose.msra.mxu0 0.0
  %6851 = vmatprep.subr.mxu0 0.0
  %6852 = vmatpush1.xpose.msra.mxu0 0.0
  %6853 = vmatprep.subr.mxu0 0.0
  %6854 = vmatpush1.xpose.msra.mxu0 0.0
  %6855 = vmatprep.subr.mxu0 0.0
  %6856 = vmatpush1.xpose.msra.mxu0 0.0
  %6857 = vmatprep.subr.mxu0 0.0
  %6858 = vmatpush1.xpose.msra.mxu0 0.0
  %6859 = vmatprep.subr.mxu0 0.0
  %6860 = vmatpush1.xpose.msra.mxu0 0.0
  %6861 = vmatprep.subr.mxu0 0.0
  %6862 = vmatpush1.xpose.msra.mxu0 0.0
  %6863 = vmatprep.subr.mxu0 0.0
  %6864 = vmatpush1.xpose.msra.mxu0 0.0
  %6865 = vmatprep.subr.mxu0 0.0
  %6866 = vmatpush1.xpose.msra.mxu0 0.0
  %6867 = vmatprep.subr.mxu0 0.0
  %6868 = vmatpush1.xpose.msra.mxu0 0.0
  %6869 = vmatprep.subr.mxu0 0.0
  %6870 = vmatpush1.xpose.msra.mxu0 0.0
  %6871 = vmatprep.subr.mxu0 0.0
  %6872 = vmatpush1.xpose.msra.mxu0 0.0
  %6873 = vmatprep.subr.mxu0 0.0
  %6874 = vmatpush1.xpose.msra.mxu0 0.0
  %6875 = vmatprep.mubr.f32.mxu0 0.0
  %v6876 = vand.u32 %v6378, 4294901760
  %6877 = vmatmul.mubr.f32.gmra.mrb[0].mxu0 %v6876
  %v6878 = vpop.f32.mrb[0].mxu0
  %v6879 = vadd.f32 %v6800, %v6878
  %v6880 = vpop.f32.mrb[0].mxu0
  %6881 = vmatprep.mubr.f32.mxu0 0.0
  %v6882 = vand.u32 %v6380, 4294901760
  %6883 = vmatmul.mubr.f32.gmra.mrb[0].mxu0 %v6882
  %v6884 = vpop.f32.mrb[0].mxu0
  %v6885 = vadd.f32 %v6806, %v6884
  %v6886 = vpop.f32.mrb[0].mxu0
  %6887 = vdwg.mxu0
  %v6888 = vsel %vm1580, %v6879, -inf
  %6889 = vmax.xlane.f32.xlu0 %v6888
  %v6890 = vpop.xlane.xlu0 %6889
  %v6891 = vsel %vm1584, %v6885, -inf
  %6892 = vmax.xlane.f32.xlu0 %v6891
  %v6893 = vpop.xlane.xlu0 %6892
  %v6894 = vsub.f32 %v6879, %v6890
  %v6895 = vsub.f32 %v6885, %v6893
  %v6896 = vmul.f32 %v6894, 1.442695
  %v6897 = vpow.pop %v6896
  %v6898 = vmul.f32 %v6895, 1.442695
  %v6899 = vpow.pop %v6898
  %v6900 = vsel %vm1580, %v6897, 0.0
  %6901 = vadd.xlane.f32.xlu0 %v6900
  %v6902 = vpop.xlane.xlu0 %6901
  %v6903 = vsel %vm1584, %v6899, 0.0
  %6904 = vadd.xlane.f32.xlu0 %v6903
  %v6905 = vpop.xlane.xlu0 %6904
  %v6906 = vrcp.pop %v6902
  %v6907 = vmul.f32 %v6897, %v6906
  %v6908 = vrcp.pop %v6905
  %v6909 = vmul.f32 %v6899, %v6908
  %6910 = vrot.lane.b32.xlu0 %v5858, 112
  %v6911 = vpop.permute.xlu0 %6910
  %6912 = vrot.lane.b32.xlu0 %v5857, 112
  %v6913 = vpop.permute.xlu0 %6912
  %v6916 = vsel %vm1580, %v6907, 0
  %v6919 = vsel %vm1580, %v6909, 0
  %v6921 = vsel %vm1610, %v6913, 0
  %6923 = vmatprep.subr.mxu0 0.0
  %v6924 = vand.u32 %v6911, 4294901760
  %6925 = vmatpush1.msra.mxu0 %v6924
  %6926 = vmatprep.subr.mxu0 0.0
  %v6927 = vand.u32 %v6921, 4294901760
  %6928 = vmatpush1.msra.mxu0 %v6927
  %6929 = vmatprep.subr.mxu0 0.0
  %6930 = vmatpush1.msra.mxu0 0.0
  %6931 = vmatprep.subr.mxu0 0.0
  %6932 = vmatpush1.msra.mxu0 0.0
  %6933 = vmatprep.subr.mxu0 0.0
  %6934 = vmatpush1.msra.mxu0 0.0
  %6935 = vmatprep.subr.mxu0 0.0
  %6936 = vmatpush1.msra.mxu0 0.0
  %6937 = vmatprep.subr.mxu0 0.0
  %6938 = vmatpush1.msra.mxu0 0.0
  %6939 = vmatprep.subr.mxu0 0.0
  %6940 = vmatpush1.msra.mxu0 0.0
  %6941 = vmatprep.subr.mxu0 0.0
  %6942 = vmatpush1.msra.mxu0 0.0
  %6943 = vmatprep.subr.mxu0 0.0
  %6944 = vmatpush1.msra.mxu0 0.0
  %6945 = vmatprep.subr.mxu0 0.0
  %6946 = vmatpush1.msra.mxu0 0.0
  %6947 = vmatprep.subr.mxu0 0.0
  %6948 = vmatpush1.msra.mxu0 0.0
  %6949 = vmatprep.subr.mxu0 0.0
  %6950 = vmatpush1.msra.mxu0 0.0
  %6951 = vmatprep.subr.mxu0 0.0
  %6952 = vmatpush1.msra.mxu0 0.0
  %6953 = vmatprep.subr.mxu0 0.0
  %6954 = vmatpush1.msra.mxu0 0.0
  %6955 = vmatprep.subr.mxu0 0.0
  %6956 = vmatpush1.msra.mxu0 0.0
  %6957 = vmatprep.subr.mxu0 0.0
  %6958 = vmatpush1.msra.mxu0 0.0
  %6959 = vmatprep.subr.mxu0 0.0
  %6960 = vmatpush1.msra.mxu0 0.0
  %6961 = vmatprep.subr.mxu0 0.0
  %6962 = vmatpush1.msra.mxu0 0.0
  %6963 = vmatprep.subr.mxu0 0.0
  %6964 = vmatpush1.msra.mxu0 0.0
  %6965 = vmatprep.subr.mxu0 0.0
  %6966 = vmatpush1.msra.mxu0 0.0
  %6967 = vmatprep.subr.mxu0 0.0
  %6968 = vmatpush1.msra.mxu0 0.0
  %6969 = vmatprep.subr.mxu0 0.0
  %6970 = vmatpush1.msra.mxu0 0.0
  %6971 = vmatprep.subr.mxu0 0.0
  %6972 = vmatpush1.msra.mxu0 0.0
  %6973 = vmatprep.subr.mxu0 0.0
  %6974 = vmatpush1.msra.mxu0 0.0
  %6975 = vmatprep.subr.mxu0 0.0
  %6976 = vmatpush1.msra.mxu0 0.0
  %6977 = vmatprep.subr.mxu0 0.0
  %6978 = vmatpush1.msra.mxu0 0.0
  %6979 = vmatprep.subr.mxu0 0.0
  %6980 = vmatpush1.msra.mxu0 0.0
  %6981 = vmatprep.subr.mxu0 0.0
  %6982 = vmatpush1.msra.mxu0 0.0
  %6983 = vmatprep.subr.mxu0 0.0
  %6984 = vmatpush1.msra.mxu0 0.0
  %6985 = vmatprep.subr.mxu0 0.0
  %6986 = vmatpush1.msra.mxu0 0.0
  %6987 = vmatprep.subr.mxu0 0.0
  %6988 = vmatpush1.msra.mxu0 0.0
  %6989 = vmatprep.mubr.f32.mxu0 0.0
  %v6990 = vand.u32 %v6916, 4294901760
  %v6991 = vsub.f32 %v6916, %v6990
  %v6992 = vand.u32 %v6991, 4294901760
  %v6993 = vsub.f32 %v6991, %v6992
  %v6994 = vand.u32 %v6993, 4294901760
  %6995 = vmatmul.mubr.f32.gmra.mrb[0].mxu0 %v6994
  %v6996 = vpop.f32.mrb[0].mxu0
  %v6997 = vadd.f32 0.0, %v6996
  %v6998 = vpop.f32.mrb[0].mxu0
  %6999 = vmatprep.mubr.f32.mxu0 0.0
  %v7000 = vand.u32 %v6919, 4294901760
  %v7001 = vsub.f32 %v6919, %v7000
  %v7002 = vand.u32 %v7001, 4294901760
  %v7003 = vsub.f32 %v7001, %v7002
  %v7004 = vand.u32 %v7003, 4294901760
  %7005 = vmatmul.mubr.f32.gmra.mrb[0].mxu0 %v7004
  %v7006 = vpop.f32.mrb[0].mxu0
  %v7007 = vadd.f32 0.0, %v7006
  %v7008 = vpop.f32.mrb[0].mxu0
  %7009 = vdwg.mxu0
  %7010 = vmatprep.subr.mxu0 0.0
  %v7011 = vand.u32 %v6911, 4294901760
  %v7012 = vsub.f32 %v6911, %v7011
  %v7013 = vand.u32 %v7012, 4294901760
  %v7014 = vsub.f32 %v7012, %v7013
  %v7015 = vand.u32 %v7014, 4294901760
  %7016 = vmatpush1.msra.mxu0 %v7015
  %7017 = vmatprep.subr.mxu0 0.0
  %v7018 = vand.u32 %v6921, 4294901760
  %v7019 = vsub.f32 %v6921, %v7018
  %v7020 = vand.u32 %v7019, 4294901760
  %v7021 = vsub.f32 %v7019, %v7020
  %v7022 = vand.u32 %v7021, 4294901760
  %7023 = vmatpush1.msra.mxu0 %v7022
  %7024 = vmatprep.subr.mxu0 0.0
  %7025 = vmatpush1.msra.mxu0 0.0
  %7026 = vmatprep.subr.mxu0 0.0
  %7027 = vmatpush1.msra.mxu0 0.0
  %7028 = vmatprep.subr.mxu0 0.0
  %7029 = vmatpush1.msra.mxu0 0.0
  %7030 = vmatprep.subr.mxu0 0.0
  %7031 = vmatpush1.msra.mxu0 0.0
  %7032 = vmatprep.subr.mxu0 0.0
  %7033 = vmatpush1.msra.mxu0 0.0
  %7034 = vmatprep.subr.mxu0 0.0
  %7035 = vmatpush1.msra.mxu0 0.0
  %7036 = vmatprep.subr.mxu0 0.0
  %7037 = vmatpush1.msra.mxu0 0.0
  %7038 = vmatprep.subr.mxu0 0.0
  %7039 = vmatpush1.msra.mxu0 0.0
  %7040 = vmatprep.subr.mxu0 0.0
  %7041 = vmatpush1.msra.mxu0 0.0
  %7042 = vmatprep.subr.mxu0 0.0
  %7043 = vmatpush1.msra.mxu0 0.0
  %7044 = vmatprep.subr.mxu0 0.0
  %7045 = vmatpush1.msra.mxu0 0.0
  %7046 = vmatprep.subr.mxu0 0.0
  %7047 = vmatpush1.msra.mxu0 0.0
  %7048 = vmatprep.subr.mxu0 0.0
  %7049 = vmatpush1.msra.mxu0 0.0
  %7050 = vmatprep.subr.mxu0 0.0
  %7051 = vmatpush1.msra.mxu0 0.0
  %7052 = vmatprep.subr.mxu0 0.0
  %7053 = vmatpush1.msra.mxu0 0.0
  %7054 = vmatprep.subr.mxu0 0.0
  %7055 = vmatpush1.msra.mxu0 0.0
  %7056 = vmatprep.subr.mxu0 0.0
  %7057 = vmatpush1.msra.mxu0 0.0
  %7058 = vmatprep.subr.mxu0 0.0
  %7059 = vmatpush1.msra.mxu0 0.0
  %7060 = vmatprep.subr.mxu0 0.0
  %7061 = vmatpush1.msra.mxu0 0.0
  %7062 = vmatprep.subr.mxu0 0.0
  %7063 = vmatpush1.msra.mxu0 0.0
  %7064 = vmatprep.subr.mxu0 0.0
  %7065 = vmatpush1.msra.mxu0 0.0
  %7066 = vmatprep.subr.mxu0 0.0
  %7067 = vmatpush1.msra.mxu0 0.0
  %7068 = vmatprep.subr.mxu0 0.0
  %7069 = vmatpush1.msra.mxu0 0.0
  %7070 = vmatprep.subr.mxu0 0.0
  %7071 = vmatpush1.msra.mxu0 0.0
  %7072 = vmatprep.subr.mxu0 0.0
  %7073 = vmatpush1.msra.mxu0 0.0
  %7074 = vmatprep.subr.mxu0 0.0
  %7075 = vmatpush1.msra.mxu0 0.0
  %7076 = vmatprep.subr.mxu0 0.0
  %7077 = vmatpush1.msra.mxu0 0.0
  %7078 = vmatprep.subr.mxu0 0.0
  %7079 = vmatpush1.msra.mxu0 0.0
  %7080 = vmatprep.subr.mxu0 0.0
  %7081 = vmatpush1.msra.mxu0 0.0
  %7082 = vmatprep.subr.mxu0 0.0
  %7083 = vmatpush1.msra.mxu0 0.0
  %7084 = vmatprep.mubr.f32.mxu0 0.0
  %v7085 = vand.u32 %v6916, 4294901760
  %7086 = vmatmul.mubr.f32.gmra.mrb[0].mxu0 %v7085
  %v7087 = vpop.f32.mrb[0].mxu0
  %v7088 = vadd.f32 %v6997, %v7087
  %v7089 = vpop.f32.mrb[0].mxu0
  %7090 = vmatprep.mubr.f32.mxu0 0.0
  %v7091 = vand.u32 %v6919, 4294901760
  %7092 = vmatmul.mubr.f32.gmra.mrb[0].mxu0 %v7091
  %v7093 = vpop.f32.mrb[0].mxu0
  %v7094 = vadd.f32 %v7007, %v7093
  %v7095 = vpop.f32.mrb[0].mxu0
  %7096 = vdwg.mxu0
  %7097 = vmatprep.subr.mxu0 0.0
  %v7098 = vand.u32 %v6911, 4294901760
  %v7099 = vsub.f32 %v6911, %v7098
  %7100 = vmatpush1.msra.mxu0 %v7099
  %7101 = vmatprep.subr.mxu0 0.0
  %v7102 = vand.u32 %v6921, 4294901760
  %v7103 = vsub.f32 %v6921, %v7102
  %7104 = vmatpush1.msra.mxu0 %v7103
  %7105 = vmatprep.subr.mxu0 0.0
  %7106 = vmatpush1.msra.mxu0 0.0
  %7107 = vmatprep.subr.mxu0 0.0
  %7108 = vmatpush1.msra.mxu0 0.0
  %7109 = vmatprep.subr.mxu0 0.0
  %7110 = vmatpush1.msra.mxu0 0.0
  %7111 = vmatprep.subr.mxu0 0.0
  %7112 = vmatpush1.msra.mxu0 0.0
  %7113 = vmatprep.subr.mxu0 0.0
  %7114 = vmatpush1.msra.mxu0 0.0
  %7115 = vmatprep.subr.mxu0 0.0
  %7116 = vmatpush1.msra.mxu0 0.0
  %7117 = vmatprep.subr.mxu0 0.0
  %7118 = vmatpush1.msra.mxu0 0.0
  %7119 = vmatprep.subr.mxu0 0.0
  %7120 = vmatpush1.msra.mxu0 0.0
  %7121 = vmatprep.subr.mxu0 0.0
  %7122 = vmatpush1.msra.mxu0 0.0
  %7123 = vmatprep.subr.mxu0 0.0
  %7124 = vmatpush1.msra.mxu0 0.0
  %7125 = vmatprep.subr.mxu0 0.0
  %7126 = vmatpush1.msra.mxu0 0.0
  %7127 = vmatprep.subr.mxu0 0.0
  %7128 = vmatpush1.msra.mxu0 0.0
  %7129 = vmatprep.subr.mxu0 0.0
  %7130 = vmatpush1.msra.mxu0 0.0
  %7131 = vmatprep.subr.mxu0 0.0
  %7132 = vmatpush1.msra.mxu0 0.0
  %7133 = vmatprep.subr.mxu0 0.0
  %7134 = vmatpush1.msra.mxu0 0.0
  %7135 = vmatprep.subr.mxu0 0.0
  %7136 = vmatpush1.msra.mxu0 0.0
  %7137 = vmatprep.subr.mxu0 0.0
  %7138 = vmatpush1.msra.mxu0 0.0
  %7139 = vmatprep.subr.mxu0 0.0
  %7140 = vmatpush1.msra.mxu0 0.0
  %7141 = vmatprep.subr.mxu0 0.0
  %7142 = vmatpush1.msra.mxu0 0.0
  %7143 = vmatprep.subr.mxu0 0.0
  %7144 = vmatpush1.msra.mxu0 0.0
  %7145 = vmatprep.subr.mxu0 0.0
  %7146 = vmatpush1.msra.mxu0 0.0
  %7147 = vmatprep.subr.mxu0 0.0
  %7148 = vmatpush1.msra.mxu0 0.0
  %7149 = vmatprep.subr.mxu0 0.0
  %7150 = vmatpush1.msra.mxu0 0.0
  %7151 = vmatprep.subr.mxu0 0.0
  %7152 = vmatpush1.msra.mxu0 0.0
  %7153 = vmatprep.subr.mxu0 0.0
  %7154 = vmatpush1.msra.mxu0 0.0
  %7155 = vmatprep.subr.mxu0 0.0
  %7156 = vmatpush1.msra.mxu0 0.0
  %7157 = vmatprep.subr.mxu0 0.0
  %7158 = vmatpush1.msra.mxu0 0.0
  %7159 = vmatprep.subr.mxu0 0.0
  %7160 = vmatpush1.msra.mxu0 0.0
  %7161 = vmatprep.subr.mxu0 0.0
  %7162 = vmatpush1.msra.mxu0 0.0
  %7163 = vmatprep.subr.mxu0 0.0
  %7164 = vmatpush1.msra.mxu0 0.0
  %7165 = vmatprep.mubr.f32.mxu0 0.0
  %v7166 = vand.u32 %v6916, 4294901760
  %v7167 = vsub.f32 %v6916, %v7166
  %7168 = vmatmul.mubr.f32.gmra.mrb[0].mxu0 %v7167
  %v7169 = vpop.f32.mrb[0].mxu0
  %v7170 = vadd.f32 %v7088, %v7169
  %v7171 = vpop.f32.mrb[0].mxu0
  %7172 = vmatprep.mubr.f32.mxu0 0.0
  %v7173 = vand.u32 %v6919, 4294901760
  %v7174 = vsub.f32 %v6919, %v7173
  %7175 = vmatmul.mubr.f32.gmra.mrb[0].mxu0 %v7174
  %v7176 = vpop.f32.mrb[0].mxu0
  %v7177 = vadd.f32 %v7094, %v7176
  %v7178 = vpop.f32.mrb[0].mxu0
  %7179 = vdwg.mxu0
  %7180 = vmatprep.subr.mxu0 0.0
  %v7181 = vand.u32 %v6911, 4294901760
  %7182 = vmatpush1.msra.mxu0 %v7181
  %7183 = vmatprep.subr.mxu0 0.0
  %v7184 = vand.u32 %v6921, 4294901760
  %7185 = vmatpush1.msra.mxu0 %v7184
  %7186 = vmatprep.subr.mxu0 0.0
  %7187 = vmatpush1.msra.mxu0 0.0
  %7188 = vmatprep.subr.mxu0 0.0
  %7189 = vmatpush1.msra.mxu0 0.0
  %7190 = vmatprep.subr.mxu0 0.0
  %7191 = vmatpush1.msra.mxu0 0.0
  %7192 = vmatprep.subr.mxu0 0.0
  %7193 = vmatpush1.msra.mxu0 0.0
  %7194 = vmatprep.subr.mxu0 0.0
  %7195 = vmatpush1.msra.mxu0 0.0
  %7196 = vmatprep.subr.mxu0 0.0
  %7197 = vmatpush1.msra.mxu0 0.0
  %7198 = vmatprep.subr.mxu0 0.0
  %7199 = vmatpush1.msra.mxu0 0.0
  %7200 = vmatprep.subr.mxu0 0.0
  %7201 = vmatpush1.msra.mxu0 0.0
  %7202 = vmatprep.subr.mxu0 0.0
  %7203 = vmatpush1.msra.mxu0 0.0
  %7204 = vmatprep.subr.mxu0 0.0
  %7205 = vmatpush1.msra.mxu0 0.0
  %7206 = vmatprep.subr.mxu0 0.0
  %7207 = vmatpush1.msra.mxu0 0.0
  %7208 = vmatprep.subr.mxu0 0.0
  %7209 = vmatpush1.msra.mxu0 0.0
  %7210 = vmatprep.subr.mxu0 0.0
  %7211 = vmatpush1.msra.mxu0 0.0
  %7212 = vmatprep.subr.mxu0 0.0
  %7213 = vmatpush1.msra.mxu0 0.0
  %7214 = vmatprep.subr.mxu0 0.0
  %7215 = vmatpush1.msra.mxu0 0.0
  %7216 = vmatprep.subr.mxu0 0.0
  %7217 = vmatpush1.msra.mxu0 0.0
  %7218 = vmatprep.subr.mxu0 0.0
  %7219 = vmatpush1.msra.mxu0 0.0
  %7220 = vmatprep.subr.mxu0 0.0
  %7221 = vmatpush1.msra.mxu0 0.0
  %7222 = vmatprep.subr.mxu0 0.0
  %7223 = vmatpush1.msra.mxu0 0.0
  %7224 = vmatprep.subr.mxu0 0.0
  %7225 = vmatpush1.msra.mxu0 0.0
  %7226 = vmatprep.subr.mxu0 0.0
  %7227 = vmatpush1.msra.mxu0 0.0
  %7228 = vmatprep.subr.mxu0 0.0
  %7229 = vmatpush1.msra.mxu0 0.0
  %7230 = vmatprep.subr.mxu0 0.0
  %7231 = vmatpush1.msra.mxu0 0.0
  %7232 = vmatprep.subr.mxu0 0.0
  %7233 = vmatpush1.msra.mxu0 0.0
  %7234 = vmatprep.subr.mxu0 0.0
  %7235 = vmatpush1.msra.mxu0 0.0
  %7236 = vmatprep.subr.mxu0 0.0
  %7237 = vmatpush1.msra.mxu0 0.0
  %7238 = vmatprep.subr.mxu0 0.0
  %7239 = vmatpush1.msra.mxu0 0.0
  %7240 = vmatprep.subr.mxu0 0.0
  %7241 = vmatpush1.msra.mxu0 0.0
  %7242 = vmatprep.subr.mxu0 0.0
  %7243 = vmatpush1.msra.mxu0 0.0
  %7244 = vmatprep.subr.mxu0 0.0
  %7245 = vmatpush1.msra.mxu0 0.0
  %7246 = vmatprep.mubr.f32.mxu0 0.0
  %v7247 = vand.u32 %v6916, 4294901760
  %v7248 = vsub.f32 %v6916, %v7247
  %v7249 = vand.u32 %v7248, 4294901760
  %7250 = vmatmul.mubr.f32.gmra.mrb[0].mxu0 %v7249
  %v7251 = vpop.f32.mrb[0].mxu0
  %v7252 = vadd.f32 %v7170, %v7251
  %v7253 = vpop.f32.mrb[0].mxu0
  %7254 = vmatprep.mubr.f32.mxu0 0.0
  %v7255 = vand.u32 %v6919, 4294901760
  %v7256 = vsub.f32 %v6919, %v7255
  %v7257 = vand.u32 %v7256, 4294901760
  %7258 = vmatmul.mubr.f32.gmra.mrb[0].mxu0 %v7257
  %v7259 = vpop.f32.mrb[0].mxu0
  %v7260 = vadd.f32 %v7177, %v7259
  %v7261 = vpop.f32.mrb[0].mxu0
  %7262 = vdwg.mxu0
  %7263 = vmatprep.subr.mxu0 0.0
  %v7264 = vand.u32 %v6911, 4294901760
  %v7265 = vsub.f32 %v6911, %v7264
  %v7266 = vand.u32 %v7265, 4294901760
  %7267 = vmatpush1.msra.mxu0 %v7266
  %7268 = vmatprep.subr.mxu0 0.0
  %v7269 = vand.u32 %v6921, 4294901760
  %v7270 = vsub.f32 %v6921, %v7269
  %v7271 = vand.u32 %v7270, 4294901760
  %7272 = vmatpush1.msra.mxu0 %v7271
  %7273 = vmatprep.subr.mxu0 0.0
  %7274 = vmatpush1.msra.mxu0 0.0
  %7275 = vmatprep.subr.mxu0 0.0
  %7276 = vmatpush1.msra.mxu0 0.0
  %7277 = vmatprep.subr.mxu0 0.0
  %7278 = vmatpush1.msra.mxu0 0.0
  %7279 = vmatprep.subr.mxu0 0.0
  %7280 = vmatpush1.msra.mxu0 0.0
  %7281 = vmatprep.subr.mxu0 0.0
  %7282 = vmatpush1.msra.mxu0 0.0
  %7283 = vmatprep.subr.mxu0 0.0
  %7284 = vmatpush1.msra.mxu0 0.0
  %7285 = vmatprep.subr.mxu0 0.0
  %7286 = vmatpush1.msra.mxu0 0.0
  %7287 = vmatprep.subr.mxu0 0.0
  %7288 = vmatpush1.msra.mxu0 0.0
  %7289 = vmatprep.subr.mxu0 0.0
  %7290 = vmatpush1.msra.mxu0 0.0
  %7291 = vmatprep.subr.mxu0 0.0
  %7292 = vmatpush1.msra.mxu0 0.0
  %7293 = vmatprep.subr.mxu0 0.0
  %7294 = vmatpush1.msra.mxu0 0.0
  %7295 = vmatprep.subr.mxu0 0.0
  %7296 = vmatpush1.msra.mxu0 0.0
  %7297 = vmatprep.subr.mxu0 0.0
  %7298 = vmatpush1.msra.mxu0 0.0
  %7299 = vmatprep.subr.mxu0 0.0
  %7300 = vmatpush1.msra.mxu0 0.0
  %7301 = vmatprep.subr.mxu0 0.0
  %7302 = vmatpush1.msra.mxu0 0.0
  %7303 = vmatprep.subr.mxu0 0.0
  %7304 = vmatpush1.msra.mxu0 0.0
  %7305 = vmatprep.subr.mxu0 0.0
  %7306 = vmatpush1.msra.mxu0 0.0
  %7307 = vmatprep.subr.mxu0 0.0
  %7308 = vmatpush1.msra.mxu0 0.0
  %7309 = vmatprep.subr.mxu0 0.0
  %7310 = vmatpush1.msra.mxu0 0.0
  %7311 = vmatprep.subr.mxu0 0.0
  %7312 = vmatpush1.msra.mxu0 0.0
  %7313 = vmatprep.subr.mxu0 0.0
  %7314 = vmatpush1.msra.mxu0 0.0
  %7315 = vmatprep.subr.mxu0 0.0
  %7316 = vmatpush1.msra.mxu0 0.0
  %7317 = vmatprep.subr.mxu0 0.0
  %7318 = vmatpush1.msra.mxu0 0.0
  %7319 = vmatprep.subr.mxu0 0.0
  %7320 = vmatpush1.msra.mxu0 0.0
  %7321 = vmatprep.subr.mxu0 0.0
  %7322 = vmatpush1.msra.mxu0 0.0
  %7323 = vmatprep.subr.mxu0 0.0
  %7324 = vmatpush1.msra.mxu0 0.0
  %7325 = vmatprep.subr.mxu0 0.0
  %7326 = vmatpush1.msra.mxu0 0.0
  %7327 = vmatprep.subr.mxu0 0.0
  %7328 = vmatpush1.msra.mxu0 0.0
  %7329 = vmatprep.subr.mxu0 0.0
  %7330 = vmatpush1.msra.mxu0 0.0
  %7331 = vmatprep.subr.mxu0 0.0
  %7332 = vmatpush1.msra.mxu0 0.0
  %7333 = vmatprep.mubr.f32.mxu0 0.0
  %v7334 = vand.u32 %v6916, 4294901760
  %7335 = vmatmul.mubr.f32.gmra.mrb[0].mxu0 %v7334
  %v7336 = vpop.f32.mrb[0].mxu0
  %v7337 = vadd.f32 %v7252, %v7336
  %v7338 = vpop.f32.mrb[0].mxu0
  %7339 = vmatprep.mubr.f32.mxu0 0.0
  %v7340 = vand.u32 %v6919, 4294901760
  %7341 = vmatmul.mubr.f32.gmra.mrb[0].mxu0 %v7340
  %v7342 = vpop.f32.mrb[0].mxu0
  %v7343 = vadd.f32 %v7260, %v7342
  %v7344 = vpop.f32.mrb[0].mxu0
  %7345 = vdwg.mxu0
  %7346 = vmatprep.subr.mxu0 0.0
  %v7347 = vand.u32 %v6911, 4294901760
  %7348 = vmatpush1.msra.mxu0 %v7347
  %7349 = vmatprep.subr.mxu0 0.0
  %v7350 = vand.u32 %v6921, 4294901760
  %7351 = vmatpush1.msra.mxu0 %v7350
  %7352 = vmatprep.subr.mxu0 0.0
  %7353 = vmatpush1.msra.mxu0 0.0
  %7354 = vmatprep.subr.mxu0 0.0
  %7355 = vmatpush1.msra.mxu0 0.0
  %7356 = vmatprep.subr.mxu0 0.0
  %7357 = vmatpush1.msra.mxu0 0.0
  %7358 = vmatprep.subr.mxu0 0.0
  %7359 = vmatpush1.msra.mxu0 0.0
  %7360 = vmatprep.subr.mxu0 0.0
  %7361 = vmatpush1.msra.mxu0 0.0
  %7362 = vmatprep.subr.mxu0 0.0
  %7363 = vmatpush1.msra.mxu0 0.0
  %7364 = vmatprep.subr.mxu0 0.0
  %7365 = vmatpush1.msra.mxu0 0.0
  %7366 = vmatprep.subr.mxu0 0.0
  %7367 = vmatpush1.msra.mxu0 0.0
  %7368 = vmatprep.subr.mxu0 0.0
  %7369 = vmatpush1.msra.mxu0 0.0
  %7370 = vmatprep.subr.mxu0 0.0
  %7371 = vmatpush1.msra.mxu0 0.0
  %7372 = vmatprep.subr.mxu0 0.0
  %7373 = vmatpush1.msra.mxu0 0.0
  %7374 = vmatprep.subr.mxu0 0.0
  %7375 = vmatpush1.msra.mxu0 0.0
  %7376 = vmatprep.subr.mxu0 0.0
  %7377 = vmatpush1.msra.mxu0 0.0
  %7378 = vmatprep.subr.mxu0 0.0
  %7379 = vmatpush1.msra.mxu0 0.0
  %7380 = vmatprep.subr.mxu0 0.0
  %7381 = vmatpush1.msra.mxu0 0.0
  %7382 = vmatprep.subr.mxu0 0.0
  %7383 = vmatpush1.msra.mxu0 0.0
  %7384 = vmatprep.subr.mxu0 0.0
  %7385 = vmatpush1.msra.mxu0 0.0
  %7386 = vmatprep.subr.mxu0 0.0
  %7387 = vmatpush1.msra.mxu0 0.0
  %7388 = vmatprep.subr.mxu0 0.0
  %7389 = vmatpush1.msra.mxu0 0.0
  %7390 = vmatprep.subr.mxu0 0.0
  %7391 = vmatpush1.msra.mxu0 0.0
  %7392 = vmatprep.subr.mxu0 0.0
  %7393 = vmatpush1.msra.mxu0 0.0
  %7394 = vmatprep.subr.mxu0 0.0
  %7395 = vmatpush1.msra.mxu0 0.0
  %7396 = vmatprep.subr.mxu0 0.0
  %7397 = vmatpush1.msra.mxu0 0.0
  %7398 = vmatprep.subr.mxu0 0.0
  %7399 = vmatpush1.msra.mxu0 0.0
  %7400 = vmatprep.subr.mxu0 0.0
  %7401 = vmatpush1.msra.mxu0 0.0
  %7402 = vmatprep.subr.mxu0 0.0
  %7403 = vmatpush1.msra.mxu0 0.0
  %7404 = vmatprep.subr.mxu0 0.0
  %7405 = vmatpush1.msra.mxu0 0.0
  %7406 = vmatprep.subr.mxu0 0.0
  %7407 = vmatpush1.msra.mxu0 0.0
  %7408 = vmatprep.subr.mxu0 0.0
  %7409 = vmatpush1.msra.mxu0 0.0
  %7410 = vmatprep.subr.mxu0 0.0
  %7411 = vmatpush1.msra.mxu0 0.0
  %7412 = vmatprep.mubr.f32.mxu0 0.0
  %v7413 = vand.u32 %v6916, 4294901760
  %7414 = vmatmul.mubr.f32.gmra.mrb[0].mxu0 %v7413
  %v7415 = vpop.f32.mrb[0].mxu0
  %v7416 = vadd.f32 %v7337, %v7415
  %v7417 = vpop.f32.mrb[0].mxu0
  %7418 = vmatprep.mubr.f32.mxu0 0.0
  %v7419 = vand.u32 %v6919, 4294901760
  %7420 = vmatmul.mubr.f32.gmra.mrb[0].mxu0 %v7419
  %v7421 = vpop.f32.mrb[0].mxu0
  %v7422 = vadd.f32 %v7343, %v7421
  %v7423 = vpop.f32.mrb[0].mxu0
  %7424 = vdwg.mxu0
  %7425 = vrot.lane.b32.xlu0 %v5318, 96
  %v7426 = vpop.permute.xlu0 %7425
  %7427 = vrot.lane.b32.xlu0 %v5317, 96
  %v7428 = vpop.permute.xlu0 %7427
  %7429 = vrot.lane.b32.xlu0 %v5318, 32
  %v7430 = vpop.permute.xlu0 %7429
  %7431 = vrot.lane.b32.xlu0 %v5317, 32
  %v7432 = vpop.permute.xlu0 %7431
  %v7433 = vsel %vm1069, %v7426, 0
  %v7435 = vsel %vm1069, %v7428, 0
  %v7437 = vsel %vm1069, %v7430, 0
  %v7439 = vsel %vm1069, %v7432, 0
  %7441 = vmatprep.subr.mxu0 0.0
  %v7442 = vand.u32 %v7437, 4294901760
  %7443 = vmatpush1.xpose.msra.mxu0 %v7442
  %7444 = vmatprep.subr.mxu0 0.0
  %v7445 = vand.u32 %v7439, 4294901760
  %7446 = vmatpush1.xpose.msra.mxu0 %v7445
  %7447 = vmatprep.subr.mxu0 0.0
  %7448 = vmatpush1.xpose.msra.mxu0 0.0
  %7449 = vmatprep.subr.mxu0 0.0
  %7450 = vmatpush1.xpose.msra.mxu0 0.0
  %7451 = vmatprep.subr.mxu0 0.0
  %7452 = vmatpush1.xpose.msra.mxu0 0.0
  %7453 = vmatprep.subr.mxu0 0.0
  %7454 = vmatpush1.xpose.msra.mxu0 0.0
  %7455 = vmatprep.subr.mxu0 0.0
  %7456 = vmatpush1.xpose.msra.mxu0 0.0
  %7457 = vmatprep.subr.mxu0 0.0
  %7458 = vmatpush1.xpose.msra.mxu0 0.0
  %7459 = vmatprep.subr.mxu0 0.0
  %7460 = vmatpush1.xpose.msra.mxu0 0.0
  %7461 = vmatprep.subr.mxu0 0.0
  %7462 = vmatpush1.xpose.msra.mxu0 0.0
  %7463 = vmatprep.subr.mxu0 0.0
  %7464 = vmatpush1.xpose.msra.mxu0 0.0
  %7465 = vmatprep.subr.mxu0 0.0
  %7466 = vmatpush1.xpose.msra.mxu0 0.0
  %7467 = vmatprep.subr.mxu0 0.0
  %7468 = vmatpush1.xpose.msra.mxu0 0.0
  %7469 = vmatprep.subr.mxu0 0.0
  %7470 = vmatpush1.xpose.msra.mxu0 0.0
  %7471 = vmatprep.subr.mxu0 0.0
  %7472 = vmatpush1.xpose.msra.mxu0 0.0
  %7473 = vmatprep.subr.mxu0 0.0
  %7474 = vmatpush1.xpose.msra.mxu0 0.0
  %7475 = vmatprep.subr.mxu0 0.0
  %7476 = vmatpush1.xpose.msra.mxu0 0.0
  %7477 = vmatprep.subr.mxu0 0.0
  %7478 = vmatpush1.xpose.msra.mxu0 0.0
  %7479 = vmatprep.subr.mxu0 0.0
  %7480 = vmatpush1.xpose.msra.mxu0 0.0
  %7481 = vmatprep.subr.mxu0 0.0
  %7482 = vmatpush1.xpose.msra.mxu0 0.0
  %7483 = vmatprep.subr.mxu0 0.0
  %7484 = vmatpush1.xpose.msra.mxu0 0.0
  %7485 = vmatprep.subr.mxu0 0.0
  %7486 = vmatpush1.xpose.msra.mxu0 0.0
  %7487 = vmatprep.subr.mxu0 0.0
  %7488 = vmatpush1.xpose.msra.mxu0 0.0
  %7489 = vmatprep.subr.mxu0 0.0
  %7490 = vmatpush1.xpose.msra.mxu0 0.0
  %7491 = vmatprep.subr.mxu0 0.0
  %7492 = vmatpush1.xpose.msra.mxu0 0.0
  %7493 = vmatprep.subr.mxu0 0.0
  %7494 = vmatpush1.xpose.msra.mxu0 0.0
  %7495 = vmatprep.subr.mxu0 0.0
  %7496 = vmatpush1.xpose.msra.mxu0 0.0
  %7497 = vmatprep.subr.mxu0 0.0
  %7498 = vmatpush1.xpose.msra.mxu0 0.0
  %7499 = vmatprep.subr.mxu0 0.0
  %7500 = vmatpush1.xpose.msra.mxu0 0.0
  %7501 = vmatprep.subr.mxu0 0.0
  %7502 = vmatpush1.xpose.msra.mxu0 0.0
  %7503 = vmatprep.subr.mxu0 0.0
  %7504 = vmatpush1.xpose.msra.mxu0 0.0
  %7505 = vmatprep.subr.mxu0 0.0
  %7506 = vmatpush1.xpose.msra.mxu0 0.0
  %7507 = vmatprep.mubr.f32.mxu0 0.0
  %v7508 = vand.u32 %v7433, 4294901760
  %v7509 = vsub.f32 %v7433, %v7508
  %v7510 = vand.u32 %v7509, 4294901760
  %v7511 = vsub.f32 %v7509, %v7510
  %v7512 = vand.u32 %v7511, 4294901760
  %7513 = vmatmul.mubr.f32.gmra.mrb[0].mxu0 %v7512
  %v7514 = vpop.f32.mrb[0].mxu0
  %v7515 = vadd.f32 0.0, %v7514
  %v7516 = vpop.f32.mrb[0].mxu0
  %7517 = vmatprep.mubr.f32.mxu0 0.0
  %v7518 = vand.u32 %v7435, 4294901760
  %v7519 = vsub.f32 %v7435, %v7518
  %v7520 = vand.u32 %v7519, 4294901760
  %v7521 = vsub.f32 %v7519, %v7520
  %v7522 = vand.u32 %v7521, 4294901760
  %7523 = vmatmul.mubr.f32.gmra.mrb[0].mxu0 %v7522
  %v7524 = vpop.f32.mrb[0].mxu0
  %v7525 = vadd.f32 0.0, %v7524
  %v7526 = vpop.f32.mrb[0].mxu0
  %7527 = vdwg.mxu0
  %7528 = vmatprep.subr.mxu0 0.0
  %v7529 = vand.u32 %v7437, 4294901760
  %v7530 = vsub.f32 %v7437, %v7529
  %v7531 = vand.u32 %v7530, 4294901760
  %v7532 = vsub.f32 %v7530, %v7531
  %v7533 = vand.u32 %v7532, 4294901760
  %7534 = vmatpush1.xpose.msra.mxu0 %v7533
  %7535 = vmatprep.subr.mxu0 0.0
  %v7536 = vand.u32 %v7439, 4294901760
  %v7537 = vsub.f32 %v7439, %v7536
  %v7538 = vand.u32 %v7537, 4294901760
  %v7539 = vsub.f32 %v7537, %v7538
  %v7540 = vand.u32 %v7539, 4294901760
  %7541 = vmatpush1.xpose.msra.mxu0 %v7540
  %7542 = vmatprep.subr.mxu0 0.0
  %7543 = vmatpush1.xpose.msra.mxu0 0.0
  %7544 = vmatprep.subr.mxu0 0.0
  %7545 = vmatpush1.xpose.msra.mxu0 0.0
  %7546 = vmatprep.subr.mxu0 0.0
  %7547 = vmatpush1.xpose.msra.mxu0 0.0
  %7548 = vmatprep.subr.mxu0 0.0
  %7549 = vmatpush1.xpose.msra.mxu0 0.0
  %7550 = vmatprep.subr.mxu0 0.0
  %7551 = vmatpush1.xpose.msra.mxu0 0.0
  %7552 = vmatprep.subr.mxu0 0.0
  %7553 = vmatpush1.xpose.msra.mxu0 0.0
  %7554 = vmatprep.subr.mxu0 0.0
  %7555 = vmatpush1.xpose.msra.mxu0 0.0
  %7556 = vmatprep.subr.mxu0 0.0
  %7557 = vmatpush1.xpose.msra.mxu0 0.0
  %7558 = vmatprep.subr.mxu0 0.0
  %7559 = vmatpush1.xpose.msra.mxu0 0.0
  %7560 = vmatprep.subr.mxu0 0.0
  %7561 = vmatpush1.xpose.msra.mxu0 0.0
  %7562 = vmatprep.subr.mxu0 0.0
  %7563 = vmatpush1.xpose.msra.mxu0 0.0
  %7564 = vmatprep.subr.mxu0 0.0
  %7565 = vmatpush1.xpose.msra.mxu0 0.0
  %7566 = vmatprep.subr.mxu0 0.0
  %7567 = vmatpush1.xpose.msra.mxu0 0.0
  %7568 = vmatprep.subr.mxu0 0.0
  %7569 = vmatpush1.xpose.msra.mxu0 0.0
  %7570 = vmatprep.subr.mxu0 0.0
  %7571 = vmatpush1.xpose.msra.mxu0 0.0
  %7572 = vmatprep.subr.mxu0 0.0
  %7573 = vmatpush1.xpose.msra.mxu0 0.0
  %7574 = vmatprep.subr.mxu0 0.0
  %7575 = vmatpush1.xpose.msra.mxu0 0.0
  %7576 = vmatprep.subr.mxu0 0.0
  %7577 = vmatpush1.xpose.msra.mxu0 0.0
  %7578 = vmatprep.subr.mxu0 0.0
  %7579 = vmatpush1.xpose.msra.mxu0 0.0
  %7580 = vmatprep.subr.mxu0 0.0
  %7581 = vmatpush1.xpose.msra.mxu0 0.0
  %7582 = vmatprep.subr.mxu0 0.0
  %7583 = vmatpush1.xpose.msra.mxu0 0.0
  %7584 = vmatprep.subr.mxu0 0.0
  %7585 = vmatpush1.xpose.msra.mxu0 0.0
  %7586 = vmatprep.subr.mxu0 0.0
  %7587 = vmatpush1.xpose.msra.mxu0 0.0
  %7588 = vmatprep.subr.mxu0 0.0
  %7589 = vmatpush1.xpose.msra.mxu0 0.0
  %7590 = vmatprep.subr.mxu0 0.0
  %7591 = vmatpush1.xpose.msra.mxu0 0.0
  %7592 = vmatprep.subr.mxu0 0.0
  %7593 = vmatpush1.xpose.msra.mxu0 0.0
  %7594 = vmatprep.subr.mxu0 0.0
  %7595 = vmatpush1.xpose.msra.mxu0 0.0
  %7596 = vmatprep.subr.mxu0 0.0
  %7597 = vmatpush1.xpose.msra.mxu0 0.0
  %7598 = vmatprep.subr.mxu0 0.0
  %7599 = vmatpush1.xpose.msra.mxu0 0.0
  %7600 = vmatprep.subr.mxu0 0.0
  %7601 = vmatpush1.xpose.msra.mxu0 0.0
  %7602 = vmatprep.mubr.f32.mxu0 0.0
  %v7603 = vand.u32 %v7433, 4294901760
  %7604 = vmatmul.mubr.f32.gmra.mrb[0].mxu0 %v7603
  %v7605 = vpop.f32.mrb[0].mxu0
  %v7606 = vadd.f32 %v7515, %v7605
  %v7607 = vpop.f32.mrb[0].mxu0
  %7608 = vmatprep.mubr.f32.mxu0 0.0
  %v7609 = vand.u32 %v7435, 4294901760
  %7610 = vmatmul.mubr.f32.gmra.mrb[0].mxu0 %v7609
  %v7611 = vpop.f32.mrb[0].mxu0
  %v7612 = vadd.f32 %v7525, %v7611
  %v7613 = vpop.f32.mrb[0].mxu0
  %7614 = vdwg.mxu0
  %7615 = vmatprep.subr.mxu0 0.0
  %v7616 = vand.u32 %v7437, 4294901760
  %v7617 = vsub.f32 %v7437, %v7616
  %7618 = vmatpush1.xpose.msra.mxu0 %v7617
  %7619 = vmatprep.subr.mxu0 0.0
  %v7620 = vand.u32 %v7439, 4294901760
  %v7621 = vsub.f32 %v7439, %v7620
  %7622 = vmatpush1.xpose.msra.mxu0 %v7621
  %7623 = vmatprep.subr.mxu0 0.0
  %7624 = vmatpush1.xpose.msra.mxu0 0.0
  %7625 = vmatprep.subr.mxu0 0.0
  %7626 = vmatpush1.xpose.msra.mxu0 0.0
  %7627 = vmatprep.subr.mxu0 0.0
  %7628 = vmatpush1.xpose.msra.mxu0 0.0
  %7629 = vmatprep.subr.mxu0 0.0
  %7630 = vmatpush1.xpose.msra.mxu0 0.0
  %7631 = vmatprep.subr.mxu0 0.0
  %7632 = vmatpush1.xpose.msra.mxu0 0.0
  %7633 = vmatprep.subr.mxu0 0.0
  %7634 = vmatpush1.xpose.msra.mxu0 0.0
  %7635 = vmatprep.subr.mxu0 0.0
  %7636 = vmatpush1.xpose.msra.mxu0 0.0
  %7637 = vmatprep.subr.mxu0 0.0
  %7638 = vmatpush1.xpose.msra.mxu0 0.0
  %7639 = vmatprep.subr.mxu0 0.0
  %7640 = vmatpush1.xpose.msra.mxu0 0.0
  %7641 = vmatprep.subr.mxu0 0.0
  %7642 = vmatpush1.xpose.msra.mxu0 0.0
  %7643 = vmatprep.subr.mxu0 0.0
  %7644 = vmatpush1.xpose.msra.mxu0 0.0
  %7645 = vmatprep.subr.mxu0 0.0
  %7646 = vmatpush1.xpose.msra.mxu0 0.0
  %7647 = vmatprep.subr.mxu0 0.0
  %7648 = vmatpush1.xpose.msra.mxu0 0.0
  %7649 = vmatprep.subr.mxu0 0.0
  %7650 = vmatpush1.xpose.msra.mxu0 0.0
  %7651 = vmatprep.subr.mxu0 0.0
  %7652 = vmatpush1.xpose.msra.mxu0 0.0
  %7653 = vmatprep.subr.mxu0 0.0
  %7654 = vmatpush1.xpose.msra.mxu0 0.0
  %7655 = vmatprep.subr.mxu0 0.0
  %7656 = vmatpush1.xpose.msra.mxu0 0.0
  %7657 = vmatprep.subr.mxu0 0.0
  %7658 = vmatpush1.xpose.msra.mxu0 0.0
  %7659 = vmatprep.subr.mxu0 0.0
  %7660 = vmatpush1.xpose.msra.mxu0 0.0
  %7661 = vmatprep.subr.mxu0 0.0
  %7662 = vmatpush1.xpose.msra.mxu0 0.0
  %7663 = vmatprep.subr.mxu0 0.0
  %7664 = vmatpush1.xpose.msra.mxu0 0.0
  %7665 = vmatprep.subr.mxu0 0.0
  %7666 = vmatpush1.xpose.msra.mxu0 0.0
  %7667 = vmatprep.subr.mxu0 0.0
  %7668 = vmatpush1.xpose.msra.mxu0 0.0
  %7669 = vmatprep.subr.mxu0 0.0
  %7670 = vmatpush1.xpose.msra.mxu0 0.0
  %7671 = vmatprep.subr.mxu0 0.0
  %7672 = vmatpush1.xpose.msra.mxu0 0.0
  %7673 = vmatprep.subr.mxu0 0.0
  %7674 = vmatpush1.xpose.msra.mxu0 0.0
  %7675 = vmatprep.subr.mxu0 0.0
  %7676 = vmatpush1.xpose.msra.mxu0 0.0
  %7677 = vmatprep.subr.mxu0 0.0
  %7678 = vmatpush1.xpose.msra.mxu0 0.0
  %7679 = vmatprep.subr.mxu0 0.0
  %7680 = vmatpush1.xpose.msra.mxu0 0.0
  %7681 = vmatprep.subr.mxu0 0.0
  %7682 = vmatpush1.xpose.msra.mxu0 0.0
  %7683 = vmatprep.mubr.f32.mxu0 0.0
  %v7684 = vand.u32 %v7433, 4294901760
  %v7685 = vsub.f32 %v7433, %v7684
  %7686 = vmatmul.mubr.f32.gmra.mrb[0].mxu0 %v7685
  %v7687 = vpop.f32.mrb[0].mxu0
  %v7688 = vadd.f32 %v7606, %v7687
  %v7689 = vpop.f32.mrb[0].mxu0
  %7690 = vmatprep.mubr.f32.mxu0 0.0
  %v7691 = vand.u32 %v7435, 4294901760
  %v7692 = vsub.f32 %v7435, %v7691
  %7693 = vmatmul.mubr.f32.gmra.mrb[0].mxu0 %v7692
  %v7694 = vpop.f32.mrb[0].mxu0
  %v7695 = vadd.f32 %v7612, %v7694
  %v7696 = vpop.f32.mrb[0].mxu0
  %7697 = vdwg.mxu0
  %7698 = vmatprep.subr.mxu0 0.0
  %v7699 = vand.u32 %v7437, 4294901760
  %7700 = vmatpush1.xpose.msra.mxu0 %v7699
  %7701 = vmatprep.subr.mxu0 0.0
  %v7702 = vand.u32 %v7439, 4294901760
  %7703 = vmatpush1.xpose.msra.mxu0 %v7702
  %7704 = vmatprep.subr.mxu0 0.0
  %7705 = vmatpush1.xpose.msra.mxu0 0.0
  %7706 = vmatprep.subr.mxu0 0.0
  %7707 = vmatpush1.xpose.msra.mxu0 0.0
  %7708 = vmatprep.subr.mxu0 0.0
  %7709 = vmatpush1.xpose.msra.mxu0 0.0
  %7710 = vmatprep.subr.mxu0 0.0
  %7711 = vmatpush1.xpose.msra.mxu0 0.0
  %7712 = vmatprep.subr.mxu0 0.0
  %7713 = vmatpush1.xpose.msra.mxu0 0.0
  %7714 = vmatprep.subr.mxu0 0.0
  %7715 = vmatpush1.xpose.msra.mxu0 0.0
  %7716 = vmatprep.subr.mxu0 0.0
  %7717 = vmatpush1.xpose.msra.mxu0 0.0
  %7718 = vmatprep.subr.mxu0 0.0
  %7719 = vmatpush1.xpose.msra.mxu0 0.0
  %7720 = vmatprep.subr.mxu0 0.0
  %7721 = vmatpush1.xpose.msra.mxu0 0.0
  %7722 = vmatprep.subr.mxu0 0.0
  %7723 = vmatpush1.xpose.msra.mxu0 0.0
  %7724 = vmatprep.subr.mxu0 0.0
  %7725 = vmatpush1.xpose.msra.mxu0 0.0
  %7726 = vmatprep.subr.mxu0 0.0
  %7727 = vmatpush1.xpose.msra.mxu0 0.0
  %7728 = vmatprep.subr.mxu0 0.0
  %7729 = vmatpush1.xpose.msra.mxu0 0.0
  %7730 = vmatprep.subr.mxu0 0.0
  %7731 = vmatpush1.xpose.msra.mxu0 0.0
  %7732 = vmatprep.subr.mxu0 0.0
  %7733 = vmatpush1.xpose.msra.mxu0 0.0
  %7734 = vmatprep.subr.mxu0 0.0
  %7735 = vmatpush1.xpose.msra.mxu0 0.0
  %7736 = vmatprep.subr.mxu0 0.0
  %7737 = vmatpush1.xpose.msra.mxu0 0.0
  %7738 = vmatprep.subr.mxu0 0.0
  %7739 = vmatpush1.xpose.msra.mxu0 0.0
  %7740 = vmatprep.subr.mxu0 0.0
  %7741 = vmatpush1.xpose.msra.mxu0 0.0
  %7742 = vmatprep.subr.mxu0 0.0
  %7743 = vmatpush1.xpose.msra.mxu0 0.0
  %7744 = vmatprep.subr.mxu0 0.0
  %7745 = vmatpush1.xpose.msra.mxu0 0.0
  %7746 = vmatprep.subr.mxu0 0.0
  %7747 = vmatpush1.xpose.msra.mxu0 0.0
  %7748 = vmatprep.subr.mxu0 0.0
  %7749 = vmatpush1.xpose.msra.mxu0 0.0
  %7750 = vmatprep.subr.mxu0 0.0
  %7751 = vmatpush1.xpose.msra.mxu0 0.0
  %7752 = vmatprep.subr.mxu0 0.0
  %7753 = vmatpush1.xpose.msra.mxu0 0.0
  %7754 = vmatprep.subr.mxu0 0.0
  %7755 = vmatpush1.xpose.msra.mxu0 0.0
  %7756 = vmatprep.subr.mxu0 0.0
  %7757 = vmatpush1.xpose.msra.mxu0 0.0
  %7758 = vmatprep.subr.mxu0 0.0
  %7759 = vmatpush1.xpose.msra.mxu0 0.0
  %7760 = vmatprep.subr.mxu0 0.0
  %7761 = vmatpush1.xpose.msra.mxu0 0.0
  %7762 = vmatprep.subr.mxu0 0.0
  %7763 = vmatpush1.xpose.msra.mxu0 0.0
  %7764 = vmatprep.mubr.f32.mxu0 0.0
  %v7765 = vand.u32 %v7433, 4294901760
  %v7766 = vsub.f32 %v7433, %v7765
  %v7767 = vand.u32 %v7766, 4294901760
  %7768 = vmatmul.mubr.f32.gmra.mrb[0].mxu0 %v7767
  %v7769 = vpop.f32.mrb[0].mxu0
  %v7770 = vadd.f32 %v7688, %v7769
  %v7771 = vpop.f32.mrb[0].mxu0
  %7772 = vmatprep.mubr.f32.mxu0 0.0
  %v7773 = vand.u32 %v7435, 4294901760
  %v7774 = vsub.f32 %v7435, %v7773
  %v7775 = vand.u32 %v7774, 4294901760
  %7776 = vmatmul.mubr.f32.gmra.mrb[0].mxu0 %v7775
  %v7777 = vpop.f32.mrb[0].mxu0
  %v7778 = vadd.f32 %v7695, %v7777
  %v7779 = vpop.f32.mrb[0].mxu0
  %7780 = vdwg.mxu0
  %7781 = vmatprep.subr.mxu0 0.0
  %v7782 = vand.u32 %v7437, 4294901760
  %v7783 = vsub.f32 %v7437, %v7782
  %v7784 = vand.u32 %v7783, 4294901760
  %7785 = vmatpush1.xpose.msra.mxu0 %v7784
  %7786 = vmatprep.subr.mxu0 0.0
  %v7787 = vand.u32 %v7439, 4294901760
  %v7788 = vsub.f32 %v7439, %v7787
  %v7789 = vand.u32 %v7788, 4294901760
  %7790 = vmatpush1.xpose.msra.mxu0 %v7789
  %7791 = vmatprep.subr.mxu0 0.0
  %7792 = vmatpush1.xpose.msra.mxu0 0.0
  %7793 = vmatprep.subr.mxu0 0.0
  %7794 = vmatpush1.xpose.msra.mxu0 0.0
  %7795 = vmatprep.subr.mxu0 0.0
  %7796 = vmatpush1.xpose.msra.mxu0 0.0
  %7797 = vmatprep.subr.mxu0 0.0
  %7798 = vmatpush1.xpose.msra.mxu0 0.0
  %7799 = vmatprep.subr.mxu0 0.0
  %7800 = vmatpush1.xpose.msra.mxu0 0.0
  %7801 = vmatprep.subr.mxu0 0.0
  %7802 = vmatpush1.xpose.msra.mxu0 0.0
  %7803 = vmatprep.subr.mxu0 0.0
  %7804 = vmatpush1.xpose.msra.mxu0 0.0
  %7805 = vmatprep.subr.mxu0 0.0
  %7806 = vmatpush1.xpose.msra.mxu0 0.0
  %7807 = vmatprep.subr.mxu0 0.0
  %7808 = vmatpush1.xpose.msra.mxu0 0.0
  %7809 = vmatprep.subr.mxu0 0.0
  %7810 = vmatpush1.xpose.msra.mxu0 0.0
  %7811 = vmatprep.subr.mxu0 0.0
  %7812 = vmatpush1.xpose.msra.mxu0 0.0
  %7813 = vmatprep.subr.mxu0 0.0
  %7814 = vmatpush1.xpose.msra.mxu0 0.0
  %7815 = vmatprep.subr.mxu0 0.0
  %7816 = vmatpush1.xpose.msra.mxu0 0.0
  %7817 = vmatprep.subr.mxu0 0.0
  %7818 = vmatpush1.xpose.msra.mxu0 0.0
  %7819 = vmatprep.subr.mxu0 0.0
  %7820 = vmatpush1.xpose.msra.mxu0 0.0
  %7821 = vmatprep.subr.mxu0 0.0
  %7822 = vmatpush1.xpose.msra.mxu0 0.0
  %7823 = vmatprep.subr.mxu0 0.0
  %7824 = vmatpush1.xpose.msra.mxu0 0.0
  %7825 = vmatprep.subr.mxu0 0.0
  %7826 = vmatpush1.xpose.msra.mxu0 0.0
  %7827 = vmatprep.subr.mxu0 0.0
  %7828 = vmatpush1.xpose.msra.mxu0 0.0
  %7829 = vmatprep.subr.mxu0 0.0
  %7830 = vmatpush1.xpose.msra.mxu0 0.0
  %7831 = vmatprep.subr.mxu0 0.0
  %7832 = vmatpush1.xpose.msra.mxu0 0.0
  %7833 = vmatprep.subr.mxu0 0.0
  %7834 = vmatpush1.xpose.msra.mxu0 0.0
  %7835 = vmatprep.subr.mxu0 0.0
  %7836 = vmatpush1.xpose.msra.mxu0 0.0
  %7837 = vmatprep.subr.mxu0 0.0
  %7838 = vmatpush1.xpose.msra.mxu0 0.0
  %7839 = vmatprep.subr.mxu0 0.0
  %7840 = vmatpush1.xpose.msra.mxu0 0.0
  %7841 = vmatprep.subr.mxu0 0.0
  %7842 = vmatpush1.xpose.msra.mxu0 0.0
  %7843 = vmatprep.subr.mxu0 0.0
  %7844 = vmatpush1.xpose.msra.mxu0 0.0
  %7845 = vmatprep.subr.mxu0 0.0
  %7846 = vmatpush1.xpose.msra.mxu0 0.0
  %7847 = vmatprep.subr.mxu0 0.0
  %7848 = vmatpush1.xpose.msra.mxu0 0.0
  %7849 = vmatprep.subr.mxu0 0.0
  %7850 = vmatpush1.xpose.msra.mxu0 0.0
  %7851 = vmatprep.mubr.f32.mxu0 0.0
  %v7852 = vand.u32 %v7433, 4294901760
  %7853 = vmatmul.mubr.f32.gmra.mrb[0].mxu0 %v7852
  %v7854 = vpop.f32.mrb[0].mxu0
  %v7855 = vadd.f32 %v7770, %v7854
  %v7856 = vpop.f32.mrb[0].mxu0
  %7857 = vmatprep.mubr.f32.mxu0 0.0
  %v7858 = vand.u32 %v7435, 4294901760
  %7859 = vmatmul.mubr.f32.gmra.mrb[0].mxu0 %v7858
  %v7860 = vpop.f32.mrb[0].mxu0
  %v7861 = vadd.f32 %v7778, %v7860
  %v7862 = vpop.f32.mrb[0].mxu0
  %7863 = vdwg.mxu0
  %7864 = vmatprep.subr.mxu0 0.0
  %v7865 = vand.u32 %v7437, 4294901760
  %7866 = vmatpush1.xpose.msra.mxu0 %v7865
  %7867 = vmatprep.subr.mxu0 0.0
  %v7868 = vand.u32 %v7439, 4294901760
  %7869 = vmatpush1.xpose.msra.mxu0 %v7868
  %7870 = vmatprep.subr.mxu0 0.0
  %7871 = vmatpush1.xpose.msra.mxu0 0.0
  %7872 = vmatprep.subr.mxu0 0.0
  %7873 = vmatpush1.xpose.msra.mxu0 0.0
  %7874 = vmatprep.subr.mxu0 0.0
  %7875 = vmatpush1.xpose.msra.mxu0 0.0
  %7876 = vmatprep.subr.mxu0 0.0
  %7877 = vmatpush1.xpose.msra.mxu0 0.0
  %7878 = vmatprep.subr.mxu0 0.0
  %7879 = vmatpush1.xpose.msra.mxu0 0.0
  %7880 = vmatprep.subr.mxu0 0.0
  %7881 = vmatpush1.xpose.msra.mxu0 0.0
  %7882 = vmatprep.subr.mxu0 0.0
  %7883 = vmatpush1.xpose.msra.mxu0 0.0
  %7884 = vmatprep.subr.mxu0 0.0
  %7885 = vmatpush1.xpose.msra.mxu0 0.0
  %7886 = vmatprep.subr.mxu0 0.0
  %7887 = vmatpush1.xpose.msra.mxu0 0.0
  %7888 = vmatprep.subr.mxu0 0.0
  %7889 = vmatpush1.xpose.msra.mxu0 0.0
  %7890 = vmatprep.subr.mxu0 0.0
  %7891 = vmatpush1.xpose.msra.mxu0 0.0
  %7892 = vmatprep.subr.mxu0 0.0
  %7893 = vmatpush1.xpose.msra.mxu0 0.0
  %7894 = vmatprep.subr.mxu0 0.0
  %7895 = vmatpush1.xpose.msra.mxu0 0.0
  %7896 = vmatprep.subr.mxu0 0.0
  %7897 = vmatpush1.xpose.msra.mxu0 0.0
  %7898 = vmatprep.subr.mxu0 0.0
  %7899 = vmatpush1.xpose.msra.mxu0 0.0
  %7900 = vmatprep.subr.mxu0 0.0
  %7901 = vmatpush1.xpose.msra.mxu0 0.0
  %7902 = vmatprep.subr.mxu0 0.0
  %7903 = vmatpush1.xpose.msra.mxu0 0.0
  %7904 = vmatprep.subr.mxu0 0.0
  %7905 = vmatpush1.xpose.msra.mxu0 0.0
  %7906 = vmatprep.subr.mxu0 0.0
  %7907 = vmatpush1.xpose.msra.mxu0 0.0
  %7908 = vmatprep.subr.mxu0 0.0
  %7909 = vmatpush1.xpose.msra.mxu0 0.0
  %7910 = vmatprep.subr.mxu0 0.0
  %7911 = vmatpush1.xpose.msra.mxu0 0.0
  %7912 = vmatprep.subr.mxu0 0.0
  %7913 = vmatpush1.xpose.msra.mxu0 0.0
  %7914 = vmatprep.subr.mxu0 0.0
  %7915 = vmatpush1.xpose.msra.mxu0 0.0
  %7916 = vmatprep.subr.mxu0 0.0
  %7917 = vmatpush1.xpose.msra.mxu0 0.0
  %7918 = vmatprep.subr.mxu0 0.0
  %7919 = vmatpush1.xpose.msra.mxu0 0.0
  %7920 = vmatprep.subr.mxu0 0.0
  %7921 = vmatpush1.xpose.msra.mxu0 0.0
  %7922 = vmatprep.subr.mxu0 0.0
  %7923 = vmatpush1.xpose.msra.mxu0 0.0
  %7924 = vmatprep.subr.mxu0 0.0
  %7925 = vmatpush1.xpose.msra.mxu0 0.0
  %7926 = vmatprep.subr.mxu0 0.0
  %7927 = vmatpush1.xpose.msra.mxu0 0.0
  %7928 = vmatprep.subr.mxu0 0.0
  %7929 = vmatpush1.xpose.msra.mxu0 0.0
  %7930 = vmatprep.mubr.f32.mxu0 0.0
  %v7931 = vand.u32 %v7433, 4294901760
  %7932 = vmatmul.mubr.f32.gmra.mrb[0].mxu0 %v7931
  %v7933 = vpop.f32.mrb[0].mxu0
  %v7934 = vadd.f32 %v7855, %v7933
  %v7935 = vpop.f32.mrb[0].mxu0
  %7936 = vmatprep.mubr.f32.mxu0 0.0
  %v7937 = vand.u32 %v7435, 4294901760
  %7938 = vmatmul.mubr.f32.gmra.mrb[0].mxu0 %v7937
  %v7939 = vpop.f32.mrb[0].mxu0
  %v7940 = vadd.f32 %v7861, %v7939
  %v7941 = vpop.f32.mrb[0].mxu0
  %7942 = vdwg.mxu0
  %v7943 = vsel %vm1580, %v7934, -inf
  %7944 = vmax.xlane.f32.xlu0 %v7943
  %v7945 = vpop.xlane.xlu0 %7944
  %v7946 = vsel %vm1584, %v7940, -inf
  %7947 = vmax.xlane.f32.xlu0 %v7946
  %v7948 = vpop.xlane.xlu0 %7947
  %v7949 = vsub.f32 %v7934, %v7945
  %v7950 = vsub.f32 %v7940, %v7948
  %v7951 = vmul.f32 %v7949, 1.442695
  %v7952 = vpow.pop %v7951
  %v7953 = vmul.f32 %v7950, 1.442695
  %v7954 = vpow.pop %v7953
  %v7955 = vsel %vm1580, %v7952, 0.0
  %7956 = vadd.xlane.f32.xlu0 %v7955
  %v7957 = vpop.xlane.xlu0 %7956
  %v7958 = vsel %vm1584, %v7954, 0.0
  %7959 = vadd.xlane.f32.xlu0 %v7958
  %v7960 = vpop.xlane.xlu0 %7959
  %v7961 = vrcp.pop %v7957
  %v7962 = vmul.f32 %v7952, %v7961
  %v7963 = vrcp.pop %v7960
  %v7964 = vmul.f32 %v7954, %v7963
  %7965 = vrot.lane.b32.xlu0 %v5858, 96
  %v7966 = vpop.permute.xlu0 %7965
  %7967 = vrot.lane.b32.xlu0 %v5857, 96
  %v7968 = vpop.permute.xlu0 %7967
  %v7971 = vsel %vm1580, %v7962, 0
  %v7974 = vsel %vm1580, %v7964, 0
  %v7976 = vsel %vm1610, %v7968, 0
  %7978 = vmatprep.subr.mxu0 0.0
  %v7979 = vand.u32 %v7966, 4294901760
  %7980 = vmatpush1.msra.mxu0 %v7979
  %7981 = vmatprep.subr.mxu0 0.0
  %v7982 = vand.u32 %v7976, 4294901760
  %7983 = vmatpush1.msra.mxu0 %v7982
  %7984 = vmatprep.subr.mxu0 0.0
  %7985 = vmatpush1.msra.mxu0 0.0
  %7986 = vmatprep.subr.mxu0 0.0
  %7987 = vmatpush1.msra.mxu0 0.0
  %7988 = vmatprep.subr.mxu0 0.0
  %7989 = vmatpush1.msra.mxu0 0.0
  %7990 = vmatprep.subr.mxu0 0.0
  %7991 = vmatpush1.msra.mxu0 0.0
  %7992 = vmatprep.subr.mxu0 0.0
  %7993 = vmatpush1.msra.mxu0 0.0
  %7994 = vmatprep.subr.mxu0 0.0
  %7995 = vmatpush1.msra.mxu0 0.0
  %7996 = vmatprep.subr.mxu0 0.0
  %7997 = vmatpush1.msra.mxu0 0.0
  %7998 = vmatprep.subr.mxu0 0.0
  %7999 = vmatpush1.msra.mxu0 0.0
  %8000 = vmatprep.subr.mxu0 0.0
  %8001 = vmatpush1.msra.mxu0 0.0
  %8002 = vmatprep.subr.mxu0 0.0
  %8003 = vmatpush1.msra.mxu0 0.0
  %8004 = vmatprep.subr.mxu0 0.0
  %8005 = vmatpush1.msra.mxu0 0.0
  %8006 = vmatprep.subr.mxu0 0.0
  %8007 = vmatpush1.msra.mxu0 0.0
  %8008 = vmatprep.subr.mxu0 0.0
  %8009 = vmatpush1.msra.mxu0 0.0
  %8010 = vmatprep.subr.mxu0 0.0
  %8011 = vmatpush1.msra.mxu0 0.0
  %8012 = vmatprep.subr.mxu0 0.0
  %8013 = vmatpush1.msra.mxu0 0.0
  %8014 = vmatprep.subr.mxu0 0.0
  %8015 = vmatpush1.msra.mxu0 0.0
  %8016 = vmatprep.subr.mxu0 0.0
  %8017 = vmatpush1.msra.mxu0 0.0
  %8018 = vmatprep.subr.mxu0 0.0
  %8019 = vmatpush1.msra.mxu0 0.0
  %8020 = vmatprep.subr.mxu0 0.0
  %8021 = vmatpush1.msra.mxu0 0.0
  %8022 = vmatprep.subr.mxu0 0.0
  %8023 = vmatpush1.msra.mxu0 0.0
  %8024 = vmatprep.subr.mxu0 0.0
  %8025 = vmatpush1.msra.mxu0 0.0
  %8026 = vmatprep.subr.mxu0 0.0
  %8027 = vmatpush1.msra.mxu0 0.0
  %8028 = vmatprep.subr.mxu0 0.0
  %8029 = vmatpush1.msra.mxu0 0.0
  %8030 = vmatprep.subr.mxu0 0.0
  %8031 = vmatpush1.msra.mxu0 0.0
  %8032 = vmatprep.subr.mxu0 0.0
  %8033 = vmatpush1.msra.mxu0 0.0
  %8034 = vmatprep.subr.mxu0 0.0
  %8035 = vmatpush1.msra.mxu0 0.0
  %8036 = vmatprep.subr.mxu0 0.0
  %8037 = vmatpush1.msra.mxu0 0.0
  %8038 = vmatprep.subr.mxu0 0.0
  %8039 = vmatpush1.msra.mxu0 0.0
  %8040 = vmatprep.subr.mxu0 0.0
  %8041 = vmatpush1.msra.mxu0 0.0
  %8042 = vmatprep.subr.mxu0 0.0
  %8043 = vmatpush1.msra.mxu0 0.0
  %8044 = vmatprep.mubr.f32.mxu0 0.0
  %v8045 = vand.u32 %v7971, 4294901760
  %v8046 = vsub.f32 %v7971, %v8045
  %v8047 = vand.u32 %v8046, 4294901760
  %v8048 = vsub.f32 %v8046, %v8047
  %v8049 = vand.u32 %v8048, 4294901760
  %8050 = vmatmul.mubr.f32.gmra.mrb[0].mxu0 %v8049
  %v8051 = vpop.f32.mrb[0].mxu0
  %v8052 = vadd.f32 0.0, %v8051
  %v8053 = vpop.f32.mrb[0].mxu0
  %8054 = vmatprep.mubr.f32.mxu0 0.0
  %v8055 = vand.u32 %v7974, 4294901760
  %v8056 = vsub.f32 %v7974, %v8055
  %v8057 = vand.u32 %v8056, 4294901760
  %v8058 = vsub.f32 %v8056, %v8057
  %v8059 = vand.u32 %v8058, 4294901760
  %8060 = vmatmul.mubr.f32.gmra.mrb[0].mxu0 %v8059
  %v8061 = vpop.f32.mrb[0].mxu0
  %v8062 = vadd.f32 0.0, %v8061
  %v8063 = vpop.f32.mrb[0].mxu0
  %8064 = vdwg.mxu0
  %8065 = vmatprep.subr.mxu0 0.0
  %v8066 = vand.u32 %v7966, 4294901760
  %v8067 = vsub.f32 %v7966, %v8066
  %v8068 = vand.u32 %v8067, 4294901760
  %v8069 = vsub.f32 %v8067, %v8068
  %v8070 = vand.u32 %v8069, 4294901760
  %8071 = vmatpush1.msra.mxu0 %v8070
  %8072 = vmatprep.subr.mxu0 0.0
  %v8073 = vand.u32 %v7976, 4294901760
  %v8074 = vsub.f32 %v7976, %v8073
  %v8075 = vand.u32 %v8074, 4294901760
  %v8076 = vsub.f32 %v8074, %v8075
  %v8077 = vand.u32 %v8076, 4294901760
  %8078 = vmatpush1.msra.mxu0 %v8077
  %8079 = vmatprep.subr.mxu0 0.0
  %8080 = vmatpush1.msra.mxu0 0.0
  %8081 = vmatprep.subr.mxu0 0.0
  %8082 = vmatpush1.msra.mxu0 0.0
  %8083 = vmatprep.subr.mxu0 0.0
  %8084 = vmatpush1.msra.mxu0 0.0
  %8085 = vmatprep.subr.mxu0 0.0
  %8086 = vmatpush1.msra.mxu0 0.0
  %8087 = vmatprep.subr.mxu0 0.0
  %8088 = vmatpush1.msra.mxu0 0.0
  %8089 = vmatprep.subr.mxu0 0.0
  %8090 = vmatpush1.msra.mxu0 0.0
  %8091 = vmatprep.subr.mxu0 0.0
  %8092 = vmatpush1.msra.mxu0 0.0
  %8093 = vmatprep.subr.mxu0 0.0
  %8094 = vmatpush1.msra.mxu0 0.0
  %8095 = vmatprep.subr.mxu0 0.0
  %8096 = vmatpush1.msra.mxu0 0.0
  %8097 = vmatprep.subr.mxu0 0.0
  %8098 = vmatpush1.msra.mxu0 0.0
  %8099 = vmatprep.subr.mxu0 0.0
  %8100 = vmatpush1.msra.mxu0 0.0
  %8101 = vmatprep.subr.mxu0 0.0
  %8102 = vmatpush1.msra.mxu0 0.0
  %8103 = vmatprep.subr.mxu0 0.0
  %8104 = vmatpush1.msra.mxu0 0.0
  %8105 = vmatprep.subr.mxu0 0.0
  %8106 = vmatpush1.msra.mxu0 0.0
  %8107 = vmatprep.subr.mxu0 0.0
  %8108 = vmatpush1.msra.mxu0 0.0
  %8109 = vmatprep.subr.mxu0 0.0
  %8110 = vmatpush1.msra.mxu0 0.0
  %8111 = vmatprep.subr.mxu0 0.0
  %8112 = vmatpush1.msra.mxu0 0.0
  %8113 = vmatprep.subr.mxu0 0.0
  %8114 = vmatpush1.msra.mxu0 0.0
  %8115 = vmatprep.subr.mxu0 0.0
  %8116 = vmatpush1.msra.mxu0 0.0
  %8117 = vmatprep.subr.mxu0 0.0
  %8118 = vmatpush1.msra.mxu0 0.0
  %8119 = vmatprep.subr.mxu0 0.0
  %8120 = vmatpush1.msra.mxu0 0.0
  %8121 = vmatprep.subr.mxu0 0.0
  %8122 = vmatpush1.msra.mxu0 0.0
  %8123 = vmatprep.subr.mxu0 0.0
  %8124 = vmatpush1.msra.mxu0 0.0
  %8125 = vmatprep.subr.mxu0 0.0
  %8126 = vmatpush1.msra.mxu0 0.0
  %8127 = vmatprep.subr.mxu0 0.0
  %8128 = vmatpush1.msra.mxu0 0.0
  %8129 = vmatprep.subr.mxu0 0.0
  %8130 = vmatpush1.msra.mxu0 0.0
  %8131 = vmatprep.subr.mxu0 0.0
  %8132 = vmatpush1.msra.mxu0 0.0
  %8133 = vmatprep.subr.mxu0 0.0
  %8134 = vmatpush1.msra.mxu0 0.0
  %8135 = vmatprep.subr.mxu0 0.0
  %8136 = vmatpush1.msra.mxu0 0.0
  %8137 = vmatprep.subr.mxu0 0.0
  %8138 = vmatpush1.msra.mxu0 0.0
  %8139 = vmatprep.mubr.f32.mxu0 0.0
  %v8140 = vand.u32 %v7971, 4294901760
  %8141 = vmatmul.mubr.f32.gmra.mrb[0].mxu0 %v8140
  %v8142 = vpop.f32.mrb[0].mxu0
  %v8143 = vadd.f32 %v8052, %v8142
  %v8144 = vpop.f32.mrb[0].mxu0
  %8145 = vmatprep.mubr.f32.mxu0 0.0
  %v8146 = vand.u32 %v7974, 4294901760
  %8147 = vmatmul.mubr.f32.gmra.mrb[0].mxu0 %v8146
  %v8148 = vpop.f32.mrb[0].mxu0
  %v8149 = vadd.f32 %v8062, %v8148
  %v8150 = vpop.f32.mrb[0].mxu0
  %8151 = vdwg.mxu0
  %8152 = vmatprep.subr.mxu0 0.0
  %v8153 = vand.u32 %v7966, 4294901760
  %v8154 = vsub.f32 %v7966, %v8153
  %8155 = vmatpush1.msra.mxu0 %v8154
  %8156 = vmatprep.subr.mxu0 0.0
  %v8157 = vand.u32 %v7976, 4294901760
  %v8158 = vsub.f32 %v7976, %v8157
  %8159 = vmatpush1.msra.mxu0 %v8158
  %8160 = vmatprep.subr.mxu0 0.0
  %8161 = vmatpush1.msra.mxu0 0.0
  %8162 = vmatprep.subr.mxu0 0.0
  %8163 = vmatpush1.msra.mxu0 0.0
  %8164 = vmatprep.subr.mxu0 0.0
  %8165 = vmatpush1.msra.mxu0 0.0
  %8166 = vmatprep.subr.mxu0 0.0
  %8167 = vmatpush1.msra.mxu0 0.0
  %8168 = vmatprep.subr.mxu0 0.0
  %8169 = vmatpush1.msra.mxu0 0.0
  %8170 = vmatprep.subr.mxu0 0.0
  %8171 = vmatpush1.msra.mxu0 0.0
  %8172 = vmatprep.subr.mxu0 0.0
  %8173 = vmatpush1.msra.mxu0 0.0
  %8174 = vmatprep.subr.mxu0 0.0
  %8175 = vmatpush1.msra.mxu0 0.0
  %8176 = vmatprep.subr.mxu0 0.0
  %8177 = vmatpush1.msra.mxu0 0.0
  %8178 = vmatprep.subr.mxu0 0.0
  %8179 = vmatpush1.msra.mxu0 0.0
  %8180 = vmatprep.subr.mxu0 0.0
  %8181 = vmatpush1.msra.mxu0 0.0
  %8182 = vmatprep.subr.mxu0 0.0
  %8183 = vmatpush1.msra.mxu0 0.0
  %8184 = vmatprep.subr.mxu0 0.0
  %8185 = vmatpush1.msra.mxu0 0.0
  %8186 = vmatprep.subr.mxu0 0.0
  %8187 = vmatpush1.msra.mxu0 0.0
  %8188 = vmatprep.subr.mxu0 0.0
  %8189 = vmatpush1.msra.mxu0 0.0
  %8190 = vmatprep.subr.mxu0 0.0
  %8191 = vmatpush1.msra.mxu0 0.0
  %8192 = vmatprep.subr.mxu0 0.0
  %8193 = vmatpush1.msra.mxu0 0.0
  %8194 = vmatprep.subr.mxu0 0.0
  %8195 = vmatpush1.msra.mxu0 0.0
  %8196 = vmatprep.subr.mxu0 0.0
  %8197 = vmatpush1.msra.mxu0 0.0
  %8198 = vmatprep.subr.mxu0 0.0
  %8199 = vmatpush1.msra.mxu0 0.0
  %8200 = vmatprep.subr.mxu0 0.0
  %8201 = vmatpush1.msra.mxu0 0.0
  %8202 = vmatprep.subr.mxu0 0.0
  %8203 = vmatpush1.msra.mxu0 0.0
  %8204 = vmatprep.subr.mxu0 0.0
  %8205 = vmatpush1.msra.mxu0 0.0
  %8206 = vmatprep.subr.mxu0 0.0
  %8207 = vmatpush1.msra.mxu0 0.0
  %8208 = vmatprep.subr.mxu0 0.0
  %8209 = vmatpush1.msra.mxu0 0.0
  %8210 = vmatprep.subr.mxu0 0.0
  %8211 = vmatpush1.msra.mxu0 0.0
  %8212 = vmatprep.subr.mxu0 0.0
  %8213 = vmatpush1.msra.mxu0 0.0
  %8214 = vmatprep.subr.mxu0 0.0
  %8215 = vmatpush1.msra.mxu0 0.0
  %8216 = vmatprep.subr.mxu0 0.0
  %8217 = vmatpush1.msra.mxu0 0.0
  %8218 = vmatprep.subr.mxu0 0.0
  %8219 = vmatpush1.msra.mxu0 0.0
  %8220 = vmatprep.mubr.f32.mxu0 0.0
  %v8221 = vand.u32 %v7971, 4294901760
  %v8222 = vsub.f32 %v7971, %v8221
  %8223 = vmatmul.mubr.f32.gmra.mrb[0].mxu0 %v8222
  %v8224 = vpop.f32.mrb[0].mxu0
  %v8225 = vadd.f32 %v8143, %v8224
  %v8226 = vpop.f32.mrb[0].mxu0
  %8227 = vmatprep.mubr.f32.mxu0 0.0
  %v8228 = vand.u32 %v7974, 4294901760
  %v8229 = vsub.f32 %v7974, %v8228
  %8230 = vmatmul.mubr.f32.gmra.mrb[0].mxu0 %v8229
  %v8231 = vpop.f32.mrb[0].mxu0
  %v8232 = vadd.f32 %v8149, %v8231
  %v8233 = vpop.f32.mrb[0].mxu0
  %8234 = vdwg.mxu0
  %8235 = vmatprep.subr.mxu0 0.0
  %v8236 = vand.u32 %v7966, 4294901760
  %8237 = vmatpush1.msra.mxu0 %v8236
  %8238 = vmatprep.subr.mxu0 0.0
  %v8239 = vand.u32 %v7976, 4294901760
  %8240 = vmatpush1.msra.mxu0 %v8239
  %8241 = vmatprep.subr.mxu0 0.0
  %8242 = vmatpush1.msra.mxu0 0.0
  %8243 = vmatprep.subr.mxu0 0.0
  %8244 = vmatpush1.msra.mxu0 0.0
  %8245 = vmatprep.subr.mxu0 0.0
  %8246 = vmatpush1.msra.mxu0 0.0
  %8247 = vmatprep.subr.mxu0 0.0
  %8248 = vmatpush1.msra.mxu0 0.0
  %8249 = vmatprep.subr.mxu0 0.0
  %8250 = vmatpush1.msra.mxu0 0.0
  %8251 = vmatprep.subr.mxu0 0.0
  %8252 = vmatpush1.msra.mxu0 0.0
  %8253 = vmatprep.subr.mxu0 0.0
  %8254 = vmatpush1.msra.mxu0 0.0
  %8255 = vmatprep.subr.mxu0 0.0
  %8256 = vmatpush1.msra.mxu0 0.0
  %8257 = vmatprep.subr.mxu0 0.0
  %8258 = vmatpush1.msra.mxu0 0.0
  %8259 = vmatprep.subr.mxu0 0.0
  %8260 = vmatpush1.msra.mxu0 0.0
  %8261 = vmatprep.subr.mxu0 0.0
  %8262 = vmatpush1.msra.mxu0 0.0
  %8263 = vmatprep.subr.mxu0 0.0
  %8264 = vmatpush1.msra.mxu0 0.0
  %8265 = vmatprep.subr.mxu0 0.0
  %8266 = vmatpush1.msra.mxu0 0.0
  %8267 = vmatprep.subr.mxu0 0.0
  %8268 = vmatpush1.msra.mxu0 0.0
  %8269 = vmatprep.subr.mxu0 0.0
  %8270 = vmatpush1.msra.mxu0 0.0
  %8271 = vmatprep.subr.mxu0 0.0
  %8272 = vmatpush1.msra.mxu0 0.0
  %8273 = vmatprep.subr.mxu0 0.0
  %8274 = vmatpush1.msra.mxu0 0.0
  %8275 = vmatprep.subr.mxu0 0.0
  %8276 = vmatpush1.msra.mxu0 0.0
  %8277 = vmatprep.subr.mxu0 0.0
  %8278 = vmatpush1.msra.mxu0 0.0
  %8279 = vmatprep.subr.mxu0 0.0
  %8280 = vmatpush1.msra.mxu0 0.0
  %8281 = vmatprep.subr.mxu0 0.0
  %8282 = vmatpush1.msra.mxu0 0.0
  %8283 = vmatprep.subr.mxu0 0.0
  %8284 = vmatpush1.msra.mxu0 0.0
  %8285 = vmatprep.subr.mxu0 0.0
  %8286 = vmatpush1.msra.mxu0 0.0
  %8287 = vmatprep.subr.mxu0 0.0
  %8288 = vmatpush1.msra.mxu0 0.0
  %8289 = vmatprep.subr.mxu0 0.0
  %8290 = vmatpush1.msra.mxu0 0.0
  %8291 = vmatprep.subr.mxu0 0.0
  %8292 = vmatpush1.msra.mxu0 0.0
  %8293 = vmatprep.subr.mxu0 0.0
  %8294 = vmatpush1.msra.mxu0 0.0
  %8295 = vmatprep.subr.mxu0 0.0
  %8296 = vmatpush1.msra.mxu0 0.0
  %8297 = vmatprep.subr.mxu0 0.0
  %8298 = vmatpush1.msra.mxu0 0.0
  %8299 = vmatprep.subr.mxu0 0.0
  %8300 = vmatpush1.msra.mxu0 0.0
  %8301 = vmatprep.mubr.f32.mxu0 0.0
  %v8302 = vand.u32 %v7971, 4294901760
  %v8303 = vsub.f32 %v7971, %v8302
  %v8304 = vand.u32 %v8303, 4294901760
  %8305 = vmatmul.mubr.f32.gmra.mrb[0].mxu0 %v8304
  %v8306 = vpop.f32.mrb[0].mxu0
  %v8307 = vadd.f32 %v8225, %v8306
  %v8308 = vpop.f32.mrb[0].mxu0
  %8309 = vmatprep.mubr.f32.mxu0 0.0
  %v8310 = vand.u32 %v7974, 4294901760
  %v8311 = vsub.f32 %v7974, %v8310
  %v8312 = vand.u32 %v8311, 4294901760
  %8313 = vmatmul.mubr.f32.gmra.mrb[0].mxu0 %v8312
  %v8314 = vpop.f32.mrb[0].mxu0
  %v8315 = vadd.f32 %v8232, %v8314
  %v8316 = vpop.f32.mrb[0].mxu0
  %8317 = vdwg.mxu0
  %8318 = vmatprep.subr.mxu0 0.0
  %v8319 = vand.u32 %v7966, 4294901760
  %v8320 = vsub.f32 %v7966, %v8319
  %v8321 = vand.u32 %v8320, 4294901760
  %8322 = vmatpush1.msra.mxu0 %v8321
  %8323 = vmatprep.subr.mxu0 0.0
  %v8324 = vand.u32 %v7976, 4294901760
  %v8325 = vsub.f32 %v7976, %v8324
  %v8326 = vand.u32 %v8325, 4294901760
  %8327 = vmatpush1.msra.mxu0 %v8326
  %8328 = vmatprep.subr.mxu0 0.0
  %8329 = vmatpush1.msra.mxu0 0.0
  %8330 = vmatprep.subr.mxu0 0.0
  %8331 = vmatpush1.msra.mxu0 0.0
  %8332 = vmatprep.subr.mxu0 0.0
  %8333 = vmatpush1.msra.mxu0 0.0
  %8334 = vmatprep.subr.mxu0 0.0
  %8335 = vmatpush1.msra.mxu0 0.0
  %8336 = vmatprep.subr.mxu0 0.0
  %8337 = vmatpush1.msra.mxu0 0.0
  %8338 = vmatprep.subr.mxu0 0.0
  %8339 = vmatpush1.msra.mxu0 0.0
  %8340 = vmatprep.subr.mxu0 0.0
  %8341 = vmatpush1.msra.mxu0 0.0
  %8342 = vmatprep.subr.mxu0 0.0
  %8343 = vmatpush1.msra.mxu0 0.0
  %8344 = vmatprep.subr.mxu0 0.0
  %8345 = vmatpush1.msra.mxu0 0.0
  %8346 = vmatprep.subr.mxu0 0.0
  %8347 = vmatpush1.msra.mxu0 0.0
  %8348 = vmatprep.subr.mxu0 0.0
  %8349 = vmatpush1.msra.mxu0 0.0
  %8350 = vmatprep.subr.mxu0 0.0
  %8351 = vmatpush1.msra.mxu0 0.0
  %8352 = vmatprep.subr.mxu0 0.0
  %8353 = vmatpush1.msra.mxu0 0.0
  %8354 = vmatprep.subr.mxu0 0.0
  %8355 = vmatpush1.msra.mxu0 0.0
  %8356 = vmatprep.subr.mxu0 0.0
  %8357 = vmatpush1.msra.mxu0 0.0
  %8358 = vmatprep.subr.mxu0 0.0
  %8359 = vmatpush1.msra.mxu0 0.0
  %8360 = vmatprep.subr.mxu0 0.0
  %8361 = vmatpush1.msra.mxu0 0.0
  %8362 = vmatprep.subr.mxu0 0.0
  %8363 = vmatpush1.msra.mxu0 0.0
  %8364 = vmatprep.subr.mxu0 0.0
  %8365 = vmatpush1.msra.mxu0 0.0
  %8366 = vmatprep.subr.mxu0 0.0
  %8367 = vmatpush1.msra.mxu0 0.0
  %8368 = vmatprep.subr.mxu0 0.0
  %8369 = vmatpush1.msra.mxu0 0.0
  %8370 = vmatprep.subr.mxu0 0.0
  %8371 = vmatpush1.msra.mxu0 0.0
  %8372 = vmatprep.subr.mxu0 0.0
  %8373 = vmatpush1.msra.mxu0 0.0
  %8374 = vmatprep.subr.mxu0 0.0
  %8375 = vmatpush1.msra.mxu0 0.0
  %8376 = vmatprep.subr.mxu0 0.0
  %8377 = vmatpush1.msra.mxu0 0.0
  %8378 = vmatprep.subr.mxu0 0.0
  %8379 = vmatpush1.msra.mxu0 0.0
  %8380 = vmatprep.subr.mxu0 0.0
  %8381 = vmatpush1.msra.mxu0 0.0
  %8382 = vmatprep.subr.mxu0 0.0
  %8383 = vmatpush1.msra.mxu0 0.0
  %8384 = vmatprep.subr.mxu0 0.0
  %8385 = vmatpush1.msra.mxu0 0.0
  %8386 = vmatprep.subr.mxu0 0.0
  %8387 = vmatpush1.msra.mxu0 0.0
  %8388 = vmatprep.mubr.f32.mxu0 0.0
  %v8389 = vand.u32 %v7971, 4294901760
  %8390 = vmatmul.mubr.f32.gmra.mrb[0].mxu0 %v8389
  %v8391 = vpop.f32.mrb[0].mxu0
  %v8392 = vadd.f32 %v8307, %v8391
  %v8393 = vpop.f32.mrb[0].mxu0
  %8394 = vmatprep.mubr.f32.mxu0 0.0
  %v8395 = vand.u32 %v7974, 4294901760
  %8396 = vmatmul.mubr.f32.gmra.mrb[0].mxu0 %v8395
  %v8397 = vpop.f32.mrb[0].mxu0
  %v8398 = vadd.f32 %v8315, %v8397
  %v8399 = vpop.f32.mrb[0].mxu0
  %8400 = vdwg.mxu0
  %8401 = vmatprep.subr.mxu0 0.0
  %v8402 = vand.u32 %v7966, 4294901760
  %8403 = vmatpush1.msra.mxu0 %v8402
  %8404 = vmatprep.subr.mxu0 0.0
  %v8405 = vand.u32 %v7976, 4294901760
  %8406 = vmatpush1.msra.mxu0 %v8405
  %8407 = vmatprep.subr.mxu0 0.0
  %8408 = vmatpush1.msra.mxu0 0.0
  %8409 = vmatprep.subr.mxu0 0.0
  %8410 = vmatpush1.msra.mxu0 0.0
  %8411 = vmatprep.subr.mxu0 0.0
  %8412 = vmatpush1.msra.mxu0 0.0
  %8413 = vmatprep.subr.mxu0 0.0
  %8414 = vmatpush1.msra.mxu0 0.0
  %8415 = vmatprep.subr.mxu0 0.0
  %8416 = vmatpush1.msra.mxu0 0.0
  %8417 = vmatprep.subr.mxu0 0.0
  %8418 = vmatpush1.msra.mxu0 0.0
  %8419 = vmatprep.subr.mxu0 0.0
  %8420 = vmatpush1.msra.mxu0 0.0
  %8421 = vmatprep.subr.mxu0 0.0
  %8422 = vmatpush1.msra.mxu0 0.0
  %8423 = vmatprep.subr.mxu0 0.0
  %8424 = vmatpush1.msra.mxu0 0.0
  %8425 = vmatprep.subr.mxu0 0.0
  %8426 = vmatpush1.msra.mxu0 0.0
  %8427 = vmatprep.subr.mxu0 0.0
  %8428 = vmatpush1.msra.mxu0 0.0
  %8429 = vmatprep.subr.mxu0 0.0
  %8430 = vmatpush1.msra.mxu0 0.0
  %8431 = vmatprep.subr.mxu0 0.0
  %8432 = vmatpush1.msra.mxu0 0.0
  %8433 = vmatprep.subr.mxu0 0.0
  %8434 = vmatpush1.msra.mxu0 0.0
  %8435 = vmatprep.subr.mxu0 0.0
  %8436 = vmatpush1.msra.mxu0 0.0
  %8437 = vmatprep.subr.mxu0 0.0
  %8438 = vmatpush1.msra.mxu0 0.0
  %8439 = vmatprep.subr.mxu0 0.0
  %8440 = vmatpush1.msra.mxu0 0.0
  %8441 = vmatprep.subr.mxu0 0.0
  %8442 = vmatpush1.msra.mxu0 0.0
  %8443 = vmatprep.subr.mxu0 0.0
  %8444 = vmatpush1.msra.mxu0 0.0
  %8445 = vmatprep.subr.mxu0 0.0
  %8446 = vmatpush1.msra.mxu0 0.0
  %8447 = vmatprep.subr.mxu0 0.0
  %8448 = vmatpush1.msra.mxu0 0.0
  %8449 = vmatprep.subr.mxu0 0.0
  %8450 = vmatpush1.msra.mxu0 0.0
  %8451 = vmatprep.subr.mxu0 0.0
  %8452 = vmatpush1.msra.mxu0 0.0
  %8453 = vmatprep.subr.mxu0 0.0
  %8454 = vmatpush1.msra.mxu0 0.0
  %8455 = vmatprep.subr.mxu0 0.0
  %8456 = vmatpush1.msra.mxu0 0.0
  %8457 = vmatprep.subr.mxu0 0.0
  %8458 = vmatpush1.msra.mxu0 0.0
  %8459 = vmatprep.subr.mxu0 0.0
  %8460 = vmatpush1.msra.mxu0 0.0
  %8461 = vmatprep.subr.mxu0 0.0
  %8462 = vmatpush1.msra.mxu0 0.0
  %8463 = vmatprep.subr.mxu0 0.0
  %8464 = vmatpush1.msra.mxu0 0.0
  %8465 = vmatprep.subr.mxu0 0.0
  %8466 = vmatpush1.msra.mxu0 0.0
  %8467 = vmatprep.mubr.f32.mxu0 0.0
  %v8468 = vand.u32 %v7971, 4294901760
  %8469 = vmatmul.mubr.f32.gmra.mrb[0].mxu0 %v8468
  %v8470 = vpop.f32.mrb[0].mxu0
  %v8471 = vadd.f32 %v8392, %v8470
  %v8472 = vpop.f32.mrb[0].mxu0
  %8473 = vmatprep.mubr.f32.mxu0 0.0
  %v8474 = vand.u32 %v7974, 4294901760
  %8475 = vmatmul.mubr.f32.gmra.mrb[0].mxu0 %v8474
  %v8476 = vpop.f32.mrb[0].mxu0
  %v8477 = vadd.f32 %v8398, %v8476
  %v8478 = vpop.f32.mrb[0].mxu0
  %8479 = vdwg.mxu0
  %8480 = vrot.lane.b32.xlu0 %v5318, 80
  %v8481 = vpop.permute.xlu0 %8480
  %8482 = vrot.lane.b32.xlu0 %v5317, 80
  %v8483 = vpop.permute.xlu0 %8482
  %8484 = vrot.lane.b32.xlu0 %v5318, 16
  %v8485 = vpop.permute.xlu0 %8484
  %8486 = vrot.lane.b32.xlu0 %v5317, 16
  %v8487 = vpop.permute.xlu0 %8486
  %v8488 = vsel %vm1069, %v8481, 0
  %v8490 = vsel %vm1069, %v8483, 0
  %v8492 = vsel %vm1069, %v8485, 0
  %v8494 = vsel %vm1069, %v8487, 0
  %8496 = vmatprep.subr.mxu0 0.0
  %v8497 = vand.u32 %v8492, 4294901760
  %8498 = vmatpush1.xpose.msra.mxu0 %v8497
  %8499 = vmatprep.subr.mxu0 0.0
  %v8500 = vand.u32 %v8494, 4294901760
  %8501 = vmatpush1.xpose.msra.mxu0 %v8500
  %8502 = vmatprep.subr.mxu0 0.0
  %8503 = vmatpush1.xpose.msra.mxu0 0.0
  %8504 = vmatprep.subr.mxu0 0.0
  %8505 = vmatpush1.xpose.msra.mxu0 0.0
  %8506 = vmatprep.subr.mxu0 0.0
  %8507 = vmatpush1.xpose.msra.mxu0 0.0
  %8508 = vmatprep.subr.mxu0 0.0
  %8509 = vmatpush1.xpose.msra.mxu0 0.0
  %8510 = vmatprep.subr.mxu0 0.0
  %8511 = vmatpush1.xpose.msra.mxu0 0.0
  %8512 = vmatprep.subr.mxu0 0.0
  %8513 = vmatpush1.xpose.msra.mxu0 0.0
  %8514 = vmatprep.subr.mxu0 0.0
  %8515 = vmatpush1.xpose.msra.mxu0 0.0
  %8516 = vmatprep.subr.mxu0 0.0
  %8517 = vmatpush1.xpose.msra.mxu0 0.0
  %8518 = vmatprep.subr.mxu0 0.0
  %8519 = vmatpush1.xpose.msra.mxu0 0.0
  %8520 = vmatprep.subr.mxu0 0.0
  %8521 = vmatpush1.xpose.msra.mxu0 0.0
  %8522 = vmatprep.subr.mxu0 0.0
  %8523 = vmatpush1.xpose.msra.mxu0 0.0
  %8524 = vmatprep.subr.mxu0 0.0
  %8525 = vmatpush1.xpose.msra.mxu0 0.0
  %8526 = vmatprep.subr.mxu0 0.0
  %8527 = vmatpush1.xpose.msra.mxu0 0.0
  %8528 = vmatprep.subr.mxu0 0.0
  %8529 = vmatpush1.xpose.msra.mxu0 0.0
  %8530 = vmatprep.subr.mxu0 0.0
  %8531 = vmatpush1.xpose.msra.mxu0 0.0
  %8532 = vmatprep.subr.mxu0 0.0
  %8533 = vmatpush1.xpose.msra.mxu0 0.0
  %8534 = vmatprep.subr.mxu0 0.0
  %8535 = vmatpush1.xpose.msra.mxu0 0.0
  %8536 = vmatprep.subr.mxu0 0.0
  %8537 = vmatpush1.xpose.msra.mxu0 0.0
  %8538 = vmatprep.subr.mxu0 0.0
  %8539 = vmatpush1.xpose.msra.mxu0 0.0
  %8540 = vmatprep.subr.mxu0 0.0
  %8541 = vmatpush1.xpose.msra.mxu0 0.0
  %8542 = vmatprep.subr.mxu0 0.0
  %8543 = vmatpush1.xpose.msra.mxu0 0.0
  %8544 = vmatprep.subr.mxu0 0.0
  %8545 = vmatpush1.xpose.msra.mxu0 0.0
  %8546 = vmatprep.subr.mxu0 0.0
  %8547 = vmatpush1.xpose.msra.mxu0 0.0
  %8548 = vmatprep.subr.mxu0 0.0
  %8549 = vmatpush1.xpose.msra.mxu0 0.0
  %8550 = vmatprep.subr.mxu0 0.0
  %8551 = vmatpush1.xpose.msra.mxu0 0.0
  %8552 = vmatprep.subr.mxu0 0.0
  %8553 = vmatpush1.xpose.msra.mxu0 0.0
  %8554 = vmatprep.subr.mxu0 0.0
  %8555 = vmatpush1.xpose.msra.mxu0 0.0
  %8556 = vmatprep.subr.mxu0 0.0
  %8557 = vmatpush1.xpose.msra.mxu0 0.0
  %8558 = vmatprep.subr.mxu0 0.0
  %8559 = vmatpush1.xpose.msra.mxu0 0.0
  %8560 = vmatprep.subr.mxu0 0.0
  %8561 = vmatpush1.xpose.msra.mxu0 0.0
  %8562 = vmatprep.mubr.f32.mxu0 0.0
  %v8563 = vand.u32 %v8488, 4294901760
  %v8564 = vsub.f32 %v8488, %v8563
  %v8565 = vand.u32 %v8564, 4294901760
  %v8566 = vsub.f32 %v8564, %v8565
  %v8567 = vand.u32 %v8566, 4294901760
  %8568 = vmatmul.mubr.f32.gmra.mrb[0].mxu0 %v8567
  %v8569 = vpop.f32.mrb[0].mxu0
  %v8570 = vadd.f32 0.0, %v8569
  %v8571 = vpop.f32.mrb[0].mxu0
  %8572 = vmatprep.mubr.f32.mxu0 0.0
  %v8573 = vand.u32 %v8490, 4294901760
  %v8574 = vsub.f32 %v8490, %v8573
  %v8575 = vand.u32 %v8574, 4294901760
  %v8576 = vsub.f32 %v8574, %v8575
  %v8577 = vand.u32 %v8576, 4294901760
  %8578 = vmatmul.mubr.f32.gmra.mrb[0].mxu0 %v8577
  %v8579 = vpop.f32.mrb[0].mxu0
  %v8580 = vadd.f32 0.0, %v8579
  %v8581 = vpop.f32.mrb[0].mxu0
  %8582 = vdwg.mxu0
  %8583 = vmatprep.subr.mxu0 0.0
  %v8584 = vand.u32 %v8492, 4294901760
  %v8585 = vsub.f32 %v8492, %v8584
  %v8586 = vand.u32 %v8585, 4294901760
  %v8587 = vsub.f32 %v8585, %v8586
  %v8588 = vand.u32 %v8587, 4294901760
  %8589 = vmatpush1.xpose.msra.mxu0 %v8588
  %8590 = vmatprep.subr.mxu0 0.0
  %v8591 = vand.u32 %v8494, 4294901760
  %v8592 = vsub.f32 %v8494, %v8591
  %v8593 = vand.u32 %v8592, 4294901760
  %v8594 = vsub.f32 %v8592, %v8593
  %v8595 = vand.u32 %v8594, 4294901760
  %8596 = vmatpush1.xpose.msra.mxu0 %v8595
  %8597 = vmatprep.subr.mxu0 0.0
  %8598 = vmatpush1.xpose.msra.mxu0 0.0
  %8599 = vmatprep.subr.mxu0 0.0
  %8600 = vmatpush1.xpose.msra.mxu0 0.0
  %8601 = vmatprep.subr.mxu0 0.0
  %8602 = vmatpush1.xpose.msra.mxu0 0.0
  %8603 = vmatprep.subr.mxu0 0.0
  %8604 = vmatpush1.xpose.msra.mxu0 0.0
  %8605 = vmatprep.subr.mxu0 0.0
  %8606 = vmatpush1.xpose.msra.mxu0 0.0
  %8607 = vmatprep.subr.mxu0 0.0
  %8608 = vmatpush1.xpose.msra.mxu0 0.0
  %8609 = vmatprep.subr.mxu0 0.0
  %8610 = vmatpush1.xpose.msra.mxu0 0.0
  %8611 = vmatprep.subr.mxu0 0.0
  %8612 = vmatpush1.xpose.msra.mxu0 0.0
  %8613 = vmatprep.subr.mxu0 0.0
  %8614 = vmatpush1.xpose.msra.mxu0 0.0
  %8615 = vmatprep.subr.mxu0 0.0
  %8616 = vmatpush1.xpose.msra.mxu0 0.0
  %8617 = vmatprep.subr.mxu0 0.0
  %8618 = vmatpush1.xpose.msra.mxu0 0.0
  %8619 = vmatprep.subr.mxu0 0.0
  %8620 = vmatpush1.xpose.msra.mxu0 0.0
  %8621 = vmatprep.subr.mxu0 0.0
  %8622 = vmatpush1.xpose.msra.mxu0 0.0
  %8623 = vmatprep.subr.mxu0 0.0
  %8624 = vmatpush1.xpose.msra.mxu0 0.0
  %8625 = vmatprep.subr.mxu0 0.0
  %8626 = vmatpush1.xpose.msra.mxu0 0.0
  %8627 = vmatprep.subr.mxu0 0.0
  %8628 = vmatpush1.xpose.msra.mxu0 0.0
  %8629 = vmatprep.subr.mxu0 0.0
  %8630 = vmatpush1.xpose.msra.mxu0 0.0
  %8631 = vmatprep.subr.mxu0 0.0
  %8632 = vmatpush1.xpose.msra.mxu0 0.0
  %8633 = vmatprep.subr.mxu0 0.0
  %8634 = vmatpush1.xpose.msra.mxu0 0.0
  %8635 = vmatprep.subr.mxu0 0.0
  %8636 = vmatpush1.xpose.msra.mxu0 0.0
  %8637 = vmatprep.subr.mxu0 0.0
  %8638 = vmatpush1.xpose.msra.mxu0 0.0
  %8639 = vmatprep.subr.mxu0 0.0
  %8640 = vmatpush1.xpose.msra.mxu0 0.0
  %8641 = vmatprep.subr.mxu0 0.0
  %8642 = vmatpush1.xpose.msra.mxu0 0.0
  %8643 = vmatprep.subr.mxu0 0.0
  %8644 = vmatpush1.xpose.msra.mxu0 0.0
  %8645 = vmatprep.subr.mxu0 0.0
  %8646 = vmatpush1.xpose.msra.mxu0 0.0
  %8647 = vmatprep.subr.mxu0 0.0
  %8648 = vmatpush1.xpose.msra.mxu0 0.0
  %8649 = vmatprep.subr.mxu0 0.0
  %8650 = vmatpush1.xpose.msra.mxu0 0.0
  %8651 = vmatprep.subr.mxu0 0.0
  %8652 = vmatpush1.xpose.msra.mxu0 0.0
  %8653 = vmatprep.subr.mxu0 0.0
  %8654 = vmatpush1.xpose.msra.mxu0 0.0
  %8655 = vmatprep.subr.mxu0 0.0
  %8656 = vmatpush1.xpose.msra.mxu0 0.0
  %8657 = vmatprep.mubr.f32.mxu0 0.0
  %v8658 = vand.u32 %v8488, 4294901760
  %8659 = vmatmul.mubr.f32.gmra.mrb[0].mxu0 %v8658
  %v8660 = vpop.f32.mrb[0].mxu0
  %v8661 = vadd.f32 %v8570, %v8660
  %v8662 = vpop.f32.mrb[0].mxu0
  %8663 = vmatprep.mubr.f32.mxu0 0.0
  %v8664 = vand.u32 %v8490, 4294901760
  %8665 = vmatmul.mubr.f32.gmra.mrb[0].mxu0 %v8664
  %v8666 = vpop.f32.mrb[0].mxu0
  %v8667 = vadd.f32 %v8580, %v8666
  %v8668 = vpop.f32.mrb[0].mxu0
  %8669 = vdwg.mxu0
  %8670 = vmatprep.subr.mxu0 0.0
  %v8671 = vand.u32 %v8492, 4294901760
  %v8672 = vsub.f32 %v8492, %v8671
  %8673 = vmatpush1.xpose.msra.mxu0 %v8672
  %8674 = vmatprep.subr.mxu0 0.0
  %v8675 = vand.u32 %v8494, 4294901760
  %v8676 = vsub.f32 %v8494, %v8675
  %8677 = vmatpush1.xpose.msra.mxu0 %v8676
  %8678 = vmatprep.subr.mxu0 0.0
  %8679 = vmatpush1.xpose.msra.mxu0 0.0
  %8680 = vmatprep.subr.mxu0 0.0
  %8681 = vmatpush1.xpose.msra.mxu0 0.0
  %8682 = vmatprep.subr.mxu0 0.0
  %8683 = vmatpush1.xpose.msra.mxu0 0.0
  %8684 = vmatprep.subr.mxu0 0.0
  %8685 = vmatpush1.xpose.msra.mxu0 0.0
  %8686 = vmatprep.subr.mxu0 0.0
  %8687 = vmatpush1.xpose.msra.mxu0 0.0
  %8688 = vmatprep.subr.mxu0 0.0
  %8689 = vmatpush1.xpose.msra.mxu0 0.0
  %8690 = vmatprep.subr.mxu0 0.0
  %8691 = vmatpush1.xpose.msra.mxu0 0.0
  %8692 = vmatprep.subr.mxu0 0.0
  %8693 = vmatpush1.xpose.msra.mxu0 0.0
  %8694 = vmatprep.subr.mxu0 0.0
  %8695 = vmatpush1.xpose.msra.mxu0 0.0
  %8696 = vmatprep.subr.mxu0 0.0
  %8697 = vmatpush1.xpose.msra.mxu0 0.0
  %8698 = vmatprep.subr.mxu0 0.0
  %8699 = vmatpush1.xpose.msra.mxu0 0.0
  %8700 = vmatprep.subr.mxu0 0.0
  %8701 = vmatpush1.xpose.msra.mxu0 0.0
  %8702 = vmatprep.subr.mxu0 0.0
  %8703 = vmatpush1.xpose.msra.mxu0 0.0
  %8704 = vmatprep.subr.mxu0 0.0
  %8705 = vmatpush1.xpose.msra.mxu0 0.0
  %8706 = vmatprep.subr.mxu0 0.0
  %8707 = vmatpush1.xpose.msra.mxu0 0.0
  %8708 = vmatprep.subr.mxu0 0.0
  %8709 = vmatpush1.xpose.msra.mxu0 0.0
  %8710 = vmatprep.subr.mxu0 0.0
  %8711 = vmatpush1.xpose.msra.mxu0 0.0
  %8712 = vmatprep.subr.mxu0 0.0
  %8713 = vmatpush1.xpose.msra.mxu0 0.0
  %8714 = vmatprep.subr.mxu0 0.0
  %8715 = vmatpush1.xpose.msra.mxu0 0.0
  %8716 = vmatprep.subr.mxu0 0.0
  %8717 = vmatpush1.xpose.msra.mxu0 0.0
  %8718 = vmatprep.subr.mxu0 0.0
  %8719 = vmatpush1.xpose.msra.mxu0 0.0
  %8720 = vmatprep.subr.mxu0 0.0
  %8721 = vmatpush1.xpose.msra.mxu0 0.0
  %8722 = vmatprep.subr.mxu0 0.0
  %8723 = vmatpush1.xpose.msra.mxu0 0.0
  %8724 = vmatprep.subr.mxu0 0.0
  %8725 = vmatpush1.xpose.msra.mxu0 0.0
  %8726 = vmatprep.subr.mxu0 0.0
  %8727 = vmatpush1.xpose.msra.mxu0 0.0
  %8728 = vmatprep.subr.mxu0 0.0
  %8729 = vmatpush1.xpose.msra.mxu0 0.0
  %8730 = vmatprep.subr.mxu0 0.0
  %8731 = vmatpush1.xpose.msra.mxu0 0.0
  %8732 = vmatprep.subr.mxu0 0.0
  %8733 = vmatpush1.xpose.msra.mxu0 0.0
  %8734 = vmatprep.subr.mxu0 0.0
  %8735 = vmatpush1.xpose.msra.mxu0 0.0
  %8736 = vmatprep.subr.mxu0 0.0
  %8737 = vmatpush1.xpose.msra.mxu0 0.0
  %8738 = vmatprep.mubr.f32.mxu0 0.0
  %v8739 = vand.u32 %v8488, 4294901760
  %v8740 = vsub.f32 %v8488, %v8739
  %8741 = vmatmul.mubr.f32.gmra.mrb[0].mxu0 %v8740
  %v8742 = vpop.f32.mrb[0].mxu0
  %v8743 = vadd.f32 %v8661, %v8742
  %v8744 = vpop.f32.mrb[0].mxu0
  %8745 = vmatprep.mubr.f32.mxu0 0.0
  %v8746 = vand.u32 %v8490, 4294901760
  %v8747 = vsub.f32 %v8490, %v8746
  %8748 = vmatmul.mubr.f32.gmra.mrb[0].mxu0 %v8747
  %v8749 = vpop.f32.mrb[0].mxu0
  %v8750 = vadd.f32 %v8667, %v8749
  %v8751 = vpop.f32.mrb[0].mxu0
  %8752 = vdwg.mxu0
  %8753 = vmatprep.subr.mxu0 0.0
  %v8754 = vand.u32 %v8492, 4294901760
  %8755 = vmatpush1.xpose.msra.mxu0 %v8754
  %8756 = vmatprep.subr.mxu0 0.0
  %v8757 = vand.u32 %v8494, 4294901760
  %8758 = vmatpush1.xpose.msra.mxu0 %v8757
  %8759 = vmatprep.subr.mxu0 0.0
  %8760 = vmatpush1.xpose.msra.mxu0 0.0
  %8761 = vmatprep.subr.mxu0 0.0
  %8762 = vmatpush1.xpose.msra.mxu0 0.0
  %8763 = vmatprep.subr.mxu0 0.0
  %8764 = vmatpush1.xpose.msra.mxu0 0.0
  %8765 = vmatprep.subr.mxu0 0.0
  %8766 = vmatpush1.xpose.msra.mxu0 0.0
  %8767 = vmatprep.subr.mxu0 0.0
  %8768 = vmatpush1.xpose.msra.mxu0 0.0
  %8769 = vmatprep.subr.mxu0 0.0
  %8770 = vmatpush1.xpose.msra.mxu0 0.0
  %8771 = vmatprep.subr.mxu0 0.0
  %8772 = vmatpush1.xpose.msra.mxu0 0.0
  %8773 = vmatprep.subr.mxu0 0.0
  %8774 = vmatpush1.xpose.msra.mxu0 0.0
  %8775 = vmatprep.subr.mxu0 0.0
  %8776 = vmatpush1.xpose.msra.mxu0 0.0
  %8777 = vmatprep.subr.mxu0 0.0
  %8778 = vmatpush1.xpose.msra.mxu0 0.0
  %8779 = vmatprep.subr.mxu0 0.0
  %8780 = vmatpush1.xpose.msra.mxu0 0.0
  %8781 = vmatprep.subr.mxu0 0.0
  %8782 = vmatpush1.xpose.msra.mxu0 0.0
  %8783 = vmatprep.subr.mxu0 0.0
  %8784 = vmatpush1.xpose.msra.mxu0 0.0
  %8785 = vmatprep.subr.mxu0 0.0
  %8786 = vmatpush1.xpose.msra.mxu0 0.0
  %8787 = vmatprep.subr.mxu0 0.0
  %8788 = vmatpush1.xpose.msra.mxu0 0.0
  %8789 = vmatprep.subr.mxu0 0.0
  %8790 = vmatpush1.xpose.msra.mxu0 0.0
  %8791 = vmatprep.subr.mxu0 0.0
  %8792 = vmatpush1.xpose.msra.mxu0 0.0
  %8793 = vmatprep.subr.mxu0 0.0
  %8794 = vmatpush1.xpose.msra.mxu0 0.0
  %8795 = vmatprep.subr.mxu0 0.0
  %8796 = vmatpush1.xpose.msra.mxu0 0.0
  %8797 = vmatprep.subr.mxu0 0.0
  %8798 = vmatpush1.xpose.msra.mxu0 0.0
  %8799 = vmatprep.subr.mxu0 0.0
  %8800 = vmatpush1.xpose.msra.mxu0 0.0
  %8801 = vmatprep.subr.mxu0 0.0
  %8802 = vmatpush1.xpose.msra.mxu0 0.0
  %8803 = vmatprep.subr.mxu0 0.0
  %8804 = vmatpush1.xpose.msra.mxu0 0.0
  %8805 = vmatprep.subr.mxu0 0.0
  %8806 = vmatpush1.xpose.msra.mxu0 0.0
  %8807 = vmatprep.subr.mxu0 0.0
  %8808 = vmatpush1.xpose.msra.mxu0 0.0
  %8809 = vmatprep.subr.mxu0 0.0
  %8810 = vmatpush1.xpose.msra.mxu0 0.0
  %8811 = vmatprep.subr.mxu0 0.0
  %8812 = vmatpush1.xpose.msra.mxu0 0.0
  %8813 = vmatprep.subr.mxu0 0.0
  %8814 = vmatpush1.xpose.msra.mxu0 0.0
  %8815 = vmatprep.subr.mxu0 0.0
  %8816 = vmatpush1.xpose.msra.mxu0 0.0
  %8817 = vmatprep.subr.mxu0 0.0
  %8818 = vmatpush1.xpose.msra.mxu0 0.0
  %8819 = vmatprep.mubr.f32.mxu0 0.0
  %v8820 = vand.u32 %v8488, 4294901760
  %v8821 = vsub.f32 %v8488, %v8820
  %v8822 = vand.u32 %v8821, 4294901760
  %8823 = vmatmul.mubr.f32.gmra.mrb[0].mxu0 %v8822
  %v8824 = vpop.f32.mrb[0].mxu0
  %v8825 = vadd.f32 %v8743, %v8824
  %v8826 = vpop.f32.mrb[0].mxu0
  %8827 = vmatprep.mubr.f32.mxu0 0.0
  %v8828 = vand.u32 %v8490, 4294901760
  %v8829 = vsub.f32 %v8490, %v8828
  %v8830 = vand.u32 %v8829, 4294901760
  %8831 = vmatmul.mubr.f32.gmra.mrb[0].mxu0 %v8830
  %v8832 = vpop.f32.mrb[0].mxu0
  %v8833 = vadd.f32 %v8750, %v8832
  %v8834 = vpop.f32.mrb[0].mxu0
  %8835 = vdwg.mxu0
  %8836 = vmatprep.subr.mxu0 0.0
  %v8837 = vand.u32 %v8492, 4294901760
  %v8838 = vsub.f32 %v8492, %v8837
  %v8839 = vand.u32 %v8838, 4294901760
  %8840 = vmatpush1.xpose.msra.mxu0 %v8839
  %8841 = vmatprep.subr.mxu0 0.0
  %v8842 = vand.u32 %v8494, 4294901760
  %v8843 = vsub.f32 %v8494, %v8842
  %v8844 = vand.u32 %v8843, 4294901760
  %8845 = vmatpush1.xpose.msra.mxu0 %v8844
  %8846 = vmatprep.subr.mxu0 0.0
  %8847 = vmatpush1.xpose.msra.mxu0 0.0
  %8848 = vmatprep.subr.mxu0 0.0
  %8849 = vmatpush1.xpose.msra.mxu0 0.0
  %8850 = vmatprep.subr.mxu0 0.0
  %8851 = vmatpush1.xpose.msra.mxu0 0.0
  %8852 = vmatprep.subr.mxu0 0.0
  %8853 = vmatpush1.xpose.msra.mxu0 0.0
  %8854 = vmatprep.subr.mxu0 0.0
  %8855 = vmatpush1.xpose.msra.mxu0 0.0
  %8856 = vmatprep.subr.mxu0 0.0
  %8857 = vmatpush1.xpose.msra.mxu0 0.0
  %8858 = vmatprep.subr.mxu0 0.0
  %8859 = vmatpush1.xpose.msra.mxu0 0.0
  %8860 = vmatprep.subr.mxu0 0.0
  %8861 = vmatpush1.xpose.msra.mxu0 0.0
  %8862 = vmatprep.subr.mxu0 0.0
  %8863 = vmatpush1.xpose.msra.mxu0 0.0
  %8864 = vmatprep.subr.mxu0 0.0
  %8865 = vmatpush1.xpose.msra.mxu0 0.0
  %8866 = vmatprep.subr.mxu0 0.0
  %8867 = vmatpush1.xpose.msra.mxu0 0.0
  %8868 = vmatprep.subr.mxu0 0.0
  %8869 = vmatpush1.xpose.msra.mxu0 0.0
  %8870 = vmatprep.subr.mxu0 0.0
  %8871 = vmatpush1.xpose.msra.mxu0 0.0
  %8872 = vmatprep.subr.mxu0 0.0
  %8873 = vmatpush1.xpose.msra.mxu0 0.0
  %8874 = vmatprep.subr.mxu0 0.0
  %8875 = vmatpush1.xpose.msra.mxu0 0.0
  %8876 = vmatprep.subr.mxu0 0.0
  %8877 = vmatpush1.xpose.msra.mxu0 0.0
  %8878 = vmatprep.subr.mxu0 0.0
  %8879 = vmatpush1.xpose.msra.mxu0 0.0
  %8880 = vmatprep.subr.mxu0 0.0
  %8881 = vmatpush1.xpose.msra.mxu0 0.0
  %8882 = vmatprep.subr.mxu0 0.0
  %8883 = vmatpush1.xpose.msra.mxu0 0.0
  %8884 = vmatprep.subr.mxu0 0.0
  %8885 = vmatpush1.xpose.msra.mxu0 0.0
  %8886 = vmatprep.subr.mxu0 0.0
  %8887 = vmatpush1.xpose.msra.mxu0 0.0
  %8888 = vmatprep.subr.mxu0 0.0
  %8889 = vmatpush1.xpose.msra.mxu0 0.0
  %8890 = vmatprep.subr.mxu0 0.0
  %8891 = vmatpush1.xpose.msra.mxu0 0.0
  %8892 = vmatprep.subr.mxu0 0.0
  %8893 = vmatpush1.xpose.msra.mxu0 0.0
  %8894 = vmatprep.subr.mxu0 0.0
  %8895 = vmatpush1.xpose.msra.mxu0 0.0
  %8896 = vmatprep.subr.mxu0 0.0
  %8897 = vmatpush1.xpose.msra.mxu0 0.0
  %8898 = vmatprep.subr.mxu0 0.0
  %8899 = vmatpush1.xpose.msra.mxu0 0.0
  %8900 = vmatprep.subr.mxu0 0.0
  %8901 = vmatpush1.xpose.msra.mxu0 0.0
  %8902 = vmatprep.subr.mxu0 0.0
  %8903 = vmatpush1.xpose.msra.mxu0 0.0
  %8904 = vmatprep.subr.mxu0 0.0
  %8905 = vmatpush1.xpose.msra.mxu0 0.0
  %8906 = vmatprep.mubr.f32.mxu0 0.0
  %v8907 = vand.u32 %v8488, 4294901760
  %8908 = vmatmul.mubr.f32.gmra.mrb[0].mxu0 %v8907
  %v8909 = vpop.f32.mrb[0].mxu0
  %v8910 = vadd.f32 %v8825, %v8909
  %v8911 = vpop.f32.mrb[0].mxu0
  %8912 = vmatprep.mubr.f32.mxu0 0.0
  %v8913 = vand.u32 %v8490, 4294901760
  %8914 = vmatmul.mubr.f32.gmra.mrb[0].mxu0 %v8913
  %v8915 = vpop.f32.mrb[0].mxu0
  %v8916 = vadd.f32 %v8833, %v8915
  %v8917 = vpop.f32.mrb[0].mxu0
  %8918 = vdwg.mxu0
  %8919 = vmatprep.subr.mxu0 0.0
  %v8920 = vand.u32 %v8492, 4294901760
  %8921 = vmatpush1.xpose.msra.mxu0 %v8920
  %8922 = vmatprep.subr.mxu0 0.0
  %v8923 = vand.u32 %v8494, 4294901760
  %8924 = vmatpush1.xpose.msra.mxu0 %v8923
  %8925 = vmatprep.subr.mxu0 0.0
  %8926 = vmatpush1.xpose.msra.mxu0 0.0
  %8927 = vmatprep.subr.mxu0 0.0
  %8928 = vmatpush1.xpose.msra.mxu0 0.0
  %8929 = vmatprep.subr.mxu0 0.0
  %8930 = vmatpush1.xpose.msra.mxu0 0.0
  %8931 = vmatprep.subr.mxu0 0.0
  %8932 = vmatpush1.xpose.msra.mxu0 0.0
  %8933 = vmatprep.subr.mxu0 0.0
  %8934 = vmatpush1.xpose.msra.mxu0 0.0
  %8935 = vmatprep.subr.mxu0 0.0
  %8936 = vmatpush1.xpose.msra.mxu0 0.0
  %8937 = vmatprep.subr.mxu0 0.0
  %8938 = vmatpush1.xpose.msra.mxu0 0.0
  %8939 = vmatprep.subr.mxu0 0.0
  %8940 = vmatpush1.xpose.msra.mxu0 0.0
  %8941 = vmatprep.subr.mxu0 0.0
  %8942 = vmatpush1.xpose.msra.mxu0 0.0
  %8943 = vmatprep.subr.mxu0 0.0
  %8944 = vmatpush1.xpose.msra.mxu0 0.0
  %8945 = vmatprep.subr.mxu0 0.0
  %8946 = vmatpush1.xpose.msra.mxu0 0.0
  %8947 = vmatprep.subr.mxu0 0.0
  %8948 = vmatpush1.xpose.msra.mxu0 0.0
  %8949 = vmatprep.subr.mxu0 0.0
  %8950 = vmatpush1.xpose.msra.mxu0 0.0
  %8951 = vmatprep.subr.mxu0 0.0
  %8952 = vmatpush1.xpose.msra.mxu0 0.0
  %8953 = vmatprep.subr.mxu0 0.0
  %8954 = vmatpush1.xpose.msra.mxu0 0.0
  %8955 = vmatprep.subr.mxu0 0.0
  %8956 = vmatpush1.xpose.msra.mxu0 0.0
  %8957 = vmatprep.subr.mxu0 0.0
  %8958 = vmatpush1.xpose.msra.mxu0 0.0
  %8959 = vmatprep.subr.mxu0 0.0
  %8960 = vmatpush1.xpose.msra.mxu0 0.0
  %8961 = vmatprep.subr.mxu0 0.0
  %8962 = vmatpush1.xpose.msra.mxu0 0.0
  %8963 = vmatprep.subr.mxu0 0.0
  %8964 = vmatpush1.xpose.msra.mxu0 0.0
  %8965 = vmatprep.subr.mxu0 0.0
  %8966 = vmatpush1.xpose.msra.mxu0 0.0
  %8967 = vmatprep.subr.mxu0 0.0
  %8968 = vmatpush1.xpose.msra.mxu0 0.0
  %8969 = vmatprep.subr.mxu0 0.0
  %8970 = vmatpush1.xpose.msra.mxu0 0.0
  %8971 = vmatprep.subr.mxu0 0.0
  %8972 = vmatpush1.xpose.msra.mxu0 0.0
  %8973 = vmatprep.subr.mxu0 0.0
  %8974 = vmatpush1.xpose.msra.mxu0 0.0
  %8975 = vmatprep.subr.mxu0 0.0
  %8976 = vmatpush1.xpose.msra.mxu0 0.0
  %8977 = vmatprep.subr.mxu0 0.0
  %8978 = vmatpush1.xpose.msra.mxu0 0.0
  %8979 = vmatprep.subr.mxu0 0.0
  %8980 = vmatpush1.xpose.msra.mxu0 0.0
  %8981 = vmatprep.subr.mxu0 0.0
  %8982 = vmatpush1.xpose.msra.mxu0 0.0
  %8983 = vmatprep.subr.mxu0 0.0
  %8984 = vmatpush1.xpose.msra.mxu0 0.0
  %8985 = vmatprep.mubr.f32.mxu0 0.0
  %v8986 = vand.u32 %v8488, 4294901760
  %8987 = vmatmul.mubr.f32.gmra.mrb[0].mxu0 %v8986
  %v8988 = vpop.f32.mrb[0].mxu0
  %v8989 = vadd.f32 %v8910, %v8988
  %v8990 = vpop.f32.mrb[0].mxu0
  %8991 = vmatprep.mubr.f32.mxu0 0.0
  %v8992 = vand.u32 %v8490, 4294901760
  %8993 = vmatmul.mubr.f32.gmra.mrb[0].mxu0 %v8992
  %v8994 = vpop.f32.mrb[0].mxu0
  %v8995 = vadd.f32 %v8916, %v8994
  %v8996 = vpop.f32.mrb[0].mxu0
  %8997 = vdwg.mxu0
  %v8998 = vsel %vm1580, %v8989, -inf
  %8999 = vmax.xlane.f32.xlu0 %v8998
  %v9000 = vpop.xlane.xlu0 %8999
  %v9001 = vsel %vm1584, %v8995, -inf
  %9002 = vmax.xlane.f32.xlu0 %v9001
  %v9003 = vpop.xlane.xlu0 %9002
  %v9004 = vsub.f32 %v8989, %v9000
  %v9005 = vsub.f32 %v8995, %v9003
  %v9006 = vmul.f32 %v9004, 1.442695
  %v9007 = vpow.pop %v9006
  %v9008 = vmul.f32 %v9005, 1.442695
  %v9009 = vpow.pop %v9008
  %v9010 = vsel %vm1580, %v9007, 0.0
  %9011 = vadd.xlane.f32.xlu0 %v9010
  %v9012 = vpop.xlane.xlu0 %9011
  %v9013 = vsel %vm1584, %v9009, 0.0
  %9014 = vadd.xlane.f32.xlu0 %v9013
  %v9015 = vpop.xlane.xlu0 %9014
  %v9016 = vrcp.pop %v9012
  %v9017 = vmul.f32 %v9007, %v9016
  %v9018 = vrcp.pop %v9015
  %v9019 = vmul.f32 %v9009, %v9018
  %9020 = vrot.lane.b32.xlu0 %v5858, 80
  %v9021 = vpop.permute.xlu0 %9020
  %9022 = vrot.lane.b32.xlu0 %v5857, 80
  %v9023 = vpop.permute.xlu0 %9022
  %v9026 = vsel %vm1580, %v9017, 0
  %v9029 = vsel %vm1580, %v9019, 0
  %v9031 = vsel %vm1610, %v9023, 0
  %9033 = vmatprep.subr.mxu0 0.0
  %v9034 = vand.u32 %v9021, 4294901760
  %9035 = vmatpush1.msra.mxu0 %v9034
  %9036 = vmatprep.subr.mxu0 0.0
  %v9037 = vand.u32 %v9031, 4294901760
  %9038 = vmatpush1.msra.mxu0 %v9037
  %9039 = vmatprep.subr.mxu0 0.0
  %9040 = vmatpush1.msra.mxu0 0.0
  %9041 = vmatprep.subr.mxu0 0.0
  %9042 = vmatpush1.msra.mxu0 0.0
  %9043 = vmatprep.subr.mxu0 0.0
  %9044 = vmatpush1.msra.mxu0 0.0
  %9045 = vmatprep.subr.mxu0 0.0
  %9046 = vmatpush1.msra.mxu0 0.0
  %9047 = vmatprep.subr.mxu0 0.0
  %9048 = vmatpush1.msra.mxu0 0.0
  %9049 = vmatprep.subr.mxu0 0.0
  %9050 = vmatpush1.msra.mxu0 0.0
  %9051 = vmatprep.subr.mxu0 0.0
  %9052 = vmatpush1.msra.mxu0 0.0
  %9053 = vmatprep.subr.mxu0 0.0
  %9054 = vmatpush1.msra.mxu0 0.0
  %9055 = vmatprep.subr.mxu0 0.0
  %9056 = vmatpush1.msra.mxu0 0.0
  %9057 = vmatprep.subr.mxu0 0.0
  %9058 = vmatpush1.msra.mxu0 0.0
  %9059 = vmatprep.subr.mxu0 0.0
  %9060 = vmatpush1.msra.mxu0 0.0
  %9061 = vmatprep.subr.mxu0 0.0
  %9062 = vmatpush1.msra.mxu0 0.0
  %9063 = vmatprep.subr.mxu0 0.0
  %9064 = vmatpush1.msra.mxu0 0.0
  %9065 = vmatprep.subr.mxu0 0.0
  %9066 = vmatpush1.msra.mxu0 0.0
  %9067 = vmatprep.subr.mxu0 0.0
  %9068 = vmatpush1.msra.mxu0 0.0
  %9069 = vmatprep.subr.mxu0 0.0
  %9070 = vmatpush1.msra.mxu0 0.0
  %9071 = vmatprep.subr.mxu0 0.0
  %9072 = vmatpush1.msra.mxu0 0.0
  %9073 = vmatprep.subr.mxu0 0.0
  %9074 = vmatpush1.msra.mxu0 0.0
  %9075 = vmatprep.subr.mxu0 0.0
  %9076 = vmatpush1.msra.mxu0 0.0
  %9077 = vmatprep.subr.mxu0 0.0
  %9078 = vmatpush1.msra.mxu0 0.0
  %9079 = vmatprep.subr.mxu0 0.0
  %9080 = vmatpush1.msra.mxu0 0.0
  %9081 = vmatprep.subr.mxu0 0.0
  %9082 = vmatpush1.msra.mxu0 0.0
  %9083 = vmatprep.subr.mxu0 0.0
  %9084 = vmatpush1.msra.mxu0 0.0
  %9085 = vmatprep.subr.mxu0 0.0
  %9086 = vmatpush1.msra.mxu0 0.0
  %9087 = vmatprep.subr.mxu0 0.0
  %9088 = vmatpush1.msra.mxu0 0.0
  %9089 = vmatprep.subr.mxu0 0.0
  %9090 = vmatpush1.msra.mxu0 0.0
  %9091 = vmatprep.subr.mxu0 0.0
  %9092 = vmatpush1.msra.mxu0 0.0
  %9093 = vmatprep.subr.mxu0 0.0
  %9094 = vmatpush1.msra.mxu0 0.0
  %9095 = vmatprep.subr.mxu0 0.0
  %9096 = vmatpush1.msra.mxu0 0.0
  %9097 = vmatprep.subr.mxu0 0.0
  %9098 = vmatpush1.msra.mxu0 0.0
  %9099 = vmatprep.mubr.f32.mxu0 0.0
  %v9100 = vand.u32 %v9026, 4294901760
  %v9101 = vsub.f32 %v9026, %v9100
  %v9102 = vand.u32 %v9101, 4294901760
  %v9103 = vsub.f32 %v9101, %v9102
  %v9104 = vand.u32 %v9103, 4294901760
  %9105 = vmatmul.mubr.f32.gmra.mrb[0].mxu0 %v9104
  %v9106 = vpop.f32.mrb[0].mxu0
  %v9107 = vadd.f32 0.0, %v9106
  %v9108 = vpop.f32.mrb[0].mxu0
  %9109 = vmatprep.mubr.f32.mxu0 0.0
  %v9110 = vand.u32 %v9029, 4294901760
  %v9111 = vsub.f32 %v9029, %v9110
  %v9112 = vand.u32 %v9111, 4294901760
  %v9113 = vsub.f32 %v9111, %v9112
  %v9114 = vand.u32 %v9113, 4294901760
  %9115 = vmatmul.mubr.f32.gmra.mrb[0].mxu0 %v9114
  %v9116 = vpop.f32.mrb[0].mxu0
  %v9117 = vadd.f32 0.0, %v9116
  %v9118 = vpop.f32.mrb[0].mxu0
  %9119 = vdwg.mxu0
  %9120 = vmatprep.subr.mxu0 0.0
  %v9121 = vand.u32 %v9021, 4294901760
  %v9122 = vsub.f32 %v9021, %v9121
  %v9123 = vand.u32 %v9122, 4294901760
  %v9124 = vsub.f32 %v9122, %v9123
  %v9125 = vand.u32 %v9124, 4294901760
  %9126 = vmatpush1.msra.mxu0 %v9125
  %9127 = vmatprep.subr.mxu0 0.0
  %v9128 = vand.u32 %v9031, 4294901760
  %v9129 = vsub.f32 %v9031, %v9128
  %v9130 = vand.u32 %v9129, 4294901760
  %v9131 = vsub.f32 %v9129, %v9130
  %v9132 = vand.u32 %v9131, 4294901760
  %9133 = vmatpush1.msra.mxu0 %v9132
  %9134 = vmatprep.subr.mxu0 0.0
  %9135 = vmatpush1.msra.mxu0 0.0
  %9136 = vmatprep.subr.mxu0 0.0
  %9137 = vmatpush1.msra.mxu0 0.0
  %9138 = vmatprep.subr.mxu0 0.0
  %9139 = vmatpush1.msra.mxu0 0.0
  %9140 = vmatprep.subr.mxu0 0.0
  %9141 = vmatpush1.msra.mxu0 0.0
  %9142 = vmatprep.subr.mxu0 0.0
  %9143 = vmatpush1.msra.mxu0 0.0
  %9144 = vmatprep.subr.mxu0 0.0
  %9145 = vmatpush1.msra.mxu0 0.0
  %9146 = vmatprep.subr.mxu0 0.0
  %9147 = vmatpush1.msra.mxu0 0.0
  %9148 = vmatprep.subr.mxu0 0.0
  %9149 = vmatpush1.msra.mxu0 0.0
  %9150 = vmatprep.subr.mxu0 0.0
  %9151 = vmatpush1.msra.mxu0 0.0
  %9152 = vmatprep.subr.mxu0 0.0
  %9153 = vmatpush1.msra.mxu0 0.0
  %9154 = vmatprep.subr.mxu0 0.0
  %9155 = vmatpush1.msra.mxu0 0.0
  %9156 = vmatprep.subr.mxu0 0.0
  %9157 = vmatpush1.msra.mxu0 0.0
  %9158 = vmatprep.subr.mxu0 0.0
  %9159 = vmatpush1.msra.mxu0 0.0
  %9160 = vmatprep.subr.mxu0 0.0
  %9161 = vmatpush1.msra.mxu0 0.0
  %9162 = vmatprep.subr.mxu0 0.0
  %9163 = vmatpush1.msra.mxu0 0.0
  %9164 = vmatprep.subr.mxu0 0.0
  %9165 = vmatpush1.msra.mxu0 0.0
  %9166 = vmatprep.subr.mxu0 0.0
  %9167 = vmatpush1.msra.mxu0 0.0
  %9168 = vmatprep.subr.mxu0 0.0
  %9169 = vmatpush1.msra.mxu0 0.0
  %9170 = vmatprep.subr.mxu0 0.0
  %9171 = vmatpush1.msra.mxu0 0.0
  %9172 = vmatprep.subr.mxu0 0.0
  %9173 = vmatpush1.msra.mxu0 0.0
  %9174 = vmatprep.subr.mxu0 0.0
  %9175 = vmatpush1.msra.mxu0 0.0
  %9176 = vmatprep.subr.mxu0 0.0
  %9177 = vmatpush1.msra.mxu0 0.0
  %9178 = vmatprep.subr.mxu0 0.0
  %9179 = vmatpush1.msra.mxu0 0.0
  %9180 = vmatprep.subr.mxu0 0.0
  %9181 = vmatpush1.msra.mxu0 0.0
  %9182 = vmatprep.subr.mxu0 0.0
  %9183 = vmatpush1.msra.mxu0 0.0
  %9184 = vmatprep.subr.mxu0 0.0
  %9185 = vmatpush1.msra.mxu0 0.0
  %9186 = vmatprep.subr.mxu0 0.0
  %9187 = vmatpush1.msra.mxu0 0.0
  %9188 = vmatprep.subr.mxu0 0.0
  %9189 = vmatpush1.msra.mxu0 0.0
  %9190 = vmatprep.subr.mxu0 0.0
  %9191 = vmatpush1.msra.mxu0 0.0
  %9192 = vmatprep.subr.mxu0 0.0
  %9193 = vmatpush1.msra.mxu0 0.0
  %9194 = vmatprep.mubr.f32.mxu0 0.0
  %v9195 = vand.u32 %v9026, 4294901760
  %9196 = vmatmul.mubr.f32.gmra.mrb[0].mxu0 %v9195
  %v9197 = vpop.f32.mrb[0].mxu0
  %v9198 = vadd.f32 %v9107, %v9197
  %v9199 = vpop.f32.mrb[0].mxu0
  %9200 = vmatprep.mubr.f32.mxu0 0.0
  %v9201 = vand.u32 %v9029, 4294901760
  %9202 = vmatmul.mubr.f32.gmra.mrb[0].mxu0 %v9201
  %v9203 = vpop.f32.mrb[0].mxu0
  %v9204 = vadd.f32 %v9117, %v9203
  %v9205 = vpop.f32.mrb[0].mxu0
  %9206 = vdwg.mxu0
  %9207 = vmatprep.subr.mxu0 0.0
  %v9208 = vand.u32 %v9021, 4294901760
  %v9209 = vsub.f32 %v9021, %v9208
  %9210 = vmatpush1.msra.mxu0 %v9209
  %9211 = vmatprep.subr.mxu0 0.0
  %v9212 = vand.u32 %v9031, 4294901760
  %v9213 = vsub.f32 %v9031, %v9212
  %9214 = vmatpush1.msra.mxu0 %v9213
  %9215 = vmatprep.subr.mxu0 0.0
  %9216 = vmatpush1.msra.mxu0 0.0
  %9217 = vmatprep.subr.mxu0 0.0
  %9218 = vmatpush1.msra.mxu0 0.0
  %9219 = vmatprep.subr.mxu0 0.0
  %9220 = vmatpush1.msra.mxu0 0.0
  %9221 = vmatprep.subr.mxu0 0.0
  %9222 = vmatpush1.msra.mxu0 0.0
  %9223 = vmatprep.subr.mxu0 0.0
  %9224 = vmatpush1.msra.mxu0 0.0
  %9225 = vmatprep.subr.mxu0 0.0
  %9226 = vmatpush1.msra.mxu0 0.0
  %9227 = vmatprep.subr.mxu0 0.0
  %9228 = vmatpush1.msra.mxu0 0.0
  %9229 = vmatprep.subr.mxu0 0.0
  %9230 = vmatpush1.msra.mxu0 0.0
  %9231 = vmatprep.subr.mxu0 0.0
  %9232 = vmatpush1.msra.mxu0 0.0
  %9233 = vmatprep.subr.mxu0 0.0
  %9234 = vmatpush1.msra.mxu0 0.0
  %9235 = vmatprep.subr.mxu0 0.0
  %9236 = vmatpush1.msra.mxu0 0.0
  %9237 = vmatprep.subr.mxu0 0.0
  %9238 = vmatpush1.msra.mxu0 0.0
  %9239 = vmatprep.subr.mxu0 0.0
  %9240 = vmatpush1.msra.mxu0 0.0
  %9241 = vmatprep.subr.mxu0 0.0
  %9242 = vmatpush1.msra.mxu0 0.0
  %9243 = vmatprep.subr.mxu0 0.0
  %9244 = vmatpush1.msra.mxu0 0.0
  %9245 = vmatprep.subr.mxu0 0.0
  %9246 = vmatpush1.msra.mxu0 0.0
  %9247 = vmatprep.subr.mxu0 0.0
  %9248 = vmatpush1.msra.mxu0 0.0
  %9249 = vmatprep.subr.mxu0 0.0
  %9250 = vmatpush1.msra.mxu0 0.0
  %9251 = vmatprep.subr.mxu0 0.0
  %9252 = vmatpush1.msra.mxu0 0.0
  %9253 = vmatprep.subr.mxu0 0.0
  %9254 = vmatpush1.msra.mxu0 0.0
  %9255 = vmatprep.subr.mxu0 0.0
  %9256 = vmatpush1.msra.mxu0 0.0
  %9257 = vmatprep.subr.mxu0 0.0
  %9258 = vmatpush1.msra.mxu0 0.0
  %9259 = vmatprep.subr.mxu0 0.0
  %9260 = vmatpush1.msra.mxu0 0.0
  %9261 = vmatprep.subr.mxu0 0.0
  %9262 = vmatpush1.msra.mxu0 0.0
  %9263 = vmatprep.subr.mxu0 0.0
  %9264 = vmatpush1.msra.mxu0 0.0
  %9265 = vmatprep.subr.mxu0 0.0
  %9266 = vmatpush1.msra.mxu0 0.0
  %9267 = vmatprep.subr.mxu0 0.0
  %9268 = vmatpush1.msra.mxu0 0.0
  %9269 = vmatprep.subr.mxu0 0.0
  %9270 = vmatpush1.msra.mxu0 0.0
  %9271 = vmatprep.subr.mxu0 0.0
  %9272 = vmatpush1.msra.mxu0 0.0
  %9273 = vmatprep.subr.mxu0 0.0
  %9274 = vmatpush1.msra.mxu0 0.0
  %9275 = vmatprep.mubr.f32.mxu0 0.0
  %v9276 = vand.u32 %v9026, 4294901760
  %v9277 = vsub.f32 %v9026, %v9276
  %9278 = vmatmul.mubr.f32.gmra.mrb[0].mxu0 %v9277
  %v9279 = vpop.f32.mrb[0].mxu0
  %v9280 = vadd.f32 %v9198, %v9279
  %v9281 = vpop.f32.mrb[0].mxu0
  %9282 = vmatprep.mubr.f32.mxu0 0.0
  %v9283 = vand.u32 %v9029, 4294901760
  %v9284 = vsub.f32 %v9029, %v9283
  %9285 = vmatmul.mubr.f32.gmra.mrb[0].mxu0 %v9284
  %v9286 = vpop.f32.mrb[0].mxu0
  %v9287 = vadd.f32 %v9204, %v9286
  %v9288 = vpop.f32.mrb[0].mxu0
  %9289 = vdwg.mxu0
  %9290 = vmatprep.subr.mxu0 0.0
  %v9291 = vand.u32 %v9021, 4294901760
  %9292 = vmatpush1.msra.mxu0 %v9291
  %9293 = vmatprep.subr.mxu0 0.0
  %v9294 = vand.u32 %v9031, 4294901760
  %9295 = vmatpush1.msra.mxu0 %v9294
  %9296 = vmatprep.subr.mxu0 0.0
  %9297 = vmatpush1.msra.mxu0 0.0
  %9298 = vmatprep.subr.mxu0 0.0
  %9299 = vmatpush1.msra.mxu0 0.0
  %9300 = vmatprep.subr.mxu0 0.0
  %9301 = vmatpush1.msra.mxu0 0.0
  %9302 = vmatprep.subr.mxu0 0.0
  %9303 = vmatpush1.msra.mxu0 0.0
  %9304 = vmatprep.subr.mxu0 0.0
  %9305 = vmatpush1.msra.mxu0 0.0
  %9306 = vmatprep.subr.mxu0 0.0
  %9307 = vmatpush1.msra.mxu0 0.0
  %9308 = vmatprep.subr.mxu0 0.0
  %9309 = vmatpush1.msra.mxu0 0.0
  %9310 = vmatprep.subr.mxu0 0.0
  %9311 = vmatpush1.msra.mxu0 0.0
  %9312 = vmatprep.subr.mxu0 0.0
  %9313 = vmatpush1.msra.mxu0 0.0
  %9314 = vmatprep.subr.mxu0 0.0
  %9315 = vmatpush1.msra.mxu0 0.0
  %9316 = vmatprep.subr.mxu0 0.0
  %9317 = vmatpush1.msra.mxu0 0.0
  %9318 = vmatprep.subr.mxu0 0.0
  %9319 = vmatpush1.msra.mxu0 0.0
  %9320 = vmatprep.subr.mxu0 0.0
  %9321 = vmatpush1.msra.mxu0 0.0
  %9322 = vmatprep.subr.mxu0 0.0
  %9323 = vmatpush1.msra.mxu0 0.0
  %9324 = vmatprep.subr.mxu0 0.0
  %9325 = vmatpush1.msra.mxu0 0.0
  %9326 = vmatprep.subr.mxu0 0.0
  %9327 = vmatpush1.msra.mxu0 0.0
  %9328 = vmatprep.subr.mxu0 0.0
  %9329 = vmatpush1.msra.mxu0 0.0
  %9330 = vmatprep.subr.mxu0 0.0
  %9331 = vmatpush1.msra.mxu0 0.0
  %9332 = vmatprep.subr.mxu0 0.0
  %9333 = vmatpush1.msra.mxu0 0.0
  %9334 = vmatprep.subr.mxu0 0.0
  %9335 = vmatpush1.msra.mxu0 0.0
  %9336 = vmatprep.subr.mxu0 0.0
  %9337 = vmatpush1.msra.mxu0 0.0
  %9338 = vmatprep.subr.mxu0 0.0
  %9339 = vmatpush1.msra.mxu0 0.0
  %9340 = vmatprep.subr.mxu0 0.0
  %9341 = vmatpush1.msra.mxu0 0.0
  %9342 = vmatprep.subr.mxu0 0.0
  %9343 = vmatpush1.msra.mxu0 0.0
  %9344 = vmatprep.subr.mxu0 0.0
  %9345 = vmatpush1.msra.mxu0 0.0
  %9346 = vmatprep.subr.mxu0 0.0
  %9347 = vmatpush1.msra.mxu0 0.0
  %9348 = vmatprep.subr.mxu0 0.0
  %9349 = vmatpush1.msra.mxu0 0.0
  %9350 = vmatprep.subr.mxu0 0.0
  %9351 = vmatpush1.msra.mxu0 0.0
  %9352 = vmatprep.subr.mxu0 0.0
  %9353 = vmatpush1.msra.mxu0 0.0
  %9354 = vmatprep.subr.mxu0 0.0
  %9355 = vmatpush1.msra.mxu0 0.0
  %9356 = vmatprep.mubr.f32.mxu0 0.0
  %v9357 = vand.u32 %v9026, 4294901760
  %v9358 = vsub.f32 %v9026, %v9357
  %v9359 = vand.u32 %v9358, 4294901760
  %9360 = vmatmul.mubr.f32.gmra.mrb[0].mxu0 %v9359
  %v9361 = vpop.f32.mrb[0].mxu0
  %v9362 = vadd.f32 %v9280, %v9361
  %v9363 = vpop.f32.mrb[0].mxu0
  %9364 = vmatprep.mubr.f32.mxu0 0.0
  %v9365 = vand.u32 %v9029, 4294901760
  %v9366 = vsub.f32 %v9029, %v9365
  %v9367 = vand.u32 %v9366, 4294901760
  %9368 = vmatmul.mubr.f32.gmra.mrb[0].mxu0 %v9367
  %v9369 = vpop.f32.mrb[0].mxu0
  %v9370 = vadd.f32 %v9287, %v9369
  %v9371 = vpop.f32.mrb[0].mxu0
  %9372 = vdwg.mxu0
  %9373 = vmatprep.subr.mxu0 0.0
  %v9374 = vand.u32 %v9021, 4294901760
  %v9375 = vsub.f32 %v9021, %v9374
  %v9376 = vand.u32 %v9375, 4294901760
  %9377 = vmatpush1.msra.mxu0 %v9376
  %9378 = vmatprep.subr.mxu0 0.0
  %v9379 = vand.u32 %v9031, 4294901760
  %v9380 = vsub.f32 %v9031, %v9379
  %v9381 = vand.u32 %v9380, 4294901760
  %9382 = vmatpush1.msra.mxu0 %v9381
  %9383 = vmatprep.subr.mxu0 0.0
  %9384 = vmatpush1.msra.mxu0 0.0
  %9385 = vmatprep.subr.mxu0 0.0
  %9386 = vmatpush1.msra.mxu0 0.0
  %9387 = vmatprep.subr.mxu0 0.0
  %9388 = vmatpush1.msra.mxu0 0.0
  %9389 = vmatprep.subr.mxu0 0.0
  %9390 = vmatpush1.msra.mxu0 0.0
  %9391 = vmatprep.subr.mxu0 0.0
  %9392 = vmatpush1.msra.mxu0 0.0
  %9393 = vmatprep.subr.mxu0 0.0
  %9394 = vmatpush1.msra.mxu0 0.0
  %9395 = vmatprep.subr.mxu0 0.0
  %9396 = vmatpush1.msra.mxu0 0.0
  %9397 = vmatprep.subr.mxu0 0.0
  %9398 = vmatpush1.msra.mxu0 0.0
  %9399 = vmatprep.subr.mxu0 0.0
  %9400 = vmatpush1.msra.mxu0 0.0
  %9401 = vmatprep.subr.mxu0 0.0
  %9402 = vmatpush1.msra.mxu0 0.0
  %9403 = vmatprep.subr.mxu0 0.0
  %9404 = vmatpush1.msra.mxu0 0.0
  %9405 = vmatprep.subr.mxu0 0.0
  %9406 = vmatpush1.msra.mxu0 0.0
  %9407 = vmatprep.subr.mxu0 0.0
  %9408 = vmatpush1.msra.mxu0 0.0
  %9409 = vmatprep.subr.mxu0 0.0
  %9410 = vmatpush1.msra.mxu0 0.0
  %9411 = vmatprep.subr.mxu0 0.0
  %9412 = vmatpush1.msra.mxu0 0.0
  %9413 = vmatprep.subr.mxu0 0.0
  %9414 = vmatpush1.msra.mxu0 0.0
  %9415 = vmatprep.subr.mxu0 0.0
  %9416 = vmatpush1.msra.mxu0 0.0
  %9417 = vmatprep.subr.mxu0 0.0
  %9418 = vmatpush1.msra.mxu0 0.0
  %9419 = vmatprep.subr.mxu0 0.0
  %9420 = vmatpush1.msra.mxu0 0.0
  %9421 = vmatprep.subr.mxu0 0.0
  %9422 = vmatpush1.msra.mxu0 0.0
  %9423 = vmatprep.subr.mxu0 0.0
  %9424 = vmatpush1.msra.mxu0 0.0
  %9425 = vmatprep.subr.mxu0 0.0
  %9426 = vmatpush1.msra.mxu0 0.0
  %9427 = vmatprep.subr.mxu0 0.0
  %9428 = vmatpush1.msra.mxu0 0.0
  %9429 = vmatprep.subr.mxu0 0.0
  %9430 = vmatpush1.msra.mxu0 0.0
  %9431 = vmatprep.subr.mxu0 0.0
  %9432 = vmatpush1.msra.mxu0 0.0
  %9433 = vmatprep.subr.mxu0 0.0
  %9434 = vmatpush1.msra.mxu0 0.0
  %9435 = vmatprep.subr.mxu0 0.0
  %9436 = vmatpush1.msra.mxu0 0.0
  %9437 = vmatprep.subr.mxu0 0.0
  %9438 = vmatpush1.msra.mxu0 0.0
  %9439 = vmatprep.subr.mxu0 0.0
  %9440 = vmatpush1.msra.mxu0 0.0
  %9441 = vmatprep.subr.mxu0 0.0
  %9442 = vmatpush1.msra.mxu0 0.0
  %9443 = vmatprep.mubr.f32.mxu0 0.0
  %v9444 = vand.u32 %v9026, 4294901760
  %9445 = vmatmul.mubr.f32.gmra.mrb[0].mxu0 %v9444
  %v9446 = vpop.f32.mrb[0].mxu0
  %v9447 = vadd.f32 %v9362, %v9446
  %v9448 = vpop.f32.mrb[0].mxu0
  %9449 = vmatprep.mubr.f32.mxu0 0.0
  %v9450 = vand.u32 %v9029, 4294901760
  %9451 = vmatmul.mubr.f32.gmra.mrb[0].mxu0 %v9450
  %v9452 = vpop.f32.mrb[0].mxu0
  %v9453 = vadd.f32 %v9370, %v9452
  %v9454 = vpop.f32.mrb[0].mxu0
  %9455 = vdwg.mxu0
  %9456 = vmatprep.subr.mxu0 0.0
  %v9457 = vand.u32 %v9021, 4294901760
  %9458 = vmatpush1.msra.mxu0 %v9457
  %9459 = vmatprep.subr.mxu0 0.0
  %v9460 = vand.u32 %v9031, 4294901760
  %9461 = vmatpush1.msra.mxu0 %v9460
  %9462 = vmatprep.subr.mxu0 0.0
  %9463 = vmatpush1.msra.mxu0 0.0
  %9464 = vmatprep.subr.mxu0 0.0
  %9465 = vmatpush1.msra.mxu0 0.0
  %9466 = vmatprep.subr.mxu0 0.0
  %9467 = vmatpush1.msra.mxu0 0.0
  %9468 = vmatprep.subr.mxu0 0.0
  %9469 = vmatpush1.msra.mxu0 0.0
  %9470 = vmatprep.subr.mxu0 0.0
  %9471 = vmatpush1.msra.mxu0 0.0
  %9472 = vmatprep.subr.mxu0 0.0
  %9473 = vmatpush1.msra.mxu0 0.0
  %9474 = vmatprep.subr.mxu0 0.0
  %9475 = vmatpush1.msra.mxu0 0.0
  %9476 = vmatprep.subr.mxu0 0.0
  %9477 = vmatpush1.msra.mxu0 0.0
  %9478 = vmatprep.subr.mxu0 0.0
  %9479 = vmatpush1.msra.mxu0 0.0
  %9480 = vmatprep.subr.mxu0 0.0
  %9481 = vmatpush1.msra.mxu0 0.0
  %9482 = vmatprep.subr.mxu0 0.0
  %9483 = vmatpush1.msra.mxu0 0.0
  %9484 = vmatprep.subr.mxu0 0.0
  %9485 = vmatpush1.msra.mxu0 0.0
  %9486 = vmatprep.subr.mxu0 0.0
  %9487 = vmatpush1.msra.mxu0 0.0
  %9488 = vmatprep.subr.mxu0 0.0
  %9489 = vmatpush1.msra.mxu0 0.0
  %9490 = vmatprep.subr.mxu0 0.0
  %9491 = vmatpush1.msra.mxu0 0.0
  %9492 = vmatprep.subr.mxu0 0.0
  %9493 = vmatpush1.msra.mxu0 0.0
  %9494 = vmatprep.subr.mxu0 0.0
  %9495 = vmatpush1.msra.mxu0 0.0
  %9496 = vmatprep.subr.mxu0 0.0
  %9497 = vmatpush1.msra.mxu0 0.0
  %9498 = vmatprep.subr.mxu0 0.0
  %9499 = vmatpush1.msra.mxu0 0.0
  %9500 = vmatprep.subr.mxu0 0.0
  %9501 = vmatpush1.msra.mxu0 0.0
  %9502 = vmatprep.subr.mxu0 0.0
  %9503 = vmatpush1.msra.mxu0 0.0
  %9504 = vmatprep.subr.mxu0 0.0
  %9505 = vmatpush1.msra.mxu0 0.0
  %9506 = vmatprep.subr.mxu0 0.0
  %9507 = vmatpush1.msra.mxu0 0.0
  %9508 = vmatprep.subr.mxu0 0.0
  %9509 = vmatpush1.msra.mxu0 0.0
  %9510 = vmatprep.subr.mxu0 0.0
  %9511 = vmatpush1.msra.mxu0 0.0
  %9512 = vmatprep.subr.mxu0 0.0
  %9513 = vmatpush1.msra.mxu0 0.0
  %9514 = vmatprep.subr.mxu0 0.0
  %9515 = vmatpush1.msra.mxu0 0.0
  %9516 = vmatprep.subr.mxu0 0.0
  %9517 = vmatpush1.msra.mxu0 0.0
  %9518 = vmatprep.subr.mxu0 0.0
  %9519 = vmatpush1.msra.mxu0 0.0
  %9520 = vmatprep.subr.mxu0 0.0
  %9521 = vmatpush1.msra.mxu0 0.0
  %9522 = vmatprep.mubr.f32.mxu0 0.0
  %v9523 = vand.u32 %v9026, 4294901760
  %9524 = vmatmul.mubr.f32.gmra.mrb[0].mxu0 %v9523
  %v9525 = vpop.f32.mrb[0].mxu0
  %v9526 = vadd.f32 %v9447, %v9525
  %v9527 = vpop.f32.mrb[0].mxu0
  %9528 = vmatprep.mubr.f32.mxu0 0.0
  %v9529 = vand.u32 %v9029, 4294901760
  %9530 = vmatmul.mubr.f32.gmra.mrb[0].mxu0 %v9529
  %v9531 = vpop.f32.mrb[0].mxu0
  %v9532 = vadd.f32 %v9453, %v9531
  %v9533 = vpop.f32.mrb[0].mxu0
  %9534 = vdwg.mxu0
  %9537 = vrot.lane.b32.xlu0 %v7416, 16
  %v9538 = vpop.permute.xlu0 %9537
  %9539 = vrot.lane.b32.xlu0 %v7422, 16
  %v9540 = vpop.permute.xlu0 %9539
  %9545 = vrot.lane.b32.xlu0 %v8471, 32
  %v9546 = vpop.permute.xlu0 %9545
  %9547 = vrot.lane.b32.xlu0 %v8477, 32
  %v9548 = vpop.permute.xlu0 %9547
  %9553 = vrot.lane.b32.xlu0 %v9526, 48
  %v9554 = vpop.permute.xlu0 %9553
  %9555 = vrot.lane.b32.xlu0 %v9532, 48
  %v9556 = vpop.permute.xlu0 %9555
  %v9559 = vsel %vm1069, %v6361, %v9538
  %v9560 = vsel %vm1069, %v6367, %v9540
  %v9561 = vsel %vm5308, %v9559, %v9546
  %v9562 = vsel %vm5308, %v9560, %v9548
  %v9563 = vsel %vm5311, %v9561, %v9554
  %v9564 = vsel %vm5311, %v9562, %v9556
  %v9567 = vrot.slane %v9563, 7
  %v9568 = vrot.slane %v9564, 7
  %v9569 = vsel %vm1610, %v9567, %v9568
  %v9571 = vsel %vm1610, %v5313, %v9567
  %v9573 = vlaneseq
  %v9574 = vshrl.u32 %v9573, 7
  %v9575 = vsub.s32 0, %v9574
  %v9576 = vrot.slane %v73, %v9575
  %vm9578 = vcmask 523264
  %v9580 = vsel %vm9578, %v5312, 0
  %v9583 = vsel %vm9578, %v9571, 0
  %v9585 = vsel %vm9578, %v9569, 0
  %9587 = vmatprep.subr.mxu0 0.0
  %v9588 = vand.u32 %v65, 4294901760
  %9589 = vmatpush1.msra.mxu0 %v9588
  %9590 = vmatprep.subr.mxu0 0.0
  %v9591 = vand.u32 %v66, 4294901760
  %9592 = vmatpush1.msra.mxu0 %v9591
  %9593 = vmatprep.subr.mxu0 0.0
  %v9594 = vand.u32 %v67, 4294901760
  %9595 = vmatpush1.msra.mxu0 %v9594
  %9596 = vmatprep.subr.mxu0 0.0
  %v9597 = vand.u32 %v68, 4294901760
  %9598 = vmatpush1.msra.mxu0 %v9597
  %9599 = vmatprep.subr.mxu0 0.0
  %v9600 = vand.u32 %v69, 4294901760
  %9601 = vmatpush1.msra.mxu0 %v9600
  %9602 = vmatprep.subr.mxu0 0.0
  %v9603 = vand.u32 %v70, 4294901760
  %9604 = vmatpush1.msra.mxu0 %v9603
  %9605 = vmatprep.subr.mxu0 0.0
  %v9606 = vand.u32 %v71, 4294901760
  %9607 = vmatpush1.msra.mxu0 %v9606
  %9608 = vmatprep.subr.mxu0 0.0
  %v9609 = vand.u32 %v72, 4294901760
  %9610 = vmatpush1.msra.mxu0 %v9609
  %9611 = vmatprep.subr.mxu0 0.0
  %9612 = vmatpush1.msra.mxu0 0.0
  %9613 = vmatprep.subr.mxu0 0.0
  %9614 = vmatpush1.msra.mxu0 0.0
  %9615 = vmatprep.subr.mxu0 0.0
  %9616 = vmatpush1.msra.mxu0 0.0
  %9617 = vmatprep.subr.mxu0 0.0
  %9618 = vmatpush1.msra.mxu0 0.0
  %9619 = vmatprep.subr.mxu0 0.0
  %9620 = vmatpush1.msra.mxu0 0.0
  %9621 = vmatprep.subr.mxu0 0.0
  %9622 = vmatpush1.msra.mxu0 0.0
  %9623 = vmatprep.subr.mxu0 0.0
  %9624 = vmatpush1.msra.mxu0 0.0
  %9625 = vmatprep.subr.mxu0 0.0
  %9626 = vmatpush1.msra.mxu0 0.0
  %9627 = vmatprep.subr.mxu0 0.0
  %9628 = vmatpush1.msra.mxu0 0.0
  %9629 = vmatprep.subr.mxu0 0.0
  %9630 = vmatpush1.msra.mxu0 0.0
  %9631 = vmatprep.subr.mxu0 0.0
  %9632 = vmatpush1.msra.mxu0 0.0
  %9633 = vmatprep.subr.mxu0 0.0
  %9634 = vmatpush1.msra.mxu0 0.0
  %9635 = vmatprep.subr.mxu0 0.0
  %9636 = vmatpush1.msra.mxu0 0.0
  %9637 = vmatprep.subr.mxu0 0.0
  %9638 = vmatpush1.msra.mxu0 0.0
  %9639 = vmatprep.subr.mxu0 0.0
  %9640 = vmatpush1.msra.mxu0 0.0
  %9641 = vmatprep.subr.mxu0 0.0
  %9642 = vmatpush1.msra.mxu0 0.0
  %9643 = vmatprep.subr.mxu0 0.0
  %9644 = vmatpush1.msra.mxu0 0.0
  %9645 = vmatprep.subr.mxu0 0.0
  %9646 = vmatpush1.msra.mxu0 0.0
  %9647 = vmatprep.subr.mxu0 0.0
  %9648 = vmatpush1.msra.mxu0 0.0
  %9649 = vmatprep.subr.mxu0 0.0
  %9650 = vmatpush1.msra.mxu0 0.0
  %9651 = vmatprep.subr.mxu0 0.0
  %9652 = vmatpush1.msra.mxu0 0.0
  %9653 = vmatprep.subr.mxu0 0.0
  %9654 = vmatpush1.msra.mxu0 0.0
  %9655 = vmatprep.subr.mxu0 0.0
  %9656 = vmatpush1.msra.mxu0 0.0
  %9657 = vmatprep.subr.mxu0 0.0
  %9658 = vmatpush1.msra.mxu0 0.0
  %9659 = vmatprep.mubr.f32.mxu0 0.0
  %v9660 = vand.u32 %v9580, 4294901760
  %v9661 = vsub.f32 %v9580, %v9660
  %v9662 = vand.u32 %v9661, 4294901760
  %v9663 = vsub.f32 %v9661, %v9662
  %v9664 = vand.u32 %v9663, 4294901760
  %9665 = vmatmul.mubr.f32.gmra.mrb[0].mxu0 %v9664
  %v9666 = vpop.f32.mrb[0].mxu0
  %v9667 = vadd.f32 %v9576, %v9666
  %v9668 = vpop.f32.mrb[0].mxu0
  %9669 = vmatprep.mubr.f32.mxu0 0.0
  %v9670 = vand.u32 %v9583, 4294901760
  %v9671 = vsub.f32 %v9583, %v9670
  %v9672 = vand.u32 %v9671, 4294901760
  %v9673 = vsub.f32 %v9671, %v9672
  %v9674 = vand.u32 %v9673, 4294901760
  %9675 = vmatmul.mubr.f32.gmra.mrb[0].mxu0 %v9674
  %v9676 = vpop.f32.mrb[0].mxu0
  %v9677 = vadd.f32 %v9576, %v9676
  %v9678 = vpop.f32.mrb[0].mxu0
  %9679 = vmatprep.mubr.f32.mxu0 0.0
  %v9680 = vand.u32 %v9585, 4294901760
  %v9681 = vsub.f32 %v9585, %v9680
  %v9682 = vand.u32 %v9681, 4294901760
  %v9683 = vsub.f32 %v9681, %v9682
  %v9684 = vand.u32 %v9683, 4294901760
  %9685 = vmatmul.mubr.f32.gmra.mrb[0].mxu0 %v9684
  %v9686 = vpop.f32.mrb[0].mxu0
  %v9687 = vadd.f32 %v9576, %v9686
  %v9688 = vpop.f32.mrb[0].mxu0
  %9689 = vdwg.mxu0
  %9690 = vmatprep.subr.mxu0 0.0
  %v9691 = vand.u32 %v65, 4294901760
  %v9692 = vsub.f32 %v65, %v9691
  %v9693 = vand.u32 %v9692, 4294901760
  %v9694 = vsub.f32 %v9692, %v9693
  %v9695 = vand.u32 %v9694, 4294901760
  %9696 = vmatpush1.msra.mxu0 %v9695
  %9697 = vmatprep.subr.mxu0 0.0
  %v9698 = vand.u32 %v66, 4294901760
  %v9699 = vsub.f32 %v66, %v9698
  %v9700 = vand.u32 %v9699, 4294901760
  %v9701 = vsub.f32 %v9699, %v9700
  %v9702 = vand.u32 %v9701, 4294901760
  %9703 = vmatpush1.msra.mxu0 %v9702
  %9704 = vmatprep.subr.mxu0 0.0
  %v9705 = vand.u32 %v67, 4294901760
  %v9706 = vsub.f32 %v67, %v9705
  %v9707 = vand.u32 %v9706, 4294901760
  %v9708 = vsub.f32 %v9706, %v9707
  %v9709 = vand.u32 %v9708, 4294901760
  %9710 = vmatpush1.msra.mxu0 %v9709
  %9711 = vmatprep.subr.mxu0 0.0
  %v9712 = vand.u32 %v68, 4294901760
  %v9713 = vsub.f32 %v68, %v9712
  %v9714 = vand.u32 %v9713, 4294901760
  %v9715 = vsub.f32 %v9713, %v9714
  %v9716 = vand.u32 %v9715, 4294901760
  %9717 = vmatpush1.msra.mxu0 %v9716
  %9718 = vmatprep.subr.mxu0 0.0
  %v9719 = vand.u32 %v69, 4294901760
  %v9720 = vsub.f32 %v69, %v9719
  %v9721 = vand.u32 %v9720, 4294901760
  %v9722 = vsub.f32 %v9720, %v9721
  %v9723 = vand.u32 %v9722, 4294901760
  %9724 = vmatpush1.msra.mxu0 %v9723
  %9725 = vmatprep.subr.mxu0 0.0
  %v9726 = vand.u32 %v70, 4294901760
  %v9727 = vsub.f32 %v70, %v9726
  %v9728 = vand.u32 %v9727, 4294901760
  %v9729 = vsub.f32 %v9727, %v9728
  %v9730 = vand.u32 %v9729, 4294901760
  %9731 = vmatpush1.msra.mxu0 %v9730
  %9732 = vmatprep.subr.mxu0 0.0
  %v9733 = vand.u32 %v71, 4294901760
  %v9734 = vsub.f32 %v71, %v9733
  %v9735 = vand.u32 %v9734, 4294901760
  %v9736 = vsub.f32 %v9734, %v9735
  %v9737 = vand.u32 %v9736, 4294901760
  %9738 = vmatpush1.msra.mxu0 %v9737
  %9739 = vmatprep.subr.mxu0 0.0
  %v9740 = vand.u32 %v72, 4294901760
  %v9741 = vsub.f32 %v72, %v9740
  %v9742 = vand.u32 %v9741, 4294901760
  %v9743 = vsub.f32 %v9741, %v9742
  %v9744 = vand.u32 %v9743, 4294901760
  %9745 = vmatpush1.msra.mxu0 %v9744
  %9746 = vmatprep.subr.mxu0 0.0
  %9747 = vmatpush1.msra.mxu0 0.0
  %9748 = vmatprep.subr.mxu0 0.0
  %9749 = vmatpush1.msra.mxu0 0.0
  %9750 = vmatprep.subr.mxu0 0.0
  %9751 = vmatpush1.msra.mxu0 0.0
  %9752 = vmatprep.subr.mxu0 0.0
  %9753 = vmatpush1.msra.mxu0 0.0
  %9754 = vmatprep.subr.mxu0 0.0
  %9755 = vmatpush1.msra.mxu0 0.0
  %9756 = vmatprep.subr.mxu0 0.0
  %9757 = vmatpush1.msra.mxu0 0.0
  %9758 = vmatprep.subr.mxu0 0.0
  %9759 = vmatpush1.msra.mxu0 0.0
  %9760 = vmatprep.subr.mxu0 0.0
  %9761 = vmatpush1.msra.mxu0 0.0
  %9762 = vmatprep.subr.mxu0 0.0
  %9763 = vmatpush1.msra.mxu0 0.0
  %9764 = vmatprep.subr.mxu0 0.0
  %9765 = vmatpush1.msra.mxu0 0.0
  %9766 = vmatprep.subr.mxu0 0.0
  %9767 = vmatpush1.msra.mxu0 0.0
  %9768 = vmatprep.subr.mxu0 0.0
  %9769 = vmatpush1.msra.mxu0 0.0
  %9770 = vmatprep.subr.mxu0 0.0
  %9771 = vmatpush1.msra.mxu0 0.0
  %9772 = vmatprep.subr.mxu0 0.0
  %9773 = vmatpush1.msra.mxu0 0.0
  %9774 = vmatprep.subr.mxu0 0.0
  %9775 = vmatpush1.msra.mxu0 0.0
  %9776 = vmatprep.subr.mxu0 0.0
  %9777 = vmatpush1.msra.mxu0 0.0
  %9778 = vmatprep.subr.mxu0 0.0
  %9779 = vmatpush1.msra.mxu0 0.0
  %9780 = vmatprep.subr.mxu0 0.0
  %9781 = vmatpush1.msra.mxu0 0.0
  %9782 = vmatprep.subr.mxu0 0.0
  %9783 = vmatpush1.msra.mxu0 0.0
  %9784 = vmatprep.subr.mxu0 0.0
  %9785 = vmatpush1.msra.mxu0 0.0
  %9786 = vmatprep.subr.mxu0 0.0
  %9787 = vmatpush1.msra.mxu0 0.0
  %9788 = vmatprep.subr.mxu0 0.0
  %9789 = vmatpush1.msra.mxu0 0.0
  %9790 = vmatprep.subr.mxu0 0.0
  %9791 = vmatpush1.msra.mxu0 0.0
  %9792 = vmatprep.subr.mxu0 0.0
  %9793 = vmatpush1.msra.mxu0 0.0
  %9794 = vmatprep.mubr.f32.mxu0 0.0
  %v9795 = vand.u32 %v9580, 4294901760
  %9796 = vmatmul.mubr.f32.gmra.mrb[0].mxu0 %v9795
  %v9797 = vpop.f32.mrb[0].mxu0
  %v9798 = vadd.f32 %v9667, %v9797
  %v9799 = vpop.f32.mrb[0].mxu0
  %9800 = vmatprep.mubr.f32.mxu0 0.0
  %v9801 = vand.u32 %v9583, 4294901760
  %9802 = vmatmul.mubr.f32.gmra.mrb[0].mxu0 %v9801
  %v9803 = vpop.f32.mrb[0].mxu0
  %v9804 = vadd.f32 %v9677, %v9803
  %v9805 = vpop.f32.mrb[0].mxu0
  %9806 = vmatprep.mubr.f32.mxu0 0.0
  %v9807 = vand.u32 %v9585, 4294901760
  %9808 = vmatmul.mubr.f32.gmra.mrb[0].mxu0 %v9807
  %v9809 = vpop.f32.mrb[0].mxu0
  %v9810 = vadd.f32 %v9687, %v9809
  %v9811 = vpop.f32.mrb[0].mxu0
  %9812 = vdwg.mxu0
  %9813 = vmatprep.subr.mxu0 0.0
  %v9814 = vand.u32 %v65, 4294901760
  %v9815 = vsub.f32 %v65, %v9814
  %9816 = vmatpush1.msra.mxu0 %v9815
  %9817 = vmatprep.subr.mxu0 0.0
  %v9818 = vand.u32 %v66, 4294901760
  %v9819 = vsub.f32 %v66, %v9818
  %9820 = vmatpush1.msra.mxu0 %v9819
  %9821 = vmatprep.subr.mxu0 0.0
  %v9822 = vand.u32 %v67, 4294901760
  %v9823 = vsub.f32 %v67, %v9822
  %9824 = vmatpush1.msra.mxu0 %v9823
  %9825 = vmatprep.subr.mxu0 0.0
  %v9826 = vand.u32 %v68, 4294901760
  %v9827 = vsub.f32 %v68, %v9826
  %9828 = vmatpush1.msra.mxu0 %v9827
  %9829 = vmatprep.subr.mxu0 0.0
  %v9830 = vand.u32 %v69, 4294901760
  %v9831 = vsub.f32 %v69, %v9830
  %9832 = vmatpush1.msra.mxu0 %v9831
  %9833 = vmatprep.subr.mxu0 0.0
  %v9834 = vand.u32 %v70, 4294901760
  %v9835 = vsub.f32 %v70, %v9834
  %9836 = vmatpush1.msra.mxu0 %v9835
  %9837 = vmatprep.subr.mxu0 0.0
  %v9838 = vand.u32 %v71, 4294901760
  %v9839 = vsub.f32 %v71, %v9838
  %9840 = vmatpush1.msra.mxu0 %v9839
  %9841 = vmatprep.subr.mxu0 0.0
  %v9842 = vand.u32 %v72, 4294901760
  %v9843 = vsub.f32 %v72, %v9842
  %9844 = vmatpush1.msra.mxu0 %v9843
  %9845 = vmatprep.subr.mxu0 0.0
  %9846 = vmatpush1.msra.mxu0 0.0
  %9847 = vmatprep.subr.mxu0 0.0
  %9848 = vmatpush1.msra.mxu0 0.0
  %9849 = vmatprep.subr.mxu0 0.0
  %9850 = vmatpush1.msra.mxu0 0.0
  %9851 = vmatprep.subr.mxu0 0.0
  %9852 = vmatpush1.msra.mxu0 0.0
  %9853 = vmatprep.subr.mxu0 0.0
  %9854 = vmatpush1.msra.mxu0 0.0
  %9855 = vmatprep.subr.mxu0 0.0
  %9856 = vmatpush1.msra.mxu0 0.0
  %9857 = vmatprep.subr.mxu0 0.0
  %9858 = vmatpush1.msra.mxu0 0.0
  %9859 = vmatprep.subr.mxu0 0.0
  %9860 = vmatpush1.msra.mxu0 0.0
  %9861 = vmatprep.subr.mxu0 0.0
  %9862 = vmatpush1.msra.mxu0 0.0
  %9863 = vmatprep.subr.mxu0 0.0
  %9864 = vmatpush1.msra.mxu0 0.0
  %9865 = vmatprep.subr.mxu0 0.0
  %9866 = vmatpush1.msra.mxu0 0.0
  %9867 = vmatprep.subr.mxu0 0.0
  %9868 = vmatpush1.msra.mxu0 0.0
  %9869 = vmatprep.subr.mxu0 0.0
  %9870 = vmatpush1.msra.mxu0 0.0
  %9871 = vmatprep.subr.mxu0 0.0
  %9872 = vmatpush1.msra.mxu0 0.0
  %9873 = vmatprep.subr.mxu0 0.0
  %9874 = vmatpush1.msra.mxu0 0.0
  %9875 = vmatprep.subr.mxu0 0.0
  %9876 = vmatpush1.msra.mxu0 0.0
  %9877 = vmatprep.subr.mxu0 0.0
  %9878 = vmatpush1.msra.mxu0 0.0
  %9879 = vmatprep.subr.mxu0 0.0
  %9880 = vmatpush1.msra.mxu0 0.0
  %9881 = vmatprep.subr.mxu0 0.0
  %9882 = vmatpush1.msra.mxu0 0.0
  %9883 = vmatprep.subr.mxu0 0.0
  %9884 = vmatpush1.msra.mxu0 0.0
  %9885 = vmatprep.subr.mxu0 0.0
  %9886 = vmatpush1.msra.mxu0 0.0
  %9887 = vmatprep.subr.mxu0 0.0
  %9888 = vmatpush1.msra.mxu0 0.0
  %9889 = vmatprep.subr.mxu0 0.0
  %9890 = vmatpush1.msra.mxu0 0.0
  %9891 = vmatprep.subr.mxu0 0.0
  %9892 = vmatpush1.msra.mxu0 0.0
  %9893 = vmatprep.mubr.f32.mxu0 0.0
  %v9894 = vand.u32 %v9580, 4294901760
  %v9895 = vsub.f32 %v9580, %v9894
  %9896 = vmatmul.mubr.f32.gmra.mrb[0].mxu0 %v9895
  %v9897 = vpop.f32.mrb[0].mxu0
  %v9898 = vadd.f32 %v9798, %v9897
  %v9899 = vpop.f32.mrb[0].mxu0
  %9900 = vmatprep.mubr.f32.mxu0 0.0
  %v9901 = vand.u32 %v9583, 4294901760
  %v9902 = vsub.f32 %v9583, %v9901
  %9903 = vmatmul.mubr.f32.gmra.mrb[0].mxu0 %v9902
  %v9904 = vpop.f32.mrb[0].mxu0
  %v9905 = vadd.f32 %v9804, %v9904
  %v9906 = vpop.f32.mrb[0].mxu0
  %9907 = vmatprep.mubr.f32.mxu0 0.0
  %v9908 = vand.u32 %v9585, 4294901760
  %v9909 = vsub.f32 %v9585, %v9908
  %9910 = vmatmul.mubr.f32.gmra.mrb[0].mxu0 %v9909
  %v9911 = vpop.f32.mrb[0].mxu0
  %v9912 = vadd.f32 %v9810, %v9911
  %v9913 = vpop.f32.mrb[0].mxu0
  %9914 = vdwg.mxu0
  %9915 = vmatprep.subr.mxu0 0.0
  %v9916 = vand.u32 %v65, 4294901760
  %9917 = vmatpush1.msra.mxu0 %v9916
  %9918 = vmatprep.subr.mxu0 0.0
  %v9919 = vand.u32 %v66, 4294901760
  %9920 = vmatpush1.msra.mxu0 %v9919
  %9921 = vmatprep.subr.mxu0 0.0
  %v9922 = vand.u32 %v67, 4294901760
  %9923 = vmatpush1.msra.mxu0 %v9922
  %9924 = vmatprep.subr.mxu0 0.0
  %v9925 = vand.u32 %v68, 4294901760
  %9926 = vmatpush1.msra.mxu0 %v9925
  %9927 = vmatprep.subr.mxu0 0.0
  %v9928 = vand.u32 %v69, 4294901760
  %9929 = vmatpush1.msra.mxu0 %v9928
  %9930 = vmatprep.subr.mxu0 0.0
  %v9931 = vand.u32 %v70, 4294901760
  %9932 = vmatpush1.msra.mxu0 %v9931
  %9933 = vmatprep.subr.mxu0 0.0
  %v9934 = vand.u32 %v71, 4294901760
  %9935 = vmatpush1.msra.mxu0 %v9934
  %9936 = vmatprep.subr.mxu0 0.0
  %v9937 = vand.u32 %v72, 4294901760
  %9938 = vmatpush1.msra.mxu0 %v9937
  %9939 = vmatprep.subr.mxu0 0.0
  %9940 = vmatpush1.msra.mxu0 0.0
  %9941 = vmatprep.subr.mxu0 0.0
  %9942 = vmatpush1.msra.mxu0 0.0
  %9943 = vmatprep.subr.mxu0 0.0
  %9944 = vmatpush1.msra.mxu0 0.0
  %9945 = vmatprep.subr.mxu0 0.0
  %9946 = vmatpush1.msra.mxu0 0.0
  %9947 = vmatprep.subr.mxu0 0.0
  %9948 = vmatpush1.msra.mxu0 0.0
  %9949 = vmatprep.subr.mxu0 0.0
  %9950 = vmatpush1.msra.mxu0 0.0
  %9951 = vmatprep.subr.mxu0 0.0
  %9952 = vmatpush1.msra.mxu0 0.0
  %9953 = vmatprep.subr.mxu0 0.0
  %9954 = vmatpush1.msra.mxu0 0.0
  %9955 = vmatprep.subr.mxu0 0.0
  %9956 = vmatpush1.msra.mxu0 0.0
  %9957 = vmatprep.subr.mxu0 0.0
  %9958 = vmatpush1.msra.mxu0 0.0
  %9959 = vmatprep.subr.mxu0 0.0
  %9960 = vmatpush1.msra.mxu0 0.0
  %9961 = vmatprep.subr.mxu0 0.0
  %9962 = vmatpush1.msra.mxu0 0.0
  %9963 = vmatprep.subr.mxu0 0.0
  %9964 = vmatpush1.msra.mxu0 0.0
  %9965 = vmatprep.subr.mxu0 0.0
  %9966 = vmatpush1.msra.mxu0 0.0
  %9967 = vmatprep.subr.mxu0 0.0
  %9968 = vmatpush1.msra.mxu0 0.0
  %9969 = vmatprep.subr.mxu0 0.0
  %9970 = vmatpush1.msra.mxu0 0.0
  %9971 = vmatprep.subr.mxu0 0.0
  %9972 = vmatpush1.msra.mxu0 0.0
  %9973 = vmatprep.subr.mxu0 0.0
  %9974 = vmatpush1.msra.mxu0 0.0
  %9975 = vmatprep.subr.mxu0 0.0
  %9976 = vmatpush1.msra.mxu0 0.0
  %9977 = vmatprep.subr.mxu0 0.0
  %9978 = vmatpush1.msra.mxu0 0.0
  %9979 = vmatprep.subr.mxu0 0.0
  %9980 = vmatpush1.msra.mxu0 0.0
  %9981 = vmatprep.subr.mxu0 0.0
  %9982 = vmatpush1.msra.mxu0 0.0
  %9983 = vmatprep.subr.mxu0 0.0
  %9984 = vmatpush1.msra.mxu0 0.0
  %9985 = vmatprep.subr.mxu0 0.0
  %9986 = vmatpush1.msra.mxu0 0.0
  %9987 = vmatprep.mubr.f32.mxu0 0.0
  %v9988 = vand.u32 %v9580, 4294901760
  %v9989 = vsub.f32 %v9580, %v9988
  %v9990 = vand.u32 %v9989, 4294901760
  %9991 = vmatmul.mubr.f32.gmra.mrb[0].mxu0 %v9990
  %v9992 = vpop.f32.mrb[0].mxu0
  %v9993 = vadd.f32 %v9898, %v9992
  %v9994 = vpop.f32.mrb[0].mxu0
  %9995 = vmatprep.mubr.f32.mxu0 0.0
  %v9996 = vand.u32 %v9583, 4294901760
  %v9997 = vsub.f32 %v9583, %v9996
  %v9998 = vand.u32 %v9997, 4294901760
  %9999 = vmatmul.mubr.f32.gmra.mrb[0].mxu0 %v9998
  %v10000 = vpop.f32.mrb[0].mxu0
  %v10001 = vadd.f32 %v9905, %v10000
  %v10002 = vpop.f32.mrb[0].mxu0
  %10003 = vmatprep.mubr.f32.mxu0 0.0
  %v10004 = vand.u32 %v9585, 4294901760
  %v10005 = vsub.f32 %v9585, %v10004
  %v10006 = vand.u32 %v10005, 4294901760
  %10007 = vmatmul.mubr.f32.gmra.mrb[0].mxu0 %v10006
  %v10008 = vpop.f32.mrb[0].mxu0
  %v10009 = vadd.f32 %v9912, %v10008
  %v10010 = vpop.f32.mrb[0].mxu0
  %10011 = vdwg.mxu0
  %10012 = vmatprep.subr.mxu0 0.0
  %v10013 = vand.u32 %v65, 4294901760
  %v10014 = vsub.f32 %v65, %v10013
  %v10015 = vand.u32 %v10014, 4294901760
  %10016 = vmatpush1.msra.mxu0 %v10015
  %10017 = vmatprep.subr.mxu0 0.0
  %v10018 = vand.u32 %v66, 4294901760
  %v10019 = vsub.f32 %v66, %v10018
  %v10020 = vand.u32 %v10019, 4294901760
  %10021 = vmatpush1.msra.mxu0 %v10020
  %10022 = vmatprep.subr.mxu0 0.0
  %v10023 = vand.u32 %v67, 4294901760
  %v10024 = vsub.f32 %v67, %v10023
  %v10025 = vand.u32 %v10024, 4294901760
  %10026 = vmatpush1.msra.mxu0 %v10025
  %10027 = vmatprep.subr.mxu0 0.0
  %v10028 = vand.u32 %v68, 4294901760
  %v10029 = vsub.f32 %v68, %v10028
  %v10030 = vand.u32 %v10029, 4294901760
  %10031 = vmatpush1.msra.mxu0 %v10030
  %10032 = vmatprep.subr.mxu0 0.0
  %v10033 = vand.u32 %v69, 4294901760
  %v10034 = vsub.f32 %v69, %v10033
  %v10035 = vand.u32 %v10034, 4294901760
  %10036 = vmatpush1.msra.mxu0 %v10035
  %10037 = vmatprep.subr.mxu0 0.0
  %v10038 = vand.u32 %v70, 4294901760
  %v10039 = vsub.f32 %v70, %v10038
  %v10040 = vand.u32 %v10039, 4294901760
  %10041 = vmatpush1.msra.mxu0 %v10040
  %10042 = vmatprep.subr.mxu0 0.0
  %v10043 = vand.u32 %v71, 4294901760
  %v10044 = vsub.f32 %v71, %v10043
  %v10045 = vand.u32 %v10044, 4294901760
  %10046 = vmatpush1.msra.mxu0 %v10045
  %10047 = vmatprep.subr.mxu0 0.0
  %v10048 = vand.u32 %v72, 4294901760
  %v10049 = vsub.f32 %v72, %v10048
  %v10050 = vand.u32 %v10049, 4294901760
  %10051 = vmatpush1.msra.mxu0 %v10050
  %10052 = vmatprep.subr.mxu0 0.0
  %10053 = vmatpush1.msra.mxu0 0.0
  %10054 = vmatprep.subr.mxu0 0.0
  %10055 = vmatpush1.msra.mxu0 0.0
  %10056 = vmatprep.subr.mxu0 0.0
  %10057 = vmatpush1.msra.mxu0 0.0
  %10058 = vmatprep.subr.mxu0 0.0
  %10059 = vmatpush1.msra.mxu0 0.0
  %10060 = vmatprep.subr.mxu0 0.0
  %10061 = vmatpush1.msra.mxu0 0.0
  %10062 = vmatprep.subr.mxu0 0.0
  %10063 = vmatpush1.msra.mxu0 0.0
  %10064 = vmatprep.subr.mxu0 0.0
  %10065 = vmatpush1.msra.mxu0 0.0
  %10066 = vmatprep.subr.mxu0 0.0
  %10067 = vmatpush1.msra.mxu0 0.0
  %10068 = vmatprep.subr.mxu0 0.0
  %10069 = vmatpush1.msra.mxu0 0.0
  %10070 = vmatprep.subr.mxu0 0.0
  %10071 = vmatpush1.msra.mxu0 0.0
  %10072 = vmatprep.subr.mxu0 0.0
  %10073 = vmatpush1.msra.mxu0 0.0
  %10074 = vmatprep.subr.mxu0 0.0
  %10075 = vmatpush1.msra.mxu0 0.0
  %10076 = vmatprep.subr.mxu0 0.0
  %10077 = vmatpush1.msra.mxu0 0.0
  %10078 = vmatprep.subr.mxu0 0.0
  %10079 = vmatpush1.msra.mxu0 0.0
  %10080 = vmatprep.subr.mxu0 0.0
  %10081 = vmatpush1.msra.mxu0 0.0
  %10082 = vmatprep.subr.mxu0 0.0
  %10083 = vmatpush1.msra.mxu0 0.0
  %10084 = vmatprep.subr.mxu0 0.0
  %10085 = vmatpush1.msra.mxu0 0.0
  %10086 = vmatprep.subr.mxu0 0.0
  %10087 = vmatpush1.msra.mxu0 0.0
  %10088 = vmatprep.subr.mxu0 0.0
  %10089 = vmatpush1.msra.mxu0 0.0
  %10090 = vmatprep.subr.mxu0 0.0
  %10091 = vmatpush1.msra.mxu0 0.0
  %10092 = vmatprep.subr.mxu0 0.0
  %10093 = vmatpush1.msra.mxu0 0.0
  %10094 = vmatprep.subr.mxu0 0.0
  %10095 = vmatpush1.msra.mxu0 0.0
  %10096 = vmatprep.subr.mxu0 0.0
  %10097 = vmatpush1.msra.mxu0 0.0
  %10098 = vmatprep.subr.mxu0 0.0
  %10099 = vmatpush1.msra.mxu0 0.0
  %10100 = vmatprep.mubr.f32.mxu0 0.0
  %v10101 = vand.u32 %v9580, 4294901760
  %10102 = vmatmul.mubr.f32.gmra.mrb[0].mxu0 %v10101
  %v10103 = vpop.f32.mrb[0].mxu0
  %v10104 = vadd.f32 %v9993, %v10103
  %v10105 = vpop.f32.mrb[0].mxu0
  %10106 = vmatprep.mubr.f32.mxu0 0.0
  %v10107 = vand.u32 %v9583, 4294901760
  %10108 = vmatmul.mubr.f32.gmra.mrb[0].mxu0 %v10107
  %v10109 = vpop.f32.mrb[0].mxu0
  %v10110 = vadd.f32 %v10001, %v10109
  %v10111 = vpop.f32.mrb[0].mxu0
  %10112 = vmatprep.mubr.f32.mxu0 0.0
  %v10113 = vand.u32 %v9585, 4294901760
  %10114 = vmatmul.mubr.f32.gmra.mrb[0].mxu0 %v10113
  %v10115 = vpop.f32.mrb[0].mxu0
  %v10116 = vadd.f32 %v10009, %v10115
  %v10117 = vpop.f32.mrb[0].mxu0
  %10118 = vdwg.mxu0
  %10119 = vmatprep.subr.mxu0 0.0
  %v10120 = vand.u32 %v65, 4294901760
  %10121 = vmatpush1.msra.mxu0 %v10120
  %10122 = vmatprep.subr.mxu0 0.0
  %v10123 = vand.u32 %v66, 4294901760
  %10124 = vmatpush1.msra.mxu0 %v10123
  %10125 = vmatprep.subr.mxu0 0.0
  %v10126 = vand.u32 %v67, 4294901760
  %10127 = vmatpush1.msra.mxu0 %v10126
  %10128 = vmatprep.subr.mxu0 0.0
  %v10129 = vand.u32 %v68, 4294901760
  %10130 = vmatpush1.msra.mxu0 %v10129
  %10131 = vmatprep.subr.mxu0 0.0
  %v10132 = vand.u32 %v69, 4294901760
  %10133 = vmatpush1.msra.mxu0 %v10132
  %10134 = vmatprep.subr.mxu0 0.0
  %v10135 = vand.u32 %v70, 4294901760
  %10136 = vmatpush1.msra.mxu0 %v10135
  %10137 = vmatprep.subr.mxu0 0.0
  %v10138 = vand.u32 %v71, 4294901760
  %10139 = vmatpush1.msra.mxu0 %v10138
  %10140 = vmatprep.subr.mxu0 0.0
  %v10141 = vand.u32 %v72, 4294901760
  %10142 = vmatpush1.msra.mxu0 %v10141
  %10143 = vmatprep.subr.mxu0 0.0
  %10144 = vmatpush1.msra.mxu0 0.0
  %10145 = vmatprep.subr.mxu0 0.0
  %10146 = vmatpush1.msra.mxu0 0.0
  %10147 = vmatprep.subr.mxu0 0.0
  %10148 = vmatpush1.msra.mxu0 0.0
  %10149 = vmatprep.subr.mxu0 0.0
  %10150 = vmatpush1.msra.mxu0 0.0
  %10151 = vmatprep.subr.mxu0 0.0
  %10152 = vmatpush1.msra.mxu0 0.0
  %10153 = vmatprep.subr.mxu0 0.0
  %10154 = vmatpush1.msra.mxu0 0.0
  %10155 = vmatprep.subr.mxu0 0.0
  %10156 = vmatpush1.msra.mxu0 0.0
  %10157 = vmatprep.subr.mxu0 0.0
  %10158 = vmatpush1.msra.mxu0 0.0
  %10159 = vmatprep.subr.mxu0 0.0
  %10160 = vmatpush1.msra.mxu0 0.0
  %10161 = vmatprep.subr.mxu0 0.0
  %10162 = vmatpush1.msra.mxu0 0.0
  %10163 = vmatprep.subr.mxu0 0.0
  %10164 = vmatpush1.msra.mxu0 0.0
  %10165 = vmatprep.subr.mxu0 0.0
  %10166 = vmatpush1.msra.mxu0 0.0
  %10167 = vmatprep.subr.mxu0 0.0
  %10168 = vmatpush1.msra.mxu0 0.0
  %10169 = vmatprep.subr.mxu0 0.0
  %10170 = vmatpush1.msra.mxu0 0.0
  %10171 = vmatprep.subr.mxu0 0.0
  %10172 = vmatpush1.msra.mxu0 0.0
  %10173 = vmatprep.subr.mxu0 0.0
  %10174 = vmatpush1.msra.mxu0 0.0
  %10175 = vmatprep.subr.mxu0 0.0
  %10176 = vmatpush1.msra.mxu0 0.0
  %10177 = vmatprep.subr.mxu0 0.0
  %10178 = vmatpush1.msra.mxu0 0.0
  %10179 = vmatprep.subr.mxu0 0.0
  %10180 = vmatpush1.msra.mxu0 0.0
  %10181 = vmatprep.subr.mxu0 0.0
  %10182 = vmatpush1.msra.mxu0 0.0
  %10183 = vmatprep.subr.mxu0 0.0
  %10184 = vmatpush1.msra.mxu0 0.0
  %10185 = vmatprep.subr.mxu0 0.0
  %10186 = vmatpush1.msra.mxu0 0.0
  %10187 = vmatprep.subr.mxu0 0.0
  %10188 = vmatpush1.msra.mxu0 0.0
  %10189 = vmatprep.subr.mxu0 0.0
  %10190 = vmatpush1.msra.mxu0 0.0
  %10191 = vmatprep.mubr.f32.mxu0 0.0
  %v10192 = vand.u32 %v9580, 4294901760
  %10193 = vmatmul.mubr.f32.gmra.mrb[0].mxu0 %v10192
  %v10194 = vpop.f32.mrb[0].mxu0
  %v10195 = vadd.f32 %v10104, %v10194
  %v10196 = vpop.f32.mrb[0].mxu0
  %10197 = vmatprep.mubr.f32.mxu0 0.0
  %v10198 = vand.u32 %v9583, 4294901760
  %10199 = vmatmul.mubr.f32.gmra.mrb[0].mxu0 %v10198
  %v10200 = vpop.f32.mrb[0].mxu0
  %v10201 = vadd.f32 %v10110, %v10200
  %v10202 = vpop.f32.mrb[0].mxu0
  %10203 = vmatprep.mubr.f32.mxu0 0.0
  %v10204 = vand.u32 %v9585, 4294901760
  %10205 = vmatmul.mubr.f32.gmra.mrb[0].mxu0 %v10204
  %v10206 = vpop.f32.mrb[0].mxu0
  %v10207 = vadd.f32 %v10116, %v10206
  %v10208 = vpop.f32.mrb[0].mxu0
  %10209 = vdwg.mxu0
  %10210 = vadd.xlane.f32.xlu0 %v10195
  %v10211 = vpop.xlane.xlu0 %10210
  %10212 = vadd.xlane.f32.xlu0 %v10201
  %v10213 = vpop.xlane.xlu0 %10212
  %vm10214 = vcmask 1041408
  %v10215 = vsel %vm10214, %v10207, 0.0
  %10216 = vadd.xlane.f32.xlu0 %v10215
  %v10217 = vpop.xlane.xlu0 %10216
  %v10218 = vmul.f32 %v10211, 0.015625
  %v10219 = vmul.f32 %v10213, 0.015625
  %v10220 = vmul.f32 %v10217, 0.015625
  %v10221 = vsub.f32 %v10195, %v10218
  %v10222 = vsub.f32 %v10201, %v10219
  %v10223 = vsub.f32 %v10207, %v10220
  %v10224 = vsel %vm95, 1, 0
  %vm10225 = vcmp.eq.s32.totalorder %v10224, 1
  %v10226 = vsel %vm10225, %v10221, 0.0
  %v10227 = vsel %vm10225, %v10222, 0.0
  %v10228 = vsel %vm10225, %v10223, 0.0
  %v10229 = vmul.f32 %v10226, %v10226
  %v10230 = vmul.f32 %v10227, %v10227
  %v10231 = vmul.f32 %v10228, %v10228
  %10232 = vadd.xlane.f32.xlu0 %v10229
  %v10233 = vpop.xlane.xlu0 %10232
  %10234 = vadd.xlane.f32.xlu0 %v10230
  %v10235 = vpop.xlane.xlu0 %10234
  %v10236 = vsel %vm10214, %v10231, 0.0
  %10237 = vadd.xlane.f32.xlu0 %v10236
  %v10238 = vpop.xlane.xlu0 %10237
  %v10239 = vmul.f32 %v10233, 0.015625
  %v10240 = vmul.f32 %v10235, 0.015625
  %v10241 = vmul.f32 %v10238, 0.015625
  %v10242 = vadd.f32 %v10239, 1e-05
  %v10243 = vadd.f32 %v10240, 1e-05
  %v10244 = vadd.f32 %v10241, 1e-05
  %v10245 = vrsqrt.pop %v10242
  %v10246 = vrsqrt.pop %v10243
  %v10247 = vrsqrt.pop %v10244
  %v10248 = vmul.f32 %v10226, %v10245
  %v10249 = vmul.f32 %v10227, %v10246
  %v10250 = vmul.f32 %v10228, %v10247
  %v10252 = vlaneseq
  %v10253 = vshrl.u32 %v10252, 7
  %v10254 = vsub.s32 0, %v10253
  %v10255 = vrot.slane %v91, %v10254
  %v10257 = vmul.f32 %v10248, %v10255
  %v10258 = vmul.f32 %v10249, %v10255
  %v10259 = vmul.f32 %v10250, %v10255
  %v10261 = vlaneseq
  %v10262 = vshrl.u32 %v10261, 7
  %v10263 = vsub.s32 0, %v10262
  %v10264 = vrot.slane %v92, %v10263
  %v10266 = vadd.f32 %v10257, %v10264
  %v10267 = vadd.f32 %v10258, %v10264
  %v10268 = vadd.f32 %v10259, %v10264
  %v10269 = vadd.f32 %v96, %v10266
  %v10270 = vadd.f32 %v97, %v10267
  %v10271 = vadd.f32 %v98, %v10268
  %v10273 = vlaneseq
  %v10274 = vshrl.u32 %v10273, 7
  %v10275 = vsub.s32 0, %v10274
  %v10276 = vrot.slane %v90, %v10275
  %10278 = vmatprep.subr.mxu0 0.0
  %v10279 = vand.u32 %v74, 4294901760
  %10280 = vmatpush1.msra.mxu0 %v10279
  %10281 = vmatprep.subr.mxu0 0.0
  %v10282 = vand.u32 %v75, 4294901760
  %10283 = vmatpush1.msra.mxu0 %v10282
  %10284 = vmatprep.subr.mxu0 0.0
  %v10285 = vand.u32 %v76, 4294901760
  %10286 = vmatpush1.msra.mxu0 %v10285
  %10287 = vmatprep.subr.mxu0 0.0
  %v10288 = vand.u32 %v77, 4294901760
  %10289 = vmatpush1.msra.mxu0 %v10288
  %10290 = vmatprep.subr.mxu0 0.0
  %v10291 = vand.u32 %v78, 4294901760
  %10292 = vmatpush1.msra.mxu0 %v10291
  %10293 = vmatprep.subr.mxu0 0.0
  %v10294 = vand.u32 %v79, 4294901760
  %10295 = vmatpush1.msra.mxu0 %v10294
  %10296 = vmatprep.subr.mxu0 0.0
  %v10297 = vand.u32 %v80, 4294901760
  %10298 = vmatpush1.msra.mxu0 %v10297
  %10299 = vmatprep.subr.mxu0 0.0
  %v10300 = vand.u32 %v81, 4294901760
  %10301 = vmatpush1.msra.mxu0 %v10300
  %10302 = vmatprep.subr.mxu0 0.0
  %v10303 = vand.u32 %v82, 4294901760
  %10304 = vmatpush1.msra.mxu0 %v10303
  %10305 = vmatprep.subr.mxu0 0.0
  %v10306 = vand.u32 %v83, 4294901760
  %10307 = vmatpush1.msra.mxu0 %v10306
  %10308 = vmatprep.subr.mxu0 0.0
  %v10309 = vand.u32 %v84, 4294901760
  %10310 = vmatpush1.msra.mxu0 %v10309
  %10311 = vmatprep.subr.mxu0 0.0
  %v10312 = vand.u32 %v85, 4294901760
  %10313 = vmatpush1.msra.mxu0 %v10312
  %10314 = vmatprep.subr.mxu0 0.0
  %v10315 = vand.u32 %v86, 4294901760
  %10316 = vmatpush1.msra.mxu0 %v10315
  %10317 = vmatprep.subr.mxu0 0.0
  %v10318 = vand.u32 %v87, 4294901760
  %10319 = vmatpush1.msra.mxu0 %v10318
  %10320 = vmatprep.subr.mxu0 0.0
  %v10321 = vand.u32 %v88, 4294901760
  %10322 = vmatpush1.msra.mxu0 %v10321
  %10323 = vmatprep.subr.mxu0 0.0
  %v10324 = vand.u32 %v89, 4294901760
  %10325 = vmatpush1.msra.mxu0 %v10324
  %10326 = vmatprep.subr.mxu0 0.0
  %10327 = vmatpush1.msra.mxu0 0.0
  %10328 = vmatprep.subr.mxu0 0.0
  %10329 = vmatpush1.msra.mxu0 0.0
  %10330 = vmatprep.subr.mxu0 0.0
  %10331 = vmatpush1.msra.mxu0 0.0
  %10332 = vmatprep.subr.mxu0 0.0
  %10333 = vmatpush1.msra.mxu0 0.0
  %10334 = vmatprep.subr.mxu0 0.0
  %10335 = vmatpush1.msra.mxu0 0.0
  %10336 = vmatprep.subr.mxu0 0.0
  %10337 = vmatpush1.msra.mxu0 0.0
  %10338 = vmatprep.subr.mxu0 0.0
  %10339 = vmatpush1.msra.mxu0 0.0
  %10340 = vmatprep.subr.mxu0 0.0
  %10341 = vmatpush1.msra.mxu0 0.0
  %10342 = vmatprep.subr.mxu0 0.0
  %10343 = vmatpush1.msra.mxu0 0.0
  %10344 = vmatprep.subr.mxu0 0.0
  %10345 = vmatpush1.msra.mxu0 0.0
  %10346 = vmatprep.subr.mxu0 0.0
  %10347 = vmatpush1.msra.mxu0 0.0
  %10348 = vmatprep.subr.mxu0 0.0
  %10349 = vmatpush1.msra.mxu0 0.0
  %10350 = vmatprep.subr.mxu0 0.0
  %10351 = vmatpush1.msra.mxu0 0.0
  %10352 = vmatprep.subr.mxu0 0.0
  %10353 = vmatpush1.msra.mxu0 0.0
  %10354 = vmatprep.subr.mxu0 0.0
  %10355 = vmatpush1.msra.mxu0 0.0
  %10356 = vmatprep.subr.mxu0 0.0
  %10357 = vmatpush1.msra.mxu0 0.0
  %10358 = vmatprep.mubr.f32.mxu0 0.0
  %v10359 = vand.u32 %v10269, 4294901760
  %v10360 = vsub.f32 %v10269, %v10359
  %v10361 = vand.u32 %v10360, 4294901760
  %v10362 = vsub.f32 %v10360, %v10361
  %v10363 = vand.u32 %v10362, 4294901760
  %10364 = vmatmul.mubr.f32.gmra.mrb[0].mxu0 %v10363
  %v10365 = vpop.f32.mrb[0].mxu0
  %v10366 = vadd.f32 %v10276, %v10365
  %v10367 = vpop.f32.mrb[0].mxu0
  %10368 = vmatprep.mubr.f32.mxu0 0.0
  %v10369 = vand.u32 %v10270, 4294901760
  %v10370 = vsub.f32 %v10270, %v10369
  %v10371 = vand.u32 %v10370, 4294901760
  %v10372 = vsub.f32 %v10370, %v10371
  %v10373 = vand.u32 %v10372, 4294901760
  %10374 = vmatmul.mubr.f32.gmra.mrb[0].mxu0 %v10373
  %v10375 = vpop.f32.mrb[0].mxu0
  %v10376 = vadd.f32 %v10276, %v10375
  %v10377 = vpop.f32.mrb[0].mxu0
  %10378 = vmatprep.mubr.f32.mxu0 0.0
  %v10379 = vand.u32 %v10271, 4294901760
  %v10380 = vsub.f32 %v10271, %v10379
  %v10381 = vand.u32 %v10380, 4294901760
  %v10382 = vsub.f32 %v10380, %v10381
  %v10383 = vand.u32 %v10382, 4294901760
  %10384 = vmatmul.mubr.f32.gmra.mrb[0].mxu0 %v10383
  %v10385 = vpop.f32.mrb[0].mxu0
  %v10386 = vadd.f32 %v10276, %v10385
  %v10387 = vpop.f32.mrb[0].mxu0
  %10388 = vdwg.mxu0
  %10389 = vmatprep.subr.mxu0 0.0
  %v10390 = vand.u32 %v74, 4294901760
  %v10391 = vsub.f32 %v74, %v10390
  %v10392 = vand.u32 %v10391, 4294901760
  %v10393 = vsub.f32 %v10391, %v10392
  %v10394 = vand.u32 %v10393, 4294901760
  %10395 = vmatpush1.msra.mxu0 %v10394
  %10396 = vmatprep.subr.mxu0 0.0
  %v10397 = vand.u32 %v75, 4294901760
  %v10398 = vsub.f32 %v75, %v10397
  %v10399 = vand.u32 %v10398, 4294901760
  %v10400 = vsub.f32 %v10398, %v10399
  %v10401 = vand.u32 %v10400, 4294901760
  %10402 = vmatpush1.msra.mxu0 %v10401
  %10403 = vmatprep.subr.mxu0 0.0
  %v10404 = vand.u32 %v76, 4294901760
  %v10405 = vsub.f32 %v76, %v10404
  %v10406 = vand.u32 %v10405, 4294901760
  %v10407 = vsub.f32 %v10405, %v10406
  %v10408 = vand.u32 %v10407, 4294901760
  %10409 = vmatpush1.msra.mxu0 %v10408
  %10410 = vmatprep.subr.mxu0 0.0
  %v10411 = vand.u32 %v77, 4294901760
  %v10412 = vsub.f32 %v77, %v10411
  %v10413 = vand.u32 %v10412, 4294901760
  %v10414 = vsub.f32 %v10412, %v10413
  %v10415 = vand.u32 %v10414, 4294901760
  %10416 = vmatpush1.msra.mxu0 %v10415
  %10417 = vmatprep.subr.mxu0 0.0
  %v10418 = vand.u32 %v78, 4294901760
  %v10419 = vsub.f32 %v78, %v10418
  %v10420 = vand.u32 %v10419, 4294901760
  %v10421 = vsub.f32 %v10419, %v10420
  %v10422 = vand.u32 %v10421, 4294901760
  %10423 = vmatpush1.msra.mxu0 %v10422
  %10424 = vmatprep.subr.mxu0 0.0
  %v10425 = vand.u32 %v79, 4294901760
  %v10426 = vsub.f32 %v79, %v10425
  %v10427 = vand.u32 %v10426, 4294901760
  %v10428 = vsub.f32 %v10426, %v10427
  %v10429 = vand.u32 %v10428, 4294901760
  %10430 = vmatpush1.msra.mxu0 %v10429
  %10431 = vmatprep.subr.mxu0 0.0
  %v10432 = vand.u32 %v80, 4294901760
  %v10433 = vsub.f32 %v80, %v10432
  %v10434 = vand.u32 %v10433, 4294901760
  %v10435 = vsub.f32 %v10433, %v10434
  %v10436 = vand.u32 %v10435, 4294901760
  %10437 = vmatpush1.msra.mxu0 %v10436
  %10438 = vmatprep.subr.mxu0 0.0
  %v10439 = vand.u32 %v81, 4294901760
  %v10440 = vsub.f32 %v81, %v10439
  %v10441 = vand.u32 %v10440, 4294901760
  %v10442 = vsub.f32 %v10440, %v10441
  %v10443 = vand.u32 %v10442, 4294901760
  %10444 = vmatpush1.msra.mxu0 %v10443
  %10445 = vmatprep.subr.mxu0 0.0
  %v10446 = vand.u32 %v82, 4294901760
  %v10447 = vsub.f32 %v82, %v10446
  %v10448 = vand.u32 %v10447, 4294901760
  %v10449 = vsub.f32 %v10447, %v10448
  %v10450 = vand.u32 %v10449, 4294901760
  %10451 = vmatpush1.msra.mxu0 %v10450
  %10452 = vmatprep.subr.mxu0 0.0
  %v10453 = vand.u32 %v83, 4294901760
  %v10454 = vsub.f32 %v83, %v10453
  %v10455 = vand.u32 %v10454, 4294901760
  %v10456 = vsub.f32 %v10454, %v10455
  %v10457 = vand.u32 %v10456, 4294901760
  %10458 = vmatpush1.msra.mxu0 %v10457
  %10459 = vmatprep.subr.mxu0 0.0
  %v10460 = vand.u32 %v84, 4294901760
  %v10461 = vsub.f32 %v84, %v10460
  %v10462 = vand.u32 %v10461, 4294901760
  %v10463 = vsub.f32 %v10461, %v10462
  %v10464 = vand.u32 %v10463, 4294901760
  %10465 = vmatpush1.msra.mxu0 %v10464
  %10466 = vmatprep.subr.mxu0 0.0
  %v10467 = vand.u32 %v85, 4294901760
  %v10468 = vsub.f32 %v85, %v10467
  %v10469 = vand.u32 %v10468, 4294901760
  %v10470 = vsub.f32 %v10468, %v10469
  %v10471 = vand.u32 %v10470, 4294901760
  %10472 = vmatpush1.msra.mxu0 %v10471
  %10473 = vmatprep.subr.mxu0 0.0
  %v10474 = vand.u32 %v86, 4294901760
  %v10475 = vsub.f32 %v86, %v10474
  %v10476 = vand.u32 %v10475, 4294901760
  %v10477 = vsub.f32 %v10475, %v10476
  %v10478 = vand.u32 %v10477, 4294901760
  %10479 = vmatpush1.msra.mxu0 %v10478
  %10480 = vmatprep.subr.mxu0 0.0
  %v10481 = vand.u32 %v87, 4294901760
  %v10482 = vsub.f32 %v87, %v10481
  %v10483 = vand.u32 %v10482, 4294901760
  %v10484 = vsub.f32 %v10482, %v10483
  %v10485 = vand.u32 %v10484, 4294901760
  %10486 = vmatpush1.msra.mxu0 %v10485
  %10487 = vmatprep.subr.mxu0 0.0
  %v10488 = vand.u32 %v88, 4294901760
  %v10489 = vsub.f32 %v88, %v10488
  %v10490 = vand.u32 %v10489, 4294901760
  %v10491 = vsub.f32 %v10489, %v10490
  %v10492 = vand.u32 %v10491, 4294901760
  %10493 = vmatpush1.msra.mxu0 %v10492
  %10494 = vmatprep.subr.mxu0 0.0
  %v10495 = vand.u32 %v89, 4294901760
  %v10496 = vsub.f32 %v89, %v10495
  %v10497 = vand.u32 %v10496, 4294901760
  %v10498 = vsub.f32 %v10496, %v10497
  %v10499 = vand.u32 %v10498, 4294901760
  %10500 = vmatpush1.msra.mxu0 %v10499
  %10501 = vmatprep.subr.mxu0 0.0
  %10502 = vmatpush1.msra.mxu0 0.0
  %10503 = vmatprep.subr.mxu0 0.0
  %10504 = vmatpush1.msra.mxu0 0.0
  %10505 = vmatprep.subr.mxu0 0.0
  %10506 = vmatpush1.msra.mxu0 0.0
  %10507 = vmatprep.subr.mxu0 0.0
  %10508 = vmatpush1.msra.mxu0 0.0
  %10509 = vmatprep.subr.mxu0 0.0
  %10510 = vmatpush1.msra.mxu0 0.0
  %10511 = vmatprep.subr.mxu0 0.0
  %10512 = vmatpush1.msra.mxu0 0.0
  %10513 = vmatprep.subr.mxu0 0.0
  %10514 = vmatpush1.msra.mxu0 0.0
  %10515 = vmatprep.subr.mxu0 0.0
  %10516 = vmatpush1.msra.mxu0 0.0
  %10517 = vmatprep.subr.mxu0 0.0
  %10518 = vmatpush1.msra.mxu0 0.0
  %10519 = vmatprep.subr.mxu0 0.0
  %10520 = vmatpush1.msra.mxu0 0.0
  %10521 = vmatprep.subr.mxu0 0.0
  %10522 = vmatpush1.msra.mxu0 0.0
  %10523 = vmatprep.subr.mxu0 0.0
  %10524 = vmatpush1.msra.mxu0 0.0
  %10525 = vmatprep.subr.mxu0 0.0
  %10526 = vmatpush1.msra.mxu0 0.0
  %10527 = vmatprep.subr.mxu0 0.0
  %10528 = vmatpush1.msra.mxu0 0.0
  %10529 = vmatprep.subr.mxu0 0.0
  %10530 = vmatpush1.msra.mxu0 0.0
  %10531 = vmatprep.subr.mxu0 0.0
  %10532 = vmatpush1.msra.mxu0 0.0
  %10533 = vmatprep.mubr.f32.mxu0 0.0
  %v10534 = vand.u32 %v10269, 4294901760
  %10535 = vmatmul.mubr.f32.gmra.mrb[0].mxu0 %v10534
  %v10536 = vpop.f32.mrb[0].mxu0
  %v10537 = vadd.f32 %v10366, %v10536
  %v10538 = vpop.f32.mrb[0].mxu0
  %10539 = vmatprep.mubr.f32.mxu0 0.0
  %v10540 = vand.u32 %v10270, 4294901760
  %10541 = vmatmul.mubr.f32.gmra.mrb[0].mxu0 %v10540
  %v10542 = vpop.f32.mrb[0].mxu0
  %v10543 = vadd.f32 %v10376, %v10542
  %v10544 = vpop.f32.mrb[0].mxu0
  %10545 = vmatprep.mubr.f32.mxu0 0.0
  %v10546 = vand.u32 %v10271, 4294901760
  %10547 = vmatmul.mubr.f32.gmra.mrb[0].mxu0 %v10546
  %v10548 = vpop.f32.mrb[0].mxu0
  %v10549 = vadd.f32 %v10386, %v10548
  %v10550 = vpop.f32.mrb[0].mxu0
  %10551 = vdwg.mxu0
  %10552 = vmatprep.subr.mxu0 0.0
  %v10553 = vand.u32 %v74, 4294901760
  %v10554 = vsub.f32 %v74, %v10553
  %10555 = vmatpush1.msra.mxu0 %v10554
  %10556 = vmatprep.subr.mxu0 0.0
  %v10557 = vand.u32 %v75, 4294901760
  %v10558 = vsub.f32 %v75, %v10557
  %10559 = vmatpush1.msra.mxu0 %v10558
  %10560 = vmatprep.subr.mxu0 0.0
  %v10561 = vand.u32 %v76, 4294901760
  %v10562 = vsub.f32 %v76, %v10561
  %10563 = vmatpush1.msra.mxu0 %v10562
  %10564 = vmatprep.subr.mxu0 0.0
  %v10565 = vand.u32 %v77, 4294901760
  %v10566 = vsub.f32 %v77, %v10565
  %10567 = vmatpush1.msra.mxu0 %v10566
  %10568 = vmatprep.subr.mxu0 0.0
  %v10569 = vand.u32 %v78, 4294901760
  %v10570 = vsub.f32 %v78, %v10569
  %10571 = vmatpush1.msra.mxu0 %v10570
  %10572 = vmatprep.subr.mxu0 0.0
  %v10573 = vand.u32 %v79, 4294901760
  %v10574 = vsub.f32 %v79, %v10573
  %10575 = vmatpush1.msra.mxu0 %v10574
  %10576 = vmatprep.subr.mxu0 0.0
  %v10577 = vand.u32 %v80, 4294901760
  %v10578 = vsub.f32 %v80, %v10577
  %10579 = vmatpush1.msra.mxu0 %v10578
  %10580 = vmatprep.subr.mxu0 0.0
  %v10581 = vand.u32 %v81, 4294901760
  %v10582 = vsub.f32 %v81, %v10581
  %10583 = vmatpush1.msra.mxu0 %v10582
  %10584 = vmatprep.subr.mxu0 0.0
  %v10585 = vand.u32 %v82, 4294901760
  %v10586 = vsub.f32 %v82, %v10585
  %10587 = vmatpush1.msra.mxu0 %v10586
  %10588 = vmatprep.subr.mxu0 0.0
  %v10589 = vand.u32 %v83, 4294901760
  %v10590 = vsub.f32 %v83, %v10589
  %10591 = vmatpush1.msra.mxu0 %v10590
  %10592 = vmatprep.subr.mxu0 0.0
  %v10593 = vand.u32 %v84, 4294901760
  %v10594 = vsub.f32 %v84, %v10593
  %10595 = vmatpush1.msra.mxu0 %v10594
  %10596 = vmatprep.subr.mxu0 0.0
  %v10597 = vand.u32 %v85, 4294901760
  %v10598 = vsub.f32 %v85, %v10597
  %10599 = vmatpush1.msra.mxu0 %v10598
  %10600 = vmatprep.subr.mxu0 0.0
  %v10601 = vand.u32 %v86, 4294901760
  %v10602 = vsub.f32 %v86, %v10601
  %10603 = vmatpush1.msra.mxu0 %v10602
  %10604 = vmatprep.subr.mxu0 0.0
  %v10605 = vand.u32 %v87, 4294901760
  %v10606 = vsub.f32 %v87, %v10605
  %10607 = vmatpush1.msra.mxu0 %v10606
  %10608 = vmatprep.subr.mxu0 0.0
  %v10609 = vand.u32 %v88, 4294901760
  %v10610 = vsub.f32 %v88, %v10609
  %10611 = vmatpush1.msra.mxu0 %v10610
  %10612 = vmatprep.subr.mxu0 0.0
  %v10613 = vand.u32 %v89, 4294901760
  %v10614 = vsub.f32 %v89, %v10613
  %10615 = vmatpush1.msra.mxu0 %v10614
  %10616 = vmatprep.subr.mxu0 0.0
  %10617 = vmatpush1.msra.mxu0 0.0
  %10618 = vmatprep.subr.mxu0 0.0
  %10619 = vmatpush1.msra.mxu0 0.0
  %10620 = vmatprep.subr.mxu0 0.0
  %10621 = vmatpush1.msra.mxu0 0.0
  %10622 = vmatprep.subr.mxu0 0.0
  %10623 = vmatpush1.msra.mxu0 0.0
  %10624 = vmatprep.subr.mxu0 0.0
  %10625 = vmatpush1.msra.mxu0 0.0
  %10626 = vmatprep.subr.mxu0 0.0
  %10627 = vmatpush1.msra.mxu0 0.0
  %10628 = vmatprep.subr.mxu0 0.0
  %10629 = vmatpush1.msra.mxu0 0.0
  %10630 = vmatprep.subr.mxu0 0.0
  %10631 = vmatpush1.msra.mxu0 0.0
  %10632 = vmatprep.subr.mxu0 0.0
  %10633 = vmatpush1.msra.mxu0 0.0
  %10634 = vmatprep.subr.mxu0 0.0
  %10635 = vmatpush1.msra.mxu0 0.0
  %10636 = vmatprep.subr.mxu0 0.0
  %10637 = vmatpush1.msra.mxu0 0.0
  %10638 = vmatprep.subr.mxu0 0.0
  %10639 = vmatpush1.msra.mxu0 0.0
  %10640 = vmatprep.subr.mxu0 0.0
  %10641 = vmatpush1.msra.mxu0 0.0
  %10642 = vmatprep.subr.mxu0 0.0
  %10643 = vmatpush1.msra.mxu0 0.0
  %10644 = vmatprep.subr.mxu0 0.0
  %10645 = vmatpush1.msra.mxu0 0.0
  %10646 = vmatprep.subr.mxu0 0.0
  %10647 = vmatpush1.msra.mxu0 0.0
  %10648 = vmatprep.mubr.f32.mxu0 0.0
  %v10649 = vand.u32 %v10269, 4294901760
  %v10650 = vsub.f32 %v10269, %v10649
  %10651 = vmatmul.mubr.f32.gmra.mrb[0].mxu0 %v10650
  %v10652 = vpop.f32.mrb[0].mxu0
  %v10653 = vadd.f32 %v10537, %v10652
  %v10654 = vpop.f32.mrb[0].mxu0
  %10655 = vmatprep.mubr.f32.mxu0 0.0
  %v10656 = vand.u32 %v10270, 4294901760
  %v10657 = vsub.f32 %v10270, %v10656
  %10658 = vmatmul.mubr.f32.gmra.mrb[0].mxu0 %v10657
  %v10659 = vpop.f32.mrb[0].mxu0
  %v10660 = vadd.f32 %v10543, %v10659
  %v10661 = vpop.f32.mrb[0].mxu0
  %10662 = vmatprep.mubr.f32.mxu0 0.0
  %v10663 = vand.u32 %v10271, 4294901760
  %v10664 = vsub.f32 %v10271, %v10663
  %10665 = vmatmul.mubr.f32.gmra.mrb[0].mxu0 %v10664
  %v10666 = vpop.f32.mrb[0].mxu0
  %v10667 = vadd.f32 %v10549, %v10666
  %v10668 = vpop.f32.mrb[0].mxu0
  %10669 = vdwg.mxu0
  %10670 = vmatprep.subr.mxu0 0.0
  %v10671 = vand.u32 %v74, 4294901760
  %10672 = vmatpush1.msra.mxu0 %v10671
  %10673 = vmatprep.subr.mxu0 0.0
  %v10674 = vand.u32 %v75, 4294901760
  %10675 = vmatpush1.msra.mxu0 %v10674
  %10676 = vmatprep.subr.mxu0 0.0
  %v10677 = vand.u32 %v76, 4294901760
  %10678 = vmatpush1.msra.mxu0 %v10677
  %10679 = vmatprep.subr.mxu0 0.0
  %v10680 = vand.u32 %v77, 4294901760
  %10681 = vmatpush1.msra.mxu0 %v10680
  %10682 = vmatprep.subr.mxu0 0.0
  %v10683 = vand.u32 %v78, 4294901760
  %10684 = vmatpush1.msra.mxu0 %v10683
  %10685 = vmatprep.subr.mxu0 0.0
  %v10686 = vand.u32 %v79, 4294901760
  %10687 = vmatpush1.msra.mxu0 %v10686
  %10688 = vmatprep.subr.mxu0 0.0
  %v10689 = vand.u32 %v80, 4294901760
  %10690 = vmatpush1.msra.mxu0 %v10689
  %10691 = vmatprep.subr.mxu0 0.0
  %v10692 = vand.u32 %v81, 4294901760
  %10693 = vmatpush1.msra.mxu0 %v10692
  %10694 = vmatprep.subr.mxu0 0.0
  %v10695 = vand.u32 %v82, 4294901760
  %10696 = vmatpush1.msra.mxu0 %v10695
  %10697 = vmatprep.subr.mxu0 0.0
  %v10698 = vand.u32 %v83, 4294901760
  %10699 = vmatpush1.msra.mxu0 %v10698
  %10700 = vmatprep.subr.mxu0 0.0
  %v10701 = vand.u32 %v84, 4294901760
  %10702 = vmatpush1.msra.mxu0 %v10701
  %10703 = vmatprep.subr.mxu0 0.0
  %v10704 = vand.u32 %v85, 4294901760
  %10705 = vmatpush1.msra.mxu0 %v10704
  %10706 = vmatprep.subr.mxu0 0.0
  %v10707 = vand.u32 %v86, 4294901760
  %10708 = vmatpush1.msra.mxu0 %v10707
  %10709 = vmatprep.subr.mxu0 0.0
  %v10710 = vand.u32 %v87, 4294901760
  %10711 = vmatpush1.msra.mxu0 %v10710
  %10712 = vmatprep.subr.mxu0 0.0
  %v10713 = vand.u32 %v88, 4294901760
  %10714 = vmatpush1.msra.mxu0 %v10713
  %10715 = vmatprep.subr.mxu0 0.0
  %v10716 = vand.u32 %v89, 4294901760
  %10717 = vmatpush1.msra.mxu0 %v10716
  %10718 = vmatprep.subr.mxu0 0.0
  %10719 = vmatpush1.msra.mxu0 0.0
  %10720 = vmatprep.subr.mxu0 0.0
  %10721 = vmatpush1.msra.mxu0 0.0
  %10722 = vmatprep.subr.mxu0 0.0
  %10723 = vmatpush1.msra.mxu0 0.0
  %10724 = vmatprep.subr.mxu0 0.0
  %10725 = vmatpush1.msra.mxu0 0.0
  %10726 = vmatprep.subr.mxu0 0.0
  %10727 = vmatpush1.msra.mxu0 0.0
  %10728 = vmatprep.subr.mxu0 0.0
  %10729 = vmatpush1.msra.mxu0 0.0
  %10730 = vmatprep.subr.mxu0 0.0
  %10731 = vmatpush1.msra.mxu0 0.0
  %10732 = vmatprep.subr.mxu0 0.0
  %10733 = vmatpush1.msra.mxu0 0.0
  %10734 = vmatprep.subr.mxu0 0.0
  %10735 = vmatpush1.msra.mxu0 0.0
  %10736 = vmatprep.subr.mxu0 0.0
  %10737 = vmatpush1.msra.mxu0 0.0
  %10738 = vmatprep.subr.mxu0 0.0
  %10739 = vmatpush1.msra.mxu0 0.0
  %10740 = vmatprep.subr.mxu0 0.0
  %10741 = vmatpush1.msra.mxu0 0.0
  %10742 = vmatprep.subr.mxu0 0.0
  %10743 = vmatpush1.msra.mxu0 0.0
  %10744 = vmatprep.subr.mxu0 0.0
  %10745 = vmatpush1.msra.mxu0 0.0
  %10746 = vmatprep.subr.mxu0 0.0
  %10747 = vmatpush1.msra.mxu0 0.0
  %10748 = vmatprep.subr.mxu0 0.0
  %10749 = vmatpush1.msra.mxu0 0.0
  %10750 = vmatprep.mubr.f32.mxu0 0.0
  %v10751 = vand.u32 %v10269, 4294901760
  %v10752 = vsub.f32 %v10269, %v10751
  %v10753 = vand.u32 %v10752, 4294901760
  %10754 = vmatmul.mubr.f32.gmra.mrb[0].mxu0 %v10753
  %v10755 = vpop.f32.mrb[0].mxu0
  %v10756 = vadd.f32 %v10653, %v10755
  %v10757 = vpop.f32.mrb[0].mxu0
  %10758 = vmatprep.mubr.f32.mxu0 0.0
  %v10759 = vand.u32 %v10270, 4294901760
  %v10760 = vsub.f32 %v10270, %v10759
  %v10761 = vand.u32 %v10760, 4294901760
  %10762 = vmatmul.mubr.f32.gmra.mrb[0].mxu0 %v10761
  %v10763 = vpop.f32.mrb[0].mxu0
  %v10764 = vadd.f32 %v10660, %v10763
  %v10765 = vpop.f32.mrb[0].mxu0
  %10766 = vmatprep.mubr.f32.mxu0 0.0
  %v10767 = vand.u32 %v10271, 4294901760
  %v10768 = vsub.f32 %v10271, %v10767
  %v10769 = vand.u32 %v10768, 4294901760
  %10770 = vmatmul.mubr.f32.gmra.mrb[0].mxu0 %v10769
  %v10771 = vpop.f32.mrb[0].mxu0
  %v10772 = vadd.f32 %v10667, %v10771
  %v10773 = vpop.f32.mrb[0].mxu0
  %10774 = vdwg.mxu0
  %10775 = vmatprep.subr.mxu0 0.0
  %v10776 = vand.u32 %v74, 4294901760
  %v10777 = vsub.f32 %v74, %v10776
  %v10778 = vand.u32 %v10777, 4294901760
  %10779 = vmatpush1.msra.mxu0 %v10778
  %10780 = vmatprep.subr.mxu0 0.0
  %v10781 = vand.u32 %v75, 4294901760
  %v10782 = vsub.f32 %v75, %v10781
  %v10783 = vand.u32 %v10782, 4294901760
  %10784 = vmatpush1.msra.mxu0 %v10783
  %10785 = vmatprep.subr.mxu0 0.0
  %v10786 = vand.u32 %v76, 4294901760
  %v10787 = vsub.f32 %v76, %v10786
  %v10788 = vand.u32 %v10787, 4294901760
  %10789 = vmatpush1.msra.mxu0 %v10788
  %10790 = vmatprep.subr.mxu0 0.0
  %v10791 = vand.u32 %v77, 4294901760
  %v10792 = vsub.f32 %v77, %v10791
  %v10793 = vand.u32 %v10792, 4294901760
  %10794 = vmatpush1.msra.mxu0 %v10793
  %10795 = vmatprep.subr.mxu0 0.0
  %v10796 = vand.u32 %v78, 4294901760
  %v10797 = vsub.f32 %v78, %v10796
  %v10798 = vand.u32 %v10797, 4294901760
  %10799 = vmatpush1.msra.mxu0 %v10798
  %10800 = vmatprep.subr.mxu0 0.0
  %v10801 = vand.u32 %v79, 4294901760
  %v10802 = vsub.f32 %v79, %v10801
  %v10803 = vand.u32 %v10802, 4294901760
  %10804 = vmatpush1.msra.mxu0 %v10803
  %10805 = vmatprep.subr.mxu0 0.0
  %v10806 = vand.u32 %v80, 4294901760
  %v10807 = vsub.f32 %v80, %v10806
  %v10808 = vand.u32 %v10807, 4294901760
  %10809 = vmatpush1.msra.mxu0 %v10808
  %10810 = vmatprep.subr.mxu0 0.0
  %v10811 = vand.u32 %v81, 4294901760
  %v10812 = vsub.f32 %v81, %v10811
  %v10813 = vand.u32 %v10812, 4294901760
  %10814 = vmatpush1.msra.mxu0 %v10813
  %10815 = vmatprep.subr.mxu0 0.0
  %v10816 = vand.u32 %v82, 4294901760
  %v10817 = vsub.f32 %v82, %v10816
  %v10818 = vand.u32 %v10817, 4294901760
  %10819 = vmatpush1.msra.mxu0 %v10818
  %10820 = vmatprep.subr.mxu0 0.0
  %v10821 = vand.u32 %v83, 4294901760
  %v10822 = vsub.f32 %v83, %v10821
  %v10823 = vand.u32 %v10822, 4294901760
  %10824 = vmatpush1.msra.mxu0 %v10823
  %10825 = vmatprep.subr.mxu0 0.0
  %v10826 = vand.u32 %v84, 4294901760
  %v10827 = vsub.f32 %v84, %v10826
  %v10828 = vand.u32 %v10827, 4294901760
  %10829 = vmatpush1.msra.mxu0 %v10828
  %10830 = vmatprep.subr.mxu0 0.0
  %v10831 = vand.u32 %v85, 4294901760
  %v10832 = vsub.f32 %v85, %v10831
  %v10833 = vand.u32 %v10832, 4294901760
  %10834 = vmatpush1.msra.mxu0 %v10833
  %10835 = vmatprep.subr.mxu0 0.0
  %v10836 = vand.u32 %v86, 4294901760
  %v10837 = vsub.f32 %v86, %v10836
  %v10838 = vand.u32 %v10837, 4294901760
  %10839 = vmatpush1.msra.mxu0 %v10838
  %10840 = vmatprep.subr.mxu0 0.0
  %v10841 = vand.u32 %v87, 4294901760
  %v10842 = vsub.f32 %v87, %v10841
  %v10843 = vand.u32 %v10842, 4294901760
  %10844 = vmatpush1.msra.mxu0 %v10843
  %10845 = vmatprep.subr.mxu0 0.0
  %v10846 = vand.u32 %v88, 4294901760
  %v10847 = vsub.f32 %v88, %v10846
  %v10848 = vand.u32 %v10847, 4294901760
  %10849 = vmatpush1.msra.mxu0 %v10848
  %10850 = vmatprep.subr.mxu0 0.0
  %v10851 = vand.u32 %v89, 4294901760
  %v10852 = vsub.f32 %v89, %v10851
  %v10853 = vand.u32 %v10852, 4294901760
  %10854 = vmatpush1.msra.mxu0 %v10853
  %10855 = vmatprep.subr.mxu0 0.0
  %10856 = vmatpush1.msra.mxu0 0.0
  %10857 = vmatprep.subr.mxu0 0.0
  %10858 = vmatpush1.msra.mxu0 0.0
  %10859 = vmatprep.subr.mxu0 0.0
  %10860 = vmatpush1.msra.mxu0 0.0
  %10861 = vmatprep.subr.mxu0 0.0
  %10862 = vmatpush1.msra.mxu0 0.0
  %10863 = vmatprep.subr.mxu0 0.0
  %10864 = vmatpush1.msra.mxu0 0.0
  %10865 = vmatprep.subr.mxu0 0.0
  %10866 = vmatpush1.msra.mxu0 0.0
  %10867 = vmatprep.subr.mxu0 0.0
  %10868 = vmatpush1.msra.mxu0 0.0
  %10869 = vmatprep.subr.mxu0 0.0
  %10870 = vmatpush1.msra.mxu0 0.0
  %10871 = vmatprep.subr.mxu0 0.0
  %10872 = vmatpush1.msra.mxu0 0.0
  %10873 = vmatprep.subr.mxu0 0.0
  %10874 = vmatpush1.msra.mxu0 0.0
  %10875 = vmatprep.subr.mxu0 0.0
  %10876 = vmatpush1.msra.mxu0 0.0
  %10877 = vmatprep.subr.mxu0 0.0
  %10878 = vmatpush1.msra.mxu0 0.0
  %10879 = vmatprep.subr.mxu0 0.0
  %10880 = vmatpush1.msra.mxu0 0.0
  %10881 = vmatprep.subr.mxu0 0.0
  %10882 = vmatpush1.msra.mxu0 0.0
  %10883 = vmatprep.subr.mxu0 0.0
  %10884 = vmatpush1.msra.mxu0 0.0
  %10885 = vmatprep.subr.mxu0 0.0
  %10886 = vmatpush1.msra.mxu0 0.0
  %10887 = vmatprep.mubr.f32.mxu0 0.0
  %v10888 = vand.u32 %v10269, 4294901760
  %10889 = vmatmul.mubr.f32.gmra.mrb[0].mxu0 %v10888
  %v10890 = vpop.f32.mrb[0].mxu0
  %v10891 = vadd.f32 %v10756, %v10890
  %v10892 = vpop.f32.mrb[0].mxu0
  %10893 = vmatprep.mubr.f32.mxu0 0.0
  %v10894 = vand.u32 %v10270, 4294901760
  %10895 = vmatmul.mubr.f32.gmra.mrb[0].mxu0 %v10894
  %v10896 = vpop.f32.mrb[0].mxu0
  %v10897 = vadd.f32 %v10764, %v10896
  %v10898 = vpop.f32.mrb[0].mxu0
  %10899 = vmatprep.mubr.f32.mxu0 0.0
  %v10900 = vand.u32 %v10271, 4294901760
  %10901 = vmatmul.mubr.f32.gmra.mrb[0].mxu0 %v10900
  %v10902 = vpop.f32.mrb[0].mxu0
  %v10903 = vadd.f32 %v10772, %v10902
  %v10904 = vpop.f32.mrb[0].mxu0
  %10905 = vdwg.mxu0
  %10906 = vmatprep.subr.mxu0 0.0
  %v10907 = vand.u32 %v74, 4294901760
  %10908 = vmatpush1.msra.mxu0 %v10907
  %10909 = vmatprep.subr.mxu0 0.0
  %v10910 = vand.u32 %v75, 4294901760
  %10911 = vmatpush1.msra.mxu0 %v10910
  %10912 = vmatprep.subr.mxu0 0.0
  %v10913 = vand.u32 %v76, 4294901760
  %10914 = vmatpush1.msra.mxu0 %v10913
  %10915 = vmatprep.subr.mxu0 0.0
  %v10916 = vand.u32 %v77, 4294901760
  %10917 = vmatpush1.msra.mxu0 %v10916
  %10918 = vmatprep.subr.mxu0 0.0
  %v10919 = vand.u32 %v78, 4294901760
  %10920 = vmatpush1.msra.mxu0 %v10919
  %10921 = vmatprep.subr.mxu0 0.0
  %v10922 = vand.u32 %v79, 4294901760
  %10923 = vmatpush1.msra.mxu0 %v10922
  %10924 = vmatprep.subr.mxu0 0.0
  %v10925 = vand.u32 %v80, 4294901760
  %10926 = vmatpush1.msra.mxu0 %v10925
  %10927 = vmatprep.subr.mxu0 0.0
  %v10928 = vand.u32 %v81, 4294901760
  %10929 = vmatpush1.msra.mxu0 %v10928
  %10930 = vmatprep.subr.mxu0 0.0
  %v10931 = vand.u32 %v82, 4294901760
  %10932 = vmatpush1.msra.mxu0 %v10931
  %10933 = vmatprep.subr.mxu0 0.0
  %v10934 = vand.u32 %v83, 4294901760
  %10935 = vmatpush1.msra.mxu0 %v10934
  %10936 = vmatprep.subr.mxu0 0.0
  %v10937 = vand.u32 %v84, 4294901760
  %10938 = vmatpush1.msra.mxu0 %v10937
  %10939 = vmatprep.subr.mxu0 0.0
  %v10940 = vand.u32 %v85, 4294901760
  %10941 = vmatpush1.msra.mxu0 %v10940
  %10942 = vmatprep.subr.mxu0 0.0
  %v10943 = vand.u32 %v86, 4294901760
  %10944 = vmatpush1.msra.mxu0 %v10943
  %10945 = vmatprep.subr.mxu0 0.0
  %v10946 = vand.u32 %v87, 4294901760
  %10947 = vmatpush1.msra.mxu0 %v10946
  %10948 = vmatprep.subr.mxu0 0.0
  %v10949 = vand.u32 %v88, 4294901760
  %10950 = vmatpush1.msra.mxu0 %v10949
  %10951 = vmatprep.subr.mxu0 0.0
  %v10952 = vand.u32 %v89, 4294901760
  %10953 = vmatpush1.msra.mxu0 %v10952
  %10954 = vmatprep.subr.mxu0 0.0
  %10955 = vmatpush1.msra.mxu0 0.0
  %10956 = vmatprep.subr.mxu0 0.0
  %10957 = vmatpush1.msra.mxu0 0.0
  %10958 = vmatprep.subr.mxu0 0.0
  %10959 = vmatpush1.msra.mxu0 0.0
  %10960 = vmatprep.subr.mxu0 0.0
  %10961 = vmatpush1.msra.mxu0 0.0
  %10962 = vmatprep.subr.mxu0 0.0
  %10963 = vmatpush1.msra.mxu0 0.0
  %10964 = vmatprep.subr.mxu0 0.0
  %10965 = vmatpush1.msra.mxu0 0.0
  %10966 = vmatprep.subr.mxu0 0.0
  %10967 = vmatpush1.msra.mxu0 0.0
  %10968 = vmatprep.subr.mxu0 0.0
  %10969 = vmatpush1.msra.mxu0 0.0
  %10970 = vmatprep.subr.mxu0 0.0
  %10971 = vmatpush1.msra.mxu0 0.0
  %10972 = vmatprep.subr.mxu0 0.0
  %10973 = vmatpush1.msra.mxu0 0.0
  %10974 = vmatprep.subr.mxu0 0.0
  %10975 = vmatpush1.msra.mxu0 0.0
  %10976 = vmatprep.subr.mxu0 0.0
  %10977 = vmatpush1.msra.mxu0 0.0
  %10978 = vmatprep.subr.mxu0 0.0
  %10979 = vmatpush1.msra.mxu0 0.0
  %10980 = vmatprep.subr.mxu0 0.0
  %10981 = vmatpush1.msra.mxu0 0.0
  %10982 = vmatprep.subr.mxu0 0.0
  %10983 = vmatpush1.msra.mxu0 0.0
  %10984 = vmatprep.subr.mxu0 0.0
  %10985 = vmatpush1.msra.mxu0 0.0
  %10986 = vmatprep.mubr.f32.mxu0 0.0
  %v10987 = vand.u32 %v10269, 4294901760
  %10988 = vmatmul.mubr.f32.gmra.mrb[0].mxu0 %v10987
  %v10989 = vpop.f32.mrb[0].mxu0
  %v10990 = vadd.f32 %v10891, %v10989
  %v10991 = vpop.f32.mrb[0].mxu0
  %10992 = vmatprep.mubr.f32.mxu0 0.0
  %v10993 = vand.u32 %v10270, 4294901760
  %10994 = vmatmul.mubr.f32.gmra.mrb[0].mxu0 %v10993
  %v10995 = vpop.f32.mrb[0].mxu0
  %v10996 = vadd.f32 %v10897, %v10995
  %v10997 = vpop.f32.mrb[0].mxu0
  %10998 = vmatprep.mubr.f32.mxu0 0.0
  %v10999 = vand.u32 %v10271, 4294901760
  %11000 = vmatmul.mubr.f32.gmra.mrb[0].mxu0 %v10999
  %v11001 = vpop.f32.mrb[0].mxu0
  %v11002 = vadd.f32 %v10903, %v11001
  %v11003 = vpop.f32.mrb[0].mxu0
  %11004 = vdwg.mxu0
  %11005 = vadd.xlane.f32.xlu0 %v10990
  %v11006 = vpop.xlane.xlu0 %11005
  %11007 = vadd.xlane.f32.xlu0 %v10996
  %v11008 = vpop.xlane.xlu0 %11007
  %v11009 = vsel %vm10214, %v11002, 0.0
  %11010 = vadd.xlane.f32.xlu0 %v11009
  %v11011 = vpop.xlane.xlu0 %11010
  %v11012 = vmul.f32 %v11006, 0.015625
  %v11013 = vmul.f32 %v11008, 0.015625
  %v11014 = vmul.f32 %v11011, 0.015625
  %v11015 = vsub.f32 %v10990, %v11012
  %v11016 = vsub.f32 %v10996, %v11013
  %v11017 = vsub.f32 %v11002, %v11014
  %v11018 = vsel %vm10225, %v11015, 0.0
  %v11019 = vsel %vm10225, %v11016, 0.0
  %v11020 = vsel %vm10225, %v11017, 0.0
  %v11021 = vmul.f32 %v11018, %v11018
  %v11022 = vmul.f32 %v11019, %v11019
  %v11023 = vmul.f32 %v11020, %v11020
  %11024 = vadd.xlane.f32.xlu0 %v11021
  %v11025 = vpop.xlane.xlu0 %11024
  %11026 = vadd.xlane.f32.xlu0 %v11022
  %v11027 = vpop.xlane.xlu0 %11026
  %v11028 = vsel %vm10214, %v11023, 0.0
  %11029 = vadd.xlane.f32.xlu0 %v11028
  %v11030 = vpop.xlane.xlu0 %11029
  %v11031 = vmul.f32 %v11025, 0.015625
  %v11032 = vmul.f32 %v11027, 0.015625
  %v11033 = vmul.f32 %v11030, 0.015625
  %v11034 = vadd.f32 %v11031, 1e-05
  %v11035 = vadd.f32 %v11032, 1e-05
  %v11036 = vadd.f32 %v11033, 1e-05
  %v11037 = vrsqrt.pop %v11034
  %v11038 = vrsqrt.pop %v11035
  %v11039 = vrsqrt.pop %v11036
  %v11040 = vmul.f32 %v11018, %v11037
  %v11041 = vmul.f32 %v11019, %v11038
  %v11042 = vmul.f32 %v11020, %v11039
  %v11043 = vmul.f32 %v11040, %v10255
  %v11044 = vmul.f32 %v11041, %v10255
  %v11045 = vmul.f32 %v11042, %v10255
  %v11046 = vadd.f32 %v11043, %v10264
  %v11047 = vadd.f32 %v11044, %v10264
  %v11048 = vadd.f32 %v11045, %v10264
  %v11049 = vadd.f32 %v10269, %v11046
  %v11050 = vadd.f32 %v10270, %v11047
  %v11051 = vadd.f32 %v10271, %v11048
  %11052 = vst [vmem:[%s9] sm:$0xff] %v11049
  %11053 = vst [vmem:[%s9 + $0x8] sm:$0xff] %v11050
  %11054 = vst [vmem:[%s9 + $0x10] sm:$0x3] %v11051
  // Predicated region
  $region38: #{tiny_vit_forward.1} parent=0 // pred_check
    _
  $region39: #{tiny_vit_forward.1} parent=0 // pred_check_branch
    %11056 = sbr.rel (0) target = $region41
  $region40: #{tiny_vit_forward.1} parent=0 // pred_region
    _
  $region41: #{tiny_vit_forward.1} parent=0 // pred_fallthru
    _
  // Predicated region
  $region42: #{tiny_vit_forward.1} parent=0 // pred_check
    _
  $region43: #{tiny_vit_forward.1} parent=0 // pred_check_branch
    %11058 = sbr.rel (0) target = $region45
  $region44: #{tiny_vit_forward.1} parent=0 // pred_region
    _
  $region45: #{tiny_vit_forward.1} parent=0 // pred_fallthru
    _

</llo_original>
